<compile_context>
chip_gen: v7x
topology: tpu7x:2x2x1
jax: 0.10.0
libtpu: 0.0.40
codegen_flags: <defaults>
</compile_context>

<pallas_src>
import functools

import jax
import jax.numpy as jnp
from jax import lax
from jax.experimental import pallas as pl
from jax.experimental.pallas import tpu as pltpu


# --------------------------------------------------------------------------
# Host-side relayout: pad by 1 and phase-split H/W by the conv stride so that
# every stride-s conv tap becomes a contiguous static slice inside the kernel.
# x: (N, H, W, C)  ->  (N*s*s, Hq, Wq, C)   with row index n*s*s + ph*s + pw
# where x_ps[n, ph, pw, hq, wq, c] = x_pad[n, hq*s + ph, wq*s + pw, c].
# --------------------------------------------------------------------------
def _phase_split_pad(x, stride, out_h, out_w, ksize=3, pad=1):
    N, H, W, C = x.shape
    s = stride
    Hq = (ksize - 1) // s + out_h
    Wq = (ksize - 1) // s + out_w
    xp = jnp.pad(x, ((0, 0), (pad, s * Hq - H - pad), (pad, s * Wq - W - pad), (0, 0)))
    xp = xp.reshape(N, Hq, s, Wq, s, C)
    xp = jnp.transpose(xp, (0, 2, 4, 1, 3, 5))
    return xp.reshape(N * s * s, Hq, Wq, C)


# --------------------------------------------------------------------------
# Fully fused BasicBlock kernel
# --------------------------------------------------------------------------
def _make_basic_block_kernel(s, H, W, Cin, Cout, Ho, Wo, equaldim):
    M = Ho * Wo

    def kernel(*refs):
        if equaldim:
            (x_ref, m_ref, sc1_ref, sh1_ref, w1_ref,
             sc2_ref, sh2_ref, w2_ref, o_ref, bpad_ref) = refs
            wsc_ref = None
        else:
            (x_ref, m_ref, sc1_ref, sh1_ref, w1_ref,
             sc2_ref, sh2_ref, w2_ref, wsc_ref, o_ref, bpad_ref) = refs

        # ---- bn1 + relu (prologue); mask forces the conv padding ring to 0 ----
        x = x_ref[...]                                            # (s*s, Hq, Wq, Cin)
        h = jnp.maximum(x * sc1_ref[...] + sh1_ref[...], 0.0) * m_ref[...]

        # ---- conv1: 3x3, stride s, pad 1 -- 9 in-VMEM taps, MXU-accumulated ----
        taps = []
        for i in range(3):
            for j in range(3):
                p = (i % s) * s + (j % s)
                t = h[p, i // s:i // s + Ho, j // s:j // s + Wo, :]   # (Ho, Wo, Cin)
                taps.append(t.reshape(M, Cin))
        acc = jnp.zeros((M, Cout), jnp.float32)
        for t in range(9):
            acc = acc + jnp.dot(taps[t], w1_ref[t],
                                preferred_element_type=jnp.float32)

        # ---- bn2 + relu (dropout p=0.0 is the identity) ----
        b = jnp.maximum(acc * sc2_ref[...] + sh2_ref[...], 0.0)       # (M, Cout) f32

        # ---- conv2: 3x3, stride 1, pad 1 via a zero-padded VMEM scratch ----
        bpad_ref[...] = jnp.zeros_like(bpad_ref)
        bpad_ref[1:Ho + 1, 1:Wo + 1, :] = b.reshape(Ho, Wo, Cout)
        bp = bpad_ref[...]                                            # (Ho+2, Wo+2, Cout)
        acc2 = jnp.zeros((M, Cout), jnp.float32)
        for i in range(3):
            for j in range(3):
                t2 = bp[i:i + Ho, j:j + Wo, :].reshape(M, Cout)
                acc2 = acc2 + jnp.dot(t2, w2_ref[i * 3 + j],
                                      preferred_element_type=jnp.float32)

        # ---- residual: identity, or fused 1x1-strided shortcut (== tap (1,1) of h) ----
        if equaldim:
            res = x[0, 1:H + 1, 1:W + 1, :].reshape(M, Cin)
        else:
            res = jnp.dot(taps[4], wsc_ref[...],
                          preferred_element_type=jnp.float32)

        o_ref[...] = (acc2 + res).astype(o_ref.dtype).reshape(1, Ho, Wo, Cout)

    return kernel


def basic_block_forward(x, p, stride):
    """x: (N, H, W, Cin) NHWC float32."""
    N, H, W, Cin = x.shape
    Cout = p["conv1_w"].shape[-1]
    equaldim = p["shortcut_w"] is None
    s = stride
    Ho = (H + 2 - 3) // s + 1
    Wo = (W + 2 - 3) // s + 1

    x_ps = _phase_split_pad(x, s, Ho, Wo)                          # (N*s*s, Hq, Wq, Cin)
    mask = _phase_split_pad(jnp.ones((1, H, W, 1), x.dtype), s, Ho, Wo)
    Hq, Wq = x_ps.shape[1], x_ps.shape[2]

    sc1 = p["bn1_scale"].reshape(1, Cin)
    sh1 = p["bn1_shift"].reshape(1, Cin)
    sc2 = p["bn2_scale"].reshape(1, Cout)
    sh2 = p["bn2_shift"].reshape(1, Cout)
    w1 = p["conv1_w"].reshape(9, Cin, Cout)
    w2 = p["conv2_w"].reshape(9, Cout, Cout)

    args = [x_ps, mask, sc1, sh1, w1, sc2, sh2, w2]
    in_specs = [
        pl.BlockSpec((s * s, Hq, Wq, Cin), lambda n: (n, 0, 0, 0)),
        pl.BlockSpec((s * s, Hq, Wq, 1), lambda n: (0, 0, 0, 0)),
        pl.BlockSpec((1, Cin), lambda n: (0, 0)),
        pl.BlockSpec((1, Cin), lambda n: (0, 0)),
        pl.BlockSpec((9, Cin, Cout), lambda n: (0, 0, 0)),
        pl.BlockSpec((1, Cout), lambda n: (0, 0)),
        pl.BlockSpec((1, Cout), lambda n: (0, 0)),
        pl.BlockSpec((9, Cout, Cout), lambda n: (0, 0, 0)),
    ]
    if not equaldim:
        args.append(p["shortcut_w"].reshape(Cin, Cout))
        in_specs.append(pl.BlockSpec((Cin, Cout), lambda n: (0, 0)))

    kernel = _make_basic_block_kernel(s, H, W, Cin, Cout, Ho, Wo, equaldim)
    out = pl.pallas_call(
        kernel,
        out_shape=jax.ShapeDtypeStruct((N, Ho, Wo, Cout), x.dtype),
        grid=(N,),
        in_specs=in_specs,
        out_specs=pl.BlockSpec((1, Ho, Wo, Cout), lambda n: (n, 0, 0, 0)),
        scratch_shapes=[pltpu.VMEM((Ho + 2, Wo + 2, Cout), jnp.float32)],
        compiler_params=pltpu.CompilerParams(dimension_semantics=("parallel",)),
    )(*args)
    return out


@functools.partial(jax.jit, static_argnames=("stride",))
def residual_block_forward(x, params_list, stride):
    out = basic_block_forward(x, params_list[0], stride)
    for p in params_list[1:]:
        out = basic_block_forward(out, p, 1)
    return out


# --------------------------------------------------------------------------
# Deterministic parameter initialization
# --------------------------------------------------------------------------
def _init_bn(key, dim):
    kg, kb, km, kv = jax.random.split(key, 4)
    gamma = jax.random.uniform(kg, (dim,), minval=0.5, maxval=1.5)
    beta = 0.1 * jax.random.normal(kb, (dim,))
    run_mean = 0.1 * jax.random.normal(km, (dim,))
    run_var = jax.random.uniform(kv, (dim,), minval=0.5, maxval=1.5)
    eps = 1e-5
    scale = gamma / jnp.sqrt(run_var + eps)
    shift = beta - run_mean * scale
    return scale.astype(jnp.float32), shift.astype(jnp.float32)


def _init_conv(key, kh, kw, cin, cout):
    fan = kh * kw * cin
    std = (2.0 / fan) ** 0.5
    return (std * jax.random.normal(key, (kh, kw, cin, cout))).astype(jnp.float32)


def init_basic_block(key, indim, outdim):
    k1, k2, k3, k4, k5 = jax.random.split(key, 5)
    bn1_scale, bn1_shift = _init_bn(k1, indim)
    bn2_scale, bn2_shift = _init_bn(k2, outdim)
    return {
        "bn1_scale": bn1_scale, "bn1_shift": bn1_shift,
        "conv1_w": _init_conv(k3, 3, 3, indim, outdim),
        "bn2_scale": bn2_scale, "bn2_shift": bn2_shift,
        "conv2_w": _init_conv(k4, 3, 3, outdim, outdim),
        "shortcut_w": None if indim == outdim else _init_conv(k5, 1, 1, indim, outdim),
    }


def init_residual_block(key, depth, indim, outdim):
    keys = jax.random.split(key, depth)
    params = [init_basic_block(keys[0], indim, outdim)]
    for i in range(1, depth):
        params.append(init_basic_block(keys[i], outdim, outdim))
    return params


# --------------------------------------------------------------------------
# Pure-JAX reference (no Pallas) for correctness checking
# --------------------------------------------------------------------------
def _ref_conv(x, w, stride, padding):
    return lax.conv_general_dilated(
        x, w, window_strides=(stride, stride),
        padding=((padding, padding), (padding, padding)),
        dimension_numbers=("NHWC", "HWIO", "NHWC"),
    )


def ref_basic_block(x, p, stride):
    equaldim = p["shortcut_w"] is None
    h = jnp.maximum(x * p["bn1_scale"] + p["bn1_shift"], 0.0)
    a = _ref_conv(h, p["conv1_w"], stride, 1)
    b = jnp.maximum(a * p["bn2_scale"] + p["bn2_shift"], 0.0)
    c = _ref_conv(b, p["conv2_w"], 1, 1)
    res = x if equaldim else _ref_conv(h, p["shortcut_w"], stride, 0)
    return res + c


def ref_residual_block(x, params_list, stride):
    out = ref_basic_block(x, params_list[0], stride)
    for p in params_list[1:]:
        out = ref_basic_block(out, p, 1)
    return out


# --------------------------------------------------------------------------
if __name__ == "__main__":
    key = jax.random.PRNGKey(0)
    kx, kp = jax.random.split(key)

    # ResidualBlock(depth=2, indim=4, outdim=8, stride=2, dropout=0.0)
    depth, indim, outdim, stride = 2, 4, 8, 2
    x_nchw = jax.random.normal(kx, (2, indim, 16, 16), dtype=jnp.float32)
    params = init_residual_block(kp, depth, indim, outdim)

    x_nhwc = jnp.transpose(x_nchw, (0, 2, 3, 1))       # NCHW -> NHWC
    out_nhwc = residual_block_forward(x_nhwc, params, stride=stride)
    out_nchw = jnp.transpose(out_nhwc, (0, 3, 1, 2))   # NHWC -> NCHW
    jax.block_until_ready(out_nchw)

    ref_nhwc = ref_residual_block(x_nhwc, params, stride)
    err = float(jnp.max(jnp.abs(out_nhwc - ref_nhwc)))
    assert out_nchw.shape == (2, outdim, 8, 8), out_nchw.shape
    assert err < 1e-4, f"mismatch vs reference: {err}"

    print("KERNEL_OK")
</pallas_src>

<mosaic_0001>
module attributes {stable_mosaic.version = 11 : i64} {
  func.func @kernel(%arg0: i32, %arg1: memref<4x9x9x4xf32, #tpu.memory_space<vmem>>, %arg2: memref<4x9x9x1xf32, #tpu.memory_space<vmem>>, %arg3: memref<1x4xf32, #tpu.memory_space<vmem>>, %arg4: memref<1x4xf32, #tpu.memory_space<vmem>>, %arg5: memref<9x4x8xf32, #tpu.memory_space<vmem>>, %arg6: memref<1x8xf32, #tpu.memory_space<vmem>>, %arg7: memref<1x8xf32, #tpu.memory_space<vmem>>, %arg8: memref<9x8x8xf32, #tpu.memory_space<vmem>>, %arg9: memref<4x8xf32, #tpu.memory_space<vmem>>, %arg10: memref<1x8x8x8xf32, #tpu.memory_space<vmem>>, %arg11: memref<10x10x8xf32, #tpu.memory_space<vmem>>) attributes {dimension_semantics = [#tpu.dimension_semantics<parallel>], iteration_bounds = array<i64: 2>, scalar_prefetch = 0 : i64, scratch_operands = 1 : i64, tpu.core_type = #tpu.core_type<tc>, window_params = [{transform_indices = @transform_0, window_bounds = array<i64: 4, 9, 9, 4>}, {pipeline_mode = #tpu.pipeline_mode<synchronous>, transform_indices = @transform_1, window_bounds = array<i64: 4, 9, 9, 1>}, {pipeline_mode = #tpu.pipeline_mode<synchronous>, transform_indices = @transform_2, window_bounds = array<i64: 1, 4>}, {pipeline_mode = #tpu.pipeline_mode<synchronous>, transform_indices = @transform_3, window_bounds = array<i64: 1, 4>}, {pipeline_mode = #tpu.pipeline_mode<synchronous>, transform_indices = @transform_4, window_bounds = array<i64: 9, 4, 8>}, {pipeline_mode = #tpu.pipeline_mode<synchronous>, transform_indices = @transform_5, window_bounds = array<i64: 1, 8>}, {pipeline_mode = #tpu.pipeline_mode<synchronous>, transform_indices = @transform_6, window_bounds = array<i64: 1, 8>}, {pipeline_mode = #tpu.pipeline_mode<synchronous>, transform_indices = @transform_7, window_bounds = array<i64: 9, 8, 8>}, {pipeline_mode = #tpu.pipeline_mode<synchronous>, transform_indices = @transform_8, window_bounds = array<i64: 4, 8>}, {transform_indices = @transform_9, window_bounds = array<i64: 1, 8, 8, 8>}]} {
    %c0 = arith.constant 0 : index
    %c0_0 = arith.constant 0 : index
    %c0_1 = arith.constant 0 : index
    %c0_2 = arith.constant 0 : index
    %0 = vector.load %arg1[%c0, %c0_0, %c0_1, %c0_2] : memref<4x9x9x4xf32, #tpu.memory_space<vmem>>, vector<4x9x9x4xf32>
    %c0_3 = arith.constant 0 : index
    %c0_4 = arith.constant 0 : index
    %1 = vector.load %arg3[%c0_3, %c0_4] : memref<1x4xf32, #tpu.memory_space<vmem>>, vector<1x4xf32>
    %2 = vector.shape_cast %1 : vector<1x4xf32> to vector<1x1x1x4xf32>
    %3 = vector.broadcast %2 : vector<1x1x1x4xf32> to vector<4x9x9x4xf32>
    %4 = arith.mulf %0, %3 : vector<4x9x9x4xf32>
    %c0_5 = arith.constant 0 : index
    %c0_6 = arith.constant 0 : index
    %5 = vector.load %arg4[%c0_5, %c0_6] : memref<1x4xf32, #tpu.memory_space<vmem>>, vector<1x4xf32>
    %6 = vector.shape_cast %5 : vector<1x4xf32> to vector<1x1x1x4xf32>
    %7 = vector.broadcast %6 : vector<1x1x1x4xf32> to vector<4x9x9x4xf32>
    %8 = arith.addf %4, %7 : vector<4x9x9x4xf32>
    %cst = arith.constant 0.000000e+00 : f32
    %9 = vector.broadcast %cst : f32 to vector<4x9x9x4xf32>
    %10 = arith.maximumf %8, %9 : vector<4x9x9x4xf32>
    %c0_7 = arith.constant 0 : index
    %c0_8 = arith.constant 0 : index
    %c0_9 = arith.constant 0 : index
    %c0_10 = arith.constant 0 : index
    %11 = vector.load %arg2[%c0_7, %c0_8, %c0_9, %c0_10] : memref<4x9x9x1xf32, #tpu.memory_space<vmem>>, vector<4x9x9x1xf32>
    %12 = vector.broadcast %11 : vector<4x9x9x1xf32> to vector<4x9x9x4xf32>
    %13 = arith.mulf %10, %12 : vector<4x9x9x4xf32>
    %14 = vector.extract_strided_slice %13 {offsets = [0, 0, 0, 0], sizes = [1, 8, 8, 4], strides = [1, 1, 1, 1]} : vector<4x9x9x4xf32> to vector<1x8x8x4xf32>
    %15 = vector.shape_cast %14 : vector<1x8x8x4xf32> to vector<8x8x4xf32>
    %16 = vector.shape_cast %15 : vector<8x8x4xf32> to vector<64x4xf32>
    %17 = vector.extract_strided_slice %13 {offsets = [1, 0, 0, 0], sizes = [1, 8, 8, 4], strides = [1, 1, 1, 1]} : vector<4x9x9x4xf32> to vector<1x8x8x4xf32>
    %18 = vector.shape_cast %17 : vector<1x8x8x4xf32> to vector<8x8x4xf32>
    %19 = vector.shape_cast %18 : vector<8x8x4xf32> to vector<64x4xf32>
    %20 = vector.extract_strided_slice %13 {offsets = [0, 0, 1, 0], sizes = [1, 8, 8, 4], strides = [1, 1, 1, 1]} : vector<4x9x9x4xf32> to vector<1x8x8x4xf32>
    %21 = vector.shape_cast %20 : vector<1x8x8x4xf32> to vector<8x8x4xf32>
    %22 = vector.shape_cast %21 : vector<8x8x4xf32> to vector<64x4xf32>
    %23 = vector.extract_strided_slice %13 {offsets = [2, 0, 0, 0], sizes = [1, 8, 8, 4], strides = [1, 1, 1, 1]} : vector<4x9x9x4xf32> to vector<1x8x8x4xf32>
    %24 = vector.shape_cast %23 : vector<1x8x8x4xf32> to vector<8x8x4xf32>
    %25 = vector.shape_cast %24 : vector<8x8x4xf32> to vector<64x4xf32>
    %26 = vector.extract_strided_slice %13 {offsets = [3, 0, 0, 0], sizes = [1, 8, 8, 4], strides = [1, 1, 1, 1]} : vector<4x9x9x4xf32> to vector<1x8x8x4xf32>
    %27 = vector.shape_cast %26 : vector<1x8x8x4xf32> to vector<8x8x4xf32>
    %28 = vector.shape_cast %27 : vector<8x8x4xf32> to vector<64x4xf32>
    %29 = vector.extract_strided_slice %13 {offsets = [2, 0, 1, 0], sizes = [1, 8, 8, 4], strides = [1, 1, 1, 1]} : vector<4x9x9x4xf32> to vector<1x8x8x4xf32>
    %30 = vector.shape_cast %29 : vector<1x8x8x4xf32> to vector<8x8x4xf32>
    %31 = vector.shape_cast %30 : vector<8x8x4xf32> to vector<64x4xf32>
    %32 = vector.extract_strided_slice %13 {offsets = [0, 1, 0, 0], sizes = [1, 8, 8, 4], strides = [1, 1, 1, 1]} : vector<4x9x9x4xf32> to vector<1x8x8x4xf32>
    %33 = vector.shape_cast %32 : vector<1x8x8x4xf32> to vector<8x8x4xf32>
    %34 = vector.shape_cast %33 : vector<8x8x4xf32> to vector<64x4xf32>
    %35 = vector.extract_strided_slice %13 {offsets = [1, 1, 0, 0], sizes = [1, 8, 8, 4], strides = [1, 1, 1, 1]} : vector<4x9x9x4xf32> to vector<1x8x8x4xf32>
    %36 = vector.shape_cast %35 : vector<1x8x8x4xf32> to vector<8x8x4xf32>
    %37 = vector.shape_cast %36 : vector<8x8x4xf32> to vector<64x4xf32>
    %38 = vector.extract_strided_slice %13 {offsets = [0, 1, 1, 0], sizes = [1, 8, 8, 4], strides = [1, 1, 1, 1]} : vector<4x9x9x4xf32> to vector<1x8x8x4xf32>
    %39 = vector.shape_cast %38 : vector<1x8x8x4xf32> to vector<8x8x4xf32>
    %40 = vector.shape_cast %39 : vector<8x8x4xf32> to vector<64x4xf32>
    %cst_11 = arith.constant 0.000000e+00 : f32
    %41 = vector.broadcast %cst_11 : f32 to vector<64x8xf32>
    %c0_12 = arith.constant 0 : index
    %c0_13 = arith.constant 0 : index
    %c0_14 = arith.constant 0 : index
    %42 = vector.load %arg5[%c0_12, %c0_13, %c0_14] : memref<9x4x8xf32, #tpu.memory_space<vmem>>, vector<1x4x8xf32>
    %43 = vector.shape_cast %42 : vector<1x4x8xf32> to vector<4x8xf32>
    %cst_15 = arith.constant dense<0.000000e+00> : vector<64x8xf32>
    %44 = tpu.matmul %16, %43, %cst_15 {dimension_numbers = #tpu.dot_dimension_numbers<[1], [0], [0], [1], [0, 0, 1, 1], [], []>} : vector<64x4xf32>, vector<4x8xf32>, vector<64x8xf32> -> vector<64x8xf32>
    %45 = arith.addf %41, %44 : vector<64x8xf32>
    %c1 = arith.constant 1 : index
    %c0_16 = arith.constant 0 : index
    %c0_17 = arith.constant 0 : index
    %46 = vector.load %arg5[%c1, %c0_16, %c0_17] : memref<9x4x8xf32, #tpu.memory_space<vmem>>, vector<1x4x8xf32>
    %47 = vector.shape_cast %46 : vector<1x4x8xf32> to vector<4x8xf32>
    %cst_18 = arith.constant dense<0.000000e+00> : vector<64x8xf32>
    %48 = tpu.matmul %19, %47, %cst_18 {dimension_numbers = #tpu.dot_dimension_numbers<[1], [0], [0], [1], [0, 0, 1, 1], [], []>} : vector<64x4xf32>, vector<4x8xf32>, vector<64x8xf32> -> vector<64x8xf32>
    %49 = arith.addf %45, %48 : vector<64x8xf32>
    %c2 = arith.constant 2 : index
    %c0_19 = arith.constant 0 : index
    %c0_20 = arith.constant 0 : index
    %50 = vector.load %arg5[%c2, %c0_19, %c0_20] : memref<9x4x8xf32, #tpu.memory_space<vmem>>, vector<1x4x8xf32>
    %51 = vector.shape_cast %50 : vector<1x4x8xf32> to vector<4x8xf32>
    %cst_21 = arith.constant dense<0.000000e+00> : vector<64x8xf32>
    %52 = tpu.matmul %22, %51, %cst_21 {dimension_numbers = #tpu.dot_dimension_numbers<[1], [0], [0], [1], [0, 0, 1, 1], [], []>} : vector<64x4xf32>, vector<4x8xf32>, vector<64x8xf32> -> vector<64x8xf32>
    %53 = arith.addf %49, %52 : vector<64x8xf32>
    %c3 = arith.constant 3 : index
    %c0_22 = arith.constant 0 : index
    %c0_23 = arith.constant 0 : index
    %54 = vector.load %arg5[%c3, %c0_22, %c0_23] : memref<9x4x8xf32, #tpu.memory_space<vmem>>, vector<1x4x8xf32>
    %55 = vector.shape_cast %54 : vector<1x4x8xf32> to vector<4x8xf32>
    %cst_24 = arith.constant dense<0.000000e+00> : vector<64x8xf32>
    %56 = tpu.matmul %25, %55, %cst_24 {dimension_numbers = #tpu.dot_dimension_numbers<[1], [0], [0], [1], [0, 0, 1, 1], [], []>} : vector<64x4xf32>, vector<4x8xf32>, vector<64x8xf32> -> vector<64x8xf32>
    %57 = arith.addf %53, %56 : vector<64x8xf32>
    %c4 = arith.constant 4 : index
    %c0_25 = arith.constant 0 : index
    %c0_26 = arith.constant 0 : index
    %58 = vector.load %arg5[%c4, %c0_25, %c0_26] : memref<9x4x8xf32, #tpu.memory_space<vmem>>, vector<1x4x8xf32>
    %59 = vector.shape_cast %58 : vector<1x4x8xf32> to vector<4x8xf32>
    %cst_27 = arith.constant dense<0.000000e+00> : vector<64x8xf32>
    %60 = tpu.matmul %28, %59, %cst_27 {dimension_numbers = #tpu.dot_dimension_numbers<[1], [0], [0], [1], [0, 0, 1, 1], [], []>} : vector<64x4xf32>, vector<4x8xf32>, vector<64x8xf32> -> vector<64x8xf32>
    %61 = arith.addf %57, %60 : vector<64x8xf32>
    %c5 = arith.constant 5 : index
    %c0_28 = arith.constant 0 : index
    %c0_29 = arith.constant 0 : index
    %62 = vector.load %arg5[%c5, %c0_28, %c0_29] : memref<9x4x8xf32, #tpu.memory_space<vmem>>, vector<1x4x8xf32>
    %63 = vector.shape_cast %62 : vector<1x4x8xf32> to vector<4x8xf32>
    %cst_30 = arith.constant dense<0.000000e+00> : vector<64x8xf32>
    %64 = tpu.matmul %31, %63, %cst_30 {dimension_numbers = #tpu.dot_dimension_numbers<[1], [0], [0], [1], [0, 0, 1, 1], [], []>} : vector<64x4xf32>, vector<4x8xf32>, vector<64x8xf32> -> vector<64x8xf32>
    %65 = arith.addf %61, %64 : vector<64x8xf32>
    %c6 = arith.constant 6 : index
    %c0_31 = arith.constant 0 : index
    %c0_32 = arith.constant 0 : index
    %66 = vector.load %arg5[%c6, %c0_31, %c0_32] : memref<9x4x8xf32, #tpu.memory_space<vmem>>, vector<1x4x8xf32>
    %67 = vector.shape_cast %66 : vector<1x4x8xf32> to vector<4x8xf32>
    %cst_33 = arith.constant dense<0.000000e+00> : vector<64x8xf32>
    %68 = tpu.matmul %34, %67, %cst_33 {dimension_numbers = #tpu.dot_dimension_numbers<[1], [0], [0], [1], [0, 0, 1, 1], [], []>} : vector<64x4xf32>, vector<4x8xf32>, vector<64x8xf32> -> vector<64x8xf32>
    %69 = arith.addf %65, %68 : vector<64x8xf32>
    %c7 = arith.constant 7 : index
    %c0_34 = arith.constant 0 : index
    %c0_35 = arith.constant 0 : index
    %70 = vector.load %arg5[%c7, %c0_34, %c0_35] : memref<9x4x8xf32, #tpu.memory_space<vmem>>, vector<1x4x8xf32>
    %71 = vector.shape_cast %70 : vector<1x4x8xf32> to vector<4x8xf32>
    %cst_36 = arith.constant dense<0.000000e+00> : vector<64x8xf32>
    %72 = tpu.matmul %37, %71, %cst_36 {dimension_numbers = #tpu.dot_dimension_numbers<[1], [0], [0], [1], [0, 0, 1, 1], [], []>} : vector<64x4xf32>, vector<4x8xf32>, vector<64x8xf32> -> vector<64x8xf32>
    %73 = arith.addf %69, %72 : vector<64x8xf32>
    %c8 = arith.constant 8 : index
    %c0_37 = arith.constant 0 : index
    %c0_38 = arith.constant 0 : index
    %74 = vector.load %arg5[%c8, %c0_37, %c0_38] : memref<9x4x8xf32, #tpu.memory_space<vmem>>, vector<1x4x8xf32>
    %75 = vector.shape_cast %74 : vector<1x4x8xf32> to vector<4x8xf32>
    %cst_39 = arith.constant dense<0.000000e+00> : vector<64x8xf32>
    %76 = tpu.matmul %40, %75, %cst_39 {dimension_numbers = #tpu.dot_dimension_numbers<[1], [0], [0], [1], [0, 0, 1, 1], [], []>} : vector<64x4xf32>, vector<4x8xf32>, vector<64x8xf32> -> vector<64x8xf32>
    %77 = arith.addf %73, %76 : vector<64x8xf32>
    %c0_40 = arith.constant 0 : index
    %c0_41 = arith.constant 0 : index
    %78 = vector.load %arg6[%c0_40, %c0_41] : memref<1x8xf32, #tpu.memory_space<vmem>>, vector<1x8xf32>
    %79 = vector.broadcast %78 : vector<1x8xf32> to vector<64x8xf32>
    %80 = arith.mulf %77, %79 : vector<64x8xf32>
    %c0_42 = arith.constant 0 : index
    %c0_43 = arith.constant 0 : index
    %81 = vector.load %arg7[%c0_42, %c0_43] : memref<1x8xf32, #tpu.memory_space<vmem>>, vector<1x8xf32>
    %82 = vector.broadcast %81 : vector<1x8xf32> to vector<64x8xf32>
    %83 = arith.addf %80, %82 : vector<64x8xf32>
    %cst_44 = arith.constant 0.000000e+00 : f32
    %84 = vector.broadcast %cst_44 : f32 to vector<64x8xf32>
    %85 = arith.maximumf %83, %84 : vector<64x8xf32>
    %cst_45 = arith.constant 0.000000e+00 : f32
    %86 = vector.broadcast %cst_45 : f32 to vector<10x10x8xf32>
    %c0_46 = arith.constant 0 : index
    %c0_47 = arith.constant 0 : index
    %c0_48 = arith.constant 0 : index
    %87 = vector.load %arg11[%c0_46, %c0_47, %c0_48] : memref<10x10x8xf32, #tpu.memory_space<vmem>>, vector<10x10x8xf32>
    tpu.vector_store %arg11[%c0_46, %c0_47, %c0_48], %86 {strides = array<i32>} : memref<10x10x8xf32, #tpu.memory_space<vmem>>, vector<10x10x8xf32>,
    %88 = vector.shape_cast %85 : vector<64x8xf32> to vector<8x8x8xf32>
    %c1_49 = arith.constant 1 : index
    %c1_50 = arith.constant 1 : index
    %c0_51 = arith.constant 0 : index
    %89 = vector.load %arg11[%c1_49, %c1_50, %c0_51] : memref<10x10x8xf32, #tpu.memory_space<vmem>>, vector<8x8x8xf32>
    tpu.vector_store %arg11[%c1_49, %c1_50, %c0_51], %88 {strides = array<i32>} : memref<10x10x8xf32, #tpu.memory_space<vmem>>, vector<8x8x8xf32>,
    %c0_52 = arith.constant 0 : index
    %c0_53 = arith.constant 0 : index
    %c0_54 = arith.constant 0 : index
    %90 = vector.load %arg11[%c0_52, %c0_53, %c0_54] : memref<10x10x8xf32, #tpu.memory_space<vmem>>, vector<10x10x8xf32>
    %cst_55 = arith.constant 0.000000e+00 : f32
    %91 = vector.broadcast %cst_55 : f32 to vector<64x8xf32>
    %92 = vector.extract_strided_slice %90 {offsets = [0, 0, 0], sizes = [8, 8, 8], strides = [1, 1, 1]} : vector<10x10x8xf32> to vector<8x8x8xf32>
    %93 = vector.shape_cast %92 : vector<8x8x8xf32> to vector<64x8xf32>
    %c0_56 = arith.constant 0 : index
    %c0_57 = arith.constant 0 : index
    %c0_58 = arith.constant 0 : index
    %94 = vector.load %arg8[%c0_56, %c0_57, %c0_58] : memref<9x8x8xf32, #tpu.memory_space<vmem>>, vector<1x8x8xf32>
    %95 = vector.shape_cast %94 : vector<1x8x8xf32> to vector<8x8xf32>
    %cst_59 = arith.constant dense<0.000000e+00> : vector<64x8xf32>
    %96 = tpu.matmul %93, %95, %cst_59 {dimension_numbers = #tpu.dot_dimension_numbers<[1], [0], [0], [1], [0, 0, 1, 1], [], []>} : vector<64x8xf32>, vector<8x8xf32>, vector<64x8xf32> -> vector<64x8xf32>
    %97 = arith.addf %91, %96 : vector<64x8xf32>
    %98 = vector.extract_strided_slice %90 {offsets = [0, 1, 0], sizes = [8, 8, 8], strides = [1, 1, 1]} : vector<10x10x8xf32> to vector<8x8x8xf32>
    %99 = vector.shape_cast %98 : vector<8x8x8xf32> to vector<64x8xf32>
    %c1_60 = arith.constant 1 : index
    %c0_61 = arith.constant 0 : index
    %c0_62 = arith.constant 0 : index
    %100 = vector.load %arg8[%c1_60, %c0_61, %c0_62] : memref<9x8x8xf32, #tpu.memory_space<vmem>>, vector<1x8x8xf32>
    %101 = vector.shape_cast %100 : vector<1x8x8xf32> to vector<8x8xf32>
    %cst_63 = arith.constant dense<0.000000e+00> : vector<64x8xf32>
    %102 = tpu.matmul %99, %101, %cst_63 {dimension_numbers = #tpu.dot_dimension_numbers<[1], [0], [0], [1], [0, 0, 1, 1], [], []>} : vector<64x8xf32>, vector<8x8xf32>, vector<64x8xf32> -> vector<64x8xf32>
    %103 = arith.addf %97, %102 : vector<64x8xf32>
    %104 = vector.extract_strided_slice %90 {offsets = [0, 2, 0], sizes = [8, 8, 8], strides = [1, 1, 1]} : vector<10x10x8xf32> to vector<8x8x8xf32>
    %105 = vector.shape_cast %104 : vector<8x8x8xf32> to vector<64x8xf32>
    %c2_64 = arith.constant 2 : index
    %c0_65 = arith.constant 0 : index
    %c0_66 = arith.constant 0 : index
    %106 = vector.load %arg8[%c2_64, %c0_65, %c0_66] : memref<9x8x8xf32, #tpu.memory_space<vmem>>, vector<1x8x8xf32>
    %107 = vector.shape_cast %106 : vector<1x8x8xf32> to vector<8x8xf32>
    %cst_67 = arith.constant dense<0.000000e+00> : vector<64x8xf32>
    %108 = tpu.matmul %105, %107, %cst_67 {dimension_numbers = #tpu.dot_dimension_numbers<[1], [0], [0], [1], [0, 0, 1, 1], [], []>} : vector<64x8xf32>, vector<8x8xf32>, vector<64x8xf32> -> vector<64x8xf32>
    %109 = arith.addf %103, %108 : vector<64x8xf32>
    %110 = vector.extract_strided_slice %90 {offsets = [1, 0, 0], sizes = [8, 8, 8], strides = [1, 1, 1]} : vector<10x10x8xf32> to vector<8x8x8xf32>
    %111 = vector.shape_cast %110 : vector<8x8x8xf32> to vector<64x8xf32>
    %c3_68 = arith.constant 3 : index
    %c0_69 = arith.constant 0 : index
    %c0_70 = arith.constant 0 : index
    %112 = vector.load %arg8[%c3_68, %c0_69, %c0_70] : memref<9x8x8xf32, #tpu.memory_space<vmem>>, vector<1x8x8xf32>
    %113 = vector.shape_cast %112 : vector<1x8x8xf32> to vector<8x8xf32>
    %cst_71 = arith.constant dense<0.000000e+00> : vector<64x8xf32>
    %114 = tpu.matmul %111, %113, %cst_71 {dimension_numbers = #tpu.dot_dimension_numbers<[1], [0], [0], [1], [0, 0, 1, 1], [], []>} : vector<64x8xf32>, vector<8x8xf32>, vector<64x8xf32> -> vector<64x8xf32>
    %115 = arith.addf %109, %114 : vector<64x8xf32>
    %116 = vector.extract_strided_slice %90 {offsets = [1, 1, 0], sizes = [8, 8, 8], strides = [1, 1, 1]} : vector<10x10x8xf32> to vector<8x8x8xf32>
    %117 = vector.shape_cast %116 : vector<8x8x8xf32> to vector<64x8xf32>
    %c4_72 = arith.constant 4 : index
    %c0_73 = arith.constant 0 : index
    %c0_74 = arith.constant 0 : index
    %118 = vector.load %arg8[%c4_72, %c0_73, %c0_74] : memref<9x8x8xf32, #tpu.memory_space<vmem>>, vector<1x8x8xf32>
    %119 = vector.shape_cast %118 : vector<1x8x8xf32> to vector<8x8xf32>
    %cst_75 = arith.constant dense<0.000000e+00> : vector<64x8xf32>
    %120 = tpu.matmul %117, %119, %cst_75 {dimension_numbers = #tpu.dot_dimension_numbers<[1], [0], [0], [1], [0, 0, 1, 1], [], []>} : vector<64x8xf32>, vector<8x8xf32>, vector<64x8xf32> -> vector<64x8xf32>
    %121 = arith.addf %115, %120 : vector<64x8xf32>
    %122 = vector.extract_strided_slice %90 {offsets = [1, 2, 0], sizes = [8, 8, 8], strides = [1, 1, 1]} : vector<10x10x8xf32> to vector<8x8x8xf32>
    %123 = vector.shape_cast %122 : vector<8x8x8xf32> to vector<64x8xf32>
    %c5_76 = arith.constant 5 : index
    %c0_77 = arith.constant 0 : index
    %c0_78 = arith.constant 0 : index
    %124 = vector.load %arg8[%c5_76, %c0_77, %c0_78] : memref<9x8x8xf32, #tpu.memory_space<vmem>>, vector<1x8x8xf32>
    %125 = vector.shape_cast %124 : vector<1x8x8xf32> to vector<8x8xf32>
    %cst_79 = arith.constant dense<0.000000e+00> : vector<64x8xf32>
    %126 = tpu.matmul %123, %125, %cst_79 {dimension_numbers = #tpu.dot_dimension_numbers<[1], [0], [0], [1], [0, 0, 1, 1], [], []>} : vector<64x8xf32>, vector<8x8xf32>, vector<64x8xf32> -> vector<64x8xf32>
    %127 = arith.addf %121, %126 : vector<64x8xf32>
    %128 = vector.extract_strided_slice %90 {offsets = [2, 0, 0], sizes = [8, 8, 8], strides = [1, 1, 1]} : vector<10x10x8xf32> to vector<8x8x8xf32>
    %129 = vector.shape_cast %128 : vector<8x8x8xf32> to vector<64x8xf32>
    %c6_80 = arith.constant 6 : index
    %c0_81 = arith.constant 0 : index
    %c0_82 = arith.constant 0 : index
    %130 = vector.load %arg8[%c6_80, %c0_81, %c0_82] : memref<9x8x8xf32, #tpu.memory_space<vmem>>, vector<1x8x8xf32>
    %131 = vector.shape_cast %130 : vector<1x8x8xf32> to vector<8x8xf32>
    %cst_83 = arith.constant dense<0.000000e+00> : vector<64x8xf32>
    %132 = tpu.matmul %129, %131, %cst_83 {dimension_numbers = #tpu.dot_dimension_numbers<[1], [0], [0], [1], [0, 0, 1, 1], [], []>} : vector<64x8xf32>, vector<8x8xf32>, vector<64x8xf32> -> vector<64x8xf32>
    %133 = arith.addf %127, %132 : vector<64x8xf32>
    %134 = vector.extract_strided_slice %90 {offsets = [2, 1, 0], sizes = [8, 8, 8], strides = [1, 1, 1]} : vector<10x10x8xf32> to vector<8x8x8xf32>
    %135 = vector.shape_cast %134 : vector<8x8x8xf32> to vector<64x8xf32>
    %c7_84 = arith.constant 7 : index
    %c0_85 = arith.constant 0 : index
    %c0_86 = arith.constant 0 : index
    %136 = vector.load %arg8[%c7_84, %c0_85, %c0_86] : memref<9x8x8xf32, #tpu.memory_space<vmem>>, vector<1x8x8xf32>
    %137 = vector.shape_cast %136 : vector<1x8x8xf32> to vector<8x8xf32>
    %cst_87 = arith.constant dense<0.000000e+00> : vector<64x8xf32>
    %138 = tpu.matmul %135, %137, %cst_87 {dimension_numbers = #tpu.dot_dimension_numbers<[1], [0], [0], [1], [0, 0, 1, 1], [], []>} : vector<64x8xf32>, vector<8x8xf32>, vector<64x8xf32> -> vector<64x8xf32>
    %139 = arith.addf %133, %138 : vector<64x8xf32>
    %140 = vector.extract_strided_slice %90 {offsets = [2, 2, 0], sizes = [8, 8, 8], strides = [1, 1, 1]} : vector<10x10x8xf32> to vector<8x8x8xf32>
    %141 = vector.shape_cast %140 : vector<8x8x8xf32> to vector<64x8xf32>
    %c8_88 = arith.constant 8 : index
    %c0_89 = arith.constant 0 : index
    %c0_90 = arith.constant 0 : index
    %142 = vector.load %arg8[%c8_88, %c0_89, %c0_90] : memref<9x8x8xf32, #tpu.memory_space<vmem>>, vector<1x8x8xf32>
    %143 = vector.shape_cast %142 : vector<1x8x8xf32> to vector<8x8xf32>
    %cst_91 = arith.constant dense<0.000000e+00> : vector<64x8xf32>
    %144 = tpu.matmul %141, %143, %cst_91 {dimension_numbers = #tpu.dot_dimension_numbers<[1], [0], [0], [1], [0, 0, 1, 1], [], []>} : vector<64x8xf32>, vector<8x8xf32>, vector<64x8xf32> -> vector<64x8xf32>
    %145 = arith.addf %139, %144 : vector<64x8xf32>
    %c0_92 = arith.constant 0 : index
    %c0_93 = arith.constant 0 : index
    %146 = vector.load %arg9[%c0_92, %c0_93] : memref<4x8xf32, #tpu.memory_space<vmem>>, vector<4x8xf32>
    %cst_94 = arith.constant dense<0.000000e+00> : vector<64x8xf32>
    %147 = tpu.matmul %28, %146, %cst_94 {dimension_numbers = #tpu.dot_dimension_numbers<[1], [0], [0], [1], [0, 0, 1, 1], [], []>} : vector<64x4xf32>, vector<4x8xf32>, vector<64x8xf32> -> vector<64x8xf32>
    %148 = arith.addf %145, %147 : vector<64x8xf32>
    %149 = vector.shape_cast %148 : vector<64x8xf32> to vector<1x8x8x8xf32>
    %c0_95 = arith.constant 0 : index
    %c0_96 = arith.constant 0 : index
    %c0_97 = arith.constant 0 : index
    %c0_98 = arith.constant 0 : index
    %150 = vector.load %arg10[%c0_95, %c0_96, %c0_97, %c0_98] : memref<1x8x8x8xf32, #tpu.memory_space<vmem>>, vector<1x8x8x8xf32>
    tpu.vector_store %arg10[%c0_95, %c0_96, %c0_97, %c0_98], %149 {strides = array<i32>} : memref<1x8x8x8xf32, #tpu.memory_space<vmem>>, vector<1x8x8x8xf32>,
    return
  }
  func.func @transform_0(%arg0: i32) -> (i32, i32, i32, i32) {
    %c0_i32 = arith.constant 0 : i32
    %c0_i32_0 = arith.constant 0 : i32
    %c0_i32_1 = arith.constant 0 : i32
    %c0_i32_2 = arith.constant 0 : i32
    return %arg0, %c0_i32, %c0_i32_0, %c0_i32_1 : i32, i32, i32, i32
  }
  func.func @transform_1(%arg0: i32) -> (i32, i32, i32, i32) {
    %c0_i32 = arith.constant 0 : i32
    %c0_i32_0 = arith.constant 0 : i32
    %c0_i32_1 = arith.constant 0 : i32
    %c0_i32_2 = arith.constant 0 : i32
    %c0_i32_3 = arith.constant 0 : i32
    return %c0_i32, %c0_i32_0, %c0_i32_1, %c0_i32_2 : i32, i32, i32, i32
  }
  func.func @transform_2(%arg0: i32) -> (i32, i32) {
    %c0_i32 = arith.constant 0 : i32
    %c0_i32_0 = arith.constant 0 : i32
    %c0_i32_1 = arith.constant 0 : i32
    return %c0_i32, %c0_i32_0 : i32, i32
  }
  func.func @transform_3(%arg0: i32) -> (i32, i32) {
    %c0_i32 = arith.constant 0 : i32
    %c0_i32_0 = arith.constant 0 : i32
    %c0_i32_1 = arith.constant 0 : i32
    return %c0_i32, %c0_i32_0 : i32, i32
  }
  func.func @transform_4(%arg0: i32) -> (i32, i32, i32) {
    %c0_i32 = arith.constant 0 : i32
    %c0_i32_0 = arith.constant 0 : i32
    %c0_i32_1 = arith.constant 0 : i32
    %c0_i32_2 = arith.constant 0 : i32
    return %c0_i32, %c0_i32_0, %c0_i32_1 : i32, i32, i32
  }
  func.func @transform_5(%arg0: i32) -> (i32, i32) {
    %c0_i32 = arith.constant 0 : i32
    %c0_i32_0 = arith.constant 0 : i32
    %c0_i32_1 = arith.constant 0 : i32
    return %c0_i32, %c0_i32_0 : i32, i32
  }
  func.func @transform_6(%arg0: i32) -> (i32, i32) {
    %c0_i32 = arith.constant 0 : i32
    %c0_i32_0 = arith.constant 0 : i32
    %c0_i32_1 = arith.constant 0 : i32
    return %c0_i32, %c0_i32_0 : i32, i32
  }
  func.func @transform_7(%arg0: i32) -> (i32, i32, i32) {
    %c0_i32 = arith.constant 0 : i32
    %c0_i32_0 = arith.constant 0 : i32
    %c0_i32_1 = arith.constant 0 : i32
    %c0_i32_2 = arith.constant 0 : i32
    return %c0_i32, %c0_i32_0, %c0_i32_1 : i32, i32, i32
  }
  func.func @transform_8(%arg0: i32) -> (i32, i32) {
    %c0_i32 = arith.constant 0 : i32
    %c0_i32_0 = arith.constant 0 : i32
    %c0_i32_1 = arith.constant 0 : i32
    return %c0_i32, %c0_i32_0 : i32, i32
  }
  func.func @transform_9(%arg0: i32) -> (i32, i32, i32, i32) {
    %c0_i32 = arith.constant 0 : i32
    %c0_i32_0 = arith.constant 0 : i32
    %c0_i32_1 = arith.constant 0 : i32
    %c0_i32_2 = arith.constant 0 : i32
    return %arg0, %c0_i32, %c0_i32_0, %c0_i32_1 : i32, i32, i32, i32
  }
}

module attributes {stable_mosaic.version = 11 : i64} {
  func.func @kernel(%arg0: i32, %arg1: memref<1x10x10x8xf32, #tpu.memory_space<vmem>>, %arg2: memref<1x10x10x1xf32, #tpu.memory_space<vmem>>, %arg3: memref<1x8xf32, #tpu.memory_space<vmem>>, %arg4: memref<1x8xf32, #tpu.memory_space<vmem>>, %arg5: memref<9x8x8xf32, #tpu.memory_space<vmem>>, %arg6: memref<1x8xf32, #tpu.memory_space<vmem>>, %arg7: memref<1x8xf32, #tpu.memory_space<vmem>>, %arg8: memref<9x8x8xf32, #tpu.memory_space<vmem>>, %arg9: memref<1x8x8x8xf32, #tpu.memory_space<vmem>>, %arg10: memref<10x10x8xf32, #tpu.memory_space<vmem>>) attributes {dimension_semantics = [#tpu.dimension_semantics<parallel>], iteration_bounds = array<i64: 2>, scalar_prefetch = 0 : i64, scratch_operands = 1 : i64, tpu.core_type = #tpu.core_type<tc>, window_params = [{transform_indices = @transform_0, window_bounds = array<i64: 1, 10, 10, 8>}, {pipeline_mode = #tpu.pipeline_mode<synchronous>, transform_indices = @transform_1, window_bounds = array<i64: 1, 10, 10, 1>}, {pipeline_mode = #tpu.pipeline_mode<synchronous>, transform_indices = @transform_2, window_bounds = array<i64: 1, 8>}, {pipeline_mode = #tpu.pipeline_mode<synchronous>, transform_indices = @transform_3, window_bounds = array<i64: 1, 8>}, {pipeline_mode = #tpu.pipeline_mode<synchronous>, transform_indices = @transform_4, window_bounds = array<i64: 9, 8, 8>}, {pipeline_mode = #tpu.pipeline_mode<synchronous>, transform_indices = @transform_5, window_bounds = array<i64: 1, 8>}, {pipeline_mode = #tpu.pipeline_mode<synchronous>, transform_indices = @transform_6, window_bounds = array<i64: 1, 8>}, {pipeline_mode = #tpu.pipeline_mode<synchronous>, transform_indices = @transform_7, window_bounds = array<i64: 9, 8, 8>}, {transform_indices = @transform_8, window_bounds = array<i64: 1, 8, 8, 8>}]} {
    %c0 = arith.constant 0 : index
    %c0_0 = arith.constant 0 : index
    %c0_1 = arith.constant 0 : index
    %c0_2 = arith.constant 0 : index
    %0 = vector.load %arg1[%c0, %c0_0, %c0_1, %c0_2] : memref<1x10x10x8xf32, #tpu.memory_space<vmem>>, vector<1x10x10x8xf32>
    %c0_3 = arith.constant 0 : index
    %c0_4 = arith.constant 0 : index
    %1 = vector.load %arg3[%c0_3, %c0_4] : memref<1x8xf32, #tpu.memory_space<vmem>>, vector<1x8xf32>
    %2 = vector.shape_cast %1 : vector<1x8xf32> to vector<1x1x1x8xf32>
    %3 = vector.broadcast %2 : vector<1x1x1x8xf32> to vector<1x10x10x8xf32>
    %4 = arith.mulf %0, %3 : vector<1x10x10x8xf32>
    %c0_5 = arith.constant 0 : index
    %c0_6 = arith.constant 0 : index
    %5 = vector.load %arg4[%c0_5, %c0_6] : memref<1x8xf32, #tpu.memory_space<vmem>>, vector<1x8xf32>
    %6 = vector.shape_cast %5 : vector<1x8xf32> to vector<1x1x1x8xf32>
    %7 = vector.broadcast %6 : vector<1x1x1x8xf32> to vector<1x10x10x8xf32>
    %8 = arith.addf %4, %7 : vector<1x10x10x8xf32>
    %cst = arith.constant 0.000000e+00 : f32
    %9 = vector.broadcast %cst : f32 to vector<1x10x10x8xf32>
    %10 = arith.maximumf %8, %9 : vector<1x10x10x8xf32>
    %c0_7 = arith.constant 0 : index
    %c0_8 = arith.constant 0 : index
    %c0_9 = arith.constant 0 : index
    %c0_10 = arith.constant 0 : index
    %11 = vector.load %arg2[%c0_7, %c0_8, %c0_9, %c0_10] : memref<1x10x10x1xf32, #tpu.memory_space<vmem>>, vector<1x10x10x1xf32>
    %12 = vector.broadcast %11 : vector<1x10x10x1xf32> to vector<1x10x10x8xf32>
    %13 = arith.mulf %10, %12 : vector<1x10x10x8xf32>
    %14 = vector.extract_strided_slice %13 {offsets = [0, 0, 0, 0], sizes = [1, 8, 8, 8], strides = [1, 1, 1, 1]} : vector<1x10x10x8xf32> to vector<1x8x8x8xf32>
    %15 = vector.shape_cast %14 : vector<1x8x8x8xf32> to vector<8x8x8xf32>
    %16 = vector.shape_cast %15 : vector<8x8x8xf32> to vector<64x8xf32>
    %17 = vector.extract_strided_slice %13 {offsets = [0, 0, 1, 0], sizes = [1, 8, 8, 8], strides = [1, 1, 1, 1]} : vector<1x10x10x8xf32> to vector<1x8x8x8xf32>
    %18 = vector.shape_cast %17 : vector<1x8x8x8xf32> to vector<8x8x8xf32>
    %19 = vector.shape_cast %18 : vector<8x8x8xf32> to vector<64x8xf32>
    %20 = vector.extract_strided_slice %13 {offsets = [0, 0, 2, 0], sizes = [1, 8, 8, 8], strides = [1, 1, 1, 1]} : vector<1x10x10x8xf32> to vector<1x8x8x8xf32>
    %21 = vector.shape_cast %20 : vector<1x8x8x8xf32> to vector<8x8x8xf32>
    %22 = vector.shape_cast %21 : vector<8x8x8xf32> to vector<64x8xf32>
    %23 = vector.extract_strided_slice %13 {offsets = [0, 1, 0, 0], sizes = [1, 8, 8, 8], strides = [1, 1, 1, 1]} : vector<1x10x10x8xf32> to vector<1x8x8x8xf32>
    %24 = vector.shape_cast %23 : vector<1x8x8x8xf32> to vector<8x8x8xf32>
    %25 = vector.shape_cast %24 : vector<8x8x8xf32> to vector<64x8xf32>
    %26 = vector.extract_strided_slice %13 {offsets = [0, 1, 1, 0], sizes = [1, 8, 8, 8], strides = [1, 1, 1, 1]} : vector<1x10x10x8xf32> to vector<1x8x8x8xf32>
    %27 = vector.shape_cast %26 : vector<1x8x8x8xf32> to vector<8x8x8xf32>
    %28 = vector.shape_cast %27 : vector<8x8x8xf32> to vector<64x8xf32>
    %29 = vector.extract_strided_slice %13 {offsets = [0, 1, 2, 0], sizes = [1, 8, 8, 8], strides = [1, 1, 1, 1]} : vector<1x10x10x8xf32> to vector<1x8x8x8xf32>
    %30 = vector.shape_cast %29 : vector<1x8x8x8xf32> to vector<8x8x8xf32>
    %31 = vector.shape_cast %30 : vector<8x8x8xf32> to vector<64x8xf32>
    %32 = vector.extract_strided_slice %13 {offsets = [0, 2, 0, 0], sizes = [1, 8, 8, 8], strides = [1, 1, 1, 1]} : vector<1x10x10x8xf32> to vector<1x8x8x8xf32>
    %33 = vector.shape_cast %32 : vector<1x8x8x8xf32> to vector<8x8x8xf32>
    %34 = vector.shape_cast %33 : vector<8x8x8xf32> to vector<64x8xf32>
    %35 = vector.extract_strided_slice %13 {offsets = [0, 2, 1, 0], sizes = [1, 8, 8, 8], strides = [1, 1, 1, 1]} : vector<1x10x10x8xf32> to vector<1x8x8x8xf32>
    %36 = vector.shape_cast %35 : vector<1x8x8x8xf32> to vector<8x8x8xf32>
    %37 = vector.shape_cast %36 : vector<8x8x8xf32> to vector<64x8xf32>
    %38 = vector.extract_strided_slice %13 {offsets = [0, 2, 2, 0], sizes = [1, 8, 8, 8], strides = [1, 1, 1, 1]} : vector<1x10x10x8xf32> to vector<1x8x8x8xf32>
    %39 = vector.shape_cast %38 : vector<1x8x8x8xf32> to vector<8x8x8xf32>
    %40 = vector.shape_cast %39 : vector<8x8x8xf32> to vector<64x8xf32>
    %cst_11 = arith.constant 0.000000e+00 : f32
    %41 = vector.broadcast %cst_11 : f32 to vector<64x8xf32>
    %c0_12 = arith.constant 0 : index
    %c0_13 = arith.constant 0 : index
    %c0_14 = arith.constant 0 : index
    %42 = vector.load %arg5[%c0_12, %c0_13, %c0_14] : memref<9x8x8xf32, #tpu.memory_space<vmem>>, vector<1x8x8xf32>
    %43 = vector.shape_cast %42 : vector<1x8x8xf32> to vector<8x8xf32>
    %cst_15 = arith.constant dense<0.000000e+00> : vector<64x8xf32>
    %44 = tpu.matmul %16, %43, %cst_15 {dimension_numbers = #tpu.dot_dimension_numbers<[1], [0], [0], [1], [0, 0, 1, 1], [], []>} : vector<64x8xf32>, vector<8x8xf32>, vector<64x8xf32> -> vector<64x8xf32>
    %45 = arith.addf %41, %44 : vector<64x8xf32>
    %c1 = arith.constant 1 : index
    %c0_16 = arith.constant 0 : index
    %c0_17 = arith.constant 0 : index
    %46 = vector.load %arg5[%c1, %c0_16, %c0_17] : memref<9x8x8xf32, #tpu.memory_space<vmem>>, vector<1x8x8xf32>
    %47 = vector.shape_cast %46 : vector<1x8x8xf32> to vector<8x8xf32>
    %cst_18 = arith.constant dense<0.000000e+00> : vector<64x8xf32>
    %48 = tpu.matmul %19, %47, %cst_18 {dimension_numbers = #tpu.dot_dimension_numbers<[1], [0], [0], [1], [0, 0, 1, 1], [], []>} : vector<64x8xf32>, vector<8x8xf32>, vector<64x8xf32> -> vector<64x8xf32>
    %49 = arith.addf %45, %48 : vector<64x8xf32>
    %c2 = arith.constant 2 : index
    %c0_19 = arith.constant 0 : index
    %c0_20 = arith.constant 0 : index
    %50 = vector.load %arg5[%c2, %c0_19, %c0_20] : memref<9x8x8xf32, #tpu.memory_space<vmem>>, vector<1x8x8xf32>
    %51 = vector.shape_cast %50 : vector<1x8x8xf32> to vector<8x8xf32>
    %cst_21 = arith.constant dense<0.000000e+00> : vector<64x8xf32>
    %52 = tpu.matmul %22, %51, %cst_21 {dimension_numbers = #tpu.dot_dimension_numbers<[1], [0], [0], [1], [0, 0, 1, 1], [], []>} : vector<64x8xf32>, vector<8x8xf32>, vector<64x8xf32> -> vector<64x8xf32>
    %53 = arith.addf %49, %52 : vector<64x8xf32>
    %c3 = arith.constant 3 : index
    %c0_22 = arith.constant 0 : index
    %c0_23 = arith.constant 0 : index
    %54 = vector.load %arg5[%c3, %c0_22, %c0_23] : memref<9x8x8xf32, #tpu.memory_space<vmem>>, vector<1x8x8xf32>
    %55 = vector.shape_cast %54 : vector<1x8x8xf32> to vector<8x8xf32>
    %cst_24 = arith.constant dense<0.000000e+00> : vector<64x8xf32>
    %56 = tpu.matmul %25, %55, %cst_24 {dimension_numbers = #tpu.dot_dimension_numbers<[1], [0], [0], [1], [0, 0, 1, 1], [], []>} : vector<64x8xf32>, vector<8x8xf32>, vector<64x8xf32> -> vector<64x8xf32>
    %57 = arith.addf %53, %56 : vector<64x8xf32>
    %c4 = arith.constant 4 : index
    %c0_25 = arith.constant 0 : index
    %c0_26 = arith.constant 0 : index
    %58 = vector.load %arg5[%c4, %c0_25, %c0_26] : memref<9x8x8xf32, #tpu.memory_space<vmem>>, vector<1x8x8xf32>
    %59 = vector.shape_cast %58 : vector<1x8x8xf32> to vector<8x8xf32>
    %cst_27 = arith.constant dense<0.000000e+00> : vector<64x8xf32>
    %60 = tpu.matmul %28, %59, %cst_27 {dimension_numbers = #tpu.dot_dimension_numbers<[1], [0], [0], [1], [0, 0, 1, 1], [], []>} : vector<64x8xf32>, vector<8x8xf32>, vector<64x8xf32> -> vector<64x8xf32>
    %61 = arith.addf %57, %60 : vector<64x8xf32>
    %c5 = arith.constant 5 : index
    %c0_28 = arith.constant 0 : index
    %c0_29 = arith.constant 0 : index
    %62 = vector.load %arg5[%c5, %c0_28, %c0_29] : memref<9x8x8xf32, #tpu.memory_space<vmem>>, vector<1x8x8xf32>
    %63 = vector.shape_cast %62 : vector<1x8x8xf32> to vector<8x8xf32>
    %cst_30 = arith.constant dense<0.000000e+00> : vector<64x8xf32>
    %64 = tpu.matmul %31, %63, %cst_30 {dimension_numbers = #tpu.dot_dimension_numbers<[1], [0], [0], [1], [0, 0, 1, 1], [], []>} : vector<64x8xf32>, vector<8x8xf32>, vector<64x8xf32> -> vector<64x8xf32>
    %65 = arith.addf %61, %64 : vector<64x8xf32>
    %c6 = arith.constant 6 : index
    %c0_31 = arith.constant 0 : index
    %c0_32 = arith.constant 0 : index
    %66 = vector.load %arg5[%c6, %c0_31, %c0_32] : memref<9x8x8xf32, #tpu.memory_space<vmem>>, vector<1x8x8xf32>
    %67 = vector.shape_cast %66 : vector<1x8x8xf32> to vector<8x8xf32>
    %cst_33 = arith.constant dense<0.000000e+00> : vector<64x8xf32>
    %68 = tpu.matmul %34, %67, %cst_33 {dimension_numbers = #tpu.dot_dimension_numbers<[1], [0], [0], [1], [0, 0, 1, 1], [], []>} : vector<64x8xf32>, vector<8x8xf32>, vector<64x8xf32> -> vector<64x8xf32>
    %69 = arith.addf %65, %68 : vector<64x8xf32>
    %c7 = arith.constant 7 : index
    %c0_34 = arith.constant 0 : index
    %c0_35 = arith.constant 0 : index
    %70 = vector.load %arg5[%c7, %c0_34, %c0_35] : memref<9x8x8xf32, #tpu.memory_space<vmem>>, vector<1x8x8xf32>
    %71 = vector.shape_cast %70 : vector<1x8x8xf32> to vector<8x8xf32>
    %cst_36 = arith.constant dense<0.000000e+00> : vector<64x8xf32>
    %72 = tpu.matmul %37, %71, %cst_36 {dimension_numbers = #tpu.dot_dimension_numbers<[1], [0], [0], [1], [0, 0, 1, 1], [], []>} : vector<64x8xf32>, vector<8x8xf32>, vector<64x8xf32> -> vector<64x8xf32>
    %73 = arith.addf %69, %72 : vector<64x8xf32>
    %c8 = arith.constant 8 : index
    %c0_37 = arith.constant 0 : index
    %c0_38 = arith.constant 0 : index
    %74 = vector.load %arg5[%c8, %c0_37, %c0_38] : memref<9x8x8xf32, #tpu.memory_space<vmem>>, vector<1x8x8xf32>
    %75 = vector.shape_cast %74 : vector<1x8x8xf32> to vector<8x8xf32>
    %cst_39 = arith.constant dense<0.000000e+00> : vector<64x8xf32>
    %76 = tpu.matmul %40, %75, %cst_39 {dimension_numbers = #tpu.dot_dimension_numbers<[1], [0], [0], [1], [0, 0, 1, 1], [], []>} : vector<64x8xf32>, vector<8x8xf32>, vector<64x8xf32> -> vector<64x8xf32>
    %77 = arith.addf %73, %76 : vector<64x8xf32>
    %c0_40 = arith.constant 0 : index
    %c0_41 = arith.constant 0 : index
    %78 = vector.load %arg6[%c0_40, %c0_41] : memref<1x8xf32, #tpu.memory_space<vmem>>, vector<1x8xf32>
    %79 = vector.broadcast %78 : vector<1x8xf32> to vector<64x8xf32>
    %80 = arith.mulf %77, %79 : vector<64x8xf32>
    %c0_42 = arith.constant 0 : index
    %c0_43 = arith.constant 0 : index
    %81 = vector.load %arg7[%c0_42, %c0_43] : memref<1x8xf32, #tpu.memory_space<vmem>>, vector<1x8xf32>
    %82 = vector.broadcast %81 : vector<1x8xf32> to vector<64x8xf32>
    %83 = arith.addf %80, %82 : vector<64x8xf32>
    %cst_44 = arith.constant 0.000000e+00 : f32
    %84 = vector.broadcast %cst_44 : f32 to vector<64x8xf32>
    %85 = arith.maximumf %83, %84 : vector<64x8xf32>
    %cst_45 = arith.constant 0.000000e+00 : f32
    %86 = vector.broadcast %cst_45 : f32 to vector<10x10x8xf32>
    %c0_46 = arith.constant 0 : index
    %c0_47 = arith.constant 0 : index
    %c0_48 = arith.constant 0 : index
    %87 = vector.load %arg10[%c0_46, %c0_47, %c0_48] : memref<10x10x8xf32, #tpu.memory_space<vmem>>, vector<10x10x8xf32>
    tpu.vector_store %arg10[%c0_46, %c0_47, %c0_48], %86 {strides = array<i32>} : memref<10x10x8xf32, #tpu.memory_space<vmem>>, vector<10x10x8xf32>,
    %88 = vector.shape_cast %85 : vector<64x8xf32> to vector<8x8x8xf32>
    %c1_49 = arith.constant 1 : index
    %c1_50 = arith.constant 1 : index
    %c0_51 = arith.constant 0 : index
    %89 = vector.load %arg10[%c1_49, %c1_50, %c0_51] : memref<10x10x8xf32, #tpu.memory_space<vmem>>, vector<8x8x8xf32>
    tpu.vector_store %arg10[%c1_49, %c1_50, %c0_51], %88 {strides = array<i32>} : memref<10x10x8xf32, #tpu.memory_space<vmem>>, vector<8x8x8xf32>,
    %c0_52 = arith.constant 0 : index
    %c0_53 = arith.constant 0 : index
    %c0_54 = arith.constant 0 : index
    %90 = vector.load %arg10[%c0_52, %c0_53, %c0_54] : memref<10x10x8xf32, #tpu.memory_space<vmem>>, vector<10x10x8xf32>
    %cst_55 = arith.constant 0.000000e+00 : f32
    %91 = vector.broadcast %cst_55 : f32 to vector<64x8xf32>
    %92 = vector.extract_strided_slice %90 {offsets = [0, 0, 0], sizes = [8, 8, 8], strides = [1, 1, 1]} : vector<10x10x8xf32> to vector<8x8x8xf32>
    %93 = vector.shape_cast %92 : vector<8x8x8xf32> to vector<64x8xf32>
    %c0_56 = arith.constant 0 : index
    %c0_57 = arith.constant 0 : index
    %c0_58 = arith.constant 0 : index
    %94 = vector.load %arg8[%c0_56, %c0_57, %c0_58] : memref<9x8x8xf32, #tpu.memory_space<vmem>>, vector<1x8x8xf32>
    %95 = vector.shape_cast %94 : vector<1x8x8xf32> to vector<8x8xf32>
    %cst_59 = arith.constant dense<0.000000e+00> : vector<64x8xf32>
    %96 = tpu.matmul %93, %95, %cst_59 {dimension_numbers = #tpu.dot_dimension_numbers<[1], [0], [0], [1], [0, 0, 1, 1], [], []>} : vector<64x8xf32>, vector<8x8xf32>, vector<64x8xf32> -> vector<64x8xf32>
    %97 = arith.addf %91, %96 : vector<64x8xf32>
    %98 = vector.extract_strided_slice %90 {offsets = [0, 1, 0], sizes = [8, 8, 8], strides = [1, 1, 1]} : vector<10x10x8xf32> to vector<8x8x8xf32>
    %99 = vector.shape_cast %98 : vector<8x8x8xf32> to vector<64x8xf32>
    %c1_60 = arith.constant 1 : index
    %c0_61 = arith.constant 0 : index
    %c0_62 = arith.constant 0 : index
    %100 = vector.load %arg8[%c1_60, %c0_61, %c0_62] : memref<9x8x8xf32, #tpu.memory_space<vmem>>, vector<1x8x8xf32>
    %101 = vector.shape_cast %100 : vector<1x8x8xf32> to vector<8x8xf32>
    %cst_63 = arith.constant dense<0.000000e+00> : vector<64x8xf32>
    %102 = tpu.matmul %99, %101, %cst_63 {dimension_numbers = #tpu.dot_dimension_numbers<[1], [0], [0], [1], [0, 0, 1, 1], [], []>} : vector<64x8xf32>, vector<8x8xf32>, vector<64x8xf32> -> vector<64x8xf32>
    %103 = arith.addf %97, %102 : vector<64x8xf32>
    %104 = vector.extract_strided_slice %90 {offsets = [0, 2, 0], sizes = [8, 8, 8], strides = [1, 1, 1]} : vector<10x10x8xf32> to vector<8x8x8xf32>
    %105 = vector.shape_cast %104 : vector<8x8x8xf32> to vector<64x8xf32>
    %c2_64 = arith.constant 2 : index
    %c0_65 = arith.constant 0 : index
    %c0_66 = arith.constant 0 : index
    %106 = vector.load %arg8[%c2_64, %c0_65, %c0_66] : memref<9x8x8xf32, #tpu.memory_space<vmem>>, vector<1x8x8xf32>
    %107 = vector.shape_cast %106 : vector<1x8x8xf32> to vector<8x8xf32>
    %cst_67 = arith.constant dense<0.000000e+00> : vector<64x8xf32>
    %108 = tpu.matmul %105, %107, %cst_67 {dimension_numbers = #tpu.dot_dimension_numbers<[1], [0], [0], [1], [0, 0, 1, 1], [], []>} : vector<64x8xf32>, vector<8x8xf32>, vector<64x8xf32> -> vector<64x8xf32>
    %109 = arith.addf %103, %108 : vector<64x8xf32>
    %110 = vector.extract_strided_slice %90 {offsets = [1, 0, 0], sizes = [8, 8, 8], strides = [1, 1, 1]} : vector<10x10x8xf32> to vector<8x8x8xf32>
    %111 = vector.shape_cast %110 : vector<8x8x8xf32> to vector<64x8xf32>
    %c3_68 = arith.constant 3 : index
    %c0_69 = arith.constant 0 : index
    %c0_70 = arith.constant 0 : index
    %112 = vector.load %arg8[%c3_68, %c0_69, %c0_70] : memref<9x8x8xf32, #tpu.memory_space<vmem>>, vector<1x8x8xf32>
    %113 = vector.shape_cast %112 : vector<1x8x8xf32> to vector<8x8xf32>
    %cst_71 = arith.constant dense<0.000000e+00> : vector<64x8xf32>
    %114 = tpu.matmul %111, %113, %cst_71 {dimension_numbers = #tpu.dot_dimension_numbers<[1], [0], [0], [1], [0, 0, 1, 1], [], []>} : vector<64x8xf32>, vector<8x8xf32>, vector<64x8xf32> -> vector<64x8xf32>
    %115 = arith.addf %109, %114 : vector<64x8xf32>
    %116 = vector.extract_strided_slice %90 {offsets = [1, 1, 0], sizes = [8, 8, 8], strides = [1, 1, 1]} : vector<10x10x8xf32> to vector<8x8x8xf32>
    %117 = vector.shape_cast %116 : vector<8x8x8xf32> to vector<64x8xf32>
    %c4_72 = arith.constant 4 : index
    %c0_73 = arith.constant 0 : index
    %c0_74 = arith.constant 0 : index
    %118 = vector.load %arg8[%c4_72, %c0_73, %c0_74] : memref<9x8x8xf32, #tpu.memory_space<vmem>>, vector<1x8x8xf32>
    %119 = vector.shape_cast %118 : vector<1x8x8xf32> to vector<8x8xf32>
    %cst_75 = arith.constant dense<0.000000e+00> : vector<64x8xf32>
    %120 = tpu.matmul %117, %119, %cst_75 {dimension_numbers = #tpu.dot_dimension_numbers<[1], [0], [0], [1], [0, 0, 1, 1], [], []>} : vector<64x8xf32>, vector<8x8xf32>, vector<64x8xf32> -> vector<64x8xf32>
    %121 = arith.addf %115, %120 : vector<64x8xf32>
    %122 = vector.extract_strided_slice %90 {offsets = [1, 2, 0], sizes = [8, 8, 8], strides = [1, 1, 1]} : vector<10x10x8xf32> to vector<8x8x8xf32>
    %123 = vector.shape_cast %122 : vector<8x8x8xf32> to vector<64x8xf32>
    %c5_76 = arith.constant 5 : index
    %c0_77 = arith.constant 0 : index
    %c0_78 = arith.constant 0 : index
    %124 = vector.load %arg8[%c5_76, %c0_77, %c0_78] : memref<9x8x8xf32, #tpu.memory_space<vmem>>, vector<1x8x8xf32>
    %125 = vector.shape_cast %124 : vector<1x8x8xf32> to vector<8x8xf32>
    %cst_79 = arith.constant dense<0.000000e+00> : vector<64x8xf32>
    %126 = tpu.matmul %123, %125, %cst_79 {dimension_numbers = #tpu.dot_dimension_numbers<[1], [0], [0], [1], [0, 0, 1, 1], [], []>} : vector<64x8xf32>, vector<8x8xf32>, vector<64x8xf32> -> vector<64x8xf32>
    %127 = arith.addf %121, %126 : vector<64x8xf32>
    %128 = vector.extract_strided_slice %90 {offsets = [2, 0, 0], sizes = [8, 8, 8], strides = [1, 1, 1]} : vector<10x10x8xf32> to vector<8x8x8xf32>
    %129 = vector.shape_cast %128 : vector<8x8x8xf32> to vector<64x8xf32>
    %c6_80 = arith.constant 6 : index
    %c0_81 = arith.constant 0 : index
    %c0_82 = arith.constant 0 : index
    %130 = vector.load %arg8[%c6_80, %c0_81, %c0_82] : memref<9x8x8xf32, #tpu.memory_space<vmem>>, vector<1x8x8xf32>
    %131 = vector.shape_cast %130 : vector<1x8x8xf32> to vector<8x8xf32>
    %cst_83 = arith.constant dense<0.000000e+00> : vector<64x8xf32>
    %132 = tpu.matmul %129, %131, %cst_83 {dimension_numbers = #tpu.dot_dimension_numbers<[1], [0], [0], [1], [0, 0, 1, 1], [], []>} : vector<64x8xf32>, vector<8x8xf32>, vector<64x8xf32> -> vector<64x8xf32>
    %133 = arith.addf %127, %132 : vector<64x8xf32>
    %134 = vector.extract_strided_slice %90 {offsets = [2, 1, 0], sizes = [8, 8, 8], strides = [1, 1, 1]} : vector<10x10x8xf32> to vector<8x8x8xf32>
    %135 = vector.shape_cast %134 : vector<8x8x8xf32> to vector<64x8xf32>
    %c7_84 = arith.constant 7 : index
    %c0_85 = arith.constant 0 : index
    %c0_86 = arith.constant 0 : index
    %136 = vector.load %arg8[%c7_84, %c0_85, %c0_86] : memref<9x8x8xf32, #tpu.memory_space<vmem>>, vector<1x8x8xf32>
    %137 = vector.shape_cast %136 : vector<1x8x8xf32> to vector<8x8xf32>
    %cst_87 = arith.constant dense<0.000000e+00> : vector<64x8xf32>
    %138 = tpu.matmul %135, %137, %cst_87 {dimension_numbers = #tpu.dot_dimension_numbers<[1], [0], [0], [1], [0, 0, 1, 1], [], []>} : vector<64x8xf32>, vector<8x8xf32>, vector<64x8xf32> -> vector<64x8xf32>
    %139 = arith.addf %133, %138 : vector<64x8xf32>
    %140 = vector.extract_strided_slice %90 {offsets = [2, 2, 0], sizes = [8, 8, 8], strides = [1, 1, 1]} : vector<10x10x8xf32> to vector<8x8x8xf32>
    %141 = vector.shape_cast %140 : vector<8x8x8xf32> to vector<64x8xf32>
    %c8_88 = arith.constant 8 : index
    %c0_89 = arith.constant 0 : index
    %c0_90 = arith.constant 0 : index
    %142 = vector.load %arg8[%c8_88, %c0_89, %c0_90] : memref<9x8x8xf32, #tpu.memory_space<vmem>>, vector<1x8x8xf32>
    %143 = vector.shape_cast %142 : vector<1x8x8xf32> to vector<8x8xf32>
    %cst_91 = arith.constant dense<0.000000e+00> : vector<64x8xf32>
    %144 = tpu.matmul %141, %143, %cst_91 {dimension_numbers = #tpu.dot_dimension_numbers<[1], [0], [0], [1], [0, 0, 1, 1], [], []>} : vector<64x8xf32>, vector<8x8xf32>, vector<64x8xf32> -> vector<64x8xf32>
    %145 = arith.addf %139, %144 : vector<64x8xf32>
    %146 = vector.extract_strided_slice %0 {offsets = [0, 1, 1, 0], sizes = [1, 8, 8, 8], strides = [1, 1, 1, 1]} : vector<1x10x10x8xf32> to vector<1x8x8x8xf32>
    %147 = vector.shape_cast %146 : vector<1x8x8x8xf32> to vector<8x8x8xf32>
    %148 = vector.shape_cast %147 : vector<8x8x8xf32> to vector<64x8xf32>
    %149 = arith.addf %145, %148 : vector<64x8xf32>
    %150 = vector.shape_cast %149 : vector<64x8xf32> to vector<1x8x8x8xf32>
    %c0_92 = arith.constant 0 : index
    %c0_93 = arith.constant 0 : index
    %c0_94 = arith.constant 0 : index
    %c0_95 = arith.constant 0 : index
    %151 = vector.load %arg9[%c0_92, %c0_93, %c0_94, %c0_95] : memref<1x8x8x8xf32, #tpu.memory_space<vmem>>, vector<1x8x8x8xf32>
    tpu.vector_store %arg9[%c0_92, %c0_93, %c0_94, %c0_95], %150 {strides = array<i32>} : memref<1x8x8x8xf32, #tpu.memory_space<vmem>>, vector<1x8x8x8xf32>,
    return
  }
  func.func @transform_0(%arg0: i32) -> (i32, i32, i32, i32) {
    %c0_i32 = arith.constant 0 : i32
    %c0_i32_0 = arith.constant 0 : i32
    %c0_i32_1 = arith.constant 0 : i32
    %c0_i32_2 = arith.constant 0 : i32
    return %arg0, %c0_i32, %c0_i32_0, %c0_i32_1 : i32, i32, i32, i32
  }
  func.func @transform_1(%arg0: i32) -> (i32, i32, i32, i32) {
    %c0_i32 = arith.constant 0 : i32
    %c0_i32_0 = arith.constant 0 : i32
    %c0_i32_1 = arith.constant 0 : i32
    %c0_i32_2 = arith.constant 0 : i32
    %c0_i32_3 = arith.constant 0 : i32
    return %c0_i32, %c0_i32_0, %c0_i32_1, %c0_i32_2 : i32, i32, i32, i32
  }
  func.func @transform_2(%arg0: i32) -> (i32, i32) {
    %c0_i32 = arith.constant 0 : i32
    %c0_i32_0 = arith.constant 0 : i32
    %c0_i32_1 = arith.constant 0 : i32
    return %c0_i32, %c0_i32_0 : i32, i32
  }
  func.func @transform_3(%arg0: i32) -> (i32, i32) {
    %c0_i32 = arith.constant 0 : i32
    %c0_i32_0 = arith.constant 0 : i32
    %c0_i32_1 = arith.constant 0 : i32
    return %c0_i32, %c0_i32_0 : i32, i32
  }
  func.func @transform_4(%arg0: i32) -> (i32, i32, i32) {
    %c0_i32 = arith.constant 0 : i32
    %c0_i32_0 = arith.constant 0 : i32
    %c0_i32_1 = arith.constant 0 : i32
    %c0_i32_2 = arith.constant 0 : i32
    return %c0_i32, %c0_i32_0, %c0_i32_1 : i32, i32, i32
  }
  func.func @transform_5(%arg0: i32) -> (i32, i32) {
    %c0_i32 = arith.constant 0 : i32
    %c0_i32_0 = arith.constant 0 : i32
    %c0_i32_1 = arith.constant 0 : i32
    return %c0_i32, %c0_i32_0 : i32, i32
  }
  func.func @transform_6(%arg0: i32) -> (i32, i32) {
    %c0_i32 = arith.constant 0 : i32
    %c0_i32_0 = arith.constant 0 : i32
    %c0_i32_1 = arith.constant 0 : i32
    return %c0_i32, %c0_i32_0 : i32, i32
  }
  func.func @transform_7(%arg0: i32) -> (i32, i32, i32) {
    %c0_i32 = arith.constant 0 : i32
    %c0_i32_0 = arith.constant 0 : i32
    %c0_i32_1 = arith.constant 0 : i32
    %c0_i32_2 = arith.constant 0 : i32
    return %c0_i32, %c0_i32_0, %c0_i32_1 : i32, i32, i32
  }
  func.func @transform_8(%arg0: i32) -> (i32, i32, i32, i32) {
    %c0_i32 = arith.constant 0 : i32
    %c0_i32_0 = arith.constant 0 : i32
    %c0_i32_1 = arith.constant 0 : i32
    %c0_i32_2 = arith.constant 0 : i32
    return %arg0, %c0_i32, %c0_i32_0, %c0_i32_1 : i32, i32, i32, i32
  }
}

</mosaic_0001>

<llo_original>
// kernel: residual_block_forward.3
$region0: #{residual_block_forward.3}
  #allocation0 [shape = 'u32[]', space=smem, size = 0x4, offset = 0x4, fixed_abs, tag = 'smem constant byte address 0x4 - core index']
  #allocation1 [shape = 'u32[144,128]{1,0:T(1,128)}', space=vmem, size = 0x12000, scoped, tag = 'internal scratch']
  #allocation2 [shape = 'f32[10,10,8]{2,1,0:T(8,128)}', space=vmem, size = 0x14000, scoped, tag = 'scratch operand']
  %s0 = inlined_call_operand.vmem [shape: f32[2,10,10,8], index: 0, kind: input, shape index: {}]
  %s1 = inlined_call_operand.vmem [shape: f32[1,10,10,1], index: 1, kind: input, shape index: {}]
  %s2 = inlined_call_operand.vmem [shape: f32[1,8], index: 2, kind: input, shape index: {}]
  %s3 = inlined_call_operand.vmem [shape: f32[1,8], index: 3, kind: input, shape index: {}]
  %s4 = inlined_call_operand.vmem [shape: f32[9,8,8], index: 4, kind: input, shape index: {}]
  %s5 = inlined_call_operand.vmem [shape: f32[1,8], index: 5, kind: input, shape index: {}]
  %s6 = inlined_call_operand.vmem [shape: f32[1,8], index: 6, kind: input, shape index: {}]
  %s7 = inlined_call_operand.vmem [shape: f32[9,8,8], index: 7, kind: input, shape index: {}]
  %s8 = inlined_call_operand.hbm [shape: f32[2,8,8,8], index: 8, kind: output, shape index: {}]
  %s9 = sld [smem:[#allocation0]]
  $region65: #{residual_block_forward.3} parent=0
    _
  %s11 = ssub.s32 1, %s9
  %s12 = scalar_select 0, %s11, %s9
  $region1: #{residual_block_forward.3} parent=0
    #allocation3 [shape = 'u8[65536]{0}', space=vmem, size = 0x10000, scoped, tag = 'output window, operand 0']
    #allocation4 [shape = 's32[2]{0}', space=sflag, size = 0x8, scoped, tag = 'scoped memory for residual_block_forward.3']
    %13 = vsyncpa [#allocation4], 0
    %s14 = scalar_lea.sflag [#allocation4], 1
    %15 = vsyncpa %s14, 0
    loop: start=0, step=1, limit=4
    $region2: #{residual_block_forward.3} parent=1 // loop_pre_header
      _
    $region3: #{residual_block_forward.3} parent=1 // loop_header
      %s17 = sphi 0, %s21
      %p18 = scmp.ge.s32.totalorder %s17, 4
      %s27 = sphi 0, %s29
      %s30 = sphi 0, %s27
      %s31 = sphi 0, %s30
      %s47 = sphi 0, %s31
      %s51 = sphi 0, %s51
      %s53 = sphi 0, %s51
      %s54 = sphi 0, %s53
      %s68 = sphi 0, %s54
      %s72 = sphi 0, %s72
      %s74 = sphi 0, %s72
      %s75 = sphi 0, %s74
      %s89 = sphi 0, %s75
      %s93 = sphi 0, %s93
      %s95 = sphi 0, %s93
      %s96 = sphi 0, %s95
      %s110 = sphi 0, %s96
      %s114 = sphi 0, %s114
      %s116 = sphi 0, %s114
      %s117 = sphi 0, %s116
      %s131 = sphi 0, %s117
      %s135 = sphi 0, %s135
      %s137 = sphi 0, %s135
      %s138 = sphi 0, %s137
      %s152 = sphi 0, %s138
      %s156 = sphi 0, %s156
      %s158 = sphi 0, %s156
      %s159 = sphi 0, %s158
      %s173 = sphi 0, %s159
      %s177 = sphi 0, %s177
      %s179 = sphi 0, %s177
      %s180 = sphi 0, %s179
      %s194 = sphi 0, %s180
      %s200 = sphi 0, %s202
      %s203 = sphi 0, %s200
      %s204 = sphi 0, %s203
      %s220 = sphi 0, %s204
    $region4: #{residual_block_forward.3} parent=1 // loop_header_branch
      %20 = sbr.rel (%p18) target = $region8
    $region5: #{residual_block_forward.3} parent=1 // loop_body
      %s22 = ssub.s32 %s17, 1
      %s23 = ssub.s32 %s17, 2
      %s24 = sadd.s32 %s17, 1
      %s25 = ssub.s32 %s17, %s24
      %p26 = scmp.eq.s32.totalorder %s25, 0
      %s28 = sadd.s32 %s27, 1
      %s29 = scalar_select %p26, %s27, %s28
      %p32 = pneg %p26
      %p33 = scmp.eq.s32.totalorder %s17, 1
      %p34 = por %p32, %p33
      %p35 = scmp.ne.s32.totalorder %s27, %s30
      %p36 = scmp.eq.s32.totalorder %s17, 0
      %p37 = por %p35, %p36
      %p38 = scmp.ne.s32.totalorder %s27, %s30
      %p39 = scmp.eq.s32.totalorder %s22, 1
      %p40 = por %p38, %p39
      %p41 = scmp.ne.s32.totalorder %s30, %s31
      %p42 = scmp.eq.s32.totalorder %s22, 0
      %p43 = por %p41, %p42
      %p44 = scmp.ne.s32.totalorder %s30, %s31
      %p45 = scmp.eq.s32.totalorder %s23, 1
      %p46 = por %p44, %p45
      %p48 = scmp.ne.s32.totalorder %s31, %s47
      %p49 = scmp.eq.s32.totalorder %s23, 0
      %p50 = por %p48, %p49
      %s52 = sadd.s32 %s51, 1
      %p55 = scmp.eq.s32.totalorder %s17, 1
      %p56 = scmp.ne.s32.totalorder %s51, %s53
      %p57 = scmp.eq.s32.totalorder %s17, 0
      %p58 = por %p56, %p57
      %p59 = scmp.ne.s32.totalorder %s51, %s53
      %p60 = scmp.eq.s32.totalorder %s22, 1
      %p61 = por %p59, %p60
      %p62 = scmp.ne.s32.totalorder %s53, %s54
      %p63 = scmp.eq.s32.totalorder %s22, 0
      %p64 = por %p62, %p63
      %p65 = scmp.ne.s32.totalorder %s53, %s54
      %p66 = scmp.eq.s32.totalorder %s23, 1
      %p67 = por %p65, %p66
      %p69 = scmp.ne.s32.totalorder %s54, %s68
      %p70 = scmp.eq.s32.totalorder %s23, 0
      %p71 = por %p69, %p70
      %s73 = sadd.s32 %s72, 1
      %p76 = scmp.eq.s32.totalorder %s17, 1
      %p77 = scmp.ne.s32.totalorder %s72, %s74
      %p78 = scmp.eq.s32.totalorder %s17, 0
      %p79 = por %p77, %p78
      %p80 = scmp.ne.s32.totalorder %s72, %s74
      %p81 = scmp.eq.s32.totalorder %s22, 1
      %p82 = por %p80, %p81
      %p83 = scmp.ne.s32.totalorder %s74, %s75
      %p84 = scmp.eq.s32.totalorder %s22, 0
      %p85 = por %p83, %p84
      %p86 = scmp.ne.s32.totalorder %s74, %s75
      %p87 = scmp.eq.s32.totalorder %s23, 1
      %p88 = por %p86, %p87
      %p90 = scmp.ne.s32.totalorder %s75, %s89
      %p91 = scmp.eq.s32.totalorder %s23, 0
      %p92 = por %p90, %p91
      %s94 = sadd.s32 %s93, 1
      %p97 = scmp.eq.s32.totalorder %s17, 1
      %p98 = scmp.ne.s32.totalorder %s93, %s95
      %p99 = scmp.eq.s32.totalorder %s17, 0
      %p100 = por %p98, %p99
      %p101 = scmp.ne.s32.totalorder %s93, %s95
      %p102 = scmp.eq.s32.totalorder %s22, 1
      %p103 = por %p101, %p102
      %p104 = scmp.ne.s32.totalorder %s95, %s96
      %p105 = scmp.eq.s32.totalorder %s22, 0
      %p106 = por %p104, %p105
      %p107 = scmp.ne.s32.totalorder %s95, %s96
      %p108 = scmp.eq.s32.totalorder %s23, 1
      %p109 = por %p107, %p108
      %p111 = scmp.ne.s32.totalorder %s96, %s110
      %p112 = scmp.eq.s32.totalorder %s23, 0
      %p113 = por %p111, %p112
      %s115 = sadd.s32 %s114, 1
      %p118 = scmp.eq.s32.totalorder %s17, 1
      %p119 = scmp.ne.s32.totalorder %s114, %s116
      %p120 = scmp.eq.s32.totalorder %s17, 0
      %p121 = por %p119, %p120
      %p122 = scmp.ne.s32.totalorder %s114, %s116
      %p123 = scmp.eq.s32.totalorder %s22, 1
      %p124 = por %p122, %p123
      %p125 = scmp.ne.s32.totalorder %s116, %s117
      %p126 = scmp.eq.s32.totalorder %s22, 0
      %p127 = por %p125, %p126
      %p128 = scmp.ne.s32.totalorder %s116, %s117
      %p129 = scmp.eq.s32.totalorder %s23, 1
      %p130 = por %p128, %p129
      %p132 = scmp.ne.s32.totalorder %s117, %s131
      %p133 = scmp.eq.s32.totalorder %s23, 0
      %p134 = por %p132, %p133
      %s136 = sadd.s32 %s135, 1
      %p139 = scmp.eq.s32.totalorder %s17, 1
      %p140 = scmp.ne.s32.totalorder %s135, %s137
      %p141 = scmp.eq.s32.totalorder %s17, 0
      %p142 = por %p140, %p141
      %p143 = scmp.ne.s32.totalorder %s135, %s137
      %p144 = scmp.eq.s32.totalorder %s22, 1
      %p145 = por %p143, %p144
      %p146 = scmp.ne.s32.totalorder %s137, %s138
      %p147 = scmp.eq.s32.totalorder %s22, 0
      %p148 = por %p146, %p147
      %p149 = scmp.ne.s32.totalorder %s137, %s138
      %p150 = scmp.eq.s32.totalorder %s23, 1
      %p151 = por %p149, %p150
      %p153 = scmp.ne.s32.totalorder %s138, %s152
      %p154 = scmp.eq.s32.totalorder %s23, 0
      %p155 = por %p153, %p154
      %s157 = sadd.s32 %s156, 1
      %p160 = scmp.eq.s32.totalorder %s17, 1
      %p161 = scmp.ne.s32.totalorder %s156, %s158
      %p162 = scmp.eq.s32.totalorder %s17, 0
      %p163 = por %p161, %p162
      %p164 = scmp.ne.s32.totalorder %s156, %s158
      %p165 = scmp.eq.s32.totalorder %s22, 1
      %p166 = por %p164, %p165
      %p167 = scmp.ne.s32.totalorder %s158, %s159
      %p168 = scmp.eq.s32.totalorder %s22, 0
      %p169 = por %p167, %p168
      %p170 = scmp.ne.s32.totalorder %s158, %s159
      %p171 = scmp.eq.s32.totalorder %s23, 1
      %p172 = por %p170, %p171
      %p174 = scmp.ne.s32.totalorder %s159, %s173
      %p175 = scmp.eq.s32.totalorder %s23, 0
      %p176 = por %p174, %p175
      %s178 = sadd.s32 %s177, 1
      %p181 = scmp.eq.s32.totalorder %s17, 1
      %p182 = scmp.ne.s32.totalorder %s177, %s179
      %p183 = scmp.eq.s32.totalorder %s17, 0
      %p184 = por %p182, %p183
      %p185 = scmp.ne.s32.totalorder %s177, %s179
      %p186 = scmp.eq.s32.totalorder %s22, 1
      %p187 = por %p185, %p186
      %p188 = scmp.ne.s32.totalorder %s179, %s180
      %p189 = scmp.eq.s32.totalorder %s22, 0
      %p190 = por %p188, %p189
      %p191 = scmp.ne.s32.totalorder %s179, %s180
      %p192 = scmp.eq.s32.totalorder %s23, 1
      %p193 = por %p191, %p192
      %p195 = scmp.ne.s32.totalorder %s180, %s194
      %p196 = scmp.eq.s32.totalorder %s23, 0
      %p197 = por %p195, %p196
      %s198 = ssub.s32 %s17, %s24
      %p199 = scmp.eq.s32.totalorder %s198, 0
      %s201 = sadd.s32 %s200, 1
      %s202 = scalar_select %p199, %s200, %s201
      %p205 = pneg %p199
      %p206 = scmp.eq.s32.totalorder %s17, 1
      %p207 = por %p205, %p206
      %p208 = scmp.ne.s32.totalorder %s200, %s203
      %p209 = scmp.eq.s32.totalorder %s17, 0
      %p210 = por %p208, %p209
      %p211 = scmp.ne.s32.totalorder %s200, %s203
      %p212 = scmp.eq.s32.totalorder %s22, 1
      %p213 = por %p211, %p212
      %p214 = scmp.ne.s32.totalorder %s203, %s204
      %p215 = scmp.eq.s32.totalorder %s22, 0
      %p216 = por %p214, %p215
      %p217 = scmp.ne.s32.totalorder %s203, %s204
      %p218 = scmp.eq.s32.totalorder %s23, 1
      %p219 = por %p217, %p218
      %p221 = scmp.ne.s32.totalorder %s204, %s220
      %p222 = scmp.eq.s32.totalorder %s23, 0
      %p223 = por %p221, %p222
      %p224 = scmp.le.s32.totalorder 1, %s17
      %p225 = scmp.lt.s32.totalorder %s17, 3
      %p226 = pnand %p224, %p225
      %p227 = pneg %p226
      // Predicated region
      $region9: #{residual_block_forward.3} parent=5 // pred_check
        _
      $region10: #{residual_block_forward.3} parent=5 // pred_check_branch
        %229 = sbr.rel (%p226) target = $region12
      $region11: #{residual_block_forward.3} parent=5 // pred_region
        %s230 = ssub.s32 %s17, 1
        // Predicated region
        $region13: #{residual_block_forward.3} parent=11 // pred_check
          %p231 = pneg %p64
        $region14: #{residual_block_forward.3} parent=11 // pred_check_branch
          %233 = sbr.rel (%p231) target = $region16
        $region15: #{residual_block_forward.3} parent=11 // pred_region
          _
        $region16: #{residual_block_forward.3} parent=11 // pred_fallthru
          _
        // Predicated region
        $region17: #{residual_block_forward.3} parent=11 // pred_check
          %p234 = pneg %p85
        $region18: #{residual_block_forward.3} parent=11 // pred_check_branch
          %236 = sbr.rel (%p234) target = $region20
        $region19: #{residual_block_forward.3} parent=11 // pred_region
          _
        $region20: #{residual_block_forward.3} parent=11 // pred_fallthru
          _
        // Predicated region
        $region21: #{residual_block_forward.3} parent=11 // pred_check
          %p237 = pneg %p106
        $region22: #{residual_block_forward.3} parent=11 // pred_check_branch
          %239 = sbr.rel (%p237) target = $region24
        $region23: #{residual_block_forward.3} parent=11 // pred_region
          _
        $region24: #{residual_block_forward.3} parent=11 // pred_fallthru
          _
        // Predicated region
        $region25: #{residual_block_forward.3} parent=11 // pred_check
          %p240 = pneg %p127
        $region26: #{residual_block_forward.3} parent=11 // pred_check_branch
          %242 = sbr.rel (%p240) target = $region28
        $region27: #{residual_block_forward.3} parent=11 // pred_region
          _
        $region28: #{residual_block_forward.3} parent=11 // pred_fallthru
          _
        // Predicated region
        $region29: #{residual_block_forward.3} parent=11 // pred_check
          %p243 = pneg %p148
        $region30: #{residual_block_forward.3} parent=11 // pred_check_branch
          %245 = sbr.rel (%p243) target = $region32
        $region31: #{residual_block_forward.3} parent=11 // pred_region
          _
        $region32: #{residual_block_forward.3} parent=11 // pred_fallthru
          _
        // Predicated region
        $region33: #{residual_block_forward.3} parent=11 // pred_check
          %p246 = pneg %p169
        $region34: #{residual_block_forward.3} parent=11 // pred_check_branch
          %248 = sbr.rel (%p246) target = $region36
        $region35: #{residual_block_forward.3} parent=11 // pred_region
          _
        $region36: #{residual_block_forward.3} parent=11 // pred_fallthru
          _
        // Predicated region
        $region37: #{residual_block_forward.3} parent=11 // pred_check
          %p249 = pneg %p190
        $region38: #{residual_block_forward.3} parent=11 // pred_check_branch
          %251 = sbr.rel (%p249) target = $region40
        $region39: #{residual_block_forward.3} parent=11 // pred_region
          _
        $region40: #{residual_block_forward.3} parent=11 // pred_fallthru
          _
      $region12: #{residual_block_forward.3} parent=5 // pred_fallthru
        _
      %p252 = scmp.lt.s32.totalorder %s17, 2
      // Predicated region
      $region41: #{residual_block_forward.3} parent=5 // pred_check
        %p253 = pneg %p252
      $region42: #{residual_block_forward.3} parent=5 // pred_check_branch
        %255 = sbr.rel (%p253) target = $region44
      $region43: #{residual_block_forward.3} parent=5 // pred_region
        // Predicated region
        $region45: #{residual_block_forward.3} parent=43 // pred_check
          %p256 = pneg %p37
        $region46: #{residual_block_forward.3} parent=43 // pred_check_branch
          %258 = sbr.rel (%p256) target = $region48
        $region47: #{residual_block_forward.3} parent=43 // pred_region
          %p259 = scmp.lt.s32.totalorder %s17, 1
          %s260 = scalar_select %p259, %s17, 1
          %s261 = smul.addr %s260, 20
          %s262 = smul.addr %s261, 8
          %s263 = scalar_lea.vmem %s0, %s262
        $region48: #{residual_block_forward.3} parent=43 // pred_fallthru
          _
      $region44: #{residual_block_forward.3} parent=5 // pred_fallthru
        _
      %p264 = scmp.le.s32.totalorder 1, %s17
      %p265 = scmp.lt.s32.totalorder %s17, 3
      %p266 = pnand %p264, %p265
      %p267 = pneg %p266
      // Predicated region
      $region49: #{residual_block_forward.3} parent=5 // pred_check
        _
      $region50: #{residual_block_forward.3} parent=5 // pred_check_branch
        %269 = sbr.rel (%p266) target = $region52
      $region51: #{residual_block_forward.3} parent=5 // pred_region
        %s270 = ssub.s32 %s17, 1
        %p271 = scmp.lt.s32.totalorder %s22, 1
        %s272 = scalar_select %p271, %s22, 1
        %s273 = smul.addr %s272, 20
        %s274 = smul.addr %s273, 8
        %s275 = scalar_lea.vmem %s0, %s274
        %p276 = pneg %p43
        %p277 = pneg %p40
        %p278 = pneg %p64
        %p279 = pneg %p61
        %p280 = pneg %p85
        %p281 = pneg %p82
        %p282 = pneg %p106
        %p283 = pneg %p103
        %p284 = pneg %p127
        %p285 = pneg %p124
        %p286 = pneg %p148
        %p287 = pneg %p145
        %p288 = pneg %p169
        %p289 = pneg %p166
        %p290 = pneg %p190
        %p291 = pneg %p187
        %p292 = pneg %p216
        %p293 = pneg %p213
        %s294 = sand.u32 %s203, 1
        %s295 = scalar_lea.sflag [#allocation4], %s294
        %s296 = sand.u32 %s203, 1
        %s297 = smul.addr %s296, 64
        %s298 = scalar_lea.vmem [#allocation3], %s297
        %p299 = scmp.lt.s32.totalorder %s22, 1
        %s300 = scalar_select %p299, %s22, 1
        %s301 = smul.addr %s300, 20
        %s302 = smul.addr %s301, 8
        %s303 = scalar_lea.vmem %s0, %s302
        %v304 = vld [vmem:[%s303] sm:$0xff]
        %v305 = vld [vmem:[%s303 + $0x8] sm:$0x3]
        %v306 = vld [vmem:[%s303 + $0x10] sm:$0xff]
        %v307 = vld [vmem:[%s303 + $0x18] sm:$0x3]
        %v308 = vld [vmem:[%s303 + $0x20] sm:$0xff]
        %v309 = vld [vmem:[%s303 + $0x28] sm:$0x3]
        %v310 = vld [vmem:[%s303 + $0x30] sm:$0xff]
        %v311 = vld [vmem:[%s303 + $0x38] sm:$0x3]
        %v312 = vld [vmem:[%s303 + $0x40] sm:$0xff]
        %v313 = vld [vmem:[%s303 + $0x48] sm:$0x3]
        %v314 = vld [vmem:[%s303 + $0x50] sm:$0xff]
        %v315 = vld [vmem:[%s303 + $0x58] sm:$0x3]
        %v316 = vld [vmem:[%s303 + $0x60] sm:$0xff]
        %v317 = vld [vmem:[%s303 + $0x68] sm:$0x3]
        %v318 = vld [vmem:[%s303 + $0x70] sm:$0xff]
        %v319 = vld [vmem:[%s303 + $0x78] sm:$0x3]
        %v320 = vld [vmem:[%s303 + $0x80] sm:$0xff]
        %v321 = vld [vmem:[%s303 + $0x88] sm:$0x3]
        %v322 = vld [vmem:[%s303 + $0x90] sm:$0xff]
        %v323 = vld [vmem:[%s303 + $0x98] sm:$0x3]
        %v324 = vld [vmem:[%s2] sm:$0x1]
        %v326 = vlaneseq
        %v327 = vshrl.u32 %v326, 7
        %v328 = vsub.s32 0, %v327
        %v329 = vrot.slane %v324, %v328
        %v331 = vmul.f32 %v304, %v329
        %v332 = vmul.f32 %v305, %v329
        %v333 = vmul.f32 %v306, %v329
        %v334 = vmul.f32 %v307, %v329
        %v335 = vmul.f32 %v308, %v329
        %v336 = vmul.f32 %v309, %v329
        %v337 = vmul.f32 %v310, %v329
        %v338 = vmul.f32 %v311, %v329
        %v339 = vmul.f32 %v312, %v329
        %v340 = vmul.f32 %v313, %v329
        %v341 = vmul.f32 %v314, %v329
        %v342 = vmul.f32 %v315, %v329
        %v343 = vmul.f32 %v316, %v329
        %v344 = vmul.f32 %v317, %v329
        %v345 = vmul.f32 %v318, %v329
        %v346 = vmul.f32 %v319, %v329
        %v347 = vmul.f32 %v320, %v329
        %v348 = vmul.f32 %v321, %v329
        %v349 = vmul.f32 %v322, %v329
        %v350 = vmul.f32 %v323, %v329
        %v351 = vld [vmem:[%s3] sm:$0x1]
        %v353 = vlaneseq
        %v354 = vshrl.u32 %v353, 7
        %v355 = vsub.s32 0, %v354
        %v356 = vrot.slane %v351, %v355
        %v358 = vadd.f32 %v331, %v356
        %v359 = vadd.f32 %v332, %v356
        %v360 = vadd.f32 %v333, %v356
        %v361 = vadd.f32 %v334, %v356
        %v362 = vadd.f32 %v335, %v356
        %v363 = vadd.f32 %v336, %v356
        %v364 = vadd.f32 %v337, %v356
        %v365 = vadd.f32 %v338, %v356
        %v366 = vadd.f32 %v339, %v356
        %v367 = vadd.f32 %v340, %v356
        %v368 = vadd.f32 %v341, %v356
        %v369 = vadd.f32 %v342, %v356
        %v370 = vadd.f32 %v343, %v356
        %v371 = vadd.f32 %v344, %v356
        %v372 = vadd.f32 %v345, %v356
        %v373 = vadd.f32 %v346, %v356
        %v374 = vadd.f32 %v347, %v356
        %v375 = vadd.f32 %v348, %v356
        %v376 = vadd.f32 %v349, %v356
        %v377 = vadd.f32 %v350, %v356
        %v378 = vmax.f32 %v358, 0.0
        %v379 = vmax.f32 %v359, 0.0
        %v380 = vmax.f32 %v360, 0.0
        %v381 = vmax.f32 %v361, 0.0
        %v382 = vmax.f32 %v362, 0.0
        %v383 = vmax.f32 %v363, 0.0
        %v384 = vmax.f32 %v364, 0.0
        %v385 = vmax.f32 %v365, 0.0
        %v386 = vmax.f32 %v366, 0.0
        %v387 = vmax.f32 %v367, 0.0
        %v388 = vmax.f32 %v368, 0.0
        %v389 = vmax.f32 %v369, 0.0
        %v390 = vmax.f32 %v370, 0.0
        %v391 = vmax.f32 %v371, 0.0
        %v392 = vmax.f32 %v372, 0.0
        %v393 = vmax.f32 %v373, 0.0
        %v394 = vmax.f32 %v374, 0.0
        %v395 = vmax.f32 %v375, 0.0
        %v396 = vmax.f32 %v376, 0.0
        %v397 = vmax.f32 %v377, 0.0
        %v398 = vld [vmem:[%s1] sm:$0xff]
        %v399 = vld [vmem:[%s1 + $0x8] sm:$0x3]
        %v400 = vld [vmem:[%s1 + $0x10] sm:$0xff]
        %v401 = vld [vmem:[%s1 + $0x18] sm:$0x3]
        %v402 = vld [vmem:[%s1 + $0x20] sm:$0xff]
        %v403 = vld [vmem:[%s1 + $0x28] sm:$0x3]
        %v404 = vld [vmem:[%s1 + $0x30] sm:$0xff]
        %v405 = vld [vmem:[%s1 + $0x38] sm:$0x3]
        %v406 = vld [vmem:[%s1 + $0x40] sm:$0xff]
        %v407 = vld [vmem:[%s1 + $0x48] sm:$0x3]
        %v408 = vld [vmem:[%s1 + $0x50] sm:$0xff]
        %v409 = vld [vmem:[%s1 + $0x58] sm:$0x3]
        %v410 = vld [vmem:[%s1 + $0x60] sm:$0xff]
        %v411 = vld [vmem:[%s1 + $0x68] sm:$0x3]
        %v412 = vld [vmem:[%s1 + $0x70] sm:$0xff]
        %v413 = vld [vmem:[%s1 + $0x78] sm:$0x3]
        %v414 = vld [vmem:[%s1 + $0x80] sm:$0xff]
        %v415 = vld [vmem:[%s1 + $0x88] sm:$0x3]
        %v416 = vld [vmem:[%s1 + $0x90] sm:$0xff]
        %v417 = vld [vmem:[%s1 + $0x98] sm:$0x3]
        %419 = vset.pattern.permute.xlu0 0
        %420 = vperm.xlu0 %419, %v398
        %v421 = vpop.permute.xlu0 %420
        %424 = vset.pattern.permute.xlu0 0
        %425 = vperm.xlu0 %424, %v399
        %v426 = vpop.permute.xlu0 %425
        %429 = vset.pattern.permute.xlu0 0
        %430 = vperm.xlu0 %429, %v400
        %v431 = vpop.permute.xlu0 %430
        %434 = vset.pattern.permute.xlu0 0
        %435 = vperm.xlu0 %434, %v401
        %v436 = vpop.permute.xlu0 %435
        %439 = vset.pattern.permute.xlu0 0
        %440 = vperm.xlu0 %439, %v402
        %v441 = vpop.permute.xlu0 %440
        %444 = vset.pattern.permute.xlu0 0
        %445 = vperm.xlu0 %444, %v403
        %v446 = vpop.permute.xlu0 %445
        %449 = vset.pattern.permute.xlu0 0
        %450 = vperm.xlu0 %449, %v404
        %v451 = vpop.permute.xlu0 %450
        %454 = vset.pattern.permute.xlu0 0
        %455 = vperm.xlu0 %454, %v405
        %v456 = vpop.permute.xlu0 %455
        %459 = vset.pattern.permute.xlu0 0
        %460 = vperm.xlu0 %459, %v406
        %v461 = vpop.permute.xlu0 %460
        %464 = vset.pattern.permute.xlu0 0
        %465 = vperm.xlu0 %464, %v407
        %v466 = vpop.permute.xlu0 %465
        %469 = vset.pattern.permute.xlu0 0
        %470 = vperm.xlu0 %469, %v408
        %v471 = vpop.permute.xlu0 %470
        %474 = vset.pattern.permute.xlu0 0
        %475 = vperm.xlu0 %474, %v409
        %v476 = vpop.permute.xlu0 %475
        %479 = vset.pattern.permute.xlu0 0
        %480 = vperm.xlu0 %479, %v410
        %v481 = vpop.permute.xlu0 %480
        %484 = vset.pattern.permute.xlu0 0
        %485 = vperm.xlu0 %484, %v411
        %v486 = vpop.permute.xlu0 %485
        %489 = vset.pattern.permute.xlu0 0
        %490 = vperm.xlu0 %489, %v412
        %v491 = vpop.permute.xlu0 %490
        %494 = vset.pattern.permute.xlu0 0
        %495 = vperm.xlu0 %494, %v413
        %v496 = vpop.permute.xlu0 %495
        %499 = vset.pattern.permute.xlu0 0
        %500 = vperm.xlu0 %499, %v414
        %v501 = vpop.permute.xlu0 %500
        %504 = vset.pattern.permute.xlu0 0
        %505 = vperm.xlu0 %504, %v415
        %v506 = vpop.permute.xlu0 %505
        %509 = vset.pattern.permute.xlu0 0
        %510 = vperm.xlu0 %509, %v416
        %v511 = vpop.permute.xlu0 %510
        %514 = vset.pattern.permute.xlu0 0
        %515 = vperm.xlu0 %514, %v417
        %v516 = vpop.permute.xlu0 %515
        %v518 = vmul.f32 %v378, %v421
        %v519 = vmul.f32 %v379, %v426
        %v520 = vmul.f32 %v380, %v431
        %v521 = vmul.f32 %v381, %v436
        %v522 = vmul.f32 %v382, %v441
        %v523 = vmul.f32 %v383, %v446
        %v524 = vmul.f32 %v384, %v451
        %v525 = vmul.f32 %v385, %v456
        %v526 = vmul.f32 %v386, %v461
        %v527 = vmul.f32 %v387, %v466
        %v528 = vmul.f32 %v388, %v471
        %v529 = vmul.f32 %v389, %v476
        %v530 = vmul.f32 %v390, %v481
        %v531 = vmul.f32 %v391, %v486
        %v532 = vmul.f32 %v392, %v491
        %v533 = vmul.f32 %v393, %v496
        %v534 = vmul.f32 %v394, %v501
        %v535 = vmul.f32 %v395, %v506
        %v536 = vmul.f32 %v396, %v511
        %v537 = vmul.f32 %v397, %v516
        %vm554 = vcmask 1046528
        %v555 = vrot.slane %v518, 1
        %v556 = vrot.slane %v519, 1
        %v557 = vsel %vm554, %v555, %v556
        %v558 = vrot.slane %v520, 1
        %v559 = vrot.slane %v521, 1
        %v560 = vsel %vm554, %v558, %v559
        %v561 = vrot.slane %v522, 1
        %v562 = vrot.slane %v523, 1
        %v563 = vsel %vm554, %v561, %v562
        %v564 = vrot.slane %v524, 1
        %v565 = vrot.slane %v525, 1
        %v566 = vsel %vm554, %v564, %v565
        %v567 = vrot.slane %v526, 1
        %v568 = vrot.slane %v527, 1
        %v569 = vsel %vm554, %v567, %v568
        %v570 = vrot.slane %v528, 1
        %v571 = vrot.slane %v529, 1
        %v572 = vsel %vm554, %v570, %v571
        %v573 = vrot.slane %v530, 1
        %v574 = vrot.slane %v531, 1
        %v575 = vsel %vm554, %v573, %v574
        %v576 = vrot.slane %v532, 1
        %v577 = vrot.slane %v533, 1
        %v578 = vsel %vm554, %v576, %v577
        %vm579 = vcmask 1045504
        %v580 = vrot.slane %v518, 2
        %v581 = vrot.slane %v519, 2
        %v582 = vsel %vm579, %v580, %v581
        %v583 = vrot.slane %v520, 2
        %v584 = vrot.slane %v521, 2
        %v585 = vsel %vm579, %v583, %v584
        %v586 = vrot.slane %v522, 2
        %v587 = vrot.slane %v523, 2
        %v588 = vsel %vm579, %v586, %v587
        %v589 = vrot.slane %v524, 2
        %v590 = vrot.slane %v525, 2
        %v591 = vsel %vm579, %v589, %v590
        %v592 = vrot.slane %v526, 2
        %v593 = vrot.slane %v527, 2
        %v594 = vsel %vm579, %v592, %v593
        %v595 = vrot.slane %v528, 2
        %v596 = vrot.slane %v529, 2
        %v597 = vsel %vm579, %v595, %v596
        %v598 = vrot.slane %v530, 2
        %v599 = vrot.slane %v531, 2
        %v600 = vsel %vm579, %v598, %v599
        %v601 = vrot.slane %v532, 2
        %v602 = vrot.slane %v533, 2
        %v603 = vsel %vm579, %v601, %v602
        %v606 = vrot.slane %v534, 1
        %v607 = vrot.slane %v535, 1
        %v608 = vsel %vm554, %v606, %v607
        %v609 = vrot.slane %v534, 2
        %v610 = vrot.slane %v535, 2
        %v611 = vsel %vm579, %v609, %v610
        %v614 = vrot.slane %v536, 1
        %v615 = vrot.slane %v537, 1
        %v616 = vsel %vm554, %v614, %v615
        %v617 = vrot.slane %v536, 2
        %v618 = vrot.slane %v537, 2
        %v619 = vsel %vm579, %v617, %v618
        %v620 = vld [vmem:[%s4] sm:$0xff]
        %s621 = scalar_lea.vmem %s4, 8
        %v622 = vld [vmem:[%s621] sm:$0xff]
        %vm623 = vcmask 64512
        %v624 = vsel %vm623, %v557, 0
        %v626 = vsel %vm623, %v560, 0
        %v628 = vsel %vm623, %v563, 0
        %v630 = vsel %vm623, %v566, 0
        %v632 = vsel %vm623, %v569, 0
        %v634 = vsel %vm623, %v572, 0
        %v636 = vsel %vm623, %v575, 0
        %v638 = vsel %vm623, %v578, 0
        %640 = vmatprep.subr.mxu0 0.0
        %641 = vmatpush1.msra.mxu0 %v622
        %642 = vmatprep.subr.mxu0 0.0
        %643 = vmatpush1.msra.mxu0 0.0
        %644 = vmatprep.subr.mxu0 0.0
        %645 = vmatpush1.msra.mxu0 0.0
        %646 = vmatprep.subr.mxu0 0.0
        %647 = vmatpush1.msra.mxu0 0.0
        %648 = vmatprep.subr.mxu0 0.0
        %649 = vmatpush1.msra.mxu0 0.0
        %650 = vmatprep.subr.mxu0 0.0
        %651 = vmatpush1.msra.mxu0 0.0
        %652 = vmatprep.subr.mxu0 0.0
        %653 = vmatpush1.msra.mxu0 0.0
        %654 = vmatprep.subr.mxu0 0.0
        %655 = vmatpush1.msra.mxu0 0.0
        %656 = vmatprep.subr.mxu0 0.0
        %657 = vmatpush1.msra.mxu0 0.0
        %658 = vmatprep.subr.mxu0 0.0
        %659 = vmatpush1.msra.mxu0 0.0
        %660 = vmatprep.subr.mxu0 0.0
        %661 = vmatpush1.msra.mxu0 0.0
        %662 = vmatprep.subr.mxu0 0.0
        %663 = vmatpush1.msra.mxu0 0.0
        %664 = vmatprep.subr.mxu0 0.0
        %665 = vmatpush1.msra.mxu0 0.0
        %666 = vmatprep.subr.mxu0 0.0
        %667 = vmatpush1.msra.mxu0 0.0
        %668 = vmatprep.subr.mxu0 0.0
        %669 = vmatpush1.msra.mxu0 0.0
        %670 = vmatprep.subr.mxu0 0.0
        %671 = vmatpush1.msra.mxu0 0.0
        %672 = vmatprep.subr.mxu0 0.0
        %673 = vmatpush1.msra.mxu0 0.0
        %674 = vmatprep.subr.mxu0 0.0
        %675 = vmatpush1.msra.mxu0 0.0
        %676 = vmatprep.subr.mxu0 0.0
        %677 = vmatpush1.msra.mxu0 0.0
        %678 = vmatprep.subr.mxu0 0.0
        %679 = vmatpush1.msra.mxu0 0.0
        %680 = vmatprep.subr.mxu0 0.0
        %681 = vmatpush1.msra.mxu0 0.0
        %682 = vmatprep.subr.mxu0 0.0
        %683 = vmatpush1.msra.mxu0 0.0
        %684 = vmatprep.subr.mxu0 0.0
        %685 = vmatpush1.msra.mxu0 0.0
        %686 = vmatprep.subr.mxu0 0.0
        %687 = vmatpush1.msra.mxu0 0.0
        %688 = vmatprep.subr.mxu0 0.0
        %689 = vmatpush1.msra.mxu0 0.0
        %690 = vmatprep.subr.mxu0 0.0
        %691 = vmatpush1.msra.mxu0 0.0
        %692 = vmatprep.subr.mxu0 0.0
        %693 = vmatpush1.msra.mxu0 0.0
        %694 = vmatprep.subr.mxu0 0.0
        %695 = vmatpush1.msra.mxu0 0.0
        %696 = vmatprep.subr.mxu0 0.0
        %697 = vmatpush1.msra.mxu0 0.0
        %698 = vmatprep.subr.mxu0 0.0
        %699 = vmatpush1.msra.mxu0 0.0
        %700 = vmatprep.subr.mxu0 0.0
        %701 = vmatpush1.msra.mxu0 0.0
        %702 = vmatprep.subr.mxu0 0.0
        %703 = vmatpush1.msra.mxu0 0.0
        %704 = vmatprep.mubr.f32.mxu0 0.0
        %705 = vmatmul.mubr.f32.gmra.mrb[0].mxu0 %v624
        %v706 = vpop.f32.mrb[0].mxu0
        %v707 = vadd.f32 0.0, %v706
        %v708 = vpop.f32.mrb[0].mxu0
        %709 = vmatprep.mubr.f32.mxu0 0.0
        %710 = vmatmul.mubr.f32.gmra.mrb[0].mxu0 %v626
        %v711 = vpop.f32.mrb[0].mxu0
        %v712 = vadd.f32 0.0, %v711
        %v713 = vpop.f32.mrb[0].mxu0
        %714 = vmatprep.mubr.f32.mxu0 0.0
        %715 = vmatmul.mubr.f32.gmra.mrb[0].mxu0 %v628
        %v716 = vpop.f32.mrb[0].mxu0
        %v717 = vadd.f32 0.0, %v716
        %v718 = vpop.f32.mrb[0].mxu0
        %719 = vmatprep.mubr.f32.mxu0 0.0
        %720 = vmatmul.mubr.f32.gmra.mrb[0].mxu0 %v630
        %v721 = vpop.f32.mrb[0].mxu0
        %v722 = vadd.f32 0.0, %v721
        %v723 = vpop.f32.mrb[0].mxu0
        %724 = vmatprep.mubr.f32.mxu0 0.0
        %725 = vmatmul.mubr.f32.gmra.mrb[0].mxu0 %v632
        %v726 = vpop.f32.mrb[0].mxu0
        %v727 = vadd.f32 0.0, %v726
        %v728 = vpop.f32.mrb[0].mxu0
        %729 = vmatprep.mubr.f32.mxu0 0.0
        %730 = vmatmul.mubr.f32.gmra.mrb[0].mxu0 %v634
        %v731 = vpop.f32.mrb[0].mxu0
        %v732 = vadd.f32 0.0, %v731
        %v733 = vpop.f32.mrb[0].mxu0
        %734 = vmatprep.mubr.f32.mxu0 0.0
        %735 = vmatmul.mubr.f32.gmra.mrb[0].mxu0 %v636
        %v736 = vpop.f32.mrb[0].mxu0
        %v737 = vadd.f32 0.0, %v736
        %v738 = vpop.f32.mrb[0].mxu0
        %739 = vmatprep.mubr.f32.mxu0 0.0
        %740 = vmatmul.mubr.f32.gmra.mrb[0].mxu0 %v638
        %v741 = vpop.f32.mrb[0].mxu0
        %v742 = vadd.f32 0.0, %v741
        %v743 = vpop.f32.mrb[0].mxu0
        %744 = vdwg.mxu0
        %v745 = vsel %vm623, %v518, 0
        %v747 = vsel %vm623, %v520, 0
        %v749 = vsel %vm623, %v522, 0
        %v751 = vsel %vm623, %v524, 0
        %v753 = vsel %vm623, %v526, 0
        %v755 = vsel %vm623, %v528, 0
        %v757 = vsel %vm623, %v530, 0
        %v759 = vsel %vm623, %v532, 0
        %761 = vmatprep.subr.mxu0 0.0
        %762 = vmatpush1.msra.mxu0 %v620
        %763 = vmatprep.subr.mxu0 0.0
        %764 = vmatpush1.msra.mxu0 0.0
        %765 = vmatprep.subr.mxu0 0.0
        %766 = vmatpush1.msra.mxu0 0.0
        %767 = vmatprep.subr.mxu0 0.0
        %768 = vmatpush1.msra.mxu0 0.0
        %769 = vmatprep.subr.mxu0 0.0
        %770 = vmatpush1.msra.mxu0 0.0
        %771 = vmatprep.subr.mxu0 0.0
        %772 = vmatpush1.msra.mxu0 0.0
        %773 = vmatprep.subr.mxu0 0.0
        %774 = vmatpush1.msra.mxu0 0.0
        %775 = vmatprep.subr.mxu0 0.0
        %776 = vmatpush1.msra.mxu0 0.0
        %777 = vmatprep.subr.mxu0 0.0
        %778 = vmatpush1.msra.mxu0 0.0
        %779 = vmatprep.subr.mxu0 0.0
        %780 = vmatpush1.msra.mxu0 0.0
        %781 = vmatprep.subr.mxu0 0.0
        %782 = vmatpush1.msra.mxu0 0.0
        %783 = vmatprep.subr.mxu0 0.0
        %784 = vmatpush1.msra.mxu0 0.0
        %785 = vmatprep.subr.mxu0 0.0
        %786 = vmatpush1.msra.mxu0 0.0
        %787 = vmatprep.subr.mxu0 0.0
        %788 = vmatpush1.msra.mxu0 0.0
        %789 = vmatprep.subr.mxu0 0.0
        %790 = vmatpush1.msra.mxu0 0.0
        %791 = vmatprep.subr.mxu0 0.0
        %792 = vmatpush1.msra.mxu0 0.0
        %793 = vmatprep.subr.mxu0 0.0
        %794 = vmatpush1.msra.mxu0 0.0
        %795 = vmatprep.subr.mxu0 0.0
        %796 = vmatpush1.msra.mxu0 0.0
        %797 = vmatprep.subr.mxu0 0.0
        %798 = vmatpush1.msra.mxu0 0.0
        %799 = vmatprep.subr.mxu0 0.0
        %800 = vmatpush1.msra.mxu0 0.0
        %801 = vmatprep.subr.mxu0 0.0
        %802 = vmatpush1.msra.mxu0 0.0
        %803 = vmatprep.subr.mxu0 0.0
        %804 = vmatpush1.msra.mxu0 0.0
        %805 = vmatprep.subr.mxu0 0.0
        %806 = vmatpush1.msra.mxu0 0.0
        %807 = vmatprep.subr.mxu0 0.0
        %808 = vmatpush1.msra.mxu0 0.0
        %809 = vmatprep.subr.mxu0 0.0
        %810 = vmatpush1.msra.mxu0 0.0
        %811 = vmatprep.subr.mxu0 0.0
        %812 = vmatpush1.msra.mxu0 0.0
        %813 = vmatprep.subr.mxu0 0.0
        %814 = vmatpush1.msra.mxu0 0.0
        %815 = vmatprep.subr.mxu0 0.0
        %816 = vmatpush1.msra.mxu0 0.0
        %817 = vmatprep.subr.mxu0 0.0
        %818 = vmatpush1.msra.mxu0 0.0
        %819 = vmatprep.subr.mxu0 0.0
        %820 = vmatpush1.msra.mxu0 0.0
        %821 = vmatprep.subr.mxu0 0.0
        %822 = vmatpush1.msra.mxu0 0.0
        %823 = vmatprep.subr.mxu0 0.0
        %824 = vmatpush1.msra.mxu0 0.0
        %825 = vmatprep.mubr.f32.mxu0 0.0
        %826 = vmatmul.mubr.f32.gmra.mrb[0].mxu0 %v745
        %v827 = vpop.f32.mrb[0].mxu0
        %v828 = vadd.f32 %v707, %v827
        %v829 = vpop.f32.mrb[0].mxu0
        %830 = vmatprep.mubr.f32.mxu0 0.0
        %831 = vmatmul.mubr.f32.gmra.mrb[0].mxu0 %v747
        %v832 = vpop.f32.mrb[0].mxu0
        %v833 = vadd.f32 %v712, %v832
        %v834 = vpop.f32.mrb[0].mxu0
        %835 = vmatprep.mubr.f32.mxu0 0.0
        %836 = vmatmul.mubr.f32.gmra.mrb[0].mxu0 %v749
        %v837 = vpop.f32.mrb[0].mxu0
        %v838 = vadd.f32 %v717, %v837
        %v839 = vpop.f32.mrb[0].mxu0
        %840 = vmatprep.mubr.f32.mxu0 0.0
        %841 = vmatmul.mubr.f32.gmra.mrb[0].mxu0 %v751
        %v842 = vpop.f32.mrb[0].mxu0
        %v843 = vadd.f32 %v722, %v842
        %v844 = vpop.f32.mrb[0].mxu0
        %845 = vmatprep.mubr.f32.mxu0 0.0
        %846 = vmatmul.mubr.f32.gmra.mrb[0].mxu0 %v753
        %v847 = vpop.f32.mrb[0].mxu0
        %v848 = vadd.f32 %v727, %v847
        %v849 = vpop.f32.mrb[0].mxu0
        %850 = vmatprep.mubr.f32.mxu0 0.0
        %851 = vmatmul.mubr.f32.gmra.mrb[0].mxu0 %v755
        %v852 = vpop.f32.mrb[0].mxu0
        %v853 = vadd.f32 %v732, %v852
        %v854 = vpop.f32.mrb[0].mxu0
        %855 = vmatprep.mubr.f32.mxu0 0.0
        %856 = vmatmul.mubr.f32.gmra.mrb[0].mxu0 %v757
        %v857 = vpop.f32.mrb[0].mxu0
        %v858 = vadd.f32 %v737, %v857
        %v859 = vpop.f32.mrb[0].mxu0
        %860 = vmatprep.mubr.f32.mxu0 0.0
        %861 = vmatmul.mubr.f32.gmra.mrb[0].mxu0 %v759
        %v862 = vpop.f32.mrb[0].mxu0
        %v863 = vadd.f32 %v742, %v862
        %v864 = vpop.f32.mrb[0].mxu0
        %865 = vdwg.mxu0
        %s866 = scalar_lea.vmem %s4, 16
        %v867 = vld [vmem:[%s866] sm:$0xff]
        %v868 = vsel %vm623, %v582, 0
        %v870 = vsel %vm623, %v585, 0
        %v872 = vsel %vm623, %v588, 0
        %v874 = vsel %vm623, %v591, 0
        %v876 = vsel %vm623, %v594, 0
        %v878 = vsel %vm623, %v597, 0
        %v880 = vsel %vm623, %v600, 0
        %v882 = vsel %vm623, %v603, 0
        %884 = vmatprep.subr.mxu0 0.0
        %885 = vmatpush1.msra.mxu0 %v867
        %886 = vmatprep.subr.mxu0 0.0
        %887 = vmatpush1.msra.mxu0 0.0
        %888 = vmatprep.subr.mxu0 0.0
        %889 = vmatpush1.msra.mxu0 0.0
        %890 = vmatprep.subr.mxu0 0.0
        %891 = vmatpush1.msra.mxu0 0.0
        %892 = vmatprep.subr.mxu0 0.0
        %893 = vmatpush1.msra.mxu0 0.0
        %894 = vmatprep.subr.mxu0 0.0
        %895 = vmatpush1.msra.mxu0 0.0
        %896 = vmatprep.subr.mxu0 0.0
        %897 = vmatpush1.msra.mxu0 0.0
        %898 = vmatprep.subr.mxu0 0.0
        %899 = vmatpush1.msra.mxu0 0.0
        %900 = vmatprep.subr.mxu0 0.0
        %901 = vmatpush1.msra.mxu0 0.0
        %902 = vmatprep.subr.mxu0 0.0
        %903 = vmatpush1.msra.mxu0 0.0
        %904 = vmatprep.subr.mxu0 0.0
        %905 = vmatpush1.msra.mxu0 0.0
        %906 = vmatprep.subr.mxu0 0.0
        %907 = vmatpush1.msra.mxu0 0.0
        %908 = vmatprep.subr.mxu0 0.0
        %909 = vmatpush1.msra.mxu0 0.0
        %910 = vmatprep.subr.mxu0 0.0
        %911 = vmatpush1.msra.mxu0 0.0
        %912 = vmatprep.subr.mxu0 0.0
        %913 = vmatpush1.msra.mxu0 0.0
        %914 = vmatprep.subr.mxu0 0.0
        %915 = vmatpush1.msra.mxu0 0.0
        %916 = vmatprep.subr.mxu0 0.0
        %917 = vmatpush1.msra.mxu0 0.0
        %918 = vmatprep.subr.mxu0 0.0
        %919 = vmatpush1.msra.mxu0 0.0
        %920 = vmatprep.subr.mxu0 0.0
        %921 = vmatpush1.msra.mxu0 0.0
        %922 = vmatprep.subr.mxu0 0.0
        %923 = vmatpush1.msra.mxu0 0.0
        %924 = vmatprep.subr.mxu0 0.0
        %925 = vmatpush1.msra.mxu0 0.0
        %926 = vmatprep.subr.mxu0 0.0
        %927 = vmatpush1.msra.mxu0 0.0
        %928 = vmatprep.subr.mxu0 0.0
        %929 = vmatpush1.msra.mxu0 0.0
        %930 = vmatprep.subr.mxu0 0.0
        %931 = vmatpush1.msra.mxu0 0.0
        %932 = vmatprep.subr.mxu0 0.0
        %933 = vmatpush1.msra.mxu0 0.0
        %934 = vmatprep.subr.mxu0 0.0
        %935 = vmatpush1.msra.mxu0 0.0
        %936 = vmatprep.subr.mxu0 0.0
        %937 = vmatpush1.msra.mxu0 0.0
        %938 = vmatprep.subr.mxu0 0.0
        %939 = vmatpush1.msra.mxu0 0.0
        %940 = vmatprep.subr.mxu0 0.0
        %941 = vmatpush1.msra.mxu0 0.0
        %942 = vmatprep.subr.mxu0 0.0
        %943 = vmatpush1.msra.mxu0 0.0
        %944 = vmatprep.subr.mxu0 0.0
        %945 = vmatpush1.msra.mxu0 0.0
        %946 = vmatprep.subr.mxu0 0.0
        %947 = vmatpush1.msra.mxu0 0.0
        %948 = vmatprep.mubr.f32.mxu0 0.0
        %949 = vmatmul.mubr.f32.gmra.mrb[0].mxu0 %v868
        %v950 = vpop.f32.mrb[0].mxu0
        %v951 = vadd.f32 0.0, %v950
        %v952 = vpop.f32.mrb[0].mxu0
        %953 = vmatprep.mubr.f32.mxu0 0.0
        %954 = vmatmul.mubr.f32.gmra.mrb[0].mxu0 %v870
        %v955 = vpop.f32.mrb[0].mxu0
        %v956 = vadd.f32 0.0, %v955
        %v957 = vpop.f32.mrb[0].mxu0
        %958 = vmatprep.mubr.f32.mxu0 0.0
        %959 = vmatmul.mubr.f32.gmra.mrb[0].mxu0 %v872
        %v960 = vpop.f32.mrb[0].mxu0
        %v961 = vadd.f32 0.0, %v960
        %v962 = vpop.f32.mrb[0].mxu0
        %963 = vmatprep.mubr.f32.mxu0 0.0
        %964 = vmatmul.mubr.f32.gmra.mrb[0].mxu0 %v874
        %v965 = vpop.f32.mrb[0].mxu0
        %v966 = vadd.f32 0.0, %v965
        %v967 = vpop.f32.mrb[0].mxu0
        %968 = vmatprep.mubr.f32.mxu0 0.0
        %969 = vmatmul.mubr.f32.gmra.mrb[0].mxu0 %v876
        %v970 = vpop.f32.mrb[0].mxu0
        %v971 = vadd.f32 0.0, %v970
        %v972 = vpop.f32.mrb[0].mxu0
        %973 = vmatprep.mubr.f32.mxu0 0.0
        %974 = vmatmul.mubr.f32.gmra.mrb[0].mxu0 %v878
        %v975 = vpop.f32.mrb[0].mxu0
        %v976 = vadd.f32 0.0, %v975
        %v977 = vpop.f32.mrb[0].mxu0
        %978 = vmatprep.mubr.f32.mxu0 0.0
        %979 = vmatmul.mubr.f32.gmra.mrb[0].mxu0 %v880
        %v980 = vpop.f32.mrb[0].mxu0
        %v981 = vadd.f32 0.0, %v980
        %v982 = vpop.f32.mrb[0].mxu0
        %983 = vmatprep.mubr.f32.mxu0 0.0
        %984 = vmatmul.mubr.f32.gmra.mrb[0].mxu0 %v882
        %v985 = vpop.f32.mrb[0].mxu0
        %v986 = vadd.f32 0.0, %v985
        %v987 = vpop.f32.mrb[0].mxu0
        %988 = vdwg.mxu0
        %v989 = vadd.f32 %v828, %v951
        %v990 = vadd.f32 %v833, %v956
        %v991 = vadd.f32 %v838, %v961
        %v992 = vadd.f32 %v843, %v966
        %v993 = vadd.f32 %v848, %v971
        %v994 = vadd.f32 %v853, %v976
        %v995 = vadd.f32 %v858, %v981
        %v996 = vadd.f32 %v863, %v986
        %s997 = scalar_lea.vmem %s4, 24
        %v998 = vld [vmem:[%s997] sm:$0xff]
        %v999 = vsel %vm623, %v534, 0
        %1001 = vmatprep.subr.mxu0 0.0
        %1002 = vmatpush1.msra.mxu0 %v998
        %1003 = vmatprep.subr.mxu0 0.0
        %1004 = vmatpush1.msra.mxu0 0.0
        %1005 = vmatprep.subr.mxu0 0.0
        %1006 = vmatpush1.msra.mxu0 0.0
        %1007 = vmatprep.subr.mxu0 0.0
        %1008 = vmatpush1.msra.mxu0 0.0
        %1009 = vmatprep.subr.mxu0 0.0
        %1010 = vmatpush1.msra.mxu0 0.0
        %1011 = vmatprep.subr.mxu0 0.0
        %1012 = vmatpush1.msra.mxu0 0.0
        %1013 = vmatprep.subr.mxu0 0.0
        %1014 = vmatpush1.msra.mxu0 0.0
        %1015 = vmatprep.subr.mxu0 0.0
        %1016 = vmatpush1.msra.mxu0 0.0
        %1017 = vmatprep.subr.mxu0 0.0
        %1018 = vmatpush1.msra.mxu0 0.0
        %1019 = vmatprep.subr.mxu0 0.0
        %1020 = vmatpush1.msra.mxu0 0.0
        %1021 = vmatprep.subr.mxu0 0.0
        %1022 = vmatpush1.msra.mxu0 0.0
        %1023 = vmatprep.subr.mxu0 0.0
        %1024 = vmatpush1.msra.mxu0 0.0
        %1025 = vmatprep.subr.mxu0 0.0
        %1026 = vmatpush1.msra.mxu0 0.0
        %1027 = vmatprep.subr.mxu0 0.0
        %1028 = vmatpush1.msra.mxu0 0.0
        %1029 = vmatprep.subr.mxu0 0.0
        %1030 = vmatpush1.msra.mxu0 0.0
        %1031 = vmatprep.subr.mxu0 0.0
        %1032 = vmatpush1.msra.mxu0 0.0
        %1033 = vmatprep.subr.mxu0 0.0
        %1034 = vmatpush1.msra.mxu0 0.0
        %1035 = vmatprep.subr.mxu0 0.0
        %1036 = vmatpush1.msra.mxu0 0.0
        %1037 = vmatprep.subr.mxu0 0.0
        %1038 = vmatpush1.msra.mxu0 0.0
        %1039 = vmatprep.subr.mxu0 0.0
        %1040 = vmatpush1.msra.mxu0 0.0
        %1041 = vmatprep.subr.mxu0 0.0
        %1042 = vmatpush1.msra.mxu0 0.0
        %1043 = vmatprep.subr.mxu0 0.0
        %1044 = vmatpush1.msra.mxu0 0.0
        %1045 = vmatprep.subr.mxu0 0.0
        %1046 = vmatpush1.msra.mxu0 0.0
        %1047 = vmatprep.subr.mxu0 0.0
        %1048 = vmatpush1.msra.mxu0 0.0
        %1049 = vmatprep.subr.mxu0 0.0
        %1050 = vmatpush1.msra.mxu0 0.0
        %1051 = vmatprep.subr.mxu0 0.0
        %1052 = vmatpush1.msra.mxu0 0.0
        %1053 = vmatprep.subr.mxu0 0.0
        %1054 = vmatpush1.msra.mxu0 0.0
        %1055 = vmatprep.subr.mxu0 0.0
        %1056 = vmatpush1.msra.mxu0 0.0
        %1057 = vmatprep.subr.mxu0 0.0
        %1058 = vmatpush1.msra.mxu0 0.0
        %1059 = vmatprep.subr.mxu0 0.0
        %1060 = vmatpush1.msra.mxu0 0.0
        %1061 = vmatprep.subr.mxu0 0.0
        %1062 = vmatpush1.msra.mxu0 0.0
        %1063 = vmatprep.subr.mxu0 0.0
        %1064 = vmatpush1.msra.mxu0 0.0
        %1065 = vmatprep.mubr.f32.mxu0 0.0
        %1066 = vmatmul.mubr.f32.gmra.mrb[0].mxu0 %v747
        %v1067 = vpop.f32.mrb[0].mxu0
        %v1068 = vadd.f32 0.0, %v1067
        %v1069 = vpop.f32.mrb[0].mxu0
        %1070 = vmatprep.mubr.f32.mxu0 0.0
        %1071 = vmatmul.mubr.f32.gmra.mrb[0].mxu0 %v749
        %v1072 = vpop.f32.mrb[0].mxu0
        %v1073 = vadd.f32 0.0, %v1072
        %v1074 = vpop.f32.mrb[0].mxu0
        %1075 = vmatprep.mubr.f32.mxu0 0.0
        %1076 = vmatmul.mubr.f32.gmra.mrb[0].mxu0 %v751
        %v1077 = vpop.f32.mrb[0].mxu0
        %v1078 = vadd.f32 0.0, %v1077
        %v1079 = vpop.f32.mrb[0].mxu0
        %1080 = vmatprep.mubr.f32.mxu0 0.0
        %1081 = vmatmul.mubr.f32.gmra.mrb[0].mxu0 %v753
        %v1082 = vpop.f32.mrb[0].mxu0
        %v1083 = vadd.f32 0.0, %v1082
        %v1084 = vpop.f32.mrb[0].mxu0
        %1085 = vmatprep.mubr.f32.mxu0 0.0
        %1086 = vmatmul.mubr.f32.gmra.mrb[0].mxu0 %v755
        %v1087 = vpop.f32.mrb[0].mxu0
        %v1088 = vadd.f32 0.0, %v1087
        %v1089 = vpop.f32.mrb[0].mxu0
        %1090 = vmatprep.mubr.f32.mxu0 0.0
        %1091 = vmatmul.mubr.f32.gmra.mrb[0].mxu0 %v757
        %v1092 = vpop.f32.mrb[0].mxu0
        %v1093 = vadd.f32 0.0, %v1092
        %v1094 = vpop.f32.mrb[0].mxu0
        %1095 = vmatprep.mubr.f32.mxu0 0.0
        %1096 = vmatmul.mubr.f32.gmra.mrb[0].mxu0 %v759
        %v1097 = vpop.f32.mrb[0].mxu0
        %v1098 = vadd.f32 0.0, %v1097
        %v1099 = vpop.f32.mrb[0].mxu0
        %1100 = vmatprep.mubr.f32.mxu0 0.0
        %1101 = vmatmul.mubr.f32.gmra.mrb[0].mxu0 %v999
        %v1102 = vpop.f32.mrb[0].mxu0
        %v1103 = vadd.f32 0.0, %v1102
        %v1104 = vpop.f32.mrb[0].mxu0
        %1105 = vdwg.mxu0
        %v1106 = vadd.f32 %v989, %v1068
        %v1107 = vadd.f32 %v990, %v1073
        %v1108 = vadd.f32 %v991, %v1078
        %v1109 = vadd.f32 %v992, %v1083
        %v1110 = vadd.f32 %v993, %v1088
        %v1111 = vadd.f32 %v994, %v1093
        %v1112 = vadd.f32 %v995, %v1098
        %v1113 = vadd.f32 %v996, %v1103
        %s1114 = scalar_lea.vmem %s4, 32
        %v1115 = vld [vmem:[%s1114] sm:$0xff]
        %v1116 = vsel %vm623, %v608, 0
        %1118 = vmatprep.subr.mxu0 0.0
        %1119 = vmatpush1.msra.mxu0 %v1115
        %1120 = vmatprep.subr.mxu0 0.0
        %1121 = vmatpush1.msra.mxu0 0.0
        %1122 = vmatprep.subr.mxu0 0.0
        %1123 = vmatpush1.msra.mxu0 0.0
        %1124 = vmatprep.subr.mxu0 0.0
        %1125 = vmatpush1.msra.mxu0 0.0
        %1126 = vmatprep.subr.mxu0 0.0
        %1127 = vmatpush1.msra.mxu0 0.0
        %1128 = vmatprep.subr.mxu0 0.0
        %1129 = vmatpush1.msra.mxu0 0.0
        %1130 = vmatprep.subr.mxu0 0.0
        %1131 = vmatpush1.msra.mxu0 0.0
        %1132 = vmatprep.subr.mxu0 0.0
        %1133 = vmatpush1.msra.mxu0 0.0
        %1134 = vmatprep.subr.mxu0 0.0
        %1135 = vmatpush1.msra.mxu0 0.0
        %1136 = vmatprep.subr.mxu0 0.0
        %1137 = vmatpush1.msra.mxu0 0.0
        %1138 = vmatprep.subr.mxu0 0.0
        %1139 = vmatpush1.msra.mxu0 0.0
        %1140 = vmatprep.subr.mxu0 0.0
        %1141 = vmatpush1.msra.mxu0 0.0
        %1142 = vmatprep.subr.mxu0 0.0
        %1143 = vmatpush1.msra.mxu0 0.0
        %1144 = vmatprep.subr.mxu0 0.0
        %1145 = vmatpush1.msra.mxu0 0.0
        %1146 = vmatprep.subr.mxu0 0.0
        %1147 = vmatpush1.msra.mxu0 0.0
        %1148 = vmatprep.subr.mxu0 0.0
        %1149 = vmatpush1.msra.mxu0 0.0
        %1150 = vmatprep.subr.mxu0 0.0
        %1151 = vmatpush1.msra.mxu0 0.0
        %1152 = vmatprep.subr.mxu0 0.0
        %1153 = vmatpush1.msra.mxu0 0.0
        %1154 = vmatprep.subr.mxu0 0.0
        %1155 = vmatpush1.msra.mxu0 0.0
        %1156 = vmatprep.subr.mxu0 0.0
        %1157 = vmatpush1.msra.mxu0 0.0
        %1158 = vmatprep.subr.mxu0 0.0
        %1159 = vmatpush1.msra.mxu0 0.0
        %1160 = vmatprep.subr.mxu0 0.0
        %1161 = vmatpush1.msra.mxu0 0.0
        %1162 = vmatprep.subr.mxu0 0.0
        %1163 = vmatpush1.msra.mxu0 0.0
        %1164 = vmatprep.subr.mxu0 0.0
        %1165 = vmatpush1.msra.mxu0 0.0
        %1166 = vmatprep.subr.mxu0 0.0
        %1167 = vmatpush1.msra.mxu0 0.0
        %1168 = vmatprep.subr.mxu0 0.0
        %1169 = vmatpush1.msra.mxu0 0.0
        %1170 = vmatprep.subr.mxu0 0.0
        %1171 = vmatpush1.msra.mxu0 0.0
        %1172 = vmatprep.subr.mxu0 0.0
        %1173 = vmatpush1.msra.mxu0 0.0
        %1174 = vmatprep.subr.mxu0 0.0
        %1175 = vmatpush1.msra.mxu0 0.0
        %1176 = vmatprep.subr.mxu0 0.0
        %1177 = vmatpush1.msra.mxu0 0.0
        %1178 = vmatprep.subr.mxu0 0.0
        %1179 = vmatpush1.msra.mxu0 0.0
        %1180 = vmatprep.subr.mxu0 0.0
        %1181 = vmatpush1.msra.mxu0 0.0
        %1182 = vmatprep.mubr.f32.mxu0 0.0
        %1183 = vmatmul.mubr.f32.gmra.mrb[0].mxu0 %v626
        %v1184 = vpop.f32.mrb[0].mxu0
        %v1185 = vadd.f32 0.0, %v1184
        %v1186 = vpop.f32.mrb[0].mxu0
        %1187 = vmatprep.mubr.f32.mxu0 0.0
        %1188 = vmatmul.mubr.f32.gmra.mrb[0].mxu0 %v628
        %v1189 = vpop.f32.mrb[0].mxu0
        %v1190 = vadd.f32 0.0, %v1189
        %v1191 = vpop.f32.mrb[0].mxu0
        %1192 = vmatprep.mubr.f32.mxu0 0.0
        %1193 = vmatmul.mubr.f32.gmra.mrb[0].mxu0 %v630
        %v1194 = vpop.f32.mrb[0].mxu0
        %v1195 = vadd.f32 0.0, %v1194
        %v1196 = vpop.f32.mrb[0].mxu0
        %1197 = vmatprep.mubr.f32.mxu0 0.0
        %1198 = vmatmul.mubr.f32.gmra.mrb[0].mxu0 %v632
        %v1199 = vpop.f32.mrb[0].mxu0
        %v1200 = vadd.f32 0.0, %v1199
        %v1201 = vpop.f32.mrb[0].mxu0
        %1202 = vmatprep.mubr.f32.mxu0 0.0
        %1203 = vmatmul.mubr.f32.gmra.mrb[0].mxu0 %v634
        %v1204 = vpop.f32.mrb[0].mxu0
        %v1205 = vadd.f32 0.0, %v1204
        %v1206 = vpop.f32.mrb[0].mxu0
        %1207 = vmatprep.mubr.f32.mxu0 0.0
        %1208 = vmatmul.mubr.f32.gmra.mrb[0].mxu0 %v636
        %v1209 = vpop.f32.mrb[0].mxu0
        %v1210 = vadd.f32 0.0, %v1209
        %v1211 = vpop.f32.mrb[0].mxu0
        %1212 = vmatprep.mubr.f32.mxu0 0.0
        %1213 = vmatmul.mubr.f32.gmra.mrb[0].mxu0 %v638
        %v1214 = vpop.f32.mrb[0].mxu0
        %v1215 = vadd.f32 0.0, %v1214
        %v1216 = vpop.f32.mrb[0].mxu0
        %1217 = vmatprep.mubr.f32.mxu0 0.0
        %1218 = vmatmul.mubr.f32.gmra.mrb[0].mxu0 %v1116
        %v1219 = vpop.f32.mrb[0].mxu0
        %v1220 = vadd.f32 0.0, %v1219
        %v1221 = vpop.f32.mrb[0].mxu0
        %1222 = vdwg.mxu0
        %v1223 = vadd.f32 %v1106, %v1185
        %v1224 = vadd.f32 %v1107, %v1190
        %v1225 = vadd.f32 %v1108, %v1195
        %v1226 = vadd.f32 %v1109, %v1200
        %v1227 = vadd.f32 %v1110, %v1205
        %v1228 = vadd.f32 %v1111, %v1210
        %v1229 = vadd.f32 %v1112, %v1215
        %v1230 = vadd.f32 %v1113, %v1220
        %s1231 = scalar_lea.vmem %s4, 40
        %v1232 = vld [vmem:[%s1231] sm:$0xff]
        %v1233 = vsel %vm623, %v611, 0
        %1235 = vmatprep.subr.mxu0 0.0
        %1236 = vmatpush1.msra.mxu0 %v1232
        %1237 = vmatprep.subr.mxu0 0.0
        %1238 = vmatpush1.msra.mxu0 0.0
        %1239 = vmatprep.subr.mxu0 0.0
        %1240 = vmatpush1.msra.mxu0 0.0
        %1241 = vmatprep.subr.mxu0 0.0
        %1242 = vmatpush1.msra.mxu0 0.0
        %1243 = vmatprep.subr.mxu0 0.0
        %1244 = vmatpush1.msra.mxu0 0.0
        %1245 = vmatprep.subr.mxu0 0.0
        %1246 = vmatpush1.msra.mxu0 0.0
        %1247 = vmatprep.subr.mxu0 0.0
        %1248 = vmatpush1.msra.mxu0 0.0
        %1249 = vmatprep.subr.mxu0 0.0
        %1250 = vmatpush1.msra.mxu0 0.0
        %1251 = vmatprep.subr.mxu0 0.0
        %1252 = vmatpush1.msra.mxu0 0.0
        %1253 = vmatprep.subr.mxu0 0.0
        %1254 = vmatpush1.msra.mxu0 0.0
        %1255 = vmatprep.subr.mxu0 0.0
        %1256 = vmatpush1.msra.mxu0 0.0
        %1257 = vmatprep.subr.mxu0 0.0
        %1258 = vmatpush1.msra.mxu0 0.0
        %1259 = vmatprep.subr.mxu0 0.0
        %1260 = vmatpush1.msra.mxu0 0.0
        %1261 = vmatprep.subr.mxu0 0.0
        %1262 = vmatpush1.msra.mxu0 0.0
        %1263 = vmatprep.subr.mxu0 0.0
        %1264 = vmatpush1.msra.mxu0 0.0
        %1265 = vmatprep.subr.mxu0 0.0
        %1266 = vmatpush1.msra.mxu0 0.0
        %1267 = vmatprep.subr.mxu0 0.0
        %1268 = vmatpush1.msra.mxu0 0.0
        %1269 = vmatprep.subr.mxu0 0.0
        %1270 = vmatpush1.msra.mxu0 0.0
        %1271 = vmatprep.subr.mxu0 0.0
        %1272 = vmatpush1.msra.mxu0 0.0
        %1273 = vmatprep.subr.mxu0 0.0
        %1274 = vmatpush1.msra.mxu0 0.0
        %1275 = vmatprep.subr.mxu0 0.0
        %1276 = vmatpush1.msra.mxu0 0.0
        %1277 = vmatprep.subr.mxu0 0.0
        %1278 = vmatpush1.msra.mxu0 0.0
        %1279 = vmatprep.subr.mxu0 0.0
        %1280 = vmatpush1.msra.mxu0 0.0
        %1281 = vmatprep.subr.mxu0 0.0
        %1282 = vmatpush1.msra.mxu0 0.0
        %1283 = vmatprep.subr.mxu0 0.0
        %1284 = vmatpush1.msra.mxu0 0.0
        %1285 = vmatprep.subr.mxu0 0.0
        %1286 = vmatpush1.msra.mxu0 0.0
        %1287 = vmatprep.subr.mxu0 0.0
        %1288 = vmatpush1.msra.mxu0 0.0
        %1289 = vmatprep.subr.mxu0 0.0
        %1290 = vmatpush1.msra.mxu0 0.0
        %1291 = vmatprep.subr.mxu0 0.0
        %1292 = vmatpush1.msra.mxu0 0.0
        %1293 = vmatprep.subr.mxu0 0.0
        %1294 = vmatpush1.msra.mxu0 0.0
        %1295 = vmatprep.subr.mxu0 0.0
        %1296 = vmatpush1.msra.mxu0 0.0
        %1297 = vmatprep.subr.mxu0 0.0
        %1298 = vmatpush1.msra.mxu0 0.0
        %1299 = vmatprep.mubr.f32.mxu0 0.0
        %1300 = vmatmul.mubr.f32.gmra.mrb[0].mxu0 %v870
        %v1301 = vpop.f32.mrb[0].mxu0
        %v1302 = vadd.f32 0.0, %v1301
        %v1303 = vpop.f32.mrb[0].mxu0
        %1304 = vmatprep.mubr.f32.mxu0 0.0
        %1305 = vmatmul.mubr.f32.gmra.mrb[0].mxu0 %v872
        %v1306 = vpop.f32.mrb[0].mxu0
        %v1307 = vadd.f32 0.0, %v1306
        %v1308 = vpop.f32.mrb[0].mxu0
        %1309 = vmatprep.mubr.f32.mxu0 0.0
        %1310 = vmatmul.mubr.f32.gmra.mrb[0].mxu0 %v874
        %v1311 = vpop.f32.mrb[0].mxu0
        %v1312 = vadd.f32 0.0, %v1311
        %v1313 = vpop.f32.mrb[0].mxu0
        %1314 = vmatprep.mubr.f32.mxu0 0.0
        %1315 = vmatmul.mubr.f32.gmra.mrb[0].mxu0 %v876
        %v1316 = vpop.f32.mrb[0].mxu0
        %v1317 = vadd.f32 0.0, %v1316
        %v1318 = vpop.f32.mrb[0].mxu0
        %1319 = vmatprep.mubr.f32.mxu0 0.0
        %1320 = vmatmul.mubr.f32.gmra.mrb[0].mxu0 %v878
        %v1321 = vpop.f32.mrb[0].mxu0
        %v1322 = vadd.f32 0.0, %v1321
        %v1323 = vpop.f32.mrb[0].mxu0
        %1324 = vmatprep.mubr.f32.mxu0 0.0
        %1325 = vmatmul.mubr.f32.gmra.mrb[0].mxu0 %v880
        %v1326 = vpop.f32.mrb[0].mxu0
        %v1327 = vadd.f32 0.0, %v1326
        %v1328 = vpop.f32.mrb[0].mxu0
        %1329 = vmatprep.mubr.f32.mxu0 0.0
        %1330 = vmatmul.mubr.f32.gmra.mrb[0].mxu0 %v882
        %v1331 = vpop.f32.mrb[0].mxu0
        %v1332 = vadd.f32 0.0, %v1331
        %v1333 = vpop.f32.mrb[0].mxu0
        %1334 = vmatprep.mubr.f32.mxu0 0.0
        %1335 = vmatmul.mubr.f32.gmra.mrb[0].mxu0 %v1233
        %v1336 = vpop.f32.mrb[0].mxu0
        %v1337 = vadd.f32 0.0, %v1336
        %v1338 = vpop.f32.mrb[0].mxu0
        %1339 = vdwg.mxu0
        %v1340 = vadd.f32 %v1223, %v1302
        %v1341 = vadd.f32 %v1224, %v1307
        %v1342 = vadd.f32 %v1225, %v1312
        %v1343 = vadd.f32 %v1226, %v1317
        %v1344 = vadd.f32 %v1227, %v1322
        %v1345 = vadd.f32 %v1228, %v1327
        %v1346 = vadd.f32 %v1229, %v1332
        %v1347 = vadd.f32 %v1230, %v1337
        %s1348 = scalar_lea.vmem %s4, 48
        %v1349 = vld [vmem:[%s1348] sm:$0xff]
        %v1350 = vsel %vm623, %v536, 0
        %1352 = vmatprep.subr.mxu0 0.0
        %1353 = vmatpush1.msra.mxu0 %v1349
        %1354 = vmatprep.subr.mxu0 0.0
        %1355 = vmatpush1.msra.mxu0 0.0
        %1356 = vmatprep.subr.mxu0 0.0
        %1357 = vmatpush1.msra.mxu0 0.0
        %1358 = vmatprep.subr.mxu0 0.0
        %1359 = vmatpush1.msra.mxu0 0.0
        %1360 = vmatprep.subr.mxu0 0.0
        %1361 = vmatpush1.msra.mxu0 0.0
        %1362 = vmatprep.subr.mxu0 0.0
        %1363 = vmatpush1.msra.mxu0 0.0
        %1364 = vmatprep.subr.mxu0 0.0
        %1365 = vmatpush1.msra.mxu0 0.0
        %1366 = vmatprep.subr.mxu0 0.0
        %1367 = vmatpush1.msra.mxu0 0.0
        %1368 = vmatprep.subr.mxu0 0.0
        %1369 = vmatpush1.msra.mxu0 0.0
        %1370 = vmatprep.subr.mxu0 0.0
        %1371 = vmatpush1.msra.mxu0 0.0
        %1372 = vmatprep.subr.mxu0 0.0
        %1373 = vmatpush1.msra.mxu0 0.0
        %1374 = vmatprep.subr.mxu0 0.0
        %1375 = vmatpush1.msra.mxu0 0.0
        %1376 = vmatprep.subr.mxu0 0.0
        %1377 = vmatpush1.msra.mxu0 0.0
        %1378 = vmatprep.subr.mxu0 0.0
        %1379 = vmatpush1.msra.mxu0 0.0
        %1380 = vmatprep.subr.mxu0 0.0
        %1381 = vmatpush1.msra.mxu0 0.0
        %1382 = vmatprep.subr.mxu0 0.0
        %1383 = vmatpush1.msra.mxu0 0.0
        %1384 = vmatprep.subr.mxu0 0.0
        %1385 = vmatpush1.msra.mxu0 0.0
        %1386 = vmatprep.subr.mxu0 0.0
        %1387 = vmatpush1.msra.mxu0 0.0
        %1388 = vmatprep.subr.mxu0 0.0
        %1389 = vmatpush1.msra.mxu0 0.0
        %1390 = vmatprep.subr.mxu0 0.0
        %1391 = vmatpush1.msra.mxu0 0.0
        %1392 = vmatprep.subr.mxu0 0.0
        %1393 = vmatpush1.msra.mxu0 0.0
        %1394 = vmatprep.subr.mxu0 0.0
        %1395 = vmatpush1.msra.mxu0 0.0
        %1396 = vmatprep.subr.mxu0 0.0
        %1397 = vmatpush1.msra.mxu0 0.0
        %1398 = vmatprep.subr.mxu0 0.0
        %1399 = vmatpush1.msra.mxu0 0.0
        %1400 = vmatprep.subr.mxu0 0.0
        %1401 = vmatpush1.msra.mxu0 0.0
        %1402 = vmatprep.subr.mxu0 0.0
        %1403 = vmatpush1.msra.mxu0 0.0
        %1404 = vmatprep.subr.mxu0 0.0
        %1405 = vmatpush1.msra.mxu0 0.0
        %1406 = vmatprep.subr.mxu0 0.0
        %1407 = vmatpush1.msra.mxu0 0.0
        %1408 = vmatprep.subr.mxu0 0.0
        %1409 = vmatpush1.msra.mxu0 0.0
        %1410 = vmatprep.subr.mxu0 0.0
        %1411 = vmatpush1.msra.mxu0 0.0
        %1412 = vmatprep.subr.mxu0 0.0
        %1413 = vmatpush1.msra.mxu0 0.0
        %1414 = vmatprep.subr.mxu0 0.0
        %1415 = vmatpush1.msra.mxu0 0.0
        %1416 = vmatprep.mubr.f32.mxu0 0.0
        %1417 = vmatmul.mubr.f32.gmra.mrb[0].mxu0 %v749
        %v1418 = vpop.f32.mrb[0].mxu0
        %v1419 = vadd.f32 0.0, %v1418
        %v1420 = vpop.f32.mrb[0].mxu0
        %1421 = vmatprep.mubr.f32.mxu0 0.0
        %1422 = vmatmul.mubr.f32.gmra.mrb[0].mxu0 %v751
        %v1423 = vpop.f32.mrb[0].mxu0
        %v1424 = vadd.f32 0.0, %v1423
        %v1425 = vpop.f32.mrb[0].mxu0
        %1426 = vmatprep.mubr.f32.mxu0 0.0
        %1427 = vmatmul.mubr.f32.gmra.mrb[0].mxu0 %v753
        %v1428 = vpop.f32.mrb[0].mxu0
        %v1429 = vadd.f32 0.0, %v1428
        %v1430 = vpop.f32.mrb[0].mxu0
        %1431 = vmatprep.mubr.f32.mxu0 0.0
        %1432 = vmatmul.mubr.f32.gmra.mrb[0].mxu0 %v755
        %v1433 = vpop.f32.mrb[0].mxu0
        %v1434 = vadd.f32 0.0, %v1433
        %v1435 = vpop.f32.mrb[0].mxu0
        %1436 = vmatprep.mubr.f32.mxu0 0.0
        %1437 = vmatmul.mubr.f32.gmra.mrb[0].mxu0 %v757
        %v1438 = vpop.f32.mrb[0].mxu0
        %v1439 = vadd.f32 0.0, %v1438
        %v1440 = vpop.f32.mrb[0].mxu0
        %1441 = vmatprep.mubr.f32.mxu0 0.0
        %1442 = vmatmul.mubr.f32.gmra.mrb[0].mxu0 %v759
        %v1443 = vpop.f32.mrb[0].mxu0
        %v1444 = vadd.f32 0.0, %v1443
        %v1445 = vpop.f32.mrb[0].mxu0
        %1446 = vmatprep.mubr.f32.mxu0 0.0
        %1447 = vmatmul.mubr.f32.gmra.mrb[0].mxu0 %v999
        %v1448 = vpop.f32.mrb[0].mxu0
        %v1449 = vadd.f32 0.0, %v1448
        %v1450 = vpop.f32.mrb[0].mxu0
        %1451 = vmatprep.mubr.f32.mxu0 0.0
        %1452 = vmatmul.mubr.f32.gmra.mrb[0].mxu0 %v1350
        %v1453 = vpop.f32.mrb[0].mxu0
        %v1454 = vadd.f32 0.0, %v1453
        %v1455 = vpop.f32.mrb[0].mxu0
        %1456 = vdwg.mxu0
        %v1457 = vadd.f32 %v1340, %v1419
        %v1458 = vadd.f32 %v1341, %v1424
        %v1459 = vadd.f32 %v1342, %v1429
        %v1460 = vadd.f32 %v1343, %v1434
        %v1461 = vadd.f32 %v1344, %v1439
        %v1462 = vadd.f32 %v1345, %v1444
        %v1463 = vadd.f32 %v1346, %v1449
        %v1464 = vadd.f32 %v1347, %v1454
        %s1465 = scalar_lea.vmem %s4, 56
        %v1466 = vld [vmem:[%s1465] sm:$0xff]
        %v1467 = vsel %vm623, %v616, 0
        %1469 = vmatprep.subr.mxu0 0.0
        %1470 = vmatpush1.msra.mxu0 %v1466
        %1471 = vmatprep.subr.mxu0 0.0
        %1472 = vmatpush1.msra.mxu0 0.0
        %1473 = vmatprep.subr.mxu0 0.0
        %1474 = vmatpush1.msra.mxu0 0.0
        %1475 = vmatprep.subr.mxu0 0.0
        %1476 = vmatpush1.msra.mxu0 0.0
        %1477 = vmatprep.subr.mxu0 0.0
        %1478 = vmatpush1.msra.mxu0 0.0
        %1479 = vmatprep.subr.mxu0 0.0
        %1480 = vmatpush1.msra.mxu0 0.0
        %1481 = vmatprep.subr.mxu0 0.0
        %1482 = vmatpush1.msra.mxu0 0.0
        %1483 = vmatprep.subr.mxu0 0.0
        %1484 = vmatpush1.msra.mxu0 0.0
        %1485 = vmatprep.subr.mxu0 0.0
        %1486 = vmatpush1.msra.mxu0 0.0
        %1487 = vmatprep.subr.mxu0 0.0
        %1488 = vmatpush1.msra.mxu0 0.0
        %1489 = vmatprep.subr.mxu0 0.0
        %1490 = vmatpush1.msra.mxu0 0.0
        %1491 = vmatprep.subr.mxu0 0.0
        %1492 = vmatpush1.msra.mxu0 0.0
        %1493 = vmatprep.subr.mxu0 0.0
        %1494 = vmatpush1.msra.mxu0 0.0
        %1495 = vmatprep.subr.mxu0 0.0
        %1496 = vmatpush1.msra.mxu0 0.0
        %1497 = vmatprep.subr.mxu0 0.0
        %1498 = vmatpush1.msra.mxu0 0.0
        %1499 = vmatprep.subr.mxu0 0.0
        %1500 = vmatpush1.msra.mxu0 0.0
        %1501 = vmatprep.subr.mxu0 0.0
        %1502 = vmatpush1.msra.mxu0 0.0
        %1503 = vmatprep.subr.mxu0 0.0
        %1504 = vmatpush1.msra.mxu0 0.0
        %1505 = vmatprep.subr.mxu0 0.0
        %1506 = vmatpush1.msra.mxu0 0.0
        %1507 = vmatprep.subr.mxu0 0.0
        %1508 = vmatpush1.msra.mxu0 0.0
        %1509 = vmatprep.subr.mxu0 0.0
        %1510 = vmatpush1.msra.mxu0 0.0
        %1511 = vmatprep.subr.mxu0 0.0
        %1512 = vmatpush1.msra.mxu0 0.0
        %1513 = vmatprep.subr.mxu0 0.0
        %1514 = vmatpush1.msra.mxu0 0.0
        %1515 = vmatprep.subr.mxu0 0.0
        %1516 = vmatpush1.msra.mxu0 0.0
        %1517 = vmatprep.subr.mxu0 0.0
        %1518 = vmatpush1.msra.mxu0 0.0
        %1519 = vmatprep.subr.mxu0 0.0
        %1520 = vmatpush1.msra.mxu0 0.0
        %1521 = vmatprep.subr.mxu0 0.0
        %1522 = vmatpush1.msra.mxu0 0.0
        %1523 = vmatprep.subr.mxu0 0.0
        %1524 = vmatpush1.msra.mxu0 0.0
        %1525 = vmatprep.subr.mxu0 0.0
        %1526 = vmatpush1.msra.mxu0 0.0
        %1527 = vmatprep.subr.mxu0 0.0
        %1528 = vmatpush1.msra.mxu0 0.0
        %1529 = vmatprep.subr.mxu0 0.0
        %1530 = vmatpush1.msra.mxu0 0.0
        %1531 = vmatprep.subr.mxu0 0.0
        %1532 = vmatpush1.msra.mxu0 0.0
        %1533 = vmatprep.mubr.f32.mxu0 0.0
        %1534 = vmatmul.mubr.f32.gmra.mrb[0].mxu0 %v628
        %v1535 = vpop.f32.mrb[0].mxu0
        %v1536 = vadd.f32 0.0, %v1535
        %v1537 = vpop.f32.mrb[0].mxu0
        %1538 = vmatprep.mubr.f32.mxu0 0.0
        %1539 = vmatmul.mubr.f32.gmra.mrb[0].mxu0 %v630
        %v1540 = vpop.f32.mrb[0].mxu0
        %v1541 = vadd.f32 0.0, %v1540
        %v1542 = vpop.f32.mrb[0].mxu0
        %1543 = vmatprep.mubr.f32.mxu0 0.0
        %1544 = vmatmul.mubr.f32.gmra.mrb[0].mxu0 %v632
        %v1545 = vpop.f32.mrb[0].mxu0
        %v1546 = vadd.f32 0.0, %v1545
        %v1547 = vpop.f32.mrb[0].mxu0
        %1548 = vmatprep.mubr.f32.mxu0 0.0
        %1549 = vmatmul.mubr.f32.gmra.mrb[0].mxu0 %v634
        %v1550 = vpop.f32.mrb[0].mxu0
        %v1551 = vadd.f32 0.0, %v1550
        %v1552 = vpop.f32.mrb[0].mxu0
        %1553 = vmatprep.mubr.f32.mxu0 0.0
        %1554 = vmatmul.mubr.f32.gmra.mrb[0].mxu0 %v636
        %v1555 = vpop.f32.mrb[0].mxu0
        %v1556 = vadd.f32 0.0, %v1555
        %v1557 = vpop.f32.mrb[0].mxu0
        %1558 = vmatprep.mubr.f32.mxu0 0.0
        %1559 = vmatmul.mubr.f32.gmra.mrb[0].mxu0 %v638
        %v1560 = vpop.f32.mrb[0].mxu0
        %v1561 = vadd.f32 0.0, %v1560
        %v1562 = vpop.f32.mrb[0].mxu0
        %1563 = vmatprep.mubr.f32.mxu0 0.0
        %1564 = vmatmul.mubr.f32.gmra.mrb[0].mxu0 %v1116
        %v1565 = vpop.f32.mrb[0].mxu0
        %v1566 = vadd.f32 0.0, %v1565
        %v1567 = vpop.f32.mrb[0].mxu0
        %1568 = vmatprep.mubr.f32.mxu0 0.0
        %1569 = vmatmul.mubr.f32.gmra.mrb[0].mxu0 %v1467
        %v1570 = vpop.f32.mrb[0].mxu0
        %v1571 = vadd.f32 0.0, %v1570
        %v1572 = vpop.f32.mrb[0].mxu0
        %1573 = vdwg.mxu0
        %v1574 = vadd.f32 %v1457, %v1536
        %v1575 = vadd.f32 %v1458, %v1541
        %v1576 = vadd.f32 %v1459, %v1546
        %v1577 = vadd.f32 %v1460, %v1551
        %v1578 = vadd.f32 %v1461, %v1556
        %v1579 = vadd.f32 %v1462, %v1561
        %v1580 = vadd.f32 %v1463, %v1566
        %v1581 = vadd.f32 %v1464, %v1571
        %s1582 = scalar_lea.vmem %s4, 64
        %v1583 = vld [vmem:[%s1582] sm:$0xff]
        %v1584 = vsel %vm623, %v619, 0
        %1586 = vmatprep.subr.mxu0 0.0
        %1587 = vmatpush1.msra.mxu0 %v1583
        %1588 = vmatprep.subr.mxu0 0.0
        %1589 = vmatpush1.msra.mxu0 0.0
        %1590 = vmatprep.subr.mxu0 0.0
        %1591 = vmatpush1.msra.mxu0 0.0
        %1592 = vmatprep.subr.mxu0 0.0
        %1593 = vmatpush1.msra.mxu0 0.0
        %1594 = vmatprep.subr.mxu0 0.0
        %1595 = vmatpush1.msra.mxu0 0.0
        %1596 = vmatprep.subr.mxu0 0.0
        %1597 = vmatpush1.msra.mxu0 0.0
        %1598 = vmatprep.subr.mxu0 0.0
        %1599 = vmatpush1.msra.mxu0 0.0
        %1600 = vmatprep.subr.mxu0 0.0
        %1601 = vmatpush1.msra.mxu0 0.0
        %1602 = vmatprep.subr.mxu0 0.0
        %1603 = vmatpush1.msra.mxu0 0.0
        %1604 = vmatprep.subr.mxu0 0.0
        %1605 = vmatpush1.msra.mxu0 0.0
        %1606 = vmatprep.subr.mxu0 0.0
        %1607 = vmatpush1.msra.mxu0 0.0
        %1608 = vmatprep.subr.mxu0 0.0
        %1609 = vmatpush1.msra.mxu0 0.0
        %1610 = vmatprep.subr.mxu0 0.0
        %1611 = vmatpush1.msra.mxu0 0.0
        %1612 = vmatprep.subr.mxu0 0.0
        %1613 = vmatpush1.msra.mxu0 0.0
        %1614 = vmatprep.subr.mxu0 0.0
        %1615 = vmatpush1.msra.mxu0 0.0
        %1616 = vmatprep.subr.mxu0 0.0
        %1617 = vmatpush1.msra.mxu0 0.0
        %1618 = vmatprep.subr.mxu0 0.0
        %1619 = vmatpush1.msra.mxu0 0.0
        %1620 = vmatprep.subr.mxu0 0.0
        %1621 = vmatpush1.msra.mxu0 0.0
        %1622 = vmatprep.subr.mxu0 0.0
        %1623 = vmatpush1.msra.mxu0 0.0
        %1624 = vmatprep.subr.mxu0 0.0
        %1625 = vmatpush1.msra.mxu0 0.0
        %1626 = vmatprep.subr.mxu0 0.0
        %1627 = vmatpush1.msra.mxu0 0.0
        %1628 = vmatprep.subr.mxu0 0.0
        %1629 = vmatpush1.msra.mxu0 0.0
        %1630 = vmatprep.subr.mxu0 0.0
        %1631 = vmatpush1.msra.mxu0 0.0
        %1632 = vmatprep.subr.mxu0 0.0
        %1633 = vmatpush1.msra.mxu0 0.0
        %1634 = vmatprep.subr.mxu0 0.0
        %1635 = vmatpush1.msra.mxu0 0.0
        %1636 = vmatprep.subr.mxu0 0.0
        %1637 = vmatpush1.msra.mxu0 0.0
        %1638 = vmatprep.subr.mxu0 0.0
        %1639 = vmatpush1.msra.mxu0 0.0
        %1640 = vmatprep.subr.mxu0 0.0
        %1641 = vmatpush1.msra.mxu0 0.0
        %1642 = vmatprep.subr.mxu0 0.0
        %1643 = vmatpush1.msra.mxu0 0.0
        %1644 = vmatprep.subr.mxu0 0.0
        %1645 = vmatpush1.msra.mxu0 0.0
        %1646 = vmatprep.subr.mxu0 0.0
        %1647 = vmatpush1.msra.mxu0 0.0
        %1648 = vmatprep.subr.mxu0 0.0
        %1649 = vmatpush1.msra.mxu0 0.0
        %1650 = vmatprep.mubr.f32.mxu0 0.0
        %1651 = vmatmul.mubr.f32.gmra.mrb[0].mxu0 %v872
        %v1652 = vpop.f32.mrb[0].mxu0
        %v1653 = vadd.f32 0.0, %v1652
        %v1654 = vpop.f32.mrb[0].mxu0
        %1655 = vmatprep.mubr.f32.mxu0 0.0
        %1656 = vmatmul.mubr.f32.gmra.mrb[0].mxu0 %v874
        %v1657 = vpop.f32.mrb[0].mxu0
        %v1658 = vadd.f32 0.0, %v1657
        %v1659 = vpop.f32.mrb[0].mxu0
        %1660 = vmatprep.mubr.f32.mxu0 0.0
        %1661 = vmatmul.mubr.f32.gmra.mrb[0].mxu0 %v876
        %v1662 = vpop.f32.mrb[0].mxu0
        %v1663 = vadd.f32 0.0, %v1662
        %v1664 = vpop.f32.mrb[0].mxu0
        %1665 = vmatprep.mubr.f32.mxu0 0.0
        %1666 = vmatmul.mubr.f32.gmra.mrb[0].mxu0 %v878
        %v1667 = vpop.f32.mrb[0].mxu0
        %v1668 = vadd.f32 0.0, %v1667
        %v1669 = vpop.f32.mrb[0].mxu0
        %1670 = vmatprep.mubr.f32.mxu0 0.0
        %1671 = vmatmul.mubr.f32.gmra.mrb[0].mxu0 %v880
        %v1672 = vpop.f32.mrb[0].mxu0
        %v1673 = vadd.f32 0.0, %v1672
        %v1674 = vpop.f32.mrb[0].mxu0
        %1675 = vmatprep.mubr.f32.mxu0 0.0
        %1676 = vmatmul.mubr.f32.gmra.mrb[0].mxu0 %v882
        %v1677 = vpop.f32.mrb[0].mxu0
        %v1678 = vadd.f32 0.0, %v1677
        %v1679 = vpop.f32.mrb[0].mxu0
        %1680 = vmatprep.mubr.f32.mxu0 0.0
        %1681 = vmatmul.mubr.f32.gmra.mrb[0].mxu0 %v1233
        %v1682 = vpop.f32.mrb[0].mxu0
        %v1683 = vadd.f32 0.0, %v1682
        %v1684 = vpop.f32.mrb[0].mxu0
        %1685 = vmatprep.mubr.f32.mxu0 0.0
        %1686 = vmatmul.mubr.f32.gmra.mrb[0].mxu0 %v1584
        %v1687 = vpop.f32.mrb[0].mxu0
        %v1688 = vadd.f32 0.0, %v1687
        %v1689 = vpop.f32.mrb[0].mxu0
        %1690 = vdwg.mxu0
        %v1691 = vadd.f32 %v1574, %v1653
        %v1692 = vadd.f32 %v1575, %v1658
        %v1693 = vadd.f32 %v1576, %v1663
        %v1694 = vadd.f32 %v1577, %v1668
        %v1695 = vadd.f32 %v1578, %v1673
        %v1696 = vadd.f32 %v1579, %v1678
        %v1697 = vadd.f32 %v1580, %v1683
        %v1698 = vadd.f32 %v1581, %v1688
        %v1699 = vld [vmem:[%s5] sm:$0x1]
        %v1701 = vlaneseq
        %v1702 = vshrl.u32 %v1701, 7
        %v1703 = vsub.s32 0, %v1702
        %v1704 = vrot.slane %v1699, %v1703
        %v1706 = vmul.f32 %v1691, %v1704
        %v1707 = vmul.f32 %v1692, %v1704
        %v1708 = vmul.f32 %v1693, %v1704
        %v1709 = vmul.f32 %v1694, %v1704
        %v1710 = vmul.f32 %v1695, %v1704
        %v1711 = vmul.f32 %v1696, %v1704
        %v1712 = vmul.f32 %v1697, %v1704
        %v1713 = vmul.f32 %v1698, %v1704
        %v1714 = vld [vmem:[%s6] sm:$0x1]
        %v1716 = vlaneseq
        %v1717 = vshrl.u32 %v1716, 7
        %v1718 = vsub.s32 0, %v1717
        %v1719 = vrot.slane %v1714, %v1718
        %v1721 = vadd.f32 %v1706, %v1719
        %v1722 = vadd.f32 %v1707, %v1719
        %v1723 = vadd.f32 %v1708, %v1719
        %v1724 = vadd.f32 %v1709, %v1719
        %v1725 = vadd.f32 %v1710, %v1719
        %v1726 = vadd.f32 %v1711, %v1719
        %v1727 = vadd.f32 %v1712, %v1719
        %v1728 = vadd.f32 %v1713, %v1719
        %v1729 = vmax.f32 %v1721, 0.0
        %v1730 = vmax.f32 %v1722, 0.0
        %v1731 = vmax.f32 %v1723, 0.0
        %v1732 = vmax.f32 %v1724, 0.0
        %v1733 = vmax.f32 %v1725, 0.0
        %v1734 = vmax.f32 %v1726, 0.0
        %v1735 = vmax.f32 %v1727, 0.0
        %v1736 = vmax.f32 %v1728, 0.0
        %1737 = vst.msk [vmem:[#allocation2] sm:$0xff] %vm623, 0.0
        %vm1738 = vcmask 58368
        %1739 = vst.msk [vmem:[#allocation2 + $0x8] sm:$0x3] %vm1738, 0.0
        %1740 = vst.msk [vmem:[#allocation2 + $0x10] sm:$0xff] %vm623, 0.0
        %1741 = vst.msk [vmem:[#allocation2 + $0x18] sm:$0x3] %vm1738, 0.0
        %1742 = vst.msk [vmem:[#allocation2 + $0x20] sm:$0xff] %vm623, 0.0
        %1743 = vst.msk [vmem:[#allocation2 + $0x28] sm:$0x3] %vm1738, 0.0
        %1744 = vst.msk [vmem:[#allocation2 + $0x30] sm:$0xff] %vm623, 0.0
        %1745 = vst.msk [vmem:[#allocation2 + $0x38] sm:$0x3] %vm1738, 0.0
        %1746 = vst.msk [vmem:[#allocation2 + $0x40] sm:$0xff] %vm623, 0.0
        %1747 = vst.msk [vmem:[#allocation2 + $0x48] sm:$0x3] %vm1738, 0.0
        %1748 = vst.msk [vmem:[#allocation2 + $0x50] sm:$0xff] %vm623, 0.0
        %1749 = vst.msk [vmem:[#allocation2 + $0x58] sm:$0x3] %vm1738, 0.0
        %1750 = vst.msk [vmem:[#allocation2 + $0x60] sm:$0xff] %vm623, 0.0
        %1751 = vst.msk [vmem:[#allocation2 + $0x68] sm:$0x3] %vm1738, 0.0
        %1752 = vst.msk [vmem:[#allocation2 + $0x70] sm:$0xff] %vm623, 0.0
        %1753 = vst.msk [vmem:[#allocation2 + $0x78] sm:$0x3] %vm1738, 0.0
        %1754 = vst.msk [vmem:[#allocation2 + $0x80] sm:$0xff] %vm623, 0.0
        %1755 = vst.msk [vmem:[#allocation2 + $0x88] sm:$0x3] %vm1738, 0.0
        %1756 = vst.msk [vmem:[#allocation2 + $0x90] sm:$0xff] %vm623, 0.0
        %1757 = vst.msk [vmem:[#allocation2 + $0x98] sm:$0x3] %vm1738, 0.0
        %s1758 = scalar_lea.vmem [#allocation2], 16
        %1759 = vst.msk [vmem:[%s1758 + $0x1] sm:$0xff] %vm623, %v1729
        %1760 = vst.msk [vmem:[%s1758 + $0x11] sm:$0xff] %vm623, %v1730
        %1761 = vst.msk [vmem:[%s1758 + $0x21] sm:$0xff] %vm623, %v1731
        %1762 = vst.msk [vmem:[%s1758 + $0x31] sm:$0xff] %vm623, %v1732
        %1763 = vst.msk [vmem:[%s1758 + $0x41] sm:$0xff] %vm623, %v1733
        %1764 = vst.msk [vmem:[%s1758 + $0x51] sm:$0xff] %vm623, %v1734
        %1765 = vst.msk [vmem:[%s1758 + $0x61] sm:$0xff] %vm623, %v1735
        %1766 = vst.msk [vmem:[%s1758 + $0x71] sm:$0xff] %vm623, %v1736
        %v1767 = vld [vmem:[#allocation2] sm:$0xff]
        %v1768 = vld [vmem:[#allocation2 + $0x8] sm:$0x3]
        %v1769 = vld [vmem:[#allocation2 + $0x10] sm:$0xff]
        %v1770 = vld [vmem:[#allocation2 + $0x18] sm:$0x3]
        %v1771 = vld [vmem:[#allocation2 + $0x20] sm:$0xff]
        %v1772 = vld [vmem:[#allocation2 + $0x28] sm:$0x3]
        %v1773 = vld [vmem:[#allocation2 + $0x30] sm:$0xff]
        %v1774 = vld [vmem:[#allocation2 + $0x38] sm:$0x3]
        %v1775 = vld [vmem:[#allocation2 + $0x40] sm:$0xff]
        %v1776 = vld [vmem:[#allocation2 + $0x48] sm:$0x3]
        %v1777 = vld [vmem:[#allocation2 + $0x50] sm:$0xff]
        %v1778 = vld [vmem:[#allocation2 + $0x58] sm:$0x3]
        %v1779 = vld [vmem:[#allocation2 + $0x60] sm:$0xff]
        %v1780 = vld [vmem:[#allocation2 + $0x68] sm:$0x3]
        %v1781 = vld [vmem:[#allocation2 + $0x70] sm:$0xff]
        %v1782 = vld [vmem:[#allocation2 + $0x78] sm:$0x3]
        %v1783 = vld [vmem:[#allocation2 + $0x80] sm:$0xff]
        %v1784 = vld [vmem:[#allocation2 + $0x88] sm:$0x3]
        %v1785 = vld [vmem:[#allocation2 + $0x90] sm:$0xff]
        %v1786 = vld [vmem:[#allocation2 + $0x98] sm:$0x3]
        %v1787 = vld [vmem:[%s7] sm:$0xff]
        %v1804 = vrot.slane %v1767, 1
        %v1805 = vrot.slane %v1768, 1
        %v1806 = vsel %vm554, %v1804, %v1805
        %v1807 = vrot.slane %v1769, 1
        %v1808 = vrot.slane %v1770, 1
        %v1809 = vsel %vm554, %v1807, %v1808
        %v1810 = vrot.slane %v1771, 1
        %v1811 = vrot.slane %v1772, 1
        %v1812 = vsel %vm554, %v1810, %v1811
        %v1813 = vrot.slane %v1773, 1
        %v1814 = vrot.slane %v1774, 1
        %v1815 = vsel %vm554, %v1813, %v1814
        %v1816 = vrot.slane %v1775, 1
        %v1817 = vrot.slane %v1776, 1
        %v1818 = vsel %vm554, %v1816, %v1817
        %v1819 = vrot.slane %v1777, 1
        %v1820 = vrot.slane %v1778, 1
        %v1821 = vsel %vm554, %v1819, %v1820
        %v1822 = vrot.slane %v1779, 1
        %v1823 = vrot.slane %v1780, 1
        %v1824 = vsel %vm554, %v1822, %v1823
        %v1825 = vrot.slane %v1781, 1
        %v1826 = vrot.slane %v1782, 1
        %v1827 = vsel %vm554, %v1825, %v1826
        %s1828 = scalar_lea.vmem %s7, 8
        %v1829 = vld [vmem:[%s1828] sm:$0xff]
        %v1830 = vsel %vm623, %v1806, 0
        %v1832 = vsel %vm623, %v1809, 0
        %v1834 = vsel %vm623, %v1812, 0
        %v1836 = vsel %vm623, %v1815, 0
        %v1838 = vsel %vm623, %v1818, 0
        %v1840 = vsel %vm623, %v1821, 0
        %v1842 = vsel %vm623, %v1824, 0
        %v1844 = vsel %vm623, %v1827, 0
        %1846 = vmatprep.subr.mxu0 0.0
        %1847 = vmatpush1.msra.mxu0 %v1829
        %1848 = vmatprep.subr.mxu0 0.0
        %1849 = vmatpush1.msra.mxu0 0.0
        %1850 = vmatprep.subr.mxu0 0.0
        %1851 = vmatpush1.msra.mxu0 0.0
        %1852 = vmatprep.subr.mxu0 0.0
        %1853 = vmatpush1.msra.mxu0 0.0
        %1854 = vmatprep.subr.mxu0 0.0
        %1855 = vmatpush1.msra.mxu0 0.0
        %1856 = vmatprep.subr.mxu0 0.0
        %1857 = vmatpush1.msra.mxu0 0.0
        %1858 = vmatprep.subr.mxu0 0.0
        %1859 = vmatpush1.msra.mxu0 0.0
        %1860 = vmatprep.subr.mxu0 0.0
        %1861 = vmatpush1.msra.mxu0 0.0
        %1862 = vmatprep.subr.mxu0 0.0
        %1863 = vmatpush1.msra.mxu0 0.0
        %1864 = vmatprep.subr.mxu0 0.0
        %1865 = vmatpush1.msra.mxu0 0.0
        %1866 = vmatprep.subr.mxu0 0.0
        %1867 = vmatpush1.msra.mxu0 0.0
        %1868 = vmatprep.subr.mxu0 0.0
        %1869 = vmatpush1.msra.mxu0 0.0
        %1870 = vmatprep.subr.mxu0 0.0
        %1871 = vmatpush1.msra.mxu0 0.0
        %1872 = vmatprep.subr.mxu0 0.0
        %1873 = vmatpush1.msra.mxu0 0.0
        %1874 = vmatprep.subr.mxu0 0.0
        %1875 = vmatpush1.msra.mxu0 0.0
        %1876 = vmatprep.subr.mxu0 0.0
        %1877 = vmatpush1.msra.mxu0 0.0
        %1878 = vmatprep.subr.mxu0 0.0
        %1879 = vmatpush1.msra.mxu0 0.0
        %1880 = vmatprep.subr.mxu0 0.0
        %1881 = vmatpush1.msra.mxu0 0.0
        %1882 = vmatprep.subr.mxu0 0.0
        %1883 = vmatpush1.msra.mxu0 0.0
        %1884 = vmatprep.subr.mxu0 0.0
        %1885 = vmatpush1.msra.mxu0 0.0
        %1886 = vmatprep.subr.mxu0 0.0
        %1887 = vmatpush1.msra.mxu0 0.0
        %1888 = vmatprep.subr.mxu0 0.0
        %1889 = vmatpush1.msra.mxu0 0.0
        %1890 = vmatprep.subr.mxu0 0.0
        %1891 = vmatpush1.msra.mxu0 0.0
        %1892 = vmatprep.subr.mxu0 0.0
        %1893 = vmatpush1.msra.mxu0 0.0
        %1894 = vmatprep.subr.mxu0 0.0
        %1895 = vmatpush1.msra.mxu0 0.0
        %1896 = vmatprep.subr.mxu0 0.0
        %1897 = vmatpush1.msra.mxu0 0.0
        %1898 = vmatprep.subr.mxu0 0.0
        %1899 = vmatpush1.msra.mxu0 0.0
        %1900 = vmatprep.subr.mxu0 0.0
        %1901 = vmatpush1.msra.mxu0 0.0
        %1902 = vmatprep.subr.mxu0 0.0
        %1903 = vmatpush1.msra.mxu0 0.0
        %1904 = vmatprep.subr.mxu0 0.0
        %1905 = vmatpush1.msra.mxu0 0.0
        %1906 = vmatprep.subr.mxu0 0.0
        %1907 = vmatpush1.msra.mxu0 0.0
        %1908 = vmatprep.subr.mxu0 0.0
        %1909 = vmatpush1.msra.mxu0 0.0
        %1910 = vmatprep.mubr.f32.mxu0 0.0
        %1911 = vmatmul.mubr.f32.gmra.mrb[0].mxu0 %v1830
        %v1912 = vpop.f32.mrb[0].mxu0
        %v1913 = vadd.f32 0.0, %v1912
        %v1914 = vpop.f32.mrb[0].mxu0
        %1915 = vmatprep.mubr.f32.mxu0 0.0
        %1916 = vmatmul.mubr.f32.gmra.mrb[0].mxu0 %v1832
        %v1917 = vpop.f32.mrb[0].mxu0
        %v1918 = vadd.f32 0.0, %v1917
        %v1919 = vpop.f32.mrb[0].mxu0
        %1920 = vmatprep.mubr.f32.mxu0 0.0
        %1921 = vmatmul.mubr.f32.gmra.mrb[0].mxu0 %v1834
        %v1922 = vpop.f32.mrb[0].mxu0
        %v1923 = vadd.f32 0.0, %v1922
        %v1924 = vpop.f32.mrb[0].mxu0
        %1925 = vmatprep.mubr.f32.mxu0 0.0
        %1926 = vmatmul.mubr.f32.gmra.mrb[0].mxu0 %v1836
        %v1927 = vpop.f32.mrb[0].mxu0
        %v1928 = vadd.f32 0.0, %v1927
        %v1929 = vpop.f32.mrb[0].mxu0
        %1930 = vmatprep.mubr.f32.mxu0 0.0
        %1931 = vmatmul.mubr.f32.gmra.mrb[0].mxu0 %v1838
        %v1932 = vpop.f32.mrb[0].mxu0
        %v1933 = vadd.f32 0.0, %v1932
        %v1934 = vpop.f32.mrb[0].mxu0
        %1935 = vmatprep.mubr.f32.mxu0 0.0
        %1936 = vmatmul.mubr.f32.gmra.mrb[0].mxu0 %v1840
        %v1937 = vpop.f32.mrb[0].mxu0
        %v1938 = vadd.f32 0.0, %v1937
        %v1939 = vpop.f32.mrb[0].mxu0
        %1940 = vmatprep.mubr.f32.mxu0 0.0
        %1941 = vmatmul.mubr.f32.gmra.mrb[0].mxu0 %v1842
        %v1942 = vpop.f32.mrb[0].mxu0
        %v1943 = vadd.f32 0.0, %v1942
        %v1944 = vpop.f32.mrb[0].mxu0
        %1945 = vmatprep.mubr.f32.mxu0 0.0
        %1946 = vmatmul.mubr.f32.gmra.mrb[0].mxu0 %v1844
        %v1947 = vpop.f32.mrb[0].mxu0
        %v1948 = vadd.f32 0.0, %v1947
        %v1949 = vpop.f32.mrb[0].mxu0
        %1950 = vdwg.mxu0
        %v1951 = vsel %vm623, %v1767, 0
        %v1953 = vsel %vm623, %v1769, 0
        %v1955 = vsel %vm623, %v1771, 0
        %v1957 = vsel %vm623, %v1773, 0
        %v1959 = vsel %vm623, %v1775, 0
        %v1961 = vsel %vm623, %v1777, 0
        %v1963 = vsel %vm623, %v1779, 0
        %v1965 = vsel %vm623, %v1781, 0
        %1967 = vmatprep.subr.mxu0 0.0
        %1968 = vmatpush1.msra.mxu0 %v1787
        %1969 = vmatprep.subr.mxu0 0.0
        %1970 = vmatpush1.msra.mxu0 0.0
        %1971 = vmatprep.subr.mxu0 0.0
        %1972 = vmatpush1.msra.mxu0 0.0
        %1973 = vmatprep.subr.mxu0 0.0
        %1974 = vmatpush1.msra.mxu0 0.0
        %1975 = vmatprep.subr.mxu0 0.0
        %1976 = vmatpush1.msra.mxu0 0.0
        %1977 = vmatprep.subr.mxu0 0.0
        %1978 = vmatpush1.msra.mxu0 0.0
        %1979 = vmatprep.subr.mxu0 0.0
        %1980 = vmatpush1.msra.mxu0 0.0
        %1981 = vmatprep.subr.mxu0 0.0
        %1982 = vmatpush1.msra.mxu0 0.0
        %1983 = vmatprep.subr.mxu0 0.0
        %1984 = vmatpush1.msra.mxu0 0.0
        %1985 = vmatprep.subr.mxu0 0.0
        %1986 = vmatpush1.msra.mxu0 0.0
        %1987 = vmatprep.subr.mxu0 0.0
        %1988 = vmatpush1.msra.mxu0 0.0
        %1989 = vmatprep.subr.mxu0 0.0
        %1990 = vmatpush1.msra.mxu0 0.0
        %1991 = vmatprep.subr.mxu0 0.0
        %1992 = vmatpush1.msra.mxu0 0.0
        %1993 = vmatprep.subr.mxu0 0.0
        %1994 = vmatpush1.msra.mxu0 0.0
        %1995 = vmatprep.subr.mxu0 0.0
        %1996 = vmatpush1.msra.mxu0 0.0
        %1997 = vmatprep.subr.mxu0 0.0
        %1998 = vmatpush1.msra.mxu0 0.0
        %1999 = vmatprep.subr.mxu0 0.0
        %2000 = vmatpush1.msra.mxu0 0.0
        %2001 = vmatprep.subr.mxu0 0.0
        %2002 = vmatpush1.msra.mxu0 0.0
        %2003 = vmatprep.subr.mxu0 0.0
        %2004 = vmatpush1.msra.mxu0 0.0
        %2005 = vmatprep.subr.mxu0 0.0
        %2006 = vmatpush1.msra.mxu0 0.0
        %2007 = vmatprep.subr.mxu0 0.0
        %2008 = vmatpush1.msra.mxu0 0.0
        %2009 = vmatprep.subr.mxu0 0.0
        %2010 = vmatpush1.msra.mxu0 0.0
        %2011 = vmatprep.subr.mxu0 0.0
        %2012 = vmatpush1.msra.mxu0 0.0
        %2013 = vmatprep.subr.mxu0 0.0
        %2014 = vmatpush1.msra.mxu0 0.0
        %2015 = vmatprep.subr.mxu0 0.0
        %2016 = vmatpush1.msra.mxu0 0.0
        %2017 = vmatprep.subr.mxu0 0.0
        %2018 = vmatpush1.msra.mxu0 0.0
        %2019 = vmatprep.subr.mxu0 0.0
        %2020 = vmatpush1.msra.mxu0 0.0
        %2021 = vmatprep.subr.mxu0 0.0
        %2022 = vmatpush1.msra.mxu0 0.0
        %2023 = vmatprep.subr.mxu0 0.0
        %2024 = vmatpush1.msra.mxu0 0.0
        %2025 = vmatprep.subr.mxu0 0.0
        %2026 = vmatpush1.msra.mxu0 0.0
        %2027 = vmatprep.subr.mxu0 0.0
        %2028 = vmatpush1.msra.mxu0 0.0
        %2029 = vmatprep.subr.mxu0 0.0
        %2030 = vmatpush1.msra.mxu0 0.0
        %2031 = vmatprep.mubr.f32.mxu0 0.0
        %2032 = vmatmul.mubr.f32.gmra.mrb[0].mxu0 %v1951
        %v2033 = vpop.f32.mrb[0].mxu0
        %v2034 = vadd.f32 %v1913, %v2033
        %v2035 = vpop.f32.mrb[0].mxu0
        %2036 = vmatprep.mubr.f32.mxu0 0.0
        %2037 = vmatmul.mubr.f32.gmra.mrb[0].mxu0 %v1953
        %v2038 = vpop.f32.mrb[0].mxu0
        %v2039 = vadd.f32 %v1918, %v2038
        %v2040 = vpop.f32.mrb[0].mxu0
        %2041 = vmatprep.mubr.f32.mxu0 0.0
        %2042 = vmatmul.mubr.f32.gmra.mrb[0].mxu0 %v1955
        %v2043 = vpop.f32.mrb[0].mxu0
        %v2044 = vadd.f32 %v1923, %v2043
        %v2045 = vpop.f32.mrb[0].mxu0
        %2046 = vmatprep.mubr.f32.mxu0 0.0
        %2047 = vmatmul.mubr.f32.gmra.mrb[0].mxu0 %v1957
        %v2048 = vpop.f32.mrb[0].mxu0
        %v2049 = vadd.f32 %v1928, %v2048
        %v2050 = vpop.f32.mrb[0].mxu0
        %2051 = vmatprep.mubr.f32.mxu0 0.0
        %2052 = vmatmul.mubr.f32.gmra.mrb[0].mxu0 %v1959
        %v2053 = vpop.f32.mrb[0].mxu0
        %v2054 = vadd.f32 %v1933, %v2053
        %v2055 = vpop.f32.mrb[0].mxu0
        %2056 = vmatprep.mubr.f32.mxu0 0.0
        %2057 = vmatmul.mubr.f32.gmra.mrb[0].mxu0 %v1961
        %v2058 = vpop.f32.mrb[0].mxu0
        %v2059 = vadd.f32 %v1938, %v2058
        %v2060 = vpop.f32.mrb[0].mxu0
        %2061 = vmatprep.mubr.f32.mxu0 0.0
        %2062 = vmatmul.mubr.f32.gmra.mrb[0].mxu0 %v1963
        %v2063 = vpop.f32.mrb[0].mxu0
        %v2064 = vadd.f32 %v1943, %v2063
        %v2065 = vpop.f32.mrb[0].mxu0
        %2066 = vmatprep.mubr.f32.mxu0 0.0
        %2067 = vmatmul.mubr.f32.gmra.mrb[0].mxu0 %v1965
        %v2068 = vpop.f32.mrb[0].mxu0
        %v2069 = vadd.f32 %v1948, %v2068
        %v2070 = vpop.f32.mrb[0].mxu0
        %2071 = vdwg.mxu0
        %v2072 = vrot.slane %v1767, 2
        %v2073 = vrot.slane %v1768, 2
        %v2074 = vsel %vm579, %v2072, %v2073
        %v2075 = vrot.slane %v1769, 2
        %v2076 = vrot.slane %v1770, 2
        %v2077 = vsel %vm579, %v2075, %v2076
        %v2078 = vrot.slane %v1771, 2
        %v2079 = vrot.slane %v1772, 2
        %v2080 = vsel %vm579, %v2078, %v2079
        %v2081 = vrot.slane %v1773, 2
        %v2082 = vrot.slane %v1774, 2
        %v2083 = vsel %vm579, %v2081, %v2082
        %v2084 = vrot.slane %v1775, 2
        %v2085 = vrot.slane %v1776, 2
        %v2086 = vsel %vm579, %v2084, %v2085
        %v2087 = vrot.slane %v1777, 2
        %v2088 = vrot.slane %v1778, 2
        %v2089 = vsel %vm579, %v2087, %v2088
        %v2090 = vrot.slane %v1779, 2
        %v2091 = vrot.slane %v1780, 2
        %v2092 = vsel %vm579, %v2090, %v2091
        %v2093 = vrot.slane %v1781, 2
        %v2094 = vrot.slane %v1782, 2
        %v2095 = vsel %vm579, %v2093, %v2094
        %s2096 = scalar_lea.vmem %s7, 16
        %v2097 = vld [vmem:[%s2096] sm:$0xff]
        %v2098 = vsel %vm623, %v2074, 0
        %v2100 = vsel %vm623, %v2077, 0
        %v2102 = vsel %vm623, %v2080, 0
        %v2104 = vsel %vm623, %v2083, 0
        %v2106 = vsel %vm623, %v2086, 0
        %v2108 = vsel %vm623, %v2089, 0
        %v2110 = vsel %vm623, %v2092, 0
        %v2112 = vsel %vm623, %v2095, 0
        %2114 = vmatprep.subr.mxu0 0.0
        %2115 = vmatpush1.msra.mxu0 %v2097
        %2116 = vmatprep.subr.mxu0 0.0
        %2117 = vmatpush1.msra.mxu0 0.0
        %2118 = vmatprep.subr.mxu0 0.0
        %2119 = vmatpush1.msra.mxu0 0.0
        %2120 = vmatprep.subr.mxu0 0.0
        %2121 = vmatpush1.msra.mxu0 0.0
        %2122 = vmatprep.subr.mxu0 0.0
        %2123 = vmatpush1.msra.mxu0 0.0
        %2124 = vmatprep.subr.mxu0 0.0
        %2125 = vmatpush1.msra.mxu0 0.0
        %2126 = vmatprep.subr.mxu0 0.0
        %2127 = vmatpush1.msra.mxu0 0.0
        %2128 = vmatprep.subr.mxu0 0.0
        %2129 = vmatpush1.msra.mxu0 0.0
        %2130 = vmatprep.subr.mxu0 0.0
        %2131 = vmatpush1.msra.mxu0 0.0
        %2132 = vmatprep.subr.mxu0 0.0
        %2133 = vmatpush1.msra.mxu0 0.0
        %2134 = vmatprep.subr.mxu0 0.0
        %2135 = vmatpush1.msra.mxu0 0.0
        %2136 = vmatprep.subr.mxu0 0.0
        %2137 = vmatpush1.msra.mxu0 0.0
        %2138 = vmatprep.subr.mxu0 0.0
        %2139 = vmatpush1.msra.mxu0 0.0
        %2140 = vmatprep.subr.mxu0 0.0
        %2141 = vmatpush1.msra.mxu0 0.0
        %2142 = vmatprep.subr.mxu0 0.0
        %2143 = vmatpush1.msra.mxu0 0.0
        %2144 = vmatprep.subr.mxu0 0.0
        %2145 = vmatpush1.msra.mxu0 0.0
        %2146 = vmatprep.subr.mxu0 0.0
        %2147 = vmatpush1.msra.mxu0 0.0
        %2148 = vmatprep.subr.mxu0 0.0
        %2149 = vmatpush1.msra.mxu0 0.0
        %2150 = vmatprep.subr.mxu0 0.0
        %2151 = vmatpush1.msra.mxu0 0.0
        %2152 = vmatprep.subr.mxu0 0.0
        %2153 = vmatpush1.msra.mxu0 0.0
        %2154 = vmatprep.subr.mxu0 0.0
        %2155 = vmatpush1.msra.mxu0 0.0
        %2156 = vmatprep.subr.mxu0 0.0
        %2157 = vmatpush1.msra.mxu0 0.0
        %2158 = vmatprep.subr.mxu0 0.0
        %2159 = vmatpush1.msra.mxu0 0.0
        %2160 = vmatprep.subr.mxu0 0.0
        %2161 = vmatpush1.msra.mxu0 0.0
        %2162 = vmatprep.subr.mxu0 0.0
        %2163 = vmatpush1.msra.mxu0 0.0
        %2164 = vmatprep.subr.mxu0 0.0
        %2165 = vmatpush1.msra.mxu0 0.0
        %2166 = vmatprep.subr.mxu0 0.0
        %2167 = vmatpush1.msra.mxu0 0.0
        %2168 = vmatprep.subr.mxu0 0.0
        %2169 = vmatpush1.msra.mxu0 0.0
        %2170 = vmatprep.subr.mxu0 0.0
        %2171 = vmatpush1.msra.mxu0 0.0
        %2172 = vmatprep.subr.mxu0 0.0
        %2173 = vmatpush1.msra.mxu0 0.0
        %2174 = vmatprep.subr.mxu0 0.0
        %2175 = vmatpush1.msra.mxu0 0.0
        %2176 = vmatprep.subr.mxu0 0.0
        %2177 = vmatpush1.msra.mxu0 0.0
        %2178 = vmatprep.mubr.f32.mxu0 0.0
        %2179 = vmatmul.mubr.f32.gmra.mrb[0].mxu0 %v2098
        %v2180 = vpop.f32.mrb[0].mxu0
        %v2181 = vadd.f32 0.0, %v2180
        %v2182 = vpop.f32.mrb[0].mxu0
        %2183 = vmatprep.mubr.f32.mxu0 0.0
        %2184 = vmatmul.mubr.f32.gmra.mrb[0].mxu0 %v2100
        %v2185 = vpop.f32.mrb[0].mxu0
        %v2186 = vadd.f32 0.0, %v2185
        %v2187 = vpop.f32.mrb[0].mxu0
        %2188 = vmatprep.mubr.f32.mxu0 0.0
        %2189 = vmatmul.mubr.f32.gmra.mrb[0].mxu0 %v2102
        %v2190 = vpop.f32.mrb[0].mxu0
        %v2191 = vadd.f32 0.0, %v2190
        %v2192 = vpop.f32.mrb[0].mxu0
        %2193 = vmatprep.mubr.f32.mxu0 0.0
        %2194 = vmatmul.mubr.f32.gmra.mrb[0].mxu0 %v2104
        %v2195 = vpop.f32.mrb[0].mxu0
        %v2196 = vadd.f32 0.0, %v2195
        %v2197 = vpop.f32.mrb[0].mxu0
        %2198 = vmatprep.mubr.f32.mxu0 0.0
        %2199 = vmatmul.mubr.f32.gmra.mrb[0].mxu0 %v2106
        %v2200 = vpop.f32.mrb[0].mxu0
        %v2201 = vadd.f32 0.0, %v2200
        %v2202 = vpop.f32.mrb[0].mxu0
        %2203 = vmatprep.mubr.f32.mxu0 0.0
        %2204 = vmatmul.mubr.f32.gmra.mrb[0].mxu0 %v2108
        %v2205 = vpop.f32.mrb[0].mxu0
        %v2206 = vadd.f32 0.0, %v2205
        %v2207 = vpop.f32.mrb[0].mxu0
        %2208 = vmatprep.mubr.f32.mxu0 0.0
        %2209 = vmatmul.mubr.f32.gmra.mrb[0].mxu0 %v2110
        %v2210 = vpop.f32.mrb[0].mxu0
        %v2211 = vadd.f32 0.0, %v2210
        %v2212 = vpop.f32.mrb[0].mxu0
        %2213 = vmatprep.mubr.f32.mxu0 0.0
        %2214 = vmatmul.mubr.f32.gmra.mrb[0].mxu0 %v2112
        %v2215 = vpop.f32.mrb[0].mxu0
        %v2216 = vadd.f32 0.0, %v2215
        %v2217 = vpop.f32.mrb[0].mxu0
        %2218 = vdwg.mxu0
        %v2219 = vadd.f32 %v2034, %v2181
        %v2220 = vadd.f32 %v2039, %v2186
        %v2221 = vadd.f32 %v2044, %v2191
        %v2222 = vadd.f32 %v2049, %v2196
        %v2223 = vadd.f32 %v2054, %v2201
        %v2224 = vadd.f32 %v2059, %v2206
        %v2225 = vadd.f32 %v2064, %v2211
        %v2226 = vadd.f32 %v2069, %v2216
        %s2227 = scalar_lea.vmem %s7, 24
        %v2228 = vld [vmem:[%s2227] sm:$0xff]
        %v2230 = vsel %vm623, %v1783, 0
        %2232 = vmatprep.subr.mxu0 0.0
        %2233 = vmatpush1.msra.mxu0 %v2228
        %2234 = vmatprep.subr.mxu0 0.0
        %2235 = vmatpush1.msra.mxu0 0.0
        %2236 = vmatprep.subr.mxu0 0.0
        %2237 = vmatpush1.msra.mxu0 0.0
        %2238 = vmatprep.subr.mxu0 0.0
        %2239 = vmatpush1.msra.mxu0 0.0
        %2240 = vmatprep.subr.mxu0 0.0
        %2241 = vmatpush1.msra.mxu0 0.0
        %2242 = vmatprep.subr.mxu0 0.0
        %2243 = vmatpush1.msra.mxu0 0.0
        %2244 = vmatprep.subr.mxu0 0.0
        %2245 = vmatpush1.msra.mxu0 0.0
        %2246 = vmatprep.subr.mxu0 0.0
        %2247 = vmatpush1.msra.mxu0 0.0
        %2248 = vmatprep.subr.mxu0 0.0
        %2249 = vmatpush1.msra.mxu0 0.0
        %2250 = vmatprep.subr.mxu0 0.0
        %2251 = vmatpush1.msra.mxu0 0.0
        %2252 = vmatprep.subr.mxu0 0.0
        %2253 = vmatpush1.msra.mxu0 0.0
        %2254 = vmatprep.subr.mxu0 0.0
        %2255 = vmatpush1.msra.mxu0 0.0
        %2256 = vmatprep.subr.mxu0 0.0
        %2257 = vmatpush1.msra.mxu0 0.0
        %2258 = vmatprep.subr.mxu0 0.0
        %2259 = vmatpush1.msra.mxu0 0.0
        %2260 = vmatprep.subr.mxu0 0.0
        %2261 = vmatpush1.msra.mxu0 0.0
        %2262 = vmatprep.subr.mxu0 0.0
        %2263 = vmatpush1.msra.mxu0 0.0
        %2264 = vmatprep.subr.mxu0 0.0
        %2265 = vmatpush1.msra.mxu0 0.0
        %2266 = vmatprep.subr.mxu0 0.0
        %2267 = vmatpush1.msra.mxu0 0.0
        %2268 = vmatprep.subr.mxu0 0.0
        %2269 = vmatpush1.msra.mxu0 0.0
        %2270 = vmatprep.subr.mxu0 0.0
        %2271 = vmatpush1.msra.mxu0 0.0
        %2272 = vmatprep.subr.mxu0 0.0
        %2273 = vmatpush1.msra.mxu0 0.0
        %2274 = vmatprep.subr.mxu0 0.0
        %2275 = vmatpush1.msra.mxu0 0.0
        %2276 = vmatprep.subr.mxu0 0.0
        %2277 = vmatpush1.msra.mxu0 0.0
        %2278 = vmatprep.subr.mxu0 0.0
        %2279 = vmatpush1.msra.mxu0 0.0
        %2280 = vmatprep.subr.mxu0 0.0
        %2281 = vmatpush1.msra.mxu0 0.0
        %2282 = vmatprep.subr.mxu0 0.0
        %2283 = vmatpush1.msra.mxu0 0.0
        %2284 = vmatprep.subr.mxu0 0.0
        %2285 = vmatpush1.msra.mxu0 0.0
        %2286 = vmatprep.subr.mxu0 0.0
        %2287 = vmatpush1.msra.mxu0 0.0
        %2288 = vmatprep.subr.mxu0 0.0
        %2289 = vmatpush1.msra.mxu0 0.0
        %2290 = vmatprep.subr.mxu0 0.0
        %2291 = vmatpush1.msra.mxu0 0.0
        %2292 = vmatprep.subr.mxu0 0.0
        %2293 = vmatpush1.msra.mxu0 0.0
        %2294 = vmatprep.subr.mxu0 0.0
        %2295 = vmatpush1.msra.mxu0 0.0
        %2296 = vmatprep.mubr.f32.mxu0 0.0
        %2297 = vmatmul.mubr.f32.gmra.mrb[0].mxu0 %v1953
        %v2298 = vpop.f32.mrb[0].mxu0
        %v2299 = vadd.f32 0.0, %v2298
        %v2300 = vpop.f32.mrb[0].mxu0
        %2301 = vmatprep.mubr.f32.mxu0 0.0
        %2302 = vmatmul.mubr.f32.gmra.mrb[0].mxu0 %v1955
        %v2303 = vpop.f32.mrb[0].mxu0
        %v2304 = vadd.f32 0.0, %v2303
        %v2305 = vpop.f32.mrb[0].mxu0
        %2306 = vmatprep.mubr.f32.mxu0 0.0
        %2307 = vmatmul.mubr.f32.gmra.mrb[0].mxu0 %v1957
        %v2308 = vpop.f32.mrb[0].mxu0
        %v2309 = vadd.f32 0.0, %v2308
        %v2310 = vpop.f32.mrb[0].mxu0
        %2311 = vmatprep.mubr.f32.mxu0 0.0
        %2312 = vmatmul.mubr.f32.gmra.mrb[0].mxu0 %v1959
        %v2313 = vpop.f32.mrb[0].mxu0
        %v2314 = vadd.f32 0.0, %v2313
        %v2315 = vpop.f32.mrb[0].mxu0
        %2316 = vmatprep.mubr.f32.mxu0 0.0
        %2317 = vmatmul.mubr.f32.gmra.mrb[0].mxu0 %v1961
        %v2318 = vpop.f32.mrb[0].mxu0
        %v2319 = vadd.f32 0.0, %v2318
        %v2320 = vpop.f32.mrb[0].mxu0
        %2321 = vmatprep.mubr.f32.mxu0 0.0
        %2322 = vmatmul.mubr.f32.gmra.mrb[0].mxu0 %v1963
        %v2323 = vpop.f32.mrb[0].mxu0
        %v2324 = vadd.f32 0.0, %v2323
        %v2325 = vpop.f32.mrb[0].mxu0
        %2326 = vmatprep.mubr.f32.mxu0 0.0
        %2327 = vmatmul.mubr.f32.gmra.mrb[0].mxu0 %v1965
        %v2328 = vpop.f32.mrb[0].mxu0
        %v2329 = vadd.f32 0.0, %v2328
        %v2330 = vpop.f32.mrb[0].mxu0
        %2331 = vmatprep.mubr.f32.mxu0 0.0
        %2332 = vmatmul.mubr.f32.gmra.mrb[0].mxu0 %v2230
        %v2333 = vpop.f32.mrb[0].mxu0
        %v2334 = vadd.f32 0.0, %v2333
        %v2335 = vpop.f32.mrb[0].mxu0
        %2336 = vdwg.mxu0
        %v2337 = vadd.f32 %v2219, %v2299
        %v2338 = vadd.f32 %v2220, %v2304
        %v2339 = vadd.f32 %v2221, %v2309
        %v2340 = vadd.f32 %v2222, %v2314
        %v2341 = vadd.f32 %v2223, %v2319
        %v2342 = vadd.f32 %v2224, %v2324
        %v2343 = vadd.f32 %v2225, %v2329
        %v2344 = vadd.f32 %v2226, %v2334
        %v2346 = vrot.slane %v1783, 1
        %v2347 = vrot.slane %v1784, 1
        %v2348 = vsel %vm554, %v2346, %v2347
        %s2349 = scalar_lea.vmem %s7, 32
        %v2350 = vld [vmem:[%s2349] sm:$0xff]
        %v2351 = vsel %vm623, %v2348, 0
        %2353 = vmatprep.subr.mxu0 0.0
        %2354 = vmatpush1.msra.mxu0 %v2350
        %2355 = vmatprep.subr.mxu0 0.0
        %2356 = vmatpush1.msra.mxu0 0.0
        %2357 = vmatprep.subr.mxu0 0.0
        %2358 = vmatpush1.msra.mxu0 0.0
        %2359 = vmatprep.subr.mxu0 0.0
        %2360 = vmatpush1.msra.mxu0 0.0
        %2361 = vmatprep.subr.mxu0 0.0
        %2362 = vmatpush1.msra.mxu0 0.0
        %2363 = vmatprep.subr.mxu0 0.0
        %2364 = vmatpush1.msra.mxu0 0.0
        %2365 = vmatprep.subr.mxu0 0.0
        %2366 = vmatpush1.msra.mxu0 0.0
        %2367 = vmatprep.subr.mxu0 0.0
        %2368 = vmatpush1.msra.mxu0 0.0
        %2369 = vmatprep.subr.mxu0 0.0
        %2370 = vmatpush1.msra.mxu0 0.0
        %2371 = vmatprep.subr.mxu0 0.0
        %2372 = vmatpush1.msra.mxu0 0.0
        %2373 = vmatprep.subr.mxu0 0.0
        %2374 = vmatpush1.msra.mxu0 0.0
        %2375 = vmatprep.subr.mxu0 0.0
        %2376 = vmatpush1.msra.mxu0 0.0
        %2377 = vmatprep.subr.mxu0 0.0
        %2378 = vmatpush1.msra.mxu0 0.0
        %2379 = vmatprep.subr.mxu0 0.0
        %2380 = vmatpush1.msra.mxu0 0.0
        %2381 = vmatprep.subr.mxu0 0.0
        %2382 = vmatpush1.msra.mxu0 0.0
        %2383 = vmatprep.subr.mxu0 0.0
        %2384 = vmatpush1.msra.mxu0 0.0
        %2385 = vmatprep.subr.mxu0 0.0
        %2386 = vmatpush1.msra.mxu0 0.0
        %2387 = vmatprep.subr.mxu0 0.0
        %2388 = vmatpush1.msra.mxu0 0.0
        %2389 = vmatprep.subr.mxu0 0.0
        %2390 = vmatpush1.msra.mxu0 0.0
        %2391 = vmatprep.subr.mxu0 0.0
        %2392 = vmatpush1.msra.mxu0 0.0
        %2393 = vmatprep.subr.mxu0 0.0
        %2394 = vmatpush1.msra.mxu0 0.0
        %2395 = vmatprep.subr.mxu0 0.0
        %2396 = vmatpush1.msra.mxu0 0.0
        %2397 = vmatprep.subr.mxu0 0.0
        %2398 = vmatpush1.msra.mxu0 0.0
        %2399 = vmatprep.subr.mxu0 0.0
        %2400 = vmatpush1.msra.mxu0 0.0
        %2401 = vmatprep.subr.mxu0 0.0
        %2402 = vmatpush1.msra.mxu0 0.0
        %2403 = vmatprep.subr.mxu0 0.0
        %2404 = vmatpush1.msra.mxu0 0.0
        %2405 = vmatprep.subr.mxu0 0.0
        %2406 = vmatpush1.msra.mxu0 0.0
        %2407 = vmatprep.subr.mxu0 0.0
        %2408 = vmatpush1.msra.mxu0 0.0
        %2409 = vmatprep.subr.mxu0 0.0
        %2410 = vmatpush1.msra.mxu0 0.0
        %2411 = vmatprep.subr.mxu0 0.0
        %2412 = vmatpush1.msra.mxu0 0.0
        %2413 = vmatprep.subr.mxu0 0.0
        %2414 = vmatpush1.msra.mxu0 0.0
        %2415 = vmatprep.subr.mxu0 0.0
        %2416 = vmatpush1.msra.mxu0 0.0
        %2417 = vmatprep.mubr.f32.mxu0 0.0
        %2418 = vmatmul.mubr.f32.gmra.mrb[0].mxu0 %v1832
        %v2419 = vpop.f32.mrb[0].mxu0
        %v2420 = vadd.f32 0.0, %v2419
        %v2421 = vpop.f32.mrb[0].mxu0
        %2422 = vmatprep.mubr.f32.mxu0 0.0
        %2423 = vmatmul.mubr.f32.gmra.mrb[0].mxu0 %v1834
        %v2424 = vpop.f32.mrb[0].mxu0
        %v2425 = vadd.f32 0.0, %v2424
        %v2426 = vpop.f32.mrb[0].mxu0
        %2427 = vmatprep.mubr.f32.mxu0 0.0
        %2428 = vmatmul.mubr.f32.gmra.mrb[0].mxu0 %v1836
        %v2429 = vpop.f32.mrb[0].mxu0
        %v2430 = vadd.f32 0.0, %v2429
        %v2431 = vpop.f32.mrb[0].mxu0
        %2432 = vmatprep.mubr.f32.mxu0 0.0
        %2433 = vmatmul.mubr.f32.gmra.mrb[0].mxu0 %v1838
        %v2434 = vpop.f32.mrb[0].mxu0
        %v2435 = vadd.f32 0.0, %v2434
        %v2436 = vpop.f32.mrb[0].mxu0
        %2437 = vmatprep.mubr.f32.mxu0 0.0
        %2438 = vmatmul.mubr.f32.gmra.mrb[0].mxu0 %v1840
        %v2439 = vpop.f32.mrb[0].mxu0
        %v2440 = vadd.f32 0.0, %v2439
        %v2441 = vpop.f32.mrb[0].mxu0
        %2442 = vmatprep.mubr.f32.mxu0 0.0
        %2443 = vmatmul.mubr.f32.gmra.mrb[0].mxu0 %v1842
        %v2444 = vpop.f32.mrb[0].mxu0
        %v2445 = vadd.f32 0.0, %v2444
        %v2446 = vpop.f32.mrb[0].mxu0
        %2447 = vmatprep.mubr.f32.mxu0 0.0
        %2448 = vmatmul.mubr.f32.gmra.mrb[0].mxu0 %v1844
        %v2449 = vpop.f32.mrb[0].mxu0
        %v2450 = vadd.f32 0.0, %v2449
        %v2451 = vpop.f32.mrb[0].mxu0
        %2452 = vmatprep.mubr.f32.mxu0 0.0
        %2453 = vmatmul.mubr.f32.gmra.mrb[0].mxu0 %v2351
        %v2454 = vpop.f32.mrb[0].mxu0
        %v2455 = vadd.f32 0.0, %v2454
        %v2456 = vpop.f32.mrb[0].mxu0
        %2457 = vdwg.mxu0
        %v2458 = vadd.f32 %v2337, %v2420
        %v2459 = vadd.f32 %v2338, %v2425
        %v2460 = vadd.f32 %v2339, %v2430
        %v2461 = vadd.f32 %v2340, %v2435
        %v2462 = vadd.f32 %v2341, %v2440
        %v2463 = vadd.f32 %v2342, %v2445
        %v2464 = vadd.f32 %v2343, %v2450
        %v2465 = vadd.f32 %v2344, %v2455
        %v2466 = vrot.slane %v1783, 2
        %v2467 = vrot.slane %v1784, 2
        %v2468 = vsel %vm579, %v2466, %v2467
        %s2469 = scalar_lea.vmem %s7, 40
        %v2470 = vld [vmem:[%s2469] sm:$0xff]
        %v2471 = vsel %vm623, %v2468, 0
        %2473 = vmatprep.subr.mxu0 0.0
        %2474 = vmatpush1.msra.mxu0 %v2470
        %2475 = vmatprep.subr.mxu0 0.0
        %2476 = vmatpush1.msra.mxu0 0.0
        %2477 = vmatprep.subr.mxu0 0.0
        %2478 = vmatpush1.msra.mxu0 0.0
        %2479 = vmatprep.subr.mxu0 0.0
        %2480 = vmatpush1.msra.mxu0 0.0
        %2481 = vmatprep.subr.mxu0 0.0
        %2482 = vmatpush1.msra.mxu0 0.0
        %2483 = vmatprep.subr.mxu0 0.0
        %2484 = vmatpush1.msra.mxu0 0.0
        %2485 = vmatprep.subr.mxu0 0.0
        %2486 = vmatpush1.msra.mxu0 0.0
        %2487 = vmatprep.subr.mxu0 0.0
        %2488 = vmatpush1.msra.mxu0 0.0
        %2489 = vmatprep.subr.mxu0 0.0
        %2490 = vmatpush1.msra.mxu0 0.0
        %2491 = vmatprep.subr.mxu0 0.0
        %2492 = vmatpush1.msra.mxu0 0.0
        %2493 = vmatprep.subr.mxu0 0.0
        %2494 = vmatpush1.msra.mxu0 0.0
        %2495 = vmatprep.subr.mxu0 0.0
        %2496 = vmatpush1.msra.mxu0 0.0
        %2497 = vmatprep.subr.mxu0 0.0
        %2498 = vmatpush1.msra.mxu0 0.0
        %2499 = vmatprep.subr.mxu0 0.0
        %2500 = vmatpush1.msra.mxu0 0.0
        %2501 = vmatprep.subr.mxu0 0.0
        %2502 = vmatpush1.msra.mxu0 0.0
        %2503 = vmatprep.subr.mxu0 0.0
        %2504 = vmatpush1.msra.mxu0 0.0
        %2505 = vmatprep.subr.mxu0 0.0
        %2506 = vmatpush1.msra.mxu0 0.0
        %2507 = vmatprep.subr.mxu0 0.0
        %2508 = vmatpush1.msra.mxu0 0.0
        %2509 = vmatprep.subr.mxu0 0.0
        %2510 = vmatpush1.msra.mxu0 0.0
        %2511 = vmatprep.subr.mxu0 0.0
        %2512 = vmatpush1.msra.mxu0 0.0
        %2513 = vmatprep.subr.mxu0 0.0
        %2514 = vmatpush1.msra.mxu0 0.0
        %2515 = vmatprep.subr.mxu0 0.0
        %2516 = vmatpush1.msra.mxu0 0.0
        %2517 = vmatprep.subr.mxu0 0.0
        %2518 = vmatpush1.msra.mxu0 0.0
        %2519 = vmatprep.subr.mxu0 0.0
        %2520 = vmatpush1.msra.mxu0 0.0
        %2521 = vmatprep.subr.mxu0 0.0
        %2522 = vmatpush1.msra.mxu0 0.0
        %2523 = vmatprep.subr.mxu0 0.0
        %2524 = vmatpush1.msra.mxu0 0.0
        %2525 = vmatprep.subr.mxu0 0.0
        %2526 = vmatpush1.msra.mxu0 0.0
        %2527 = vmatprep.subr.mxu0 0.0
        %2528 = vmatpush1.msra.mxu0 0.0
        %2529 = vmatprep.subr.mxu0 0.0
        %2530 = vmatpush1.msra.mxu0 0.0
        %2531 = vmatprep.subr.mxu0 0.0
        %2532 = vmatpush1.msra.mxu0 0.0
        %2533 = vmatprep.subr.mxu0 0.0
        %2534 = vmatpush1.msra.mxu0 0.0
        %2535 = vmatprep.subr.mxu0 0.0
        %2536 = vmatpush1.msra.mxu0 0.0
        %2537 = vmatprep.mubr.f32.mxu0 0.0
        %2538 = vmatmul.mubr.f32.gmra.mrb[0].mxu0 %v2100
        %v2539 = vpop.f32.mrb[0].mxu0
        %v2540 = vadd.f32 0.0, %v2539
        %v2541 = vpop.f32.mrb[0].mxu0
        %2542 = vmatprep.mubr.f32.mxu0 0.0
        %2543 = vmatmul.mubr.f32.gmra.mrb[0].mxu0 %v2102
        %v2544 = vpop.f32.mrb[0].mxu0
        %v2545 = vadd.f32 0.0, %v2544
        %v2546 = vpop.f32.mrb[0].mxu0
        %2547 = vmatprep.mubr.f32.mxu0 0.0
        %2548 = vmatmul.mubr.f32.gmra.mrb[0].mxu0 %v2104
        %v2549 = vpop.f32.mrb[0].mxu0
        %v2550 = vadd.f32 0.0, %v2549
        %v2551 = vpop.f32.mrb[0].mxu0
        %2552 = vmatprep.mubr.f32.mxu0 0.0
        %2553 = vmatmul.mubr.f32.gmra.mrb[0].mxu0 %v2106
        %v2554 = vpop.f32.mrb[0].mxu0
        %v2555 = vadd.f32 0.0, %v2554
        %v2556 = vpop.f32.mrb[0].mxu0
        %2557 = vmatprep.mubr.f32.mxu0 0.0
        %2558 = vmatmul.mubr.f32.gmra.mrb[0].mxu0 %v2108
        %v2559 = vpop.f32.mrb[0].mxu0
        %v2560 = vadd.f32 0.0, %v2559
        %v2561 = vpop.f32.mrb[0].mxu0
        %2562 = vmatprep.mubr.f32.mxu0 0.0
        %2563 = vmatmul.mubr.f32.gmra.mrb[0].mxu0 %v2110
        %v2564 = vpop.f32.mrb[0].mxu0
        %v2565 = vadd.f32 0.0, %v2564
        %v2566 = vpop.f32.mrb[0].mxu0
        %2567 = vmatprep.mubr.f32.mxu0 0.0
        %2568 = vmatmul.mubr.f32.gmra.mrb[0].mxu0 %v2112
        %v2569 = vpop.f32.mrb[0].mxu0
        %v2570 = vadd.f32 0.0, %v2569
        %v2571 = vpop.f32.mrb[0].mxu0
        %2572 = vmatprep.mubr.f32.mxu0 0.0
        %2573 = vmatmul.mubr.f32.gmra.mrb[0].mxu0 %v2471
        %v2574 = vpop.f32.mrb[0].mxu0
        %v2575 = vadd.f32 0.0, %v2574
        %v2576 = vpop.f32.mrb[0].mxu0
        %2577 = vdwg.mxu0
        %v2578 = vadd.f32 %v2458, %v2540
        %v2579 = vadd.f32 %v2459, %v2545
        %v2580 = vadd.f32 %v2460, %v2550
        %v2581 = vadd.f32 %v2461, %v2555
        %v2582 = vadd.f32 %v2462, %v2560
        %v2583 = vadd.f32 %v2463, %v2565
        %v2584 = vadd.f32 %v2464, %v2570
        %v2585 = vadd.f32 %v2465, %v2575
        %s2586 = scalar_lea.vmem %s7, 48
        %v2587 = vld [vmem:[%s2586] sm:$0xff]
        %v2589 = vsel %vm623, %v1785, 0
        %2591 = vmatprep.subr.mxu0 0.0
        %2592 = vmatpush1.msra.mxu0 %v2587
        %2593 = vmatprep.subr.mxu0 0.0
        %2594 = vmatpush1.msra.mxu0 0.0
        %2595 = vmatprep.subr.mxu0 0.0
        %2596 = vmatpush1.msra.mxu0 0.0
        %2597 = vmatprep.subr.mxu0 0.0
        %2598 = vmatpush1.msra.mxu0 0.0
        %2599 = vmatprep.subr.mxu0 0.0
        %2600 = vmatpush1.msra.mxu0 0.0
        %2601 = vmatprep.subr.mxu0 0.0
        %2602 = vmatpush1.msra.mxu0 0.0
        %2603 = vmatprep.subr.mxu0 0.0
        %2604 = vmatpush1.msra.mxu0 0.0
        %2605 = vmatprep.subr.mxu0 0.0
        %2606 = vmatpush1.msra.mxu0 0.0
        %2607 = vmatprep.subr.mxu0 0.0
        %2608 = vmatpush1.msra.mxu0 0.0
        %2609 = vmatprep.subr.mxu0 0.0
        %2610 = vmatpush1.msra.mxu0 0.0
        %2611 = vmatprep.subr.mxu0 0.0
        %2612 = vmatpush1.msra.mxu0 0.0
        %2613 = vmatprep.subr.mxu0 0.0
        %2614 = vmatpush1.msra.mxu0 0.0
        %2615 = vmatprep.subr.mxu0 0.0
        %2616 = vmatpush1.msra.mxu0 0.0
        %2617 = vmatprep.subr.mxu0 0.0
        %2618 = vmatpush1.msra.mxu0 0.0
        %2619 = vmatprep.subr.mxu0 0.0
        %2620 = vmatpush1.msra.mxu0 0.0
        %2621 = vmatprep.subr.mxu0 0.0
        %2622 = vmatpush1.msra.mxu0 0.0
        %2623 = vmatprep.subr.mxu0 0.0
        %2624 = vmatpush1.msra.mxu0 0.0
        %2625 = vmatprep.subr.mxu0 0.0
        %2626 = vmatpush1.msra.mxu0 0.0
        %2627 = vmatprep.subr.mxu0 0.0
        %2628 = vmatpush1.msra.mxu0 0.0
        %2629 = vmatprep.subr.mxu0 0.0
        %2630 = vmatpush1.msra.mxu0 0.0
        %2631 = vmatprep.subr.mxu0 0.0
        %2632 = vmatpush1.msra.mxu0 0.0
        %2633 = vmatprep.subr.mxu0 0.0
        %2634 = vmatpush1.msra.mxu0 0.0
        %2635 = vmatprep.subr.mxu0 0.0
        %2636 = vmatpush1.msra.mxu0 0.0
        %2637 = vmatprep.subr.mxu0 0.0
        %2638 = vmatpush1.msra.mxu0 0.0
        %2639 = vmatprep.subr.mxu0 0.0
        %2640 = vmatpush1.msra.mxu0 0.0
        %2641 = vmatprep.subr.mxu0 0.0
        %2642 = vmatpush1.msra.mxu0 0.0
        %2643 = vmatprep.subr.mxu0 0.0
        %2644 = vmatpush1.msra.mxu0 0.0
        %2645 = vmatprep.subr.mxu0 0.0
        %2646 = vmatpush1.msra.mxu0 0.0
        %2647 = vmatprep.subr.mxu0 0.0
        %2648 = vmatpush1.msra.mxu0 0.0
        %2649 = vmatprep.subr.mxu0 0.0
        %2650 = vmatpush1.msra.mxu0 0.0
        %2651 = vmatprep.subr.mxu0 0.0
        %2652 = vmatpush1.msra.mxu0 0.0
        %2653 = vmatprep.subr.mxu0 0.0
        %2654 = vmatpush1.msra.mxu0 0.0
        %2655 = vmatprep.mubr.f32.mxu0 0.0
        %2656 = vmatmul.mubr.f32.gmra.mrb[0].mxu0 %v1955
        %v2657 = vpop.f32.mrb[0].mxu0
        %v2658 = vadd.f32 0.0, %v2657
        %v2659 = vpop.f32.mrb[0].mxu0
        %2660 = vmatprep.mubr.f32.mxu0 0.0
        %2661 = vmatmul.mubr.f32.gmra.mrb[0].mxu0 %v1957
        %v2662 = vpop.f32.mrb[0].mxu0
        %v2663 = vadd.f32 0.0, %v2662
        %v2664 = vpop.f32.mrb[0].mxu0
        %2665 = vmatprep.mubr.f32.mxu0 0.0
        %2666 = vmatmul.mubr.f32.gmra.mrb[0].mxu0 %v1959
        %v2667 = vpop.f32.mrb[0].mxu0
        %v2668 = vadd.f32 0.0, %v2667
        %v2669 = vpop.f32.mrb[0].mxu0
        %2670 = vmatprep.mubr.f32.mxu0 0.0
        %2671 = vmatmul.mubr.f32.gmra.mrb[0].mxu0 %v1961
        %v2672 = vpop.f32.mrb[0].mxu0
        %v2673 = vadd.f32 0.0, %v2672
        %v2674 = vpop.f32.mrb[0].mxu0
        %2675 = vmatprep.mubr.f32.mxu0 0.0
        %2676 = vmatmul.mubr.f32.gmra.mrb[0].mxu0 %v1963
        %v2677 = vpop.f32.mrb[0].mxu0
        %v2678 = vadd.f32 0.0, %v2677
        %v2679 = vpop.f32.mrb[0].mxu0
        %2680 = vmatprep.mubr.f32.mxu0 0.0
        %2681 = vmatmul.mubr.f32.gmra.mrb[0].mxu0 %v1965
        %v2682 = vpop.f32.mrb[0].mxu0
        %v2683 = vadd.f32 0.0, %v2682
        %v2684 = vpop.f32.mrb[0].mxu0
        %2685 = vmatprep.mubr.f32.mxu0 0.0
        %2686 = vmatmul.mubr.f32.gmra.mrb[0].mxu0 %v2230
        %v2687 = vpop.f32.mrb[0].mxu0
        %v2688 = vadd.f32 0.0, %v2687
        %v2689 = vpop.f32.mrb[0].mxu0
        %2690 = vmatprep.mubr.f32.mxu0 0.0
        %2691 = vmatmul.mubr.f32.gmra.mrb[0].mxu0 %v2589
        %v2692 = vpop.f32.mrb[0].mxu0
        %v2693 = vadd.f32 0.0, %v2692
        %v2694 = vpop.f32.mrb[0].mxu0
        %2695 = vdwg.mxu0
        %v2696 = vadd.f32 %v2578, %v2658
        %v2697 = vadd.f32 %v2579, %v2663
        %v2698 = vadd.f32 %v2580, %v2668
        %v2699 = vadd.f32 %v2581, %v2673
        %v2700 = vadd.f32 %v2582, %v2678
        %v2701 = vadd.f32 %v2583, %v2683
        %v2702 = vadd.f32 %v2584, %v2688
        %v2703 = vadd.f32 %v2585, %v2693
        %v2705 = vrot.slane %v1785, 1
        %v2706 = vrot.slane %v1786, 1
        %v2707 = vsel %vm554, %v2705, %v2706
        %s2708 = scalar_lea.vmem %s7, 56
        %v2709 = vld [vmem:[%s2708] sm:$0xff]
        %v2710 = vsel %vm623, %v2707, 0
        %2712 = vmatprep.subr.mxu0 0.0
        %2713 = vmatpush1.msra.mxu0 %v2709
        %2714 = vmatprep.subr.mxu0 0.0
        %2715 = vmatpush1.msra.mxu0 0.0
        %2716 = vmatprep.subr.mxu0 0.0
        %2717 = vmatpush1.msra.mxu0 0.0
        %2718 = vmatprep.subr.mxu0 0.0
        %2719 = vmatpush1.msra.mxu0 0.0
        %2720 = vmatprep.subr.mxu0 0.0
        %2721 = vmatpush1.msra.mxu0 0.0
        %2722 = vmatprep.subr.mxu0 0.0
        %2723 = vmatpush1.msra.mxu0 0.0
        %2724 = vmatprep.subr.mxu0 0.0
        %2725 = vmatpush1.msra.mxu0 0.0
        %2726 = vmatprep.subr.mxu0 0.0
        %2727 = vmatpush1.msra.mxu0 0.0
        %2728 = vmatprep.subr.mxu0 0.0
        %2729 = vmatpush1.msra.mxu0 0.0
        %2730 = vmatprep.subr.mxu0 0.0
        %2731 = vmatpush1.msra.mxu0 0.0
        %2732 = vmatprep.subr.mxu0 0.0
        %2733 = vmatpush1.msra.mxu0 0.0
        %2734 = vmatprep.subr.mxu0 0.0
        %2735 = vmatpush1.msra.mxu0 0.0
        %2736 = vmatprep.subr.mxu0 0.0
        %2737 = vmatpush1.msra.mxu0 0.0
        %2738 = vmatprep.subr.mxu0 0.0
        %2739 = vmatpush1.msra.mxu0 0.0
        %2740 = vmatprep.subr.mxu0 0.0
        %2741 = vmatpush1.msra.mxu0 0.0
        %2742 = vmatprep.subr.mxu0 0.0
        %2743 = vmatpush1.msra.mxu0 0.0
        %2744 = vmatprep.subr.mxu0 0.0
        %2745 = vmatpush1.msra.mxu0 0.0
        %2746 = vmatprep.subr.mxu0 0.0
        %2747 = vmatpush1.msra.mxu0 0.0
        %2748 = vmatprep.subr.mxu0 0.0
        %2749 = vmatpush1.msra.mxu0 0.0
        %2750 = vmatprep.subr.mxu0 0.0
        %2751 = vmatpush1.msra.mxu0 0.0
        %2752 = vmatprep.subr.mxu0 0.0
        %2753 = vmatpush1.msra.mxu0 0.0
        %2754 = vmatprep.subr.mxu0 0.0
        %2755 = vmatpush1.msra.mxu0 0.0
        %2756 = vmatprep.subr.mxu0 0.0
        %2757 = vmatpush1.msra.mxu0 0.0
        %2758 = vmatprep.subr.mxu0 0.0
        %2759 = vmatpush1.msra.mxu0 0.0
        %2760 = vmatprep.subr.mxu0 0.0
        %2761 = vmatpush1.msra.mxu0 0.0
        %2762 = vmatprep.subr.mxu0 0.0
        %2763 = vmatpush1.msra.mxu0 0.0
        %2764 = vmatprep.subr.mxu0 0.0
        %2765 = vmatpush1.msra.mxu0 0.0
        %2766 = vmatprep.subr.mxu0 0.0
        %2767 = vmatpush1.msra.mxu0 0.0
        %2768 = vmatprep.subr.mxu0 0.0
        %2769 = vmatpush1.msra.mxu0 0.0
        %2770 = vmatprep.subr.mxu0 0.0
        %2771 = vmatpush1.msra.mxu0 0.0
        %2772 = vmatprep.subr.mxu0 0.0
        %2773 = vmatpush1.msra.mxu0 0.0
        %2774 = vmatprep.subr.mxu0 0.0
        %2775 = vmatpush1.msra.mxu0 0.0
        %2776 = vmatprep.mubr.f32.mxu0 0.0
        %2777 = vmatmul.mubr.f32.gmra.mrb[0].mxu0 %v1834
        %v2778 = vpop.f32.mrb[0].mxu0
        %v2779 = vadd.f32 0.0, %v2778
        %v2780 = vpop.f32.mrb[0].mxu0
        %2781 = vmatprep.mubr.f32.mxu0 0.0
        %2782 = vmatmul.mubr.f32.gmra.mrb[0].mxu0 %v1836
        %v2783 = vpop.f32.mrb[0].mxu0
        %v2784 = vadd.f32 0.0, %v2783
        %v2785 = vpop.f32.mrb[0].mxu0
        %2786 = vmatprep.mubr.f32.mxu0 0.0
        %2787 = vmatmul.mubr.f32.gmra.mrb[0].mxu0 %v1838
        %v2788 = vpop.f32.mrb[0].mxu0
        %v2789 = vadd.f32 0.0, %v2788
        %v2790 = vpop.f32.mrb[0].mxu0
        %2791 = vmatprep.mubr.f32.mxu0 0.0
        %2792 = vmatmul.mubr.f32.gmra.mrb[0].mxu0 %v1840
        %v2793 = vpop.f32.mrb[0].mxu0
        %v2794 = vadd.f32 0.0, %v2793
        %v2795 = vpop.f32.mrb[0].mxu0
        %2796 = vmatprep.mubr.f32.mxu0 0.0
        %2797 = vmatmul.mubr.f32.gmra.mrb[0].mxu0 %v1842
        %v2798 = vpop.f32.mrb[0].mxu0
        %v2799 = vadd.f32 0.0, %v2798
        %v2800 = vpop.f32.mrb[0].mxu0
        %2801 = vmatprep.mubr.f32.mxu0 0.0
        %2802 = vmatmul.mubr.f32.gmra.mrb[0].mxu0 %v1844
        %v2803 = vpop.f32.mrb[0].mxu0
        %v2804 = vadd.f32 0.0, %v2803
        %v2805 = vpop.f32.mrb[0].mxu0
        %2806 = vmatprep.mubr.f32.mxu0 0.0
        %2807 = vmatmul.mubr.f32.gmra.mrb[0].mxu0 %v2351
        %v2808 = vpop.f32.mrb[0].mxu0
        %v2809 = vadd.f32 0.0, %v2808
        %v2810 = vpop.f32.mrb[0].mxu0
        %2811 = vmatprep.mubr.f32.mxu0 0.0
        %2812 = vmatmul.mubr.f32.gmra.mrb[0].mxu0 %v2710
        %v2813 = vpop.f32.mrb[0].mxu0
        %v2814 = vadd.f32 0.0, %v2813
        %v2815 = vpop.f32.mrb[0].mxu0
        %2816 = vdwg.mxu0
        %v2817 = vadd.f32 %v2696, %v2779
        %v2818 = vadd.f32 %v2697, %v2784
        %v2819 = vadd.f32 %v2698, %v2789
        %v2820 = vadd.f32 %v2699, %v2794
        %v2821 = vadd.f32 %v2700, %v2799
        %v2822 = vadd.f32 %v2701, %v2804
        %v2823 = vadd.f32 %v2702, %v2809
        %v2824 = vadd.f32 %v2703, %v2814
        %v2825 = vrot.slane %v1785, 2
        %v2826 = vrot.slane %v1786, 2
        %v2827 = vsel %vm579, %v2825, %v2826
        %s2828 = scalar_lea.vmem %s7, 64
        %v2829 = vld [vmem:[%s2828] sm:$0xff]
        %v2830 = vsel %vm623, %v2827, 0
        %2832 = vmatprep.subr.mxu0 0.0
        %2833 = vmatpush1.msra.mxu0 %v2829
        %2834 = vmatprep.subr.mxu0 0.0
        %2835 = vmatpush1.msra.mxu0 0.0
        %2836 = vmatprep.subr.mxu0 0.0
        %2837 = vmatpush1.msra.mxu0 0.0
        %2838 = vmatprep.subr.mxu0 0.0
        %2839 = vmatpush1.msra.mxu0 0.0
        %2840 = vmatprep.subr.mxu0 0.0
        %2841 = vmatpush1.msra.mxu0 0.0
        %2842 = vmatprep.subr.mxu0 0.0
        %2843 = vmatpush1.msra.mxu0 0.0
        %2844 = vmatprep.subr.mxu0 0.0
        %2845 = vmatpush1.msra.mxu0 0.0
        %2846 = vmatprep.subr.mxu0 0.0
        %2847 = vmatpush1.msra.mxu0 0.0
        %2848 = vmatprep.subr.mxu0 0.0
        %2849 = vmatpush1.msra.mxu0 0.0
        %2850 = vmatprep.subr.mxu0 0.0
        %2851 = vmatpush1.msra.mxu0 0.0
        %2852 = vmatprep.subr.mxu0 0.0
        %2853 = vmatpush1.msra.mxu0 0.0
        %2854 = vmatprep.subr.mxu0 0.0
        %2855 = vmatpush1.msra.mxu0 0.0
        %2856 = vmatprep.subr.mxu0 0.0
        %2857 = vmatpush1.msra.mxu0 0.0
        %2858 = vmatprep.subr.mxu0 0.0
        %2859 = vmatpush1.msra.mxu0 0.0
        %2860 = vmatprep.subr.mxu0 0.0
        %2861 = vmatpush1.msra.mxu0 0.0
        %2862 = vmatprep.subr.mxu0 0.0
        %2863 = vmatpush1.msra.mxu0 0.0
        %2864 = vmatprep.subr.mxu0 0.0
        %2865 = vmatpush1.msra.mxu0 0.0
        %2866 = vmatprep.subr.mxu0 0.0
        %2867 = vmatpush1.msra.mxu0 0.0
        %2868 = vmatprep.subr.mxu0 0.0
        %2869 = vmatpush1.msra.mxu0 0.0
        %2870 = vmatprep.subr.mxu0 0.0
        %2871 = vmatpush1.msra.mxu0 0.0
        %2872 = vmatprep.subr.mxu0 0.0
        %2873 = vmatpush1.msra.mxu0 0.0
        %2874 = vmatprep.subr.mxu0 0.0
        %2875 = vmatpush1.msra.mxu0 0.0
        %2876 = vmatprep.subr.mxu0 0.0
        %2877 = vmatpush1.msra.mxu0 0.0
        %2878 = vmatprep.subr.mxu0 0.0
        %2879 = vmatpush1.msra.mxu0 0.0
        %2880 = vmatprep.subr.mxu0 0.0
        %2881 = vmatpush1.msra.mxu0 0.0
        %2882 = vmatprep.subr.mxu0 0.0
        %2883 = vmatpush1.msra.mxu0 0.0
        %2884 = vmatprep.subr.mxu0 0.0
        %2885 = vmatpush1.msra.mxu0 0.0
        %2886 = vmatprep.subr.mxu0 0.0
        %2887 = vmatpush1.msra.mxu0 0.0
        %2888 = vmatprep.subr.mxu0 0.0
        %2889 = vmatpush1.msra.mxu0 0.0
        %2890 = vmatprep.subr.mxu0 0.0
        %2891 = vmatpush1.msra.mxu0 0.0
        %2892 = vmatprep.subr.mxu0 0.0
        %2893 = vmatpush1.msra.mxu0 0.0
        %2894 = vmatprep.subr.mxu0 0.0
        %2895 = vmatpush1.msra.mxu0 0.0
        %2896 = vmatprep.mubr.f32.mxu0 0.0
        %2897 = vmatmul.mubr.f32.gmra.mrb[0].mxu0 %v2102
        %v2898 = vpop.f32.mrb[0].mxu0
        %v2899 = vadd.f32 0.0, %v2898
        %v2900 = vpop.f32.mrb[0].mxu0
        %2901 = vmatprep.mubr.f32.mxu0 0.0
        %2902 = vmatmul.mubr.f32.gmra.mrb[0].mxu0 %v2104
        %v2903 = vpop.f32.mrb[0].mxu0
        %v2904 = vadd.f32 0.0, %v2903
        %v2905 = vpop.f32.mrb[0].mxu0
        %2906 = vmatprep.mubr.f32.mxu0 0.0
        %2907 = vmatmul.mubr.f32.gmra.mrb[0].mxu0 %v2106
        %v2908 = vpop.f32.mrb[0].mxu0
        %v2909 = vadd.f32 0.0, %v2908
        %v2910 = vpop.f32.mrb[0].mxu0
        %2911 = vmatprep.mubr.f32.mxu0 0.0
        %2912 = vmatmul.mubr.f32.gmra.mrb[0].mxu0 %v2108
        %v2913 = vpop.f32.mrb[0].mxu0
        %v2914 = vadd.f32 0.0, %v2913
        %v2915 = vpop.f32.mrb[0].mxu0
        %2916 = vmatprep.mubr.f32.mxu0 0.0
        %2917 = vmatmul.mubr.f32.gmra.mrb[0].mxu0 %v2110
        %v2918 = vpop.f32.mrb[0].mxu0
        %v2919 = vadd.f32 0.0, %v2918
        %v2920 = vpop.f32.mrb[0].mxu0
        %2921 = vmatprep.mubr.f32.mxu0 0.0
        %2922 = vmatmul.mubr.f32.gmra.mrb[0].mxu0 %v2112
        %v2923 = vpop.f32.mrb[0].mxu0
        %v2924 = vadd.f32 0.0, %v2923
        %v2925 = vpop.f32.mrb[0].mxu0
        %2926 = vmatprep.mubr.f32.mxu0 0.0
        %2927 = vmatmul.mubr.f32.gmra.mrb[0].mxu0 %v2471
        %v2928 = vpop.f32.mrb[0].mxu0
        %v2929 = vadd.f32 0.0, %v2928
        %v2930 = vpop.f32.mrb[0].mxu0
        %2931 = vmatprep.mubr.f32.mxu0 0.0
        %2932 = vmatmul.mubr.f32.gmra.mrb[0].mxu0 %v2830
        %v2933 = vpop.f32.mrb[0].mxu0
        %v2934 = vadd.f32 0.0, %v2933
        %v2935 = vpop.f32.mrb[0].mxu0
        %2936 = vdwg.mxu0
        %v2937 = vadd.f32 %v2817, %v2899
        %v2938 = vadd.f32 %v2818, %v2904
        %v2939 = vadd.f32 %v2819, %v2909
        %v2940 = vadd.f32 %v2820, %v2914
        %v2941 = vadd.f32 %v2821, %v2919
        %v2942 = vadd.f32 %v2822, %v2924
        %v2943 = vadd.f32 %v2823, %v2929
        %v2944 = vadd.f32 %v2824, %v2934
        %v2961 = vrot.slane %v306, 1
        %v2962 = vrot.slane %v307, 1
        %v2963 = vsel %vm554, %v2961, %v2962
        %v2964 = vrot.slane %v308, 1
        %v2965 = vrot.slane %v309, 1
        %v2966 = vsel %vm554, %v2964, %v2965
        %v2967 = vrot.slane %v310, 1
        %v2968 = vrot.slane %v311, 1
        %v2969 = vsel %vm554, %v2967, %v2968
        %v2970 = vrot.slane %v312, 1
        %v2971 = vrot.slane %v313, 1
        %v2972 = vsel %vm554, %v2970, %v2971
        %v2973 = vrot.slane %v314, 1
        %v2974 = vrot.slane %v315, 1
        %v2975 = vsel %vm554, %v2973, %v2974
        %v2976 = vrot.slane %v316, 1
        %v2977 = vrot.slane %v317, 1
        %v2978 = vsel %vm554, %v2976, %v2977
        %v2979 = vrot.slane %v318, 1
        %v2980 = vrot.slane %v319, 1
        %v2981 = vsel %vm554, %v2979, %v2980
        %v2982 = vrot.slane %v320, 1
        %v2983 = vrot.slane %v321, 1
        %v2984 = vsel %vm554, %v2982, %v2983
        %v2993 = vadd.f32 %v2937, %v2963
        %v2994 = vadd.f32 %v2938, %v2966
        %v2995 = vadd.f32 %v2939, %v2969
        %v2996 = vadd.f32 %v2940, %v2972
        %v2997 = vadd.f32 %v2941, %v2975
        %v2998 = vadd.f32 %v2942, %v2978
        %v2999 = vadd.f32 %v2943, %v2981
        %v3000 = vadd.f32 %v2944, %v2984
        %3001 = vst.msk [vmem:[%s298] sm:$0xff] %vm623, %v2993
        %3002 = vst.msk [vmem:[%s298 + $0x8] sm:$0xff] %vm623, %v2994
        %3003 = vst.msk [vmem:[%s298 + $0x10] sm:$0xff] %vm623, %v2995
        %3004 = vst.msk [vmem:[%s298 + $0x18] sm:$0xff] %vm623, %v2996
        %3005 = vst.msk [vmem:[%s298 + $0x20] sm:$0xff] %vm623, %v2997
        %3006 = vst.msk [vmem:[%s298 + $0x28] sm:$0xff] %vm623, %v2998
        %3007 = vst.msk [vmem:[%s298 + $0x30] sm:$0xff] %vm623, %v2999
        %3008 = vst.msk [vmem:[%s298 + $0x38] sm:$0xff] %vm623, %v3000
        %s3009 = sand.u32 %s203, 1
        %s3010 = scalar_lea.sflag [#allocation4], %s3009
        %s3011 = sand.u32 %s203, 1
        %s3012 = smul.addr %s3011, 64
        %s3013 = scalar_lea.vmem [#allocation3], %s3012
        // Predicated region
        $region53: #{residual_block_forward.3} parent=51 // pred_check
          %p3014 = pneg %p213
        $region54: #{residual_block_forward.3} parent=51 // pred_check_branch
          %3016 = sbr.rel (%p3014) target = $region56
        $region55: #{residual_block_forward.3} parent=51 // pred_region
          %s3018 = ssub.s32 1024, 1024
          %3019 = vsyncadd %s3010, %s3018
          %s3020 = smul.addr %s22, 8
          %s3021 = smul.addr %s3020, 128
          %s3022 = scalar_lea.hbm %s8, %s3021
          %s3023 = sshll.u32 %s3013, 4
          %s3024 = int_to_ptr.vmem [resolvable:$true] %s3023
          %3029 = dma.vmem_to_hbm [thread:$0]  %s3024, 1024, %s3022, %s3010, 128, 128, 8
        $region56: #{residual_block_forward.3} parent=51 // pred_fallthru
          _
      $region52: #{residual_block_forward.3} parent=5 // pred_fallthru
        _
      %p3030 = scmp.le.s32.totalorder 2, %s17
      // Predicated region
      $region57: #{residual_block_forward.3} parent=5 // pred_check
        %p3031 = pneg %p3030
      $region58: #{residual_block_forward.3} parent=5 // pred_check_branch
        %3033 = sbr.rel (%p3031) target = $region60
      $region59: #{residual_block_forward.3} parent=5 // pred_region
        %s3034 = ssub.s32 %s17, 2
        // Predicated region
        $region61: #{residual_block_forward.3} parent=59 // pred_check
          %p3035 = pneg %p219
        $region62: #{residual_block_forward.3} parent=59 // pred_check_branch
          %3037 = sbr.rel (%p3035) target = $region64
        $region63: #{residual_block_forward.3} parent=59 // pred_region
          %s3038 = sand.u32 %s204, 1
          %s3039 = scalar_lea.sflag [#allocation4], %s3038
          %s3040 = sand.u32 %s204, 1
          %s3041 = smul.addr %s3040, 64
          %s3042 = scalar_lea.vmem [#allocation3], %s3041
          %3043 = dma.done %s3039, 1024
        $region64: #{residual_block_forward.3} parent=59 // pred_fallthru
          _
      $region60: #{residual_block_forward.3} parent=5 // pred_fallthru
        _
    $region6: #{residual_block_forward.3} parent=1 // loop_footer
      %s21 = sadd.s32 1, %s17
    $region7: #{residual_block_forward.3} parent=1 // loop_footer_branch
      %16 = sbr.rel target = $region3
    $region8: #{residual_block_forward.3} parent=1 // loop_exit
      _
    %3044 = vsyncpa [#allocation4], 1
    %s3045 = scalar_lea.sflag [#allocation4], 1
    %3046 = vsyncpa %s3045, 1

// kernel: residual_block_forward.2
$region0: #{residual_block_forward.2}
  #allocation0 [shape = 'u32[]', space=smem, size = 0x4, offset = 0x4, fixed_abs, tag = 'smem constant byte address 0x4 - core index']
  #allocation1 [shape = 'u32[144,128]{1,0:T(1,128)}', space=vmem, size = 0x12000, scoped, tag = 'internal scratch']
  #allocation2 [shape = 'f32[10,10,8]{2,1,0:T(8,128)}', space=vmem, size = 0x14000, scoped, tag = 'scratch operand']
  %s0 = inlined_call_operand.vmem [shape: f32[8,9,9,4], index: 0, kind: input, shape index: {}]
  %s1 = inlined_call_operand.vmem [shape: f32[4,9,9,1], index: 1, kind: input, shape index: {}]
  %s2 = inlined_call_operand.vmem [shape: f32[1,4], index: 2, kind: input, shape index: {}]
  %s3 = inlined_call_operand.vmem [shape: f32[1,4], index: 3, kind: input, shape index: {}]
  %s4 = inlined_call_operand.vmem [shape: f32[9,4,8], index: 4, kind: input, shape index: {}]
  %s5 = inlined_call_operand.vmem [shape: f32[1,8], index: 5, kind: input, shape index: {}]
  %s6 = inlined_call_operand.vmem [shape: f32[1,8], index: 6, kind: input, shape index: {}]
  %s7 = inlined_call_operand.vmem [shape: f32[9,8,8], index: 7, kind: input, shape index: {}]
  %s8 = inlined_call_operand.vmem [shape: f32[4,8], index: 8, kind: input, shape index: {}]
  %s9 = inlined_call_operand.vmem [shape: f32[2,8,8,8], index: 9, kind: output, shape index: {}]
  %s10 = sld [smem:[#allocation0]]
  $region69: #{residual_block_forward.2} parent=0
    _
  %s12 = ssub.s32 1, %s10
  %s13 = scalar_select 0, %s12, %s10
  loop: start=0, step=1, limit=4
  $region2: #{residual_block_forward.2} parent=0 // loop_pre_header
    _
  $region3: #{residual_block_forward.2} parent=0 // loop_header
    %s15 = sphi 0, %s19
    %p16 = scmp.ge.s32.totalorder %s15, 4
    %s25 = sphi 0, %s27
    %s28 = sphi 0, %s25
    %s29 = sphi 0, %s28
    %s45 = sphi 0, %s29
    %s49 = sphi 0, %s49
    %s51 = sphi 0, %s49
    %s52 = sphi 0, %s51
    %s66 = sphi 0, %s52
    %s70 = sphi 0, %s70
    %s72 = sphi 0, %s70
    %s73 = sphi 0, %s72
    %s87 = sphi 0, %s73
    %s91 = sphi 0, %s91
    %s93 = sphi 0, %s91
    %s94 = sphi 0, %s93
    %s108 = sphi 0, %s94
    %s112 = sphi 0, %s112
    %s114 = sphi 0, %s112
    %s115 = sphi 0, %s114
    %s129 = sphi 0, %s115
    %s133 = sphi 0, %s133
    %s135 = sphi 0, %s133
    %s136 = sphi 0, %s135
    %s150 = sphi 0, %s136
    %s154 = sphi 0, %s154
    %s156 = sphi 0, %s154
    %s157 = sphi 0, %s156
    %s171 = sphi 0, %s157
    %s175 = sphi 0, %s175
    %s177 = sphi 0, %s175
    %s178 = sphi 0, %s177
    %s192 = sphi 0, %s178
    %s196 = sphi 0, %s196
    %s198 = sphi 0, %s196
    %s199 = sphi 0, %s198
    %s213 = sphi 0, %s199
    %s219 = sphi 0, %s221
    %s222 = sphi 0, %s219
    %s223 = sphi 0, %s222
    %s239 = sphi 0, %s223
  $region4: #{residual_block_forward.2} parent=0 // loop_header_branch
    %18 = sbr.rel (%p16) target = $region8
  $region5: #{residual_block_forward.2} parent=0 // loop_body
    %s20 = ssub.s32 %s15, 1
    %s21 = ssub.s32 %s15, 2
    %s22 = sadd.s32 %s15, 1
    %s23 = ssub.s32 %s15, %s22
    %p24 = scmp.eq.s32.totalorder %s23, 0
    %s26 = sadd.s32 %s25, 1
    %s27 = scalar_select %p24, %s25, %s26
    %p30 = pneg %p24
    %p31 = scmp.eq.s32.totalorder %s15, 1
    %p32 = por %p30, %p31
    %p33 = scmp.ne.s32.totalorder %s25, %s28
    %p34 = scmp.eq.s32.totalorder %s15, 0
    %p35 = por %p33, %p34
    %p36 = scmp.ne.s32.totalorder %s25, %s28
    %p37 = scmp.eq.s32.totalorder %s20, 1
    %p38 = por %p36, %p37
    %p39 = scmp.ne.s32.totalorder %s28, %s29
    %p40 = scmp.eq.s32.totalorder %s20, 0
    %p41 = por %p39, %p40
    %p42 = scmp.ne.s32.totalorder %s28, %s29
    %p43 = scmp.eq.s32.totalorder %s21, 1
    %p44 = por %p42, %p43
    %p46 = scmp.ne.s32.totalorder %s29, %s45
    %p47 = scmp.eq.s32.totalorder %s21, 0
    %p48 = por %p46, %p47
    %s50 = sadd.s32 %s49, 1
    %p53 = scmp.eq.s32.totalorder %s15, 1
    %p54 = scmp.ne.s32.totalorder %s49, %s51
    %p55 = scmp.eq.s32.totalorder %s15, 0
    %p56 = por %p54, %p55
    %p57 = scmp.ne.s32.totalorder %s49, %s51
    %p58 = scmp.eq.s32.totalorder %s20, 1
    %p59 = por %p57, %p58
    %p60 = scmp.ne.s32.totalorder %s51, %s52
    %p61 = scmp.eq.s32.totalorder %s20, 0
    %p62 = por %p60, %p61
    %p63 = scmp.ne.s32.totalorder %s51, %s52
    %p64 = scmp.eq.s32.totalorder %s21, 1
    %p65 = por %p63, %p64
    %p67 = scmp.ne.s32.totalorder %s52, %s66
    %p68 = scmp.eq.s32.totalorder %s21, 0
    %p69 = por %p67, %p68
    %s71 = sadd.s32 %s70, 1
    %p74 = scmp.eq.s32.totalorder %s15, 1
    %p75 = scmp.ne.s32.totalorder %s70, %s72
    %p76 = scmp.eq.s32.totalorder %s15, 0
    %p77 = por %p75, %p76
    %p78 = scmp.ne.s32.totalorder %s70, %s72
    %p79 = scmp.eq.s32.totalorder %s20, 1
    %p80 = por %p78, %p79
    %p81 = scmp.ne.s32.totalorder %s72, %s73
    %p82 = scmp.eq.s32.totalorder %s20, 0
    %p83 = por %p81, %p82
    %p84 = scmp.ne.s32.totalorder %s72, %s73
    %p85 = scmp.eq.s32.totalorder %s21, 1
    %p86 = por %p84, %p85
    %p88 = scmp.ne.s32.totalorder %s73, %s87
    %p89 = scmp.eq.s32.totalorder %s21, 0
    %p90 = por %p88, %p89
    %s92 = sadd.s32 %s91, 1
    %p95 = scmp.eq.s32.totalorder %s15, 1
    %p96 = scmp.ne.s32.totalorder %s91, %s93
    %p97 = scmp.eq.s32.totalorder %s15, 0
    %p98 = por %p96, %p97
    %p99 = scmp.ne.s32.totalorder %s91, %s93
    %p100 = scmp.eq.s32.totalorder %s20, 1
    %p101 = por %p99, %p100
    %p102 = scmp.ne.s32.totalorder %s93, %s94
    %p103 = scmp.eq.s32.totalorder %s20, 0
    %p104 = por %p102, %p103
    %p105 = scmp.ne.s32.totalorder %s93, %s94
    %p106 = scmp.eq.s32.totalorder %s21, 1
    %p107 = por %p105, %p106
    %p109 = scmp.ne.s32.totalorder %s94, %s108
    %p110 = scmp.eq.s32.totalorder %s21, 0
    %p111 = por %p109, %p110
    %s113 = sadd.s32 %s112, 1
    %p116 = scmp.eq.s32.totalorder %s15, 1
    %p117 = scmp.ne.s32.totalorder %s112, %s114
    %p118 = scmp.eq.s32.totalorder %s15, 0
    %p119 = por %p117, %p118
    %p120 = scmp.ne.s32.totalorder %s112, %s114
    %p121 = scmp.eq.s32.totalorder %s20, 1
    %p122 = por %p120, %p121
    %p123 = scmp.ne.s32.totalorder %s114, %s115
    %p124 = scmp.eq.s32.totalorder %s20, 0
    %p125 = por %p123, %p124
    %p126 = scmp.ne.s32.totalorder %s114, %s115
    %p127 = scmp.eq.s32.totalorder %s21, 1
    %p128 = por %p126, %p127
    %p130 = scmp.ne.s32.totalorder %s115, %s129
    %p131 = scmp.eq.s32.totalorder %s21, 0
    %p132 = por %p130, %p131
    %s134 = sadd.s32 %s133, 1
    %p137 = scmp.eq.s32.totalorder %s15, 1
    %p138 = scmp.ne.s32.totalorder %s133, %s135
    %p139 = scmp.eq.s32.totalorder %s15, 0
    %p140 = por %p138, %p139
    %p141 = scmp.ne.s32.totalorder %s133, %s135
    %p142 = scmp.eq.s32.totalorder %s20, 1
    %p143 = por %p141, %p142
    %p144 = scmp.ne.s32.totalorder %s135, %s136
    %p145 = scmp.eq.s32.totalorder %s20, 0
    %p146 = por %p144, %p145
    %p147 = scmp.ne.s32.totalorder %s135, %s136
    %p148 = scmp.eq.s32.totalorder %s21, 1
    %p149 = por %p147, %p148
    %p151 = scmp.ne.s32.totalorder %s136, %s150
    %p152 = scmp.eq.s32.totalorder %s21, 0
    %p153 = por %p151, %p152
    %s155 = sadd.s32 %s154, 1
    %p158 = scmp.eq.s32.totalorder %s15, 1
    %p159 = scmp.ne.s32.totalorder %s154, %s156
    %p160 = scmp.eq.s32.totalorder %s15, 0
    %p161 = por %p159, %p160
    %p162 = scmp.ne.s32.totalorder %s154, %s156
    %p163 = scmp.eq.s32.totalorder %s20, 1
    %p164 = por %p162, %p163
    %p165 = scmp.ne.s32.totalorder %s156, %s157
    %p166 = scmp.eq.s32.totalorder %s20, 0
    %p167 = por %p165, %p166
    %p168 = scmp.ne.s32.totalorder %s156, %s157
    %p169 = scmp.eq.s32.totalorder %s21, 1
    %p170 = por %p168, %p169
    %p172 = scmp.ne.s32.totalorder %s157, %s171
    %p173 = scmp.eq.s32.totalorder %s21, 0
    %p174 = por %p172, %p173
    %s176 = sadd.s32 %s175, 1
    %p179 = scmp.eq.s32.totalorder %s15, 1
    %p180 = scmp.ne.s32.totalorder %s175, %s177
    %p181 = scmp.eq.s32.totalorder %s15, 0
    %p182 = por %p180, %p181
    %p183 = scmp.ne.s32.totalorder %s175, %s177
    %p184 = scmp.eq.s32.totalorder %s20, 1
    %p185 = por %p183, %p184
    %p186 = scmp.ne.s32.totalorder %s177, %s178
    %p187 = scmp.eq.s32.totalorder %s20, 0
    %p188 = por %p186, %p187
    %p189 = scmp.ne.s32.totalorder %s177, %s178
    %p190 = scmp.eq.s32.totalorder %s21, 1
    %p191 = por %p189, %p190
    %p193 = scmp.ne.s32.totalorder %s178, %s192
    %p194 = scmp.eq.s32.totalorder %s21, 0
    %p195 = por %p193, %p194
    %s197 = sadd.s32 %s196, 1
    %p200 = scmp.eq.s32.totalorder %s15, 1
    %p201 = scmp.ne.s32.totalorder %s196, %s198
    %p202 = scmp.eq.s32.totalorder %s15, 0
    %p203 = por %p201, %p202
    %p204 = scmp.ne.s32.totalorder %s196, %s198
    %p205 = scmp.eq.s32.totalorder %s20, 1
    %p206 = por %p204, %p205
    %p207 = scmp.ne.s32.totalorder %s198, %s199
    %p208 = scmp.eq.s32.totalorder %s20, 0
    %p209 = por %p207, %p208
    %p210 = scmp.ne.s32.totalorder %s198, %s199
    %p211 = scmp.eq.s32.totalorder %s21, 1
    %p212 = por %p210, %p211
    %p214 = scmp.ne.s32.totalorder %s199, %s213
    %p215 = scmp.eq.s32.totalorder %s21, 0
    %p216 = por %p214, %p215
    %s217 = ssub.s32 %s15, %s22
    %p218 = scmp.eq.s32.totalorder %s217, 0
    %s220 = sadd.s32 %s219, 1
    %s221 = scalar_select %p218, %s219, %s220
    %p224 = pneg %p218
    %p225 = scmp.eq.s32.totalorder %s15, 1
    %p226 = por %p224, %p225
    %p227 = scmp.ne.s32.totalorder %s219, %s222
    %p228 = scmp.eq.s32.totalorder %s15, 0
    %p229 = por %p227, %p228
    %p230 = scmp.ne.s32.totalorder %s219, %s222
    %p231 = scmp.eq.s32.totalorder %s20, 1
    %p232 = por %p230, %p231
    %p233 = scmp.ne.s32.totalorder %s222, %s223
    %p234 = scmp.eq.s32.totalorder %s20, 0
    %p235 = por %p233, %p234
    %p236 = scmp.ne.s32.totalorder %s222, %s223
    %p237 = scmp.eq.s32.totalorder %s21, 1
    %p238 = por %p236, %p237
    %p240 = scmp.ne.s32.totalorder %s223, %s239
    %p241 = scmp.eq.s32.totalorder %s21, 0
    %p242 = por %p240, %p241
    %p243 = scmp.le.s32.totalorder 1, %s15
    %p244 = scmp.lt.s32.totalorder %s15, 3
    %p245 = pnand %p243, %p244
    %p246 = pneg %p245
    // Predicated region
    $region9: #{residual_block_forward.2} parent=5 // pred_check
      _
    $region10: #{residual_block_forward.2} parent=5 // pred_check_branch
      %248 = sbr.rel (%p245) target = $region12
    $region11: #{residual_block_forward.2} parent=5 // pred_region
      %s249 = ssub.s32 %s15, 1
      // Predicated region
      $region13: #{residual_block_forward.2} parent=11 // pred_check
        %p250 = pneg %p62
      $region14: #{residual_block_forward.2} parent=11 // pred_check_branch
        %252 = sbr.rel (%p250) target = $region16
      $region15: #{residual_block_forward.2} parent=11 // pred_region
        _
      $region16: #{residual_block_forward.2} parent=11 // pred_fallthru
        _
      // Predicated region
      $region17: #{residual_block_forward.2} parent=11 // pred_check
        %p253 = pneg %p83
      $region18: #{residual_block_forward.2} parent=11 // pred_check_branch
        %255 = sbr.rel (%p253) target = $region20
      $region19: #{residual_block_forward.2} parent=11 // pred_region
        _
      $region20: #{residual_block_forward.2} parent=11 // pred_fallthru
        _
      // Predicated region
      $region21: #{residual_block_forward.2} parent=11 // pred_check
        %p256 = pneg %p104
      $region22: #{residual_block_forward.2} parent=11 // pred_check_branch
        %258 = sbr.rel (%p256) target = $region24
      $region23: #{residual_block_forward.2} parent=11 // pred_region
        _
      $region24: #{residual_block_forward.2} parent=11 // pred_fallthru
        _
      // Predicated region
      $region25: #{residual_block_forward.2} parent=11 // pred_check
        %p259 = pneg %p125
      $region26: #{residual_block_forward.2} parent=11 // pred_check_branch
        %261 = sbr.rel (%p259) target = $region28
      $region27: #{residual_block_forward.2} parent=11 // pred_region
        _
      $region28: #{residual_block_forward.2} parent=11 // pred_fallthru
        _
      // Predicated region
      $region29: #{residual_block_forward.2} parent=11 // pred_check
        %p262 = pneg %p146
      $region30: #{residual_block_forward.2} parent=11 // pred_check_branch
        %264 = sbr.rel (%p262) target = $region32
      $region31: #{residual_block_forward.2} parent=11 // pred_region
        _
      $region32: #{residual_block_forward.2} parent=11 // pred_fallthru
        _
      // Predicated region
      $region33: #{residual_block_forward.2} parent=11 // pred_check
        %p265 = pneg %p167
      $region34: #{residual_block_forward.2} parent=11 // pred_check_branch
        %267 = sbr.rel (%p265) target = $region36
      $region35: #{residual_block_forward.2} parent=11 // pred_region
        _
      $region36: #{residual_block_forward.2} parent=11 // pred_fallthru
        _
      // Predicated region
      $region37: #{residual_block_forward.2} parent=11 // pred_check
        %p268 = pneg %p188
      $region38: #{residual_block_forward.2} parent=11 // pred_check_branch
        %270 = sbr.rel (%p268) target = $region40
      $region39: #{residual_block_forward.2} parent=11 // pred_region
        _
      $region40: #{residual_block_forward.2} parent=11 // pred_fallthru
        _
      // Predicated region
      $region41: #{residual_block_forward.2} parent=11 // pred_check
        %p271 = pneg %p209
      $region42: #{residual_block_forward.2} parent=11 // pred_check_branch
        %273 = sbr.rel (%p271) target = $region44
      $region43: #{residual_block_forward.2} parent=11 // pred_region
        _
      $region44: #{residual_block_forward.2} parent=11 // pred_fallthru
        _
    $region12: #{residual_block_forward.2} parent=5 // pred_fallthru
      _
    %p274 = scmp.lt.s32.totalorder %s15, 2
    // Predicated region
    $region45: #{residual_block_forward.2} parent=5 // pred_check
      %p275 = pneg %p274
    $region46: #{residual_block_forward.2} parent=5 // pred_check_branch
      %277 = sbr.rel (%p275) target = $region48
    $region47: #{residual_block_forward.2} parent=5 // pred_region
      // Predicated region
      $region49: #{residual_block_forward.2} parent=47 // pred_check
        %p278 = pneg %p35
      $region50: #{residual_block_forward.2} parent=47 // pred_check_branch
        %280 = sbr.rel (%p278) target = $region52
      $region51: #{residual_block_forward.2} parent=47 // pred_region
        %s281 = smul.u32 4, %s15
        %p282 = scmp.lt.s32.totalorder %s281, 7
        %s283 = scalar_select %p282, %s281, 7
        %s284 = smul.addr %s283, 18
        %s285 = smul.addr %s284, 8
        %s286 = scalar_lea.vmem %s0, %s285
        %s287 = smul.u32 4, %s15
      $region52: #{residual_block_forward.2} parent=47 // pred_fallthru
        _
    $region48: #{residual_block_forward.2} parent=5 // pred_fallthru
      _
    %p288 = scmp.le.s32.totalorder 1, %s15
    %p289 = scmp.lt.s32.totalorder %s15, 3
    %p290 = pnand %p288, %p289
    %p291 = pneg %p290
    // Predicated region
    $region53: #{residual_block_forward.2} parent=5 // pred_check
      _
    $region54: #{residual_block_forward.2} parent=5 // pred_check_branch
      %293 = sbr.rel (%p290) target = $region56
    $region55: #{residual_block_forward.2} parent=5 // pred_region
      %s294 = ssub.s32 %s15, 1
      %s295 = smul.u32 4, %s20
      %p296 = scmp.lt.s32.totalorder %s295, 7
      %s297 = scalar_select %p296, %s295, 7
      %s298 = smul.addr %s297, 18
      %s299 = smul.addr %s298, 8
      %s300 = scalar_lea.vmem %s0, %s299
      %p301 = pneg %p41
      %p302 = pneg %p38
      %p303 = pneg %p62
      %p304 = pneg %p59
      %p305 = pneg %p83
      %p306 = pneg %p80
      %p307 = pneg %p104
      %p308 = pneg %p101
      %p309 = pneg %p125
      %p310 = pneg %p122
      %p311 = pneg %p146
      %p312 = pneg %p143
      %p313 = pneg %p167
      %p314 = pneg %p164
      %p315 = pneg %p188
      %p316 = pneg %p185
      %p317 = pneg %p209
      %p318 = pneg %p206
      %p319 = pneg %p235
      %p320 = pneg %p232
      %p321 = scmp.lt.s32.totalorder %s20, 1
      %s322 = scalar_select %p321, %s20, 1
      %s323 = smul.addr %s322, 8
      %s324 = smul.addr %s323, 8
      %s325 = scalar_lea.vmem %s9, %s324
      %s326 = smul.u32 4, %s20
      %p327 = scmp.lt.s32.totalorder %s326, 7
      %s328 = scalar_select %p327, %s326, 7
      %s329 = smul.addr %s328, 18
      %s330 = smul.addr %s329, 8
      %s331 = scalar_lea.vmem %s0, %s330
      %s332 = smul.u32 4, %s20
      %p333 = scmp.lt.s32.totalorder %s20, 1
      %s334 = scalar_select %p333, %s20, 1
      %s335 = smul.addr %s334, 8
      %s336 = smul.addr %s335, 8
      %s337 = scalar_lea.vmem %s9, %s336
      %v338 = vld [vmem:[%s331] sm:$0xff]
      %v339 = vld [vmem:[%s331 + $0x8] sm:$0x1]
      %v340 = vld [vmem:[%s331 + $0x10] sm:$0xff]
      %v341 = vld [vmem:[%s331 + $0x18] sm:$0x1]
      %v342 = vld [vmem:[%s331 + $0x20] sm:$0xff]
      %v343 = vld [vmem:[%s331 + $0x28] sm:$0x1]
      %v344 = vld [vmem:[%s331 + $0x30] sm:$0xff]
      %v345 = vld [vmem:[%s331 + $0x38] sm:$0x1]
      %v346 = vld [vmem:[%s331 + $0x40] sm:$0xff]
      %v347 = vld [vmem:[%s331 + $0x48] sm:$0x1]
      %v348 = vld [vmem:[%s331 + $0x50] sm:$0xff]
      %v349 = vld [vmem:[%s331 + $0x58] sm:$0x1]
      %v350 = vld [vmem:[%s331 + $0x60] sm:$0xff]
      %v351 = vld [vmem:[%s331 + $0x68] sm:$0x1]
      %v352 = vld [vmem:[%s331 + $0x70] sm:$0xff]
      %v353 = vld [vmem:[%s331 + $0x78] sm:$0x1]
      %v354 = vld [vmem:[%s331 + $0x80] sm:$0xff]
      %v355 = vld [vmem:[%s331 + $0x88] sm:$0x1]
      %v356 = vld [vmem:[%s331 + $0x90] sm:$0xff]
      %v357 = vld [vmem:[%s331 + $0xa0] sm:$0xff]
      %v358 = vld [vmem:[%s331 + $0xb0] sm:$0xff]
      %v359 = vld [vmem:[%s331 + $0xc0] sm:$0xff]
      %v360 = vld [vmem:[%s331 + $0xd0] sm:$0xff]
      %v361 = vld [vmem:[%s331 + $0xe0] sm:$0xff]
      %v362 = vld [vmem:[%s331 + $0xf0] sm:$0xff]
      %v363 = vld [vmem:[%s331 + $0x100] sm:$0xff]
      %v364 = vld [vmem:[%s331 + $0x110] sm:$0xff]
      %v365 = vld [vmem:[%s331 + $0x120] sm:$0xff]
      %v366 = vld [vmem:[%s331 + $0x128] sm:$0x1]
      %v367 = vld [vmem:[%s331 + $0x130] sm:$0xff]
      %v368 = vld [vmem:[%s331 + $0x138] sm:$0x1]
      %v369 = vld [vmem:[%s331 + $0x140] sm:$0xff]
      %v370 = vld [vmem:[%s331 + $0x148] sm:$0x1]
      %v371 = vld [vmem:[%s331 + $0x150] sm:$0xff]
      %v372 = vld [vmem:[%s331 + $0x158] sm:$0x1]
      %v373 = vld [vmem:[%s331 + $0x160] sm:$0xff]
      %v374 = vld [vmem:[%s331 + $0x168] sm:$0x1]
      %v375 = vld [vmem:[%s331 + $0x170] sm:$0xff]
      %v376 = vld [vmem:[%s331 + $0x178] sm:$0x1]
      %v377 = vld [vmem:[%s331 + $0x180] sm:$0xff]
      %v378 = vld [vmem:[%s331 + $0x188] sm:$0x1]
      %v379 = vld [vmem:[%s331 + $0x190] sm:$0xff]
      %v380 = vld [vmem:[%s331 + $0x198] sm:$0x1]
      %v381 = vld [vmem:[%s331 + $0x1b0] sm:$0xff]
      %v382 = vld [vmem:[%s331 + $0x1c0] sm:$0xff]
      %v383 = vld [vmem:[%s331 + $0x1d0] sm:$0xff]
      %v384 = vld [vmem:[%s331 + $0x1e0] sm:$0xff]
      %v385 = vld [vmem:[%s331 + $0x1f0] sm:$0xff]
      %v386 = vld [vmem:[%s331 + $0x200] sm:$0xff]
      %v387 = vld [vmem:[%s331 + $0x210] sm:$0xff]
      %v388 = vld [vmem:[%s331 + $0x220] sm:$0xff]
      %v389 = vld [vmem:[%s2] sm:$0x1]
      %v391 = vlaneseq
      %v392 = vshrl.u32 %v391, 7
      %v393 = vsub.s32 0, %v392
      %v394 = vrot.slane %v389, %v393
      %v396 = vmul.f32 %v338, %v394
      %v397 = vmul.f32 %v339, %v394
      %v398 = vmul.f32 %v340, %v394
      %v399 = vmul.f32 %v341, %v394
      %v400 = vmul.f32 %v342, %v394
      %v401 = vmul.f32 %v343, %v394
      %v402 = vmul.f32 %v344, %v394
      %v403 = vmul.f32 %v345, %v394
      %v404 = vmul.f32 %v346, %v394
      %v405 = vmul.f32 %v347, %v394
      %v406 = vmul.f32 %v348, %v394
      %v407 = vmul.f32 %v349, %v394
      %v408 = vmul.f32 %v350, %v394
      %v409 = vmul.f32 %v351, %v394
      %v410 = vmul.f32 %v352, %v394
      %v411 = vmul.f32 %v353, %v394
      %v412 = vmul.f32 %v354, %v394
      %v413 = vmul.f32 %v355, %v394
      %v414 = vmul.f32 %v356, %v394
      %v415 = vmul.f32 %v357, %v394
      %v416 = vmul.f32 %v358, %v394
      %v417 = vmul.f32 %v359, %v394
      %v418 = vmul.f32 %v360, %v394
      %v419 = vmul.f32 %v361, %v394
      %v420 = vmul.f32 %v362, %v394
      %v421 = vmul.f32 %v363, %v394
      %v422 = vmul.f32 %v364, %v394
      %v423 = vmul.f32 %v365, %v394
      %v424 = vmul.f32 %v366, %v394
      %v425 = vmul.f32 %v367, %v394
      %v426 = vmul.f32 %v368, %v394
      %v427 = vmul.f32 %v369, %v394
      %v428 = vmul.f32 %v370, %v394
      %v429 = vmul.f32 %v371, %v394
      %v430 = vmul.f32 %v372, %v394
      %v431 = vmul.f32 %v373, %v394
      %v432 = vmul.f32 %v374, %v394
      %v433 = vmul.f32 %v375, %v394
      %v434 = vmul.f32 %v376, %v394
      %v435 = vmul.f32 %v377, %v394
      %v436 = vmul.f32 %v378, %v394
      %v437 = vmul.f32 %v379, %v394
      %v438 = vmul.f32 %v380, %v394
      %v439 = vmul.f32 %v381, %v394
      %v440 = vmul.f32 %v382, %v394
      %v441 = vmul.f32 %v383, %v394
      %v442 = vmul.f32 %v384, %v394
      %v443 = vmul.f32 %v385, %v394
      %v444 = vmul.f32 %v386, %v394
      %v445 = vmul.f32 %v387, %v394
      %v446 = vmul.f32 %v388, %v394
      %v447 = vld [vmem:[%s3] sm:$0x1]
      %v449 = vlaneseq
      %v450 = vshrl.u32 %v449, 7
      %v451 = vsub.s32 0, %v450
      %v452 = vrot.slane %v447, %v451
      %v454 = vadd.f32 %v396, %v452
      %v455 = vadd.f32 %v397, %v452
      %v456 = vadd.f32 %v398, %v452
      %v457 = vadd.f32 %v399, %v452
      %v458 = vadd.f32 %v400, %v452
      %v459 = vadd.f32 %v401, %v452
      %v460 = vadd.f32 %v402, %v452
      %v461 = vadd.f32 %v403, %v452
      %v462 = vadd.f32 %v404, %v452
      %v463 = vadd.f32 %v405, %v452
      %v464 = vadd.f32 %v406, %v452
      %v465 = vadd.f32 %v407, %v452
      %v466 = vadd.f32 %v408, %v452
      %v467 = vadd.f32 %v409, %v452
      %v468 = vadd.f32 %v410, %v452
      %v469 = vadd.f32 %v411, %v452
      %v470 = vadd.f32 %v412, %v452
      %v471 = vadd.f32 %v413, %v452
      %v472 = vadd.f32 %v414, %v452
      %v473 = vadd.f32 %v415, %v452
      %v474 = vadd.f32 %v416, %v452
      %v475 = vadd.f32 %v417, %v452
      %v476 = vadd.f32 %v418, %v452
      %v477 = vadd.f32 %v419, %v452
      %v478 = vadd.f32 %v420, %v452
      %v479 = vadd.f32 %v421, %v452
      %v480 = vadd.f32 %v422, %v452
      %v481 = vadd.f32 %v423, %v452
      %v482 = vadd.f32 %v424, %v452
      %v483 = vadd.f32 %v425, %v452
      %v484 = vadd.f32 %v426, %v452
      %v485 = vadd.f32 %v427, %v452
      %v486 = vadd.f32 %v428, %v452
      %v487 = vadd.f32 %v429, %v452
      %v488 = vadd.f32 %v430, %v452
      %v489 = vadd.f32 %v431, %v452
      %v490 = vadd.f32 %v432, %v452
      %v491 = vadd.f32 %v433, %v452
      %v492 = vadd.f32 %v434, %v452
      %v493 = vadd.f32 %v435, %v452
      %v494 = vadd.f32 %v436, %v452
      %v495 = vadd.f32 %v437, %v452
      %v496 = vadd.f32 %v438, %v452
      %v497 = vadd.f32 %v439, %v452
      %v498 = vadd.f32 %v440, %v452
      %v499 = vadd.f32 %v441, %v452
      %v500 = vadd.f32 %v442, %v452
      %v501 = vadd.f32 %v443, %v452
      %v502 = vadd.f32 %v444, %v452
      %v503 = vadd.f32 %v445, %v452
      %v504 = vadd.f32 %v446, %v452
      %v505 = vmax.f32 %v454, 0.0
      %v506 = vmax.f32 %v455, 0.0
      %v507 = vmax.f32 %v456, 0.0
      %v508 = vmax.f32 %v457, 0.0
      %v509 = vmax.f32 %v458, 0.0
      %v510 = vmax.f32 %v459, 0.0
      %v511 = vmax.f32 %v460, 0.0
      %v512 = vmax.f32 %v461, 0.0
      %v513 = vmax.f32 %v462, 0.0
      %v514 = vmax.f32 %v463, 0.0
      %v515 = vmax.f32 %v464, 0.0
      %v516 = vmax.f32 %v465, 0.0
      %v517 = vmax.f32 %v466, 0.0
      %v518 = vmax.f32 %v467, 0.0
      %v519 = vmax.f32 %v468, 0.0
      %v520 = vmax.f32 %v469, 0.0
      %v521 = vmax.f32 %v470, 0.0
      %v522 = vmax.f32 %v471, 0.0
      %v523 = vmax.f32 %v472, 0.0
      %v524 = vmax.f32 %v473, 0.0
      %v525 = vmax.f32 %v474, 0.0
      %v526 = vmax.f32 %v475, 0.0
      %v527 = vmax.f32 %v476, 0.0
      %v528 = vmax.f32 %v477, 0.0
      %v529 = vmax.f32 %v478, 0.0
      %v530 = vmax.f32 %v479, 0.0
      %v531 = vmax.f32 %v480, 0.0
      %v532 = vmax.f32 %v481, 0.0
      %v533 = vmax.f32 %v482, 0.0
      %v534 = vmax.f32 %v483, 0.0
      %v535 = vmax.f32 %v484, 0.0
      %v536 = vmax.f32 %v485, 0.0
      %v537 = vmax.f32 %v486, 0.0
      %v538 = vmax.f32 %v487, 0.0
      %v539 = vmax.f32 %v488, 0.0
      %v540 = vmax.f32 %v489, 0.0
      %v541 = vmax.f32 %v490, 0.0
      %v542 = vmax.f32 %v491, 0.0
      %v543 = vmax.f32 %v492, 0.0
      %v544 = vmax.f32 %v493, 0.0
      %v545 = vmax.f32 %v494, 0.0
      %v546 = vmax.f32 %v495, 0.0
      %v547 = vmax.f32 %v496, 0.0
      %v548 = vmax.f32 %v497, 0.0
      %v549 = vmax.f32 %v498, 0.0
      %v550 = vmax.f32 %v499, 0.0
      %v551 = vmax.f32 %v500, 0.0
      %v552 = vmax.f32 %v501, 0.0
      %v553 = vmax.f32 %v502, 0.0
      %v554 = vmax.f32 %v503, 0.0
      %v555 = vmax.f32 %v504, 0.0
      %v556 = vld [vmem:[%s1] sm:$0xff]
      %v557 = vld [vmem:[%s1 + $0x8] sm:$0x1]
      %v558 = vld [vmem:[%s1 + $0x10] sm:$0xff]
      %v559 = vld [vmem:[%s1 + $0x18] sm:$0x1]
      %v560 = vld [vmem:[%s1 + $0x20] sm:$0xff]
      %v561 = vld [vmem:[%s1 + $0x28] sm:$0x1]
      %v562 = vld [vmem:[%s1 + $0x30] sm:$0xff]
      %v563 = vld [vmem:[%s1 + $0x38] sm:$0x1]
      %v564 = vld [vmem:[%s1 + $0x40] sm:$0xff]
      %v565 = vld [vmem:[%s1 + $0x48] sm:$0x1]
      %v566 = vld [vmem:[%s1 + $0x50] sm:$0xff]
      %v567 = vld [vmem:[%s1 + $0x58] sm:$0x1]
      %v568 = vld [vmem:[%s1 + $0x60] sm:$0xff]
      %v569 = vld [vmem:[%s1 + $0x68] sm:$0x1]
      %v570 = vld [vmem:[%s1 + $0x70] sm:$0xff]
      %v571 = vld [vmem:[%s1 + $0x78] sm:$0x1]
      %v572 = vld [vmem:[%s1 + $0x80] sm:$0xff]
      %v573 = vld [vmem:[%s1 + $0x88] sm:$0x1]
      %v574 = vld [vmem:[%s1 + $0x90] sm:$0xff]
      %v575 = vld [vmem:[%s1 + $0xa0] sm:$0xff]
      %v576 = vld [vmem:[%s1 + $0xb0] sm:$0xff]
      %v577 = vld [vmem:[%s1 + $0xc0] sm:$0xff]
      %v578 = vld [vmem:[%s1 + $0xd0] sm:$0xff]
      %v579 = vld [vmem:[%s1 + $0xe0] sm:$0xff]
      %v580 = vld [vmem:[%s1 + $0xf0] sm:$0xff]
      %v581 = vld [vmem:[%s1 + $0x100] sm:$0xff]
      %v582 = vld [vmem:[%s1 + $0x110] sm:$0xff]
      %v583 = vld [vmem:[%s1 + $0x120] sm:$0xff]
      %v584 = vld [vmem:[%s1 + $0x128] sm:$0x1]
      %v585 = vld [vmem:[%s1 + $0x130] sm:$0xff]
      %v586 = vld [vmem:[%s1 + $0x138] sm:$0x1]
      %v587 = vld [vmem:[%s1 + $0x140] sm:$0xff]
      %v588 = vld [vmem:[%s1 + $0x148] sm:$0x1]
      %v589 = vld [vmem:[%s1 + $0x150] sm:$0xff]
      %v590 = vld [vmem:[%s1 + $0x158] sm:$0x1]
      %v591 = vld [vmem:[%s1 + $0x160] sm:$0xff]
      %v592 = vld [vmem:[%s1 + $0x168] sm:$0x1]
      %v593 = vld [vmem:[%s1 + $0x170] sm:$0xff]
      %v594 = vld [vmem:[%s1 + $0x178] sm:$0x1]
      %v595 = vld [vmem:[%s1 + $0x180] sm:$0xff]
      %v596 = vld [vmem:[%s1 + $0x188] sm:$0x1]
      %v597 = vld [vmem:[%s1 + $0x190] sm:$0xff]
      %v598 = vld [vmem:[%s1 + $0x198] sm:$0x1]
      %v599 = vld [vmem:[%s1 + $0x1b0] sm:$0xff]
      %v600 = vld [vmem:[%s1 + $0x1c0] sm:$0xff]
      %v601 = vld [vmem:[%s1 + $0x1d0] sm:$0xff]
      %v602 = vld [vmem:[%s1 + $0x1e0] sm:$0xff]
      %v603 = vld [vmem:[%s1 + $0x1f0] sm:$0xff]
      %v604 = vld [vmem:[%s1 + $0x200] sm:$0xff]
      %v605 = vld [vmem:[%s1 + $0x210] sm:$0xff]
      %v606 = vld [vmem:[%s1 + $0x220] sm:$0xff]
      %608 = vset.pattern.permute.xlu0 0
      %609 = vperm.xlu0 %608, %v556
      %v610 = vpop.permute.xlu0 %609
      %613 = vset.pattern.permute.xlu0 0
      %614 = vperm.xlu0 %613, %v557
      %v615 = vpop.permute.xlu0 %614
      %618 = vset.pattern.permute.xlu0 0
      %619 = vperm.xlu0 %618, %v558
      %v620 = vpop.permute.xlu0 %619
      %623 = vset.pattern.permute.xlu0 0
      %624 = vperm.xlu0 %623, %v559
      %v625 = vpop.permute.xlu0 %624
      %628 = vset.pattern.permute.xlu0 0
      %629 = vperm.xlu0 %628, %v560
      %v630 = vpop.permute.xlu0 %629
      %633 = vset.pattern.permute.xlu0 0
      %634 = vperm.xlu0 %633, %v561
      %v635 = vpop.permute.xlu0 %634
      %638 = vset.pattern.permute.xlu0 0
      %639 = vperm.xlu0 %638, %v562
      %v640 = vpop.permute.xlu0 %639
      %643 = vset.pattern.permute.xlu0 0
      %644 = vperm.xlu0 %643, %v563
      %v645 = vpop.permute.xlu0 %644
      %648 = vset.pattern.permute.xlu0 0
      %649 = vperm.xlu0 %648, %v564
      %v650 = vpop.permute.xlu0 %649
      %653 = vset.pattern.permute.xlu0 0
      %654 = vperm.xlu0 %653, %v565
      %v655 = vpop.permute.xlu0 %654
      %658 = vset.pattern.permute.xlu0 0
      %659 = vperm.xlu0 %658, %v566
      %v660 = vpop.permute.xlu0 %659
      %663 = vset.pattern.permute.xlu0 0
      %664 = vperm.xlu0 %663, %v567
      %v665 = vpop.permute.xlu0 %664
      %668 = vset.pattern.permute.xlu0 0
      %669 = vperm.xlu0 %668, %v568
      %v670 = vpop.permute.xlu0 %669
      %673 = vset.pattern.permute.xlu0 0
      %674 = vperm.xlu0 %673, %v569
      %v675 = vpop.permute.xlu0 %674
      %678 = vset.pattern.permute.xlu0 0
      %679 = vperm.xlu0 %678, %v570
      %v680 = vpop.permute.xlu0 %679
      %683 = vset.pattern.permute.xlu0 0
      %684 = vperm.xlu0 %683, %v571
      %v685 = vpop.permute.xlu0 %684
      %688 = vset.pattern.permute.xlu0 0
      %689 = vperm.xlu0 %688, %v572
      %v690 = vpop.permute.xlu0 %689
      %693 = vset.pattern.permute.xlu0 0
      %694 = vperm.xlu0 %693, %v573
      %v695 = vpop.permute.xlu0 %694
      %698 = vset.pattern.permute.xlu0 0
      %699 = vperm.xlu0 %698, %v574
      %v700 = vpop.permute.xlu0 %699
      %703 = vset.pattern.permute.xlu0 0
      %704 = vperm.xlu0 %703, %v575
      %v705 = vpop.permute.xlu0 %704
      %708 = vset.pattern.permute.xlu0 0
      %709 = vperm.xlu0 %708, %v576
      %v710 = vpop.permute.xlu0 %709
      %713 = vset.pattern.permute.xlu0 0
      %714 = vperm.xlu0 %713, %v577
      %v715 = vpop.permute.xlu0 %714
      %718 = vset.pattern.permute.xlu0 0
      %719 = vperm.xlu0 %718, %v578
      %v720 = vpop.permute.xlu0 %719
      %723 = vset.pattern.permute.xlu0 0
      %724 = vperm.xlu0 %723, %v579
      %v725 = vpop.permute.xlu0 %724
      %728 = vset.pattern.permute.xlu0 0
      %729 = vperm.xlu0 %728, %v580
      %v730 = vpop.permute.xlu0 %729
      %733 = vset.pattern.permute.xlu0 0
      %734 = vperm.xlu0 %733, %v581
      %v735 = vpop.permute.xlu0 %734
      %738 = vset.pattern.permute.xlu0 0
      %739 = vperm.xlu0 %738, %v582
      %v740 = vpop.permute.xlu0 %739
      %743 = vset.pattern.permute.xlu0 0
      %744 = vperm.xlu0 %743, %v583
      %v745 = vpop.permute.xlu0 %744
      %748 = vset.pattern.permute.xlu0 0
      %749 = vperm.xlu0 %748, %v584
      %v750 = vpop.permute.xlu0 %749
      %753 = vset.pattern.permute.xlu0 0
      %754 = vperm.xlu0 %753, %v585
      %v755 = vpop.permute.xlu0 %754
      %758 = vset.pattern.permute.xlu0 0
      %759 = vperm.xlu0 %758, %v586
      %v760 = vpop.permute.xlu0 %759
      %763 = vset.pattern.permute.xlu0 0
      %764 = vperm.xlu0 %763, %v587
      %v765 = vpop.permute.xlu0 %764
      %768 = vset.pattern.permute.xlu0 0
      %769 = vperm.xlu0 %768, %v588
      %v770 = vpop.permute.xlu0 %769
      %773 = vset.pattern.permute.xlu0 0
      %774 = vperm.xlu0 %773, %v589
      %v775 = vpop.permute.xlu0 %774
      %778 = vset.pattern.permute.xlu0 0
      %779 = vperm.xlu0 %778, %v590
      %v780 = vpop.permute.xlu0 %779
      %783 = vset.pattern.permute.xlu0 0
      %784 = vperm.xlu0 %783, %v591
      %v785 = vpop.permute.xlu0 %784
      %788 = vset.pattern.permute.xlu0 0
      %789 = vperm.xlu0 %788, %v592
      %v790 = vpop.permute.xlu0 %789
      %793 = vset.pattern.permute.xlu0 0
      %794 = vperm.xlu0 %793, %v593
      %v795 = vpop.permute.xlu0 %794
      %798 = vset.pattern.permute.xlu0 0
      %799 = vperm.xlu0 %798, %v594
      %v800 = vpop.permute.xlu0 %799
      %803 = vset.pattern.permute.xlu0 0
      %804 = vperm.xlu0 %803, %v595
      %v805 = vpop.permute.xlu0 %804
      %808 = vset.pattern.permute.xlu0 0
      %809 = vperm.xlu0 %808, %v596
      %v810 = vpop.permute.xlu0 %809
      %813 = vset.pattern.permute.xlu0 0
      %814 = vperm.xlu0 %813, %v597
      %v815 = vpop.permute.xlu0 %814
      %818 = vset.pattern.permute.xlu0 0
      %819 = vperm.xlu0 %818, %v598
      %v820 = vpop.permute.xlu0 %819
      %823 = vset.pattern.permute.xlu0 0
      %824 = vperm.xlu0 %823, %v599
      %v825 = vpop.permute.xlu0 %824
      %828 = vset.pattern.permute.xlu0 0
      %829 = vperm.xlu0 %828, %v600
      %v830 = vpop.permute.xlu0 %829
      %833 = vset.pattern.permute.xlu0 0
      %834 = vperm.xlu0 %833, %v601
      %v835 = vpop.permute.xlu0 %834
      %838 = vset.pattern.permute.xlu0 0
      %839 = vperm.xlu0 %838, %v602
      %v840 = vpop.permute.xlu0 %839
      %843 = vset.pattern.permute.xlu0 0
      %844 = vperm.xlu0 %843, %v603
      %v845 = vpop.permute.xlu0 %844
      %848 = vset.pattern.permute.xlu0 0
      %849 = vperm.xlu0 %848, %v604
      %v850 = vpop.permute.xlu0 %849
      %853 = vset.pattern.permute.xlu0 0
      %854 = vperm.xlu0 %853, %v605
      %v855 = vpop.permute.xlu0 %854
      %858 = vset.pattern.permute.xlu0 0
      %859 = vperm.xlu0 %858, %v606
      %v860 = vpop.permute.xlu0 %859
      %v862 = vmul.f32 %v505, %v610
      %v863 = vmul.f32 %v506, %v615
      %v864 = vmul.f32 %v507, %v620
      %v865 = vmul.f32 %v508, %v625
      %v866 = vmul.f32 %v509, %v630
      %v867 = vmul.f32 %v510, %v635
      %v868 = vmul.f32 %v511, %v640
      %v869 = vmul.f32 %v512, %v645
      %v870 = vmul.f32 %v513, %v650
      %v871 = vmul.f32 %v514, %v655
      %v872 = vmul.f32 %v515, %v660
      %v873 = vmul.f32 %v516, %v665
      %v874 = vmul.f32 %v517, %v670
      %v875 = vmul.f32 %v518, %v675
      %v876 = vmul.f32 %v519, %v680
      %v877 = vmul.f32 %v520, %v685
      %v878 = vmul.f32 %v521, %v690
      %v879 = vmul.f32 %v522, %v695
      %v880 = vmul.f32 %v523, %v700
      %v881 = vmul.f32 %v524, %v705
      %v882 = vmul.f32 %v525, %v710
      %v883 = vmul.f32 %v526, %v715
      %v884 = vmul.f32 %v527, %v720
      %v885 = vmul.f32 %v528, %v725
      %v886 = vmul.f32 %v529, %v730
      %v887 = vmul.f32 %v530, %v735
      %v888 = vmul.f32 %v531, %v740
      %v889 = vmul.f32 %v532, %v745
      %v890 = vmul.f32 %v533, %v750
      %v891 = vmul.f32 %v534, %v755
      %v892 = vmul.f32 %v535, %v760
      %v893 = vmul.f32 %v536, %v765
      %v894 = vmul.f32 %v537, %v770
      %v895 = vmul.f32 %v538, %v775
      %v896 = vmul.f32 %v539, %v780
      %v897 = vmul.f32 %v540, %v785
      %v898 = vmul.f32 %v541, %v790
      %v899 = vmul.f32 %v542, %v795
      %v900 = vmul.f32 %v543, %v800
      %v901 = vmul.f32 %v544, %v805
      %v902 = vmul.f32 %v545, %v810
      %v903 = vmul.f32 %v546, %v815
      %v904 = vmul.f32 %v547, %v820
      %v905 = vmul.f32 %v548, %v825
      %v906 = vmul.f32 %v549, %v830
      %v907 = vmul.f32 %v550, %v835
      %v908 = vmul.f32 %v551, %v840
      %v909 = vmul.f32 %v552, %v845
      %v910 = vmul.f32 %v553, %v850
      %v911 = vmul.f32 %v554, %v855
      %v912 = vmul.f32 %v555, %v860
      %vm929 = vcmask 1046528
      %v930 = vrot.slane %v862, 1
      %v931 = vrot.slane %v863, 1
      %v932 = vsel %vm929, %v930, %v931
      %v933 = vrot.slane %v864, 1
      %v934 = vrot.slane %v865, 1
      %v935 = vsel %vm929, %v933, %v934
      %v936 = vrot.slane %v866, 1
      %v937 = vrot.slane %v867, 1
      %v938 = vsel %vm929, %v936, %v937
      %v939 = vrot.slane %v868, 1
      %v940 = vrot.slane %v869, 1
      %v941 = vsel %vm929, %v939, %v940
      %v942 = vrot.slane %v870, 1
      %v943 = vrot.slane %v871, 1
      %v944 = vsel %vm929, %v942, %v943
      %v945 = vrot.slane %v872, 1
      %v946 = vrot.slane %v873, 1
      %v947 = vsel %vm929, %v945, %v946
      %v948 = vrot.slane %v874, 1
      %v949 = vrot.slane %v875, 1
      %v950 = vsel %vm929, %v948, %v949
      %v951 = vrot.slane %v876, 1
      %v952 = vrot.slane %v877, 1
      %v953 = vsel %vm929, %v951, %v952
      %v970 = vrot.slane %v889, 1
      %v971 = vrot.slane %v890, 1
      %v972 = vsel %vm929, %v970, %v971
      %v973 = vrot.slane %v891, 1
      %v974 = vrot.slane %v892, 1
      %v975 = vsel %vm929, %v973, %v974
      %v976 = vrot.slane %v893, 1
      %v977 = vrot.slane %v894, 1
      %v978 = vsel %vm929, %v976, %v977
      %v979 = vrot.slane %v895, 1
      %v980 = vrot.slane %v896, 1
      %v981 = vsel %vm929, %v979, %v980
      %v982 = vrot.slane %v897, 1
      %v983 = vrot.slane %v898, 1
      %v984 = vsel %vm929, %v982, %v983
      %v985 = vrot.slane %v899, 1
      %v986 = vrot.slane %v900, 1
      %v987 = vsel %vm929, %v985, %v986
      %v988 = vrot.slane %v901, 1
      %v989 = vrot.slane %v902, 1
      %v990 = vsel %vm929, %v988, %v989
      %v991 = vrot.slane %v903, 1
      %v992 = vrot.slane %v904, 1
      %v993 = vsel %vm929, %v991, %v992
      %v996 = vrot.slane %v878, 1
      %v997 = vrot.slane %v879, 1
      %v998 = vsel %vm929, %v996, %v997
      %v999 = vld [vmem:[%s4] sm:$0xf]
      %s1000 = scalar_lea.vmem %s4, 4
      %v1001 = vld [vmem:[%s1000] sm:$0xf]
      %vm1002 = vcmask 31744
      %v1004 = vsel %vm1002, %v880, 0
      %v1007 = vsel %vm1002, %v881, 0
      %v1010 = vsel %vm1002, %v882, 0
      %v1013 = vsel %vm1002, %v883, 0
      %v1016 = vsel %vm1002, %v884, 0
      %v1019 = vsel %vm1002, %v885, 0
      %v1022 = vsel %vm1002, %v886, 0
      %v1025 = vsel %vm1002, %v887, 0
      %vm1027 = vcmask 1043456
      %v1029 = vsel %vm1027, %v1001, 0
      %1031 = vmatprep.subr.mxu0 0.0
      %1032 = vmatpush1.msra.mxu0 %v1029
      %1033 = vmatprep.subr.mxu0 0.0
      %1034 = vmatpush1.msra.mxu0 0.0
      %1035 = vmatprep.subr.mxu0 0.0
      %1036 = vmatpush1.msra.mxu0 0.0
      %1037 = vmatprep.subr.mxu0 0.0
      %1038 = vmatpush1.msra.mxu0 0.0
      %1039 = vmatprep.subr.mxu0 0.0
      %1040 = vmatpush1.msra.mxu0 0.0
      %1041 = vmatprep.subr.mxu0 0.0
      %1042 = vmatpush1.msra.mxu0 0.0
      %1043 = vmatprep.subr.mxu0 0.0
      %1044 = vmatpush1.msra.mxu0 0.0
      %1045 = vmatprep.subr.mxu0 0.0
      %1046 = vmatpush1.msra.mxu0 0.0
      %1047 = vmatprep.subr.mxu0 0.0
      %1048 = vmatpush1.msra.mxu0 0.0
      %1049 = vmatprep.subr.mxu0 0.0
      %1050 = vmatpush1.msra.mxu0 0.0
      %1051 = vmatprep.subr.mxu0 0.0
      %1052 = vmatpush1.msra.mxu0 0.0
      %1053 = vmatprep.subr.mxu0 0.0
      %1054 = vmatpush1.msra.mxu0 0.0
      %1055 = vmatprep.subr.mxu0 0.0
      %1056 = vmatpush1.msra.mxu0 0.0
      %1057 = vmatprep.subr.mxu0 0.0
      %1058 = vmatpush1.msra.mxu0 0.0
      %1059 = vmatprep.subr.mxu0 0.0
      %1060 = vmatpush1.msra.mxu0 0.0
      %1061 = vmatprep.subr.mxu0 0.0
      %1062 = vmatpush1.msra.mxu0 0.0
      %1063 = vmatprep.subr.mxu0 0.0
      %1064 = vmatpush1.msra.mxu0 0.0
      %1065 = vmatprep.subr.mxu0 0.0
      %1066 = vmatpush1.msra.mxu0 0.0
      %1067 = vmatprep.subr.mxu0 0.0
      %1068 = vmatpush1.msra.mxu0 0.0
      %1069 = vmatprep.subr.mxu0 0.0
      %1070 = vmatpush1.msra.mxu0 0.0
      %1071 = vmatprep.subr.mxu0 0.0
      %1072 = vmatpush1.msra.mxu0 0.0
      %1073 = vmatprep.subr.mxu0 0.0
      %1074 = vmatpush1.msra.mxu0 0.0
      %1075 = vmatprep.subr.mxu0 0.0
      %1076 = vmatpush1.msra.mxu0 0.0
      %1077 = vmatprep.subr.mxu0 0.0
      %1078 = vmatpush1.msra.mxu0 0.0
      %1079 = vmatprep.subr.mxu0 0.0
      %1080 = vmatpush1.msra.mxu0 0.0
      %1081 = vmatprep.subr.mxu0 0.0
      %1082 = vmatpush1.msra.mxu0 0.0
      %1083 = vmatprep.subr.mxu0 0.0
      %1084 = vmatpush1.msra.mxu0 0.0
      %1085 = vmatprep.subr.mxu0 0.0
      %1086 = vmatpush1.msra.mxu0 0.0
      %1087 = vmatprep.subr.mxu0 0.0
      %1088 = vmatpush1.msra.mxu0 0.0
      %1089 = vmatprep.subr.mxu0 0.0
      %1090 = vmatpush1.msra.mxu0 0.0
      %1091 = vmatprep.subr.mxu0 0.0
      %1092 = vmatpush1.msra.mxu0 0.0
      %1093 = vmatprep.subr.mxu0 0.0
      %1094 = vmatpush1.msra.mxu0 0.0
      %1095 = vmatprep.mubr.f32.mxu0 0.0
      %1096 = vmatmul.mubr.f32.gmra.mrb[0].mxu0 %v1004
      %v1097 = vpop.f32.mrb[0].mxu0
      %v1098 = vadd.f32 0.0, %v1097
      %v1099 = vpop.f32.mrb[0].mxu0
      %1100 = vmatprep.mubr.f32.mxu0 0.0
      %1101 = vmatmul.mubr.f32.gmra.mrb[0].mxu0 %v1007
      %v1102 = vpop.f32.mrb[0].mxu0
      %v1103 = vadd.f32 0.0, %v1102
      %v1104 = vpop.f32.mrb[0].mxu0
      %1105 = vmatprep.mubr.f32.mxu0 0.0
      %1106 = vmatmul.mubr.f32.gmra.mrb[0].mxu0 %v1010
      %v1107 = vpop.f32.mrb[0].mxu0
      %v1108 = vadd.f32 0.0, %v1107
      %v1109 = vpop.f32.mrb[0].mxu0
      %1110 = vmatprep.mubr.f32.mxu0 0.0
      %1111 = vmatmul.mubr.f32.gmra.mrb[0].mxu0 %v1013
      %v1112 = vpop.f32.mrb[0].mxu0
      %v1113 = vadd.f32 0.0, %v1112
      %v1114 = vpop.f32.mrb[0].mxu0
      %1115 = vmatprep.mubr.f32.mxu0 0.0
      %1116 = vmatmul.mubr.f32.gmra.mrb[0].mxu0 %v1016
      %v1117 = vpop.f32.mrb[0].mxu0
      %v1118 = vadd.f32 0.0, %v1117
      %v1119 = vpop.f32.mrb[0].mxu0
      %1120 = vmatprep.mubr.f32.mxu0 0.0
      %1121 = vmatmul.mubr.f32.gmra.mrb[0].mxu0 %v1019
      %v1122 = vpop.f32.mrb[0].mxu0
      %v1123 = vadd.f32 0.0, %v1122
      %v1124 = vpop.f32.mrb[0].mxu0
      %1125 = vmatprep.mubr.f32.mxu0 0.0
      %1126 = vmatmul.mubr.f32.gmra.mrb[0].mxu0 %v1022
      %v1127 = vpop.f32.mrb[0].mxu0
      %v1128 = vadd.f32 0.0, %v1127
      %v1129 = vpop.f32.mrb[0].mxu0
      %1130 = vmatprep.mubr.f32.mxu0 0.0
      %1131 = vmatmul.mubr.f32.gmra.mrb[0].mxu0 %v1025
      %v1132 = vpop.f32.mrb[0].mxu0
      %v1133 = vadd.f32 0.0, %v1132
      %v1134 = vpop.f32.mrb[0].mxu0
      %1135 = vdwg.mxu0
      %v1136 = vsel %vm1002, %v862, 0
      %v1138 = vsel %vm1002, %v864, 0
      %v1140 = vsel %vm1002, %v866, 0
      %v1142 = vsel %vm1002, %v868, 0
      %v1144 = vsel %vm1002, %v870, 0
      %v1146 = vsel %vm1002, %v872, 0
      %v1148 = vsel %vm1002, %v874, 0
      %v1150 = vsel %vm1002, %v876, 0
      %v1153 = vsel %vm1027, %v999, 0
      %1155 = vmatprep.subr.mxu0 0.0
      %1156 = vmatpush1.msra.mxu0 %v1153
      %1157 = vmatprep.subr.mxu0 0.0
      %1158 = vmatpush1.msra.mxu0 0.0
      %1159 = vmatprep.subr.mxu0 0.0
      %1160 = vmatpush1.msra.mxu0 0.0
      %1161 = vmatprep.subr.mxu0 0.0
      %1162 = vmatpush1.msra.mxu0 0.0
      %1163 = vmatprep.subr.mxu0 0.0
      %1164 = vmatpush1.msra.mxu0 0.0
      %1165 = vmatprep.subr.mxu0 0.0
      %1166 = vmatpush1.msra.mxu0 0.0
      %1167 = vmatprep.subr.mxu0 0.0
      %1168 = vmatpush1.msra.mxu0 0.0
      %1169 = vmatprep.subr.mxu0 0.0
      %1170 = vmatpush1.msra.mxu0 0.0
      %1171 = vmatprep.subr.mxu0 0.0
      %1172 = vmatpush1.msra.mxu0 0.0
      %1173 = vmatprep.subr.mxu0 0.0
      %1174 = vmatpush1.msra.mxu0 0.0
      %1175 = vmatprep.subr.mxu0 0.0
      %1176 = vmatpush1.msra.mxu0 0.0
      %1177 = vmatprep.subr.mxu0 0.0
      %1178 = vmatpush1.msra.mxu0 0.0
      %1179 = vmatprep.subr.mxu0 0.0
      %1180 = vmatpush1.msra.mxu0 0.0
      %1181 = vmatprep.subr.mxu0 0.0
      %1182 = vmatpush1.msra.mxu0 0.0
      %1183 = vmatprep.subr.mxu0 0.0
      %1184 = vmatpush1.msra.mxu0 0.0
      %1185 = vmatprep.subr.mxu0 0.0
      %1186 = vmatpush1.msra.mxu0 0.0
      %1187 = vmatprep.subr.mxu0 0.0
      %1188 = vmatpush1.msra.mxu0 0.0
      %1189 = vmatprep.subr.mxu0 0.0
      %1190 = vmatpush1.msra.mxu0 0.0
      %1191 = vmatprep.subr.mxu0 0.0
      %1192 = vmatpush1.msra.mxu0 0.0
      %1193 = vmatprep.subr.mxu0 0.0
      %1194 = vmatpush1.msra.mxu0 0.0
      %1195 = vmatprep.subr.mxu0 0.0
      %1196 = vmatpush1.msra.mxu0 0.0
      %1197 = vmatprep.subr.mxu0 0.0
      %1198 = vmatpush1.msra.mxu0 0.0
      %1199 = vmatprep.subr.mxu0 0.0
      %1200 = vmatpush1.msra.mxu0 0.0
      %1201 = vmatprep.subr.mxu0 0.0
      %1202 = vmatpush1.msra.mxu0 0.0
      %1203 = vmatprep.subr.mxu0 0.0
      %1204 = vmatpush1.msra.mxu0 0.0
      %1205 = vmatprep.subr.mxu0 0.0
      %1206 = vmatpush1.msra.mxu0 0.0
      %1207 = vmatprep.subr.mxu0 0.0
      %1208 = vmatpush1.msra.mxu0 0.0
      %1209 = vmatprep.subr.mxu0 0.0
      %1210 = vmatpush1.msra.mxu0 0.0
      %1211 = vmatprep.subr.mxu0 0.0
      %1212 = vmatpush1.msra.mxu0 0.0
      %1213 = vmatprep.subr.mxu0 0.0
      %1214 = vmatpush1.msra.mxu0 0.0
      %1215 = vmatprep.subr.mxu0 0.0
      %1216 = vmatpush1.msra.mxu0 0.0
      %1217 = vmatprep.subr.mxu0 0.0
      %1218 = vmatpush1.msra.mxu0 0.0
      %1219 = vmatprep.mubr.f32.mxu0 0.0
      %1220 = vmatmul.mubr.f32.gmra.mrb[0].mxu0 %v1136
      %v1221 = vpop.f32.mrb[0].mxu0
      %v1222 = vadd.f32 %v1098, %v1221
      %v1223 = vpop.f32.mrb[0].mxu0
      %1224 = vmatprep.mubr.f32.mxu0 0.0
      %1225 = vmatmul.mubr.f32.gmra.mrb[0].mxu0 %v1138
      %v1226 = vpop.f32.mrb[0].mxu0
      %v1227 = vadd.f32 %v1103, %v1226
      %v1228 = vpop.f32.mrb[0].mxu0
      %1229 = vmatprep.mubr.f32.mxu0 0.0
      %1230 = vmatmul.mubr.f32.gmra.mrb[0].mxu0 %v1140
      %v1231 = vpop.f32.mrb[0].mxu0
      %v1232 = vadd.f32 %v1108, %v1231
      %v1233 = vpop.f32.mrb[0].mxu0
      %1234 = vmatprep.mubr.f32.mxu0 0.0
      %1235 = vmatmul.mubr.f32.gmra.mrb[0].mxu0 %v1142
      %v1236 = vpop.f32.mrb[0].mxu0
      %v1237 = vadd.f32 %v1113, %v1236
      %v1238 = vpop.f32.mrb[0].mxu0
      %1239 = vmatprep.mubr.f32.mxu0 0.0
      %1240 = vmatmul.mubr.f32.gmra.mrb[0].mxu0 %v1144
      %v1241 = vpop.f32.mrb[0].mxu0
      %v1242 = vadd.f32 %v1118, %v1241
      %v1243 = vpop.f32.mrb[0].mxu0
      %1244 = vmatprep.mubr.f32.mxu0 0.0
      %1245 = vmatmul.mubr.f32.gmra.mrb[0].mxu0 %v1146
      %v1246 = vpop.f32.mrb[0].mxu0
      %v1247 = vadd.f32 %v1123, %v1246
      %v1248 = vpop.f32.mrb[0].mxu0
      %1249 = vmatprep.mubr.f32.mxu0 0.0
      %1250 = vmatmul.mubr.f32.gmra.mrb[0].mxu0 %v1148
      %v1251 = vpop.f32.mrb[0].mxu0
      %v1252 = vadd.f32 %v1128, %v1251
      %v1253 = vpop.f32.mrb[0].mxu0
      %1254 = vmatprep.mubr.f32.mxu0 0.0
      %1255 = vmatmul.mubr.f32.gmra.mrb[0].mxu0 %v1150
      %v1256 = vpop.f32.mrb[0].mxu0
      %v1257 = vadd.f32 %v1133, %v1256
      %v1258 = vpop.f32.mrb[0].mxu0
      %1259 = vdwg.mxu0
      %s1260 = scalar_lea.vmem %s4, 8
      %v1261 = vld [vmem:[%s1260] sm:$0xf]
      %v1262 = vsel %vm1002, %v932, 0
      %v1264 = vsel %vm1002, %v935, 0
      %v1266 = vsel %vm1002, %v938, 0
      %v1268 = vsel %vm1002, %v941, 0
      %v1270 = vsel %vm1002, %v944, 0
      %v1272 = vsel %vm1002, %v947, 0
      %v1274 = vsel %vm1002, %v950, 0
      %v1276 = vsel %vm1002, %v953, 0
      %v1279 = vsel %vm1027, %v1261, 0
      %1281 = vmatprep.subr.mxu0 0.0
      %1282 = vmatpush1.msra.mxu0 %v1279
      %1283 = vmatprep.subr.mxu0 0.0
      %1284 = vmatpush1.msra.mxu0 0.0
      %1285 = vmatprep.subr.mxu0 0.0
      %1286 = vmatpush1.msra.mxu0 0.0
      %1287 = vmatprep.subr.mxu0 0.0
      %1288 = vmatpush1.msra.mxu0 0.0
      %1289 = vmatprep.subr.mxu0 0.0
      %1290 = vmatpush1.msra.mxu0 0.0
      %1291 = vmatprep.subr.mxu0 0.0
      %1292 = vmatpush1.msra.mxu0 0.0
      %1293 = vmatprep.subr.mxu0 0.0
      %1294 = vmatpush1.msra.mxu0 0.0
      %1295 = vmatprep.subr.mxu0 0.0
      %1296 = vmatpush1.msra.mxu0 0.0
      %1297 = vmatprep.subr.mxu0 0.0
      %1298 = vmatpush1.msra.mxu0 0.0
      %1299 = vmatprep.subr.mxu0 0.0
      %1300 = vmatpush1.msra.mxu0 0.0
      %1301 = vmatprep.subr.mxu0 0.0
      %1302 = vmatpush1.msra.mxu0 0.0
      %1303 = vmatprep.subr.mxu0 0.0
      %1304 = vmatpush1.msra.mxu0 0.0
      %1305 = vmatprep.subr.mxu0 0.0
      %1306 = vmatpush1.msra.mxu0 0.0
      %1307 = vmatprep.subr.mxu0 0.0
      %1308 = vmatpush1.msra.mxu0 0.0
      %1309 = vmatprep.subr.mxu0 0.0
      %1310 = vmatpush1.msra.mxu0 0.0
      %1311 = vmatprep.subr.mxu0 0.0
      %1312 = vmatpush1.msra.mxu0 0.0
      %1313 = vmatprep.subr.mxu0 0.0
      %1314 = vmatpush1.msra.mxu0 0.0
      %1315 = vmatprep.subr.mxu0 0.0
      %1316 = vmatpush1.msra.mxu0 0.0
      %1317 = vmatprep.subr.mxu0 0.0
      %1318 = vmatpush1.msra.mxu0 0.0
      %1319 = vmatprep.subr.mxu0 0.0
      %1320 = vmatpush1.msra.mxu0 0.0
      %1321 = vmatprep.subr.mxu0 0.0
      %1322 = vmatpush1.msra.mxu0 0.0
      %1323 = vmatprep.subr.mxu0 0.0
      %1324 = vmatpush1.msra.mxu0 0.0
      %1325 = vmatprep.subr.mxu0 0.0
      %1326 = vmatpush1.msra.mxu0 0.0
      %1327 = vmatprep.subr.mxu0 0.0
      %1328 = vmatpush1.msra.mxu0 0.0
      %1329 = vmatprep.subr.mxu0 0.0
      %1330 = vmatpush1.msra.mxu0 0.0
      %1331 = vmatprep.subr.mxu0 0.0
      %1332 = vmatpush1.msra.mxu0 0.0
      %1333 = vmatprep.subr.mxu0 0.0
      %1334 = vmatpush1.msra.mxu0 0.0
      %1335 = vmatprep.subr.mxu0 0.0
      %1336 = vmatpush1.msra.mxu0 0.0
      %1337 = vmatprep.subr.mxu0 0.0
      %1338 = vmatpush1.msra.mxu0 0.0
      %1339 = vmatprep.subr.mxu0 0.0
      %1340 = vmatpush1.msra.mxu0 0.0
      %1341 = vmatprep.subr.mxu0 0.0
      %1342 = vmatpush1.msra.mxu0 0.0
      %1343 = vmatprep.subr.mxu0 0.0
      %1344 = vmatpush1.msra.mxu0 0.0
      %1345 = vmatprep.mubr.f32.mxu0 0.0
      %1346 = vmatmul.mubr.f32.gmra.mrb[0].mxu0 %v1262
      %v1347 = vpop.f32.mrb[0].mxu0
      %v1348 = vadd.f32 0.0, %v1347
      %v1349 = vpop.f32.mrb[0].mxu0
      %1350 = vmatprep.mubr.f32.mxu0 0.0
      %1351 = vmatmul.mubr.f32.gmra.mrb[0].mxu0 %v1264
      %v1352 = vpop.f32.mrb[0].mxu0
      %v1353 = vadd.f32 0.0, %v1352
      %v1354 = vpop.f32.mrb[0].mxu0
      %1355 = vmatprep.mubr.f32.mxu0 0.0
      %1356 = vmatmul.mubr.f32.gmra.mrb[0].mxu0 %v1266
      %v1357 = vpop.f32.mrb[0].mxu0
      %v1358 = vadd.f32 0.0, %v1357
      %v1359 = vpop.f32.mrb[0].mxu0
      %1360 = vmatprep.mubr.f32.mxu0 0.0
      %1361 = vmatmul.mubr.f32.gmra.mrb[0].mxu0 %v1268
      %v1362 = vpop.f32.mrb[0].mxu0
      %v1363 = vadd.f32 0.0, %v1362
      %v1364 = vpop.f32.mrb[0].mxu0
      %1365 = vmatprep.mubr.f32.mxu0 0.0
      %1366 = vmatmul.mubr.f32.gmra.mrb[0].mxu0 %v1270
      %v1367 = vpop.f32.mrb[0].mxu0
      %v1368 = vadd.f32 0.0, %v1367
      %v1369 = vpop.f32.mrb[0].mxu0
      %1370 = vmatprep.mubr.f32.mxu0 0.0
      %1371 = vmatmul.mubr.f32.gmra.mrb[0].mxu0 %v1272
      %v1372 = vpop.f32.mrb[0].mxu0
      %v1373 = vadd.f32 0.0, %v1372
      %v1374 = vpop.f32.mrb[0].mxu0
      %1375 = vmatprep.mubr.f32.mxu0 0.0
      %1376 = vmatmul.mubr.f32.gmra.mrb[0].mxu0 %v1274
      %v1377 = vpop.f32.mrb[0].mxu0
      %v1378 = vadd.f32 0.0, %v1377
      %v1379 = vpop.f32.mrb[0].mxu0
      %1380 = vmatprep.mubr.f32.mxu0 0.0
      %1381 = vmatmul.mubr.f32.gmra.mrb[0].mxu0 %v1276
      %v1382 = vpop.f32.mrb[0].mxu0
      %v1383 = vadd.f32 0.0, %v1382
      %v1384 = vpop.f32.mrb[0].mxu0
      %1385 = vdwg.mxu0
      %v1386 = vadd.f32 %v1222, %v1348
      %v1387 = vadd.f32 %v1227, %v1353
      %v1388 = vadd.f32 %v1232, %v1358
      %v1389 = vadd.f32 %v1237, %v1363
      %v1390 = vadd.f32 %v1242, %v1368
      %v1391 = vadd.f32 %v1247, %v1373
      %v1392 = vadd.f32 %v1252, %v1378
      %v1393 = vadd.f32 %v1257, %v1383
      %s1394 = scalar_lea.vmem %s4, 12
      %v1395 = vld [vmem:[%s1394] sm:$0xf]
      %v1396 = vsel %vm1002, %v889, 0
      %v1398 = vsel %vm1002, %v891, 0
      %v1400 = vsel %vm1002, %v893, 0
      %v1402 = vsel %vm1002, %v895, 0
      %v1404 = vsel %vm1002, %v897, 0
      %v1406 = vsel %vm1002, %v899, 0
      %v1408 = vsel %vm1002, %v901, 0
      %v1410 = vsel %vm1002, %v903, 0
      %v1413 = vsel %vm1027, %v1395, 0
      %1415 = vmatprep.subr.mxu0 0.0
      %1416 = vmatpush1.msra.mxu0 %v1413
      %1417 = vmatprep.subr.mxu0 0.0
      %1418 = vmatpush1.msra.mxu0 0.0
      %1419 = vmatprep.subr.mxu0 0.0
      %1420 = vmatpush1.msra.mxu0 0.0
      %1421 = vmatprep.subr.mxu0 0.0
      %1422 = vmatpush1.msra.mxu0 0.0
      %1423 = vmatprep.subr.mxu0 0.0
      %1424 = vmatpush1.msra.mxu0 0.0
      %1425 = vmatprep.subr.mxu0 0.0
      %1426 = vmatpush1.msra.mxu0 0.0
      %1427 = vmatprep.subr.mxu0 0.0
      %1428 = vmatpush1.msra.mxu0 0.0
      %1429 = vmatprep.subr.mxu0 0.0
      %1430 = vmatpush1.msra.mxu0 0.0
      %1431 = vmatprep.subr.mxu0 0.0
      %1432 = vmatpush1.msra.mxu0 0.0
      %1433 = vmatprep.subr.mxu0 0.0
      %1434 = vmatpush1.msra.mxu0 0.0
      %1435 = vmatprep.subr.mxu0 0.0
      %1436 = vmatpush1.msra.mxu0 0.0
      %1437 = vmatprep.subr.mxu0 0.0
      %1438 = vmatpush1.msra.mxu0 0.0
      %1439 = vmatprep.subr.mxu0 0.0
      %1440 = vmatpush1.msra.mxu0 0.0
      %1441 = vmatprep.subr.mxu0 0.0
      %1442 = vmatpush1.msra.mxu0 0.0
      %1443 = vmatprep.subr.mxu0 0.0
      %1444 = vmatpush1.msra.mxu0 0.0
      %1445 = vmatprep.subr.mxu0 0.0
      %1446 = vmatpush1.msra.mxu0 0.0
      %1447 = vmatprep.subr.mxu0 0.0
      %1448 = vmatpush1.msra.mxu0 0.0
      %1449 = vmatprep.subr.mxu0 0.0
      %1450 = vmatpush1.msra.mxu0 0.0
      %1451 = vmatprep.subr.mxu0 0.0
      %1452 = vmatpush1.msra.mxu0 0.0
      %1453 = vmatprep.subr.mxu0 0.0
      %1454 = vmatpush1.msra.mxu0 0.0
      %1455 = vmatprep.subr.mxu0 0.0
      %1456 = vmatpush1.msra.mxu0 0.0
      %1457 = vmatprep.subr.mxu0 0.0
      %1458 = vmatpush1.msra.mxu0 0.0
      %1459 = vmatprep.subr.mxu0 0.0
      %1460 = vmatpush1.msra.mxu0 0.0
      %1461 = vmatprep.subr.mxu0 0.0
      %1462 = vmatpush1.msra.mxu0 0.0
      %1463 = vmatprep.subr.mxu0 0.0
      %1464 = vmatpush1.msra.mxu0 0.0
      %1465 = vmatprep.subr.mxu0 0.0
      %1466 = vmatpush1.msra.mxu0 0.0
      %1467 = vmatprep.subr.mxu0 0.0
      %1468 = vmatpush1.msra.mxu0 0.0
      %1469 = vmatprep.subr.mxu0 0.0
      %1470 = vmatpush1.msra.mxu0 0.0
      %1471 = vmatprep.subr.mxu0 0.0
      %1472 = vmatpush1.msra.mxu0 0.0
      %1473 = vmatprep.subr.mxu0 0.0
      %1474 = vmatpush1.msra.mxu0 0.0
      %1475 = vmatprep.subr.mxu0 0.0
      %1476 = vmatpush1.msra.mxu0 0.0
      %1477 = vmatprep.subr.mxu0 0.0
      %1478 = vmatpush1.msra.mxu0 0.0
      %1479 = vmatprep.mubr.f32.mxu0 0.0
      %1480 = vmatmul.mubr.f32.gmra.mrb[0].mxu0 %v1396
      %v1481 = vpop.f32.mrb[0].mxu0
      %v1482 = vadd.f32 0.0, %v1481
      %v1483 = vpop.f32.mrb[0].mxu0
      %1484 = vmatprep.mubr.f32.mxu0 0.0
      %1485 = vmatmul.mubr.f32.gmra.mrb[0].mxu0 %v1398
      %v1486 = vpop.f32.mrb[0].mxu0
      %v1487 = vadd.f32 0.0, %v1486
      %v1488 = vpop.f32.mrb[0].mxu0
      %1489 = vmatprep.mubr.f32.mxu0 0.0
      %1490 = vmatmul.mubr.f32.gmra.mrb[0].mxu0 %v1400
      %v1491 = vpop.f32.mrb[0].mxu0
      %v1492 = vadd.f32 0.0, %v1491
      %v1493 = vpop.f32.mrb[0].mxu0
      %1494 = vmatprep.mubr.f32.mxu0 0.0
      %1495 = vmatmul.mubr.f32.gmra.mrb[0].mxu0 %v1402
      %v1496 = vpop.f32.mrb[0].mxu0
      %v1497 = vadd.f32 0.0, %v1496
      %v1498 = vpop.f32.mrb[0].mxu0
      %1499 = vmatprep.mubr.f32.mxu0 0.0
      %1500 = vmatmul.mubr.f32.gmra.mrb[0].mxu0 %v1404
      %v1501 = vpop.f32.mrb[0].mxu0
      %v1502 = vadd.f32 0.0, %v1501
      %v1503 = vpop.f32.mrb[0].mxu0
      %1504 = vmatprep.mubr.f32.mxu0 0.0
      %1505 = vmatmul.mubr.f32.gmra.mrb[0].mxu0 %v1406
      %v1506 = vpop.f32.mrb[0].mxu0
      %v1507 = vadd.f32 0.0, %v1506
      %v1508 = vpop.f32.mrb[0].mxu0
      %1509 = vmatprep.mubr.f32.mxu0 0.0
      %1510 = vmatmul.mubr.f32.gmra.mrb[0].mxu0 %v1408
      %v1511 = vpop.f32.mrb[0].mxu0
      %v1512 = vadd.f32 0.0, %v1511
      %v1513 = vpop.f32.mrb[0].mxu0
      %1514 = vmatprep.mubr.f32.mxu0 0.0
      %1515 = vmatmul.mubr.f32.gmra.mrb[0].mxu0 %v1410
      %v1516 = vpop.f32.mrb[0].mxu0
      %v1517 = vadd.f32 0.0, %v1516
      %v1518 = vpop.f32.mrb[0].mxu0
      %1519 = vdwg.mxu0
      %v1520 = vadd.f32 %v1386, %v1482
      %v1521 = vadd.f32 %v1387, %v1487
      %v1522 = vadd.f32 %v1388, %v1492
      %v1523 = vadd.f32 %v1389, %v1497
      %v1524 = vadd.f32 %v1390, %v1502
      %v1525 = vadd.f32 %v1391, %v1507
      %v1526 = vadd.f32 %v1392, %v1512
      %v1527 = vadd.f32 %v1393, %v1517
      %s1528 = scalar_lea.vmem %s4, 16
      %v1529 = vld [vmem:[%s1528] sm:$0xf]
      %v1531 = vsel %vm1002, %v905, 0
      %v1534 = vsel %vm1002, %v906, 0
      %v1537 = vsel %vm1002, %v907, 0
      %v1540 = vsel %vm1002, %v908, 0
      %v1543 = vsel %vm1002, %v909, 0
      %v1546 = vsel %vm1002, %v910, 0
      %v1549 = vsel %vm1002, %v911, 0
      %v1552 = vsel %vm1002, %v912, 0
      %v1555 = vsel %vm1027, %v1529, 0
      %1557 = vmatprep.subr.mxu0 0.0
      %1558 = vmatpush1.msra.mxu0 %v1555
      %1559 = vmatprep.subr.mxu0 0.0
      %1560 = vmatpush1.msra.mxu0 0.0
      %1561 = vmatprep.subr.mxu0 0.0
      %1562 = vmatpush1.msra.mxu0 0.0
      %1563 = vmatprep.subr.mxu0 0.0
      %1564 = vmatpush1.msra.mxu0 0.0
      %1565 = vmatprep.subr.mxu0 0.0
      %1566 = vmatpush1.msra.mxu0 0.0
      %1567 = vmatprep.subr.mxu0 0.0
      %1568 = vmatpush1.msra.mxu0 0.0
      %1569 = vmatprep.subr.mxu0 0.0
      %1570 = vmatpush1.msra.mxu0 0.0
      %1571 = vmatprep.subr.mxu0 0.0
      %1572 = vmatpush1.msra.mxu0 0.0
      %1573 = vmatprep.subr.mxu0 0.0
      %1574 = vmatpush1.msra.mxu0 0.0
      %1575 = vmatprep.subr.mxu0 0.0
      %1576 = vmatpush1.msra.mxu0 0.0
      %1577 = vmatprep.subr.mxu0 0.0
      %1578 = vmatpush1.msra.mxu0 0.0
      %1579 = vmatprep.subr.mxu0 0.0
      %1580 = vmatpush1.msra.mxu0 0.0
      %1581 = vmatprep.subr.mxu0 0.0
      %1582 = vmatpush1.msra.mxu0 0.0
      %1583 = vmatprep.subr.mxu0 0.0
      %1584 = vmatpush1.msra.mxu0 0.0
      %1585 = vmatprep.subr.mxu0 0.0
      %1586 = vmatpush1.msra.mxu0 0.0
      %1587 = vmatprep.subr.mxu0 0.0
      %1588 = vmatpush1.msra.mxu0 0.0
      %1589 = vmatprep.subr.mxu0 0.0
      %1590 = vmatpush1.msra.mxu0 0.0
      %1591 = vmatprep.subr.mxu0 0.0
      %1592 = vmatpush1.msra.mxu0 0.0
      %1593 = vmatprep.subr.mxu0 0.0
      %1594 = vmatpush1.msra.mxu0 0.0
      %1595 = vmatprep.subr.mxu0 0.0
      %1596 = vmatpush1.msra.mxu0 0.0
      %1597 = vmatprep.subr.mxu0 0.0
      %1598 = vmatpush1.msra.mxu0 0.0
      %1599 = vmatprep.subr.mxu0 0.0
      %1600 = vmatpush1.msra.mxu0 0.0
      %1601 = vmatprep.subr.mxu0 0.0
      %1602 = vmatpush1.msra.mxu0 0.0
      %1603 = vmatprep.subr.mxu0 0.0
      %1604 = vmatpush1.msra.mxu0 0.0
      %1605 = vmatprep.subr.mxu0 0.0
      %1606 = vmatpush1.msra.mxu0 0.0
      %1607 = vmatprep.subr.mxu0 0.0
      %1608 = vmatpush1.msra.mxu0 0.0
      %1609 = vmatprep.subr.mxu0 0.0
      %1610 = vmatpush1.msra.mxu0 0.0
      %1611 = vmatprep.subr.mxu0 0.0
      %1612 = vmatpush1.msra.mxu0 0.0
      %1613 = vmatprep.subr.mxu0 0.0
      %1614 = vmatpush1.msra.mxu0 0.0
      %1615 = vmatprep.subr.mxu0 0.0
      %1616 = vmatpush1.msra.mxu0 0.0
      %1617 = vmatprep.subr.mxu0 0.0
      %1618 = vmatpush1.msra.mxu0 0.0
      %1619 = vmatprep.subr.mxu0 0.0
      %1620 = vmatpush1.msra.mxu0 0.0
      %1621 = vmatprep.mubr.f32.mxu0 0.0
      %1622 = vmatmul.mubr.f32.gmra.mrb[0].mxu0 %v1531
      %v1623 = vpop.f32.mrb[0].mxu0
      %v1624 = vadd.f32 0.0, %v1623
      %v1625 = vpop.f32.mrb[0].mxu0
      %1626 = vmatprep.mubr.f32.mxu0 0.0
      %1627 = vmatmul.mubr.f32.gmra.mrb[0].mxu0 %v1534
      %v1628 = vpop.f32.mrb[0].mxu0
      %v1629 = vadd.f32 0.0, %v1628
      %v1630 = vpop.f32.mrb[0].mxu0
      %1631 = vmatprep.mubr.f32.mxu0 0.0
      %1632 = vmatmul.mubr.f32.gmra.mrb[0].mxu0 %v1537
      %v1633 = vpop.f32.mrb[0].mxu0
      %v1634 = vadd.f32 0.0, %v1633
      %v1635 = vpop.f32.mrb[0].mxu0
      %1636 = vmatprep.mubr.f32.mxu0 0.0
      %1637 = vmatmul.mubr.f32.gmra.mrb[0].mxu0 %v1540
      %v1638 = vpop.f32.mrb[0].mxu0
      %v1639 = vadd.f32 0.0, %v1638
      %v1640 = vpop.f32.mrb[0].mxu0
      %1641 = vmatprep.mubr.f32.mxu0 0.0
      %1642 = vmatmul.mubr.f32.gmra.mrb[0].mxu0 %v1543
      %v1643 = vpop.f32.mrb[0].mxu0
      %v1644 = vadd.f32 0.0, %v1643
      %v1645 = vpop.f32.mrb[0].mxu0
      %1646 = vmatprep.mubr.f32.mxu0 0.0
      %1647 = vmatmul.mubr.f32.gmra.mrb[0].mxu0 %v1546
      %v1648 = vpop.f32.mrb[0].mxu0
      %v1649 = vadd.f32 0.0, %v1648
      %v1650 = vpop.f32.mrb[0].mxu0
      %1651 = vmatprep.mubr.f32.mxu0 0.0
      %1652 = vmatmul.mubr.f32.gmra.mrb[0].mxu0 %v1549
      %v1653 = vpop.f32.mrb[0].mxu0
      %v1654 = vadd.f32 0.0, %v1653
      %v1655 = vpop.f32.mrb[0].mxu0
      %1656 = vmatprep.mubr.f32.mxu0 0.0
      %1657 = vmatmul.mubr.f32.gmra.mrb[0].mxu0 %v1552
      %v1658 = vpop.f32.mrb[0].mxu0
      %v1659 = vadd.f32 0.0, %v1658
      %v1660 = vpop.f32.mrb[0].mxu0
      %1661 = vdwg.mxu0
      %v1662 = vadd.f32 %v1520, %v1624
      %v1663 = vadd.f32 %v1521, %v1629
      %v1664 = vadd.f32 %v1522, %v1634
      %v1665 = vadd.f32 %v1523, %v1639
      %v1666 = vadd.f32 %v1524, %v1644
      %v1667 = vadd.f32 %v1525, %v1649
      %v1668 = vadd.f32 %v1526, %v1654
      %v1669 = vadd.f32 %v1527, %v1659
      %s1670 = scalar_lea.vmem %s4, 20
      %v1671 = vld [vmem:[%s1670] sm:$0xf]
      %v1672 = vsel %vm1002, %v972, 0
      %v1674 = vsel %vm1002, %v975, 0
      %v1676 = vsel %vm1002, %v978, 0
      %v1678 = vsel %vm1002, %v981, 0
      %v1680 = vsel %vm1002, %v984, 0
      %v1682 = vsel %vm1002, %v987, 0
      %v1684 = vsel %vm1002, %v990, 0
      %v1686 = vsel %vm1002, %v993, 0
      %v1689 = vsel %vm1027, %v1671, 0
      %1691 = vmatprep.subr.mxu0 0.0
      %1692 = vmatpush1.msra.mxu0 %v1689
      %1693 = vmatprep.subr.mxu0 0.0
      %1694 = vmatpush1.msra.mxu0 0.0
      %1695 = vmatprep.subr.mxu0 0.0
      %1696 = vmatpush1.msra.mxu0 0.0
      %1697 = vmatprep.subr.mxu0 0.0
      %1698 = vmatpush1.msra.mxu0 0.0
      %1699 = vmatprep.subr.mxu0 0.0
      %1700 = vmatpush1.msra.mxu0 0.0
      %1701 = vmatprep.subr.mxu0 0.0
      %1702 = vmatpush1.msra.mxu0 0.0
      %1703 = vmatprep.subr.mxu0 0.0
      %1704 = vmatpush1.msra.mxu0 0.0
      %1705 = vmatprep.subr.mxu0 0.0
      %1706 = vmatpush1.msra.mxu0 0.0
      %1707 = vmatprep.subr.mxu0 0.0
      %1708 = vmatpush1.msra.mxu0 0.0
      %1709 = vmatprep.subr.mxu0 0.0
      %1710 = vmatpush1.msra.mxu0 0.0
      %1711 = vmatprep.subr.mxu0 0.0
      %1712 = vmatpush1.msra.mxu0 0.0
      %1713 = vmatprep.subr.mxu0 0.0
      %1714 = vmatpush1.msra.mxu0 0.0
      %1715 = vmatprep.subr.mxu0 0.0
      %1716 = vmatpush1.msra.mxu0 0.0
      %1717 = vmatprep.subr.mxu0 0.0
      %1718 = vmatpush1.msra.mxu0 0.0
      %1719 = vmatprep.subr.mxu0 0.0
      %1720 = vmatpush1.msra.mxu0 0.0
      %1721 = vmatprep.subr.mxu0 0.0
      %1722 = vmatpush1.msra.mxu0 0.0
      %1723 = vmatprep.subr.mxu0 0.0
      %1724 = vmatpush1.msra.mxu0 0.0
      %1725 = vmatprep.subr.mxu0 0.0
      %1726 = vmatpush1.msra.mxu0 0.0
      %1727 = vmatprep.subr.mxu0 0.0
      %1728 = vmatpush1.msra.mxu0 0.0
      %1729 = vmatprep.subr.mxu0 0.0
      %1730 = vmatpush1.msra.mxu0 0.0
      %1731 = vmatprep.subr.mxu0 0.0
      %1732 = vmatpush1.msra.mxu0 0.0
      %1733 = vmatprep.subr.mxu0 0.0
      %1734 = vmatpush1.msra.mxu0 0.0
      %1735 = vmatprep.subr.mxu0 0.0
      %1736 = vmatpush1.msra.mxu0 0.0
      %1737 = vmatprep.subr.mxu0 0.0
      %1738 = vmatpush1.msra.mxu0 0.0
      %1739 = vmatprep.subr.mxu0 0.0
      %1740 = vmatpush1.msra.mxu0 0.0
      %1741 = vmatprep.subr.mxu0 0.0
      %1742 = vmatpush1.msra.mxu0 0.0
      %1743 = vmatprep.subr.mxu0 0.0
      %1744 = vmatpush1.msra.mxu0 0.0
      %1745 = vmatprep.subr.mxu0 0.0
      %1746 = vmatpush1.msra.mxu0 0.0
      %1747 = vmatprep.subr.mxu0 0.0
      %1748 = vmatpush1.msra.mxu0 0.0
      %1749 = vmatprep.subr.mxu0 0.0
      %1750 = vmatpush1.msra.mxu0 0.0
      %1751 = vmatprep.subr.mxu0 0.0
      %1752 = vmatpush1.msra.mxu0 0.0
      %1753 = vmatprep.subr.mxu0 0.0
      %1754 = vmatpush1.msra.mxu0 0.0
      %1755 = vmatprep.mubr.f32.mxu0 0.0
      %1756 = vmatmul.mubr.f32.gmra.mrb[0].mxu0 %v1672
      %v1757 = vpop.f32.mrb[0].mxu0
      %v1758 = vadd.f32 0.0, %v1757
      %v1759 = vpop.f32.mrb[0].mxu0
      %1760 = vmatprep.mubr.f32.mxu0 0.0
      %1761 = vmatmul.mubr.f32.gmra.mrb[0].mxu0 %v1674
      %v1762 = vpop.f32.mrb[0].mxu0
      %v1763 = vadd.f32 0.0, %v1762
      %v1764 = vpop.f32.mrb[0].mxu0
      %1765 = vmatprep.mubr.f32.mxu0 0.0
      %1766 = vmatmul.mubr.f32.gmra.mrb[0].mxu0 %v1676
      %v1767 = vpop.f32.mrb[0].mxu0
      %v1768 = vadd.f32 0.0, %v1767
      %v1769 = vpop.f32.mrb[0].mxu0
      %1770 = vmatprep.mubr.f32.mxu0 0.0
      %1771 = vmatmul.mubr.f32.gmra.mrb[0].mxu0 %v1678
      %v1772 = vpop.f32.mrb[0].mxu0
      %v1773 = vadd.f32 0.0, %v1772
      %v1774 = vpop.f32.mrb[0].mxu0
      %1775 = vmatprep.mubr.f32.mxu0 0.0
      %1776 = vmatmul.mubr.f32.gmra.mrb[0].mxu0 %v1680
      %v1777 = vpop.f32.mrb[0].mxu0
      %v1778 = vadd.f32 0.0, %v1777
      %v1779 = vpop.f32.mrb[0].mxu0
      %1780 = vmatprep.mubr.f32.mxu0 0.0
      %1781 = vmatmul.mubr.f32.gmra.mrb[0].mxu0 %v1682
      %v1782 = vpop.f32.mrb[0].mxu0
      %v1783 = vadd.f32 0.0, %v1782
      %v1784 = vpop.f32.mrb[0].mxu0
      %1785 = vmatprep.mubr.f32.mxu0 0.0
      %1786 = vmatmul.mubr.f32.gmra.mrb[0].mxu0 %v1684
      %v1787 = vpop.f32.mrb[0].mxu0
      %v1788 = vadd.f32 0.0, %v1787
      %v1789 = vpop.f32.mrb[0].mxu0
      %1790 = vmatprep.mubr.f32.mxu0 0.0
      %1791 = vmatmul.mubr.f32.gmra.mrb[0].mxu0 %v1686
      %v1792 = vpop.f32.mrb[0].mxu0
      %v1793 = vadd.f32 0.0, %v1792
      %v1794 = vpop.f32.mrb[0].mxu0
      %1795 = vdwg.mxu0
      %v1796 = vadd.f32 %v1662, %v1758
      %v1797 = vadd.f32 %v1663, %v1763
      %v1798 = vadd.f32 %v1664, %v1768
      %v1799 = vadd.f32 %v1665, %v1773
      %v1800 = vadd.f32 %v1666, %v1778
      %v1801 = vadd.f32 %v1667, %v1783
      %v1802 = vadd.f32 %v1668, %v1788
      %v1803 = vadd.f32 %v1669, %v1793
      %s1804 = scalar_lea.vmem %s4, 24
      %v1805 = vld [vmem:[%s1804] sm:$0xf]
      %v1806 = vsel %vm1002, %v878, 0
      %v1809 = vsel %vm1027, %v1805, 0
      %1811 = vmatprep.subr.mxu0 0.0
      %1812 = vmatpush1.msra.mxu0 %v1809
      %1813 = vmatprep.subr.mxu0 0.0
      %1814 = vmatpush1.msra.mxu0 0.0
      %1815 = vmatprep.subr.mxu0 0.0
      %1816 = vmatpush1.msra.mxu0 0.0
      %1817 = vmatprep.subr.mxu0 0.0
      %1818 = vmatpush1.msra.mxu0 0.0
      %1819 = vmatprep.subr.mxu0 0.0
      %1820 = vmatpush1.msra.mxu0 0.0
      %1821 = vmatprep.subr.mxu0 0.0
      %1822 = vmatpush1.msra.mxu0 0.0
      %1823 = vmatprep.subr.mxu0 0.0
      %1824 = vmatpush1.msra.mxu0 0.0
      %1825 = vmatprep.subr.mxu0 0.0
      %1826 = vmatpush1.msra.mxu0 0.0
      %1827 = vmatprep.subr.mxu0 0.0
      %1828 = vmatpush1.msra.mxu0 0.0
      %1829 = vmatprep.subr.mxu0 0.0
      %1830 = vmatpush1.msra.mxu0 0.0
      %1831 = vmatprep.subr.mxu0 0.0
      %1832 = vmatpush1.msra.mxu0 0.0
      %1833 = vmatprep.subr.mxu0 0.0
      %1834 = vmatpush1.msra.mxu0 0.0
      %1835 = vmatprep.subr.mxu0 0.0
      %1836 = vmatpush1.msra.mxu0 0.0
      %1837 = vmatprep.subr.mxu0 0.0
      %1838 = vmatpush1.msra.mxu0 0.0
      %1839 = vmatprep.subr.mxu0 0.0
      %1840 = vmatpush1.msra.mxu0 0.0
      %1841 = vmatprep.subr.mxu0 0.0
      %1842 = vmatpush1.msra.mxu0 0.0
      %1843 = vmatprep.subr.mxu0 0.0
      %1844 = vmatpush1.msra.mxu0 0.0
      %1845 = vmatprep.subr.mxu0 0.0
      %1846 = vmatpush1.msra.mxu0 0.0
      %1847 = vmatprep.subr.mxu0 0.0
      %1848 = vmatpush1.msra.mxu0 0.0
      %1849 = vmatprep.subr.mxu0 0.0
      %1850 = vmatpush1.msra.mxu0 0.0
      %1851 = vmatprep.subr.mxu0 0.0
      %1852 = vmatpush1.msra.mxu0 0.0
      %1853 = vmatprep.subr.mxu0 0.0
      %1854 = vmatpush1.msra.mxu0 0.0
      %1855 = vmatprep.subr.mxu0 0.0
      %1856 = vmatpush1.msra.mxu0 0.0
      %1857 = vmatprep.subr.mxu0 0.0
      %1858 = vmatpush1.msra.mxu0 0.0
      %1859 = vmatprep.subr.mxu0 0.0
      %1860 = vmatpush1.msra.mxu0 0.0
      %1861 = vmatprep.subr.mxu0 0.0
      %1862 = vmatpush1.msra.mxu0 0.0
      %1863 = vmatprep.subr.mxu0 0.0
      %1864 = vmatpush1.msra.mxu0 0.0
      %1865 = vmatprep.subr.mxu0 0.0
      %1866 = vmatpush1.msra.mxu0 0.0
      %1867 = vmatprep.subr.mxu0 0.0
      %1868 = vmatpush1.msra.mxu0 0.0
      %1869 = vmatprep.subr.mxu0 0.0
      %1870 = vmatpush1.msra.mxu0 0.0
      %1871 = vmatprep.subr.mxu0 0.0
      %1872 = vmatpush1.msra.mxu0 0.0
      %1873 = vmatprep.subr.mxu0 0.0
      %1874 = vmatpush1.msra.mxu0 0.0
      %1875 = vmatprep.mubr.f32.mxu0 0.0
      %1876 = vmatmul.mubr.f32.gmra.mrb[0].mxu0 %v1138
      %v1877 = vpop.f32.mrb[0].mxu0
      %v1878 = vadd.f32 0.0, %v1877
      %v1879 = vpop.f32.mrb[0].mxu0
      %1880 = vmatprep.mubr.f32.mxu0 0.0
      %1881 = vmatmul.mubr.f32.gmra.mrb[0].mxu0 %v1140
      %v1882 = vpop.f32.mrb[0].mxu0
      %v1883 = vadd.f32 0.0, %v1882
      %v1884 = vpop.f32.mrb[0].mxu0
      %1885 = vmatprep.mubr.f32.mxu0 0.0
      %1886 = vmatmul.mubr.f32.gmra.mrb[0].mxu0 %v1142
      %v1887 = vpop.f32.mrb[0].mxu0
      %v1888 = vadd.f32 0.0, %v1887
      %v1889 = vpop.f32.mrb[0].mxu0
      %1890 = vmatprep.mubr.f32.mxu0 0.0
      %1891 = vmatmul.mubr.f32.gmra.mrb[0].mxu0 %v1144
      %v1892 = vpop.f32.mrb[0].mxu0
      %v1893 = vadd.f32 0.0, %v1892
      %v1894 = vpop.f32.mrb[0].mxu0
      %1895 = vmatprep.mubr.f32.mxu0 0.0
      %1896 = vmatmul.mubr.f32.gmra.mrb[0].mxu0 %v1146
      %v1897 = vpop.f32.mrb[0].mxu0
      %v1898 = vadd.f32 0.0, %v1897
      %v1899 = vpop.f32.mrb[0].mxu0
      %1900 = vmatprep.mubr.f32.mxu0 0.0
      %1901 = vmatmul.mubr.f32.gmra.mrb[0].mxu0 %v1148
      %v1902 = vpop.f32.mrb[0].mxu0
      %v1903 = vadd.f32 0.0, %v1902
      %v1904 = vpop.f32.mrb[0].mxu0
      %1905 = vmatprep.mubr.f32.mxu0 0.0
      %1906 = vmatmul.mubr.f32.gmra.mrb[0].mxu0 %v1150
      %v1907 = vpop.f32.mrb[0].mxu0
      %v1908 = vadd.f32 0.0, %v1907
      %v1909 = vpop.f32.mrb[0].mxu0
      %1910 = vmatprep.mubr.f32.mxu0 0.0
      %1911 = vmatmul.mubr.f32.gmra.mrb[0].mxu0 %v1806
      %v1912 = vpop.f32.mrb[0].mxu0
      %v1913 = vadd.f32 0.0, %v1912
      %v1914 = vpop.f32.mrb[0].mxu0
      %1915 = vdwg.mxu0
      %v1916 = vadd.f32 %v1796, %v1878
      %v1917 = vadd.f32 %v1797, %v1883
      %v1918 = vadd.f32 %v1798, %v1888
      %v1919 = vadd.f32 %v1799, %v1893
      %v1920 = vadd.f32 %v1800, %v1898
      %v1921 = vadd.f32 %v1801, %v1903
      %v1922 = vadd.f32 %v1802, %v1908
      %v1923 = vadd.f32 %v1803, %v1913
      %s1924 = scalar_lea.vmem %s4, 28
      %v1925 = vld [vmem:[%s1924] sm:$0xf]
      %v1927 = vsel %vm1002, %v888, 0
      %v1930 = vsel %vm1027, %v1925, 0
      %1932 = vmatprep.subr.mxu0 0.0
      %1933 = vmatpush1.msra.mxu0 %v1930
      %1934 = vmatprep.subr.mxu0 0.0
      %1935 = vmatpush1.msra.mxu0 0.0
      %1936 = vmatprep.subr.mxu0 0.0
      %1937 = vmatpush1.msra.mxu0 0.0
      %1938 = vmatprep.subr.mxu0 0.0
      %1939 = vmatpush1.msra.mxu0 0.0
      %1940 = vmatprep.subr.mxu0 0.0
      %1941 = vmatpush1.msra.mxu0 0.0
      %1942 = vmatprep.subr.mxu0 0.0
      %1943 = vmatpush1.msra.mxu0 0.0
      %1944 = vmatprep.subr.mxu0 0.0
      %1945 = vmatpush1.msra.mxu0 0.0
      %1946 = vmatprep.subr.mxu0 0.0
      %1947 = vmatpush1.msra.mxu0 0.0
      %1948 = vmatprep.subr.mxu0 0.0
      %1949 = vmatpush1.msra.mxu0 0.0
      %1950 = vmatprep.subr.mxu0 0.0
      %1951 = vmatpush1.msra.mxu0 0.0
      %1952 = vmatprep.subr.mxu0 0.0
      %1953 = vmatpush1.msra.mxu0 0.0
      %1954 = vmatprep.subr.mxu0 0.0
      %1955 = vmatpush1.msra.mxu0 0.0
      %1956 = vmatprep.subr.mxu0 0.0
      %1957 = vmatpush1.msra.mxu0 0.0
      %1958 = vmatprep.subr.mxu0 0.0
      %1959 = vmatpush1.msra.mxu0 0.0
      %1960 = vmatprep.subr.mxu0 0.0
      %1961 = vmatpush1.msra.mxu0 0.0
      %1962 = vmatprep.subr.mxu0 0.0
      %1963 = vmatpush1.msra.mxu0 0.0
      %1964 = vmatprep.subr.mxu0 0.0
      %1965 = vmatpush1.msra.mxu0 0.0
      %1966 = vmatprep.subr.mxu0 0.0
      %1967 = vmatpush1.msra.mxu0 0.0
      %1968 = vmatprep.subr.mxu0 0.0
      %1969 = vmatpush1.msra.mxu0 0.0
      %1970 = vmatprep.subr.mxu0 0.0
      %1971 = vmatpush1.msra.mxu0 0.0
      %1972 = vmatprep.subr.mxu0 0.0
      %1973 = vmatpush1.msra.mxu0 0.0
      %1974 = vmatprep.subr.mxu0 0.0
      %1975 = vmatpush1.msra.mxu0 0.0
      %1976 = vmatprep.subr.mxu0 0.0
      %1977 = vmatpush1.msra.mxu0 0.0
      %1978 = vmatprep.subr.mxu0 0.0
      %1979 = vmatpush1.msra.mxu0 0.0
      %1980 = vmatprep.subr.mxu0 0.0
      %1981 = vmatpush1.msra.mxu0 0.0
      %1982 = vmatprep.subr.mxu0 0.0
      %1983 = vmatpush1.msra.mxu0 0.0
      %1984 = vmatprep.subr.mxu0 0.0
      %1985 = vmatpush1.msra.mxu0 0.0
      %1986 = vmatprep.subr.mxu0 0.0
      %1987 = vmatpush1.msra.mxu0 0.0
      %1988 = vmatprep.subr.mxu0 0.0
      %1989 = vmatpush1.msra.mxu0 0.0
      %1990 = vmatprep.subr.mxu0 0.0
      %1991 = vmatpush1.msra.mxu0 0.0
      %1992 = vmatprep.subr.mxu0 0.0
      %1993 = vmatpush1.msra.mxu0 0.0
      %1994 = vmatprep.subr.mxu0 0.0
      %1995 = vmatpush1.msra.mxu0 0.0
      %1996 = vmatprep.mubr.f32.mxu0 0.0
      %1997 = vmatmul.mubr.f32.gmra.mrb[0].mxu0 %v1007
      %v1998 = vpop.f32.mrb[0].mxu0
      %v1999 = vadd.f32 0.0, %v1998
      %v2000 = vpop.f32.mrb[0].mxu0
      %2001 = vmatprep.mubr.f32.mxu0 0.0
      %2002 = vmatmul.mubr.f32.gmra.mrb[0].mxu0 %v1010
      %v2003 = vpop.f32.mrb[0].mxu0
      %v2004 = vadd.f32 0.0, %v2003
      %v2005 = vpop.f32.mrb[0].mxu0
      %2006 = vmatprep.mubr.f32.mxu0 0.0
      %2007 = vmatmul.mubr.f32.gmra.mrb[0].mxu0 %v1013
      %v2008 = vpop.f32.mrb[0].mxu0
      %v2009 = vadd.f32 0.0, %v2008
      %v2010 = vpop.f32.mrb[0].mxu0
      %2011 = vmatprep.mubr.f32.mxu0 0.0
      %2012 = vmatmul.mubr.f32.gmra.mrb[0].mxu0 %v1016
      %v2013 = vpop.f32.mrb[0].mxu0
      %v2014 = vadd.f32 0.0, %v2013
      %v2015 = vpop.f32.mrb[0].mxu0
      %2016 = vmatprep.mubr.f32.mxu0 0.0
      %2017 = vmatmul.mubr.f32.gmra.mrb[0].mxu0 %v1019
      %v2018 = vpop.f32.mrb[0].mxu0
      %v2019 = vadd.f32 0.0, %v2018
      %v2020 = vpop.f32.mrb[0].mxu0
      %2021 = vmatprep.mubr.f32.mxu0 0.0
      %2022 = vmatmul.mubr.f32.gmra.mrb[0].mxu0 %v1022
      %v2023 = vpop.f32.mrb[0].mxu0
      %v2024 = vadd.f32 0.0, %v2023
      %v2025 = vpop.f32.mrb[0].mxu0
      %2026 = vmatprep.mubr.f32.mxu0 0.0
      %2027 = vmatmul.mubr.f32.gmra.mrb[0].mxu0 %v1025
      %v2028 = vpop.f32.mrb[0].mxu0
      %v2029 = vadd.f32 0.0, %v2028
      %v2030 = vpop.f32.mrb[0].mxu0
      %2031 = vmatprep.mubr.f32.mxu0 0.0
      %2032 = vmatmul.mubr.f32.gmra.mrb[0].mxu0 %v1927
      %v2033 = vpop.f32.mrb[0].mxu0
      %v2034 = vadd.f32 0.0, %v2033
      %v2035 = vpop.f32.mrb[0].mxu0
      %2036 = vdwg.mxu0
      %v2037 = vadd.f32 %v1916, %v1999
      %v2038 = vadd.f32 %v1917, %v2004
      %v2039 = vadd.f32 %v1918, %v2009
      %v2040 = vadd.f32 %v1919, %v2014
      %v2041 = vadd.f32 %v1920, %v2019
      %v2042 = vadd.f32 %v1921, %v2024
      %v2043 = vadd.f32 %v1922, %v2029
      %v2044 = vadd.f32 %v1923, %v2034
      %s2045 = scalar_lea.vmem %s4, 32
      %v2046 = vld [vmem:[%s2045] sm:$0xf]
      %v2047 = vsel %vm1002, %v998, 0
      %v2050 = vsel %vm1027, %v2046, 0
      %2052 = vmatprep.subr.mxu0 0.0
      %2053 = vmatpush1.msra.mxu0 %v2050
      %2054 = vmatprep.subr.mxu0 0.0
      %2055 = vmatpush1.msra.mxu0 0.0
      %2056 = vmatprep.subr.mxu0 0.0
      %2057 = vmatpush1.msra.mxu0 0.0
      %2058 = vmatprep.subr.mxu0 0.0
      %2059 = vmatpush1.msra.mxu0 0.0
      %2060 = vmatprep.subr.mxu0 0.0
      %2061 = vmatpush1.msra.mxu0 0.0
      %2062 = vmatprep.subr.mxu0 0.0
      %2063 = vmatpush1.msra.mxu0 0.0
      %2064 = vmatprep.subr.mxu0 0.0
      %2065 = vmatpush1.msra.mxu0 0.0
      %2066 = vmatprep.subr.mxu0 0.0
      %2067 = vmatpush1.msra.mxu0 0.0
      %2068 = vmatprep.subr.mxu0 0.0
      %2069 = vmatpush1.msra.mxu0 0.0
      %2070 = vmatprep.subr.mxu0 0.0
      %2071 = vmatpush1.msra.mxu0 0.0
      %2072 = vmatprep.subr.mxu0 0.0
      %2073 = vmatpush1.msra.mxu0 0.0
      %2074 = vmatprep.subr.mxu0 0.0
      %2075 = vmatpush1.msra.mxu0 0.0
      %2076 = vmatprep.subr.mxu0 0.0
      %2077 = vmatpush1.msra.mxu0 0.0
      %2078 = vmatprep.subr.mxu0 0.0
      %2079 = vmatpush1.msra.mxu0 0.0
      %2080 = vmatprep.subr.mxu0 0.0
      %2081 = vmatpush1.msra.mxu0 0.0
      %2082 = vmatprep.subr.mxu0 0.0
      %2083 = vmatpush1.msra.mxu0 0.0
      %2084 = vmatprep.subr.mxu0 0.0
      %2085 = vmatpush1.msra.mxu0 0.0
      %2086 = vmatprep.subr.mxu0 0.0
      %2087 = vmatpush1.msra.mxu0 0.0
      %2088 = vmatprep.subr.mxu0 0.0
      %2089 = vmatpush1.msra.mxu0 0.0
      %2090 = vmatprep.subr.mxu0 0.0
      %2091 = vmatpush1.msra.mxu0 0.0
      %2092 = vmatprep.subr.mxu0 0.0
      %2093 = vmatpush1.msra.mxu0 0.0
      %2094 = vmatprep.subr.mxu0 0.0
      %2095 = vmatpush1.msra.mxu0 0.0
      %2096 = vmatprep.subr.mxu0 0.0
      %2097 = vmatpush1.msra.mxu0 0.0
      %2098 = vmatprep.subr.mxu0 0.0
      %2099 = vmatpush1.msra.mxu0 0.0
      %2100 = vmatprep.subr.mxu0 0.0
      %2101 = vmatpush1.msra.mxu0 0.0
      %2102 = vmatprep.subr.mxu0 0.0
      %2103 = vmatpush1.msra.mxu0 0.0
      %2104 = vmatprep.subr.mxu0 0.0
      %2105 = vmatpush1.msra.mxu0 0.0
      %2106 = vmatprep.subr.mxu0 0.0
      %2107 = vmatpush1.msra.mxu0 0.0
      %2108 = vmatprep.subr.mxu0 0.0
      %2109 = vmatpush1.msra.mxu0 0.0
      %2110 = vmatprep.subr.mxu0 0.0
      %2111 = vmatpush1.msra.mxu0 0.0
      %2112 = vmatprep.subr.mxu0 0.0
      %2113 = vmatpush1.msra.mxu0 0.0
      %2114 = vmatprep.subr.mxu0 0.0
      %2115 = vmatpush1.msra.mxu0 0.0
      %2116 = vmatprep.mubr.f32.mxu0 0.0
      %2117 = vmatmul.mubr.f32.gmra.mrb[0].mxu0 %v1264
      %v2118 = vpop.f32.mrb[0].mxu0
      %v2119 = vadd.f32 0.0, %v2118
      %v2120 = vpop.f32.mrb[0].mxu0
      %2121 = vmatprep.mubr.f32.mxu0 0.0
      %2122 = vmatmul.mubr.f32.gmra.mrb[0].mxu0 %v1266
      %v2123 = vpop.f32.mrb[0].mxu0
      %v2124 = vadd.f32 0.0, %v2123
      %v2125 = vpop.f32.mrb[0].mxu0
      %2126 = vmatprep.mubr.f32.mxu0 0.0
      %2127 = vmatmul.mubr.f32.gmra.mrb[0].mxu0 %v1268
      %v2128 = vpop.f32.mrb[0].mxu0
      %v2129 = vadd.f32 0.0, %v2128
      %v2130 = vpop.f32.mrb[0].mxu0
      %2131 = vmatprep.mubr.f32.mxu0 0.0
      %2132 = vmatmul.mubr.f32.gmra.mrb[0].mxu0 %v1270
      %v2133 = vpop.f32.mrb[0].mxu0
      %v2134 = vadd.f32 0.0, %v2133
      %v2135 = vpop.f32.mrb[0].mxu0
      %2136 = vmatprep.mubr.f32.mxu0 0.0
      %2137 = vmatmul.mubr.f32.gmra.mrb[0].mxu0 %v1272
      %v2138 = vpop.f32.mrb[0].mxu0
      %v2139 = vadd.f32 0.0, %v2138
      %v2140 = vpop.f32.mrb[0].mxu0
      %2141 = vmatprep.mubr.f32.mxu0 0.0
      %2142 = vmatmul.mubr.f32.gmra.mrb[0].mxu0 %v1274
      %v2143 = vpop.f32.mrb[0].mxu0
      %v2144 = vadd.f32 0.0, %v2143
      %v2145 = vpop.f32.mrb[0].mxu0
      %2146 = vmatprep.mubr.f32.mxu0 0.0
      %2147 = vmatmul.mubr.f32.gmra.mrb[0].mxu0 %v1276
      %v2148 = vpop.f32.mrb[0].mxu0
      %v2149 = vadd.f32 0.0, %v2148
      %v2150 = vpop.f32.mrb[0].mxu0
      %2151 = vmatprep.mubr.f32.mxu0 0.0
      %2152 = vmatmul.mubr.f32.gmra.mrb[0].mxu0 %v2047
      %v2153 = vpop.f32.mrb[0].mxu0
      %v2154 = vadd.f32 0.0, %v2153
      %v2155 = vpop.f32.mrb[0].mxu0
      %2156 = vdwg.mxu0
      %v2157 = vadd.f32 %v2037, %v2119
      %v2158 = vadd.f32 %v2038, %v2124
      %v2159 = vadd.f32 %v2039, %v2129
      %v2160 = vadd.f32 %v2040, %v2134
      %v2161 = vadd.f32 %v2041, %v2139
      %v2162 = vadd.f32 %v2042, %v2144
      %v2163 = vadd.f32 %v2043, %v2149
      %v2164 = vadd.f32 %v2044, %v2154
      %v2165 = vld [vmem:[%s5] sm:$0x1]
      %v2167 = vlaneseq
      %v2168 = vshrl.u32 %v2167, 7
      %v2169 = vsub.s32 0, %v2168
      %v2170 = vrot.slane %v2165, %v2169
      %v2172 = vmul.f32 %v2157, %v2170
      %v2173 = vmul.f32 %v2158, %v2170
      %v2174 = vmul.f32 %v2159, %v2170
      %v2175 = vmul.f32 %v2160, %v2170
      %v2176 = vmul.f32 %v2161, %v2170
      %v2177 = vmul.f32 %v2162, %v2170
      %v2178 = vmul.f32 %v2163, %v2170
      %v2179 = vmul.f32 %v2164, %v2170
      %v2180 = vld [vmem:[%s6] sm:$0x1]
      %v2182 = vlaneseq
      %v2183 = vshrl.u32 %v2182, 7
      %v2184 = vsub.s32 0, %v2183
      %v2185 = vrot.slane %v2180, %v2184
      %v2187 = vadd.f32 %v2172, %v2185
      %v2188 = vadd.f32 %v2173, %v2185
      %v2189 = vadd.f32 %v2174, %v2185
      %v2190 = vadd.f32 %v2175, %v2185
      %v2191 = vadd.f32 %v2176, %v2185
      %v2192 = vadd.f32 %v2177, %v2185
      %v2193 = vadd.f32 %v2178, %v2185
      %v2194 = vadd.f32 %v2179, %v2185
      %v2195 = vmax.f32 %v2187, 0.0
      %v2196 = vmax.f32 %v2188, 0.0
      %v2197 = vmax.f32 %v2189, 0.0
      %v2198 = vmax.f32 %v2190, 0.0
      %v2199 = vmax.f32 %v2191, 0.0
      %v2200 = vmax.f32 %v2192, 0.0
      %v2201 = vmax.f32 %v2193, 0.0
      %v2202 = vmax.f32 %v2194, 0.0
      %vm2203 = vcmask 64512
      %2204 = vst.msk [vmem:[#allocation2] sm:$0xff] %vm2203, 0.0
      %vm2205 = vcmask 58368
      %2206 = vst.msk [vmem:[#allocation2 + $0x8] sm:$0x3] %vm2205, 0.0
      %2207 = vst.msk [vmem:[#allocation2 + $0x10] sm:$0xff] %vm2203, 0.0
      %2208 = vst.msk [vmem:[#allocation2 + $0x18] sm:$0x3] %vm2205, 0.0
      %2209 = vst.msk [vmem:[#allocation2 + $0x20] sm:$0xff] %vm2203, 0.0
      %2210 = vst.msk [vmem:[#allocation2 + $0x28] sm:$0x3] %vm2205, 0.0
      %2211 = vst.msk [vmem:[#allocation2 + $0x30] sm:$0xff] %vm2203, 0.0
      %2212 = vst.msk [vmem:[#allocation2 + $0x38] sm:$0x3] %vm2205, 0.0
      %2213 = vst.msk [vmem:[#allocation2 + $0x40] sm:$0xff] %vm2203, 0.0
      %2214 = vst.msk [vmem:[#allocation2 + $0x48] sm:$0x3] %vm2205, 0.0
      %2215 = vst.msk [vmem:[#allocation2 + $0x50] sm:$0xff] %vm2203, 0.0
      %2216 = vst.msk [vmem:[#allocation2 + $0x58] sm:$0x3] %vm2205, 0.0
      %2217 = vst.msk [vmem:[#allocation2 + $0x60] sm:$0xff] %vm2203, 0.0
      %2218 = vst.msk [vmem:[#allocation2 + $0x68] sm:$0x3] %vm2205, 0.0
      %2219 = vst.msk [vmem:[#allocation2 + $0x70] sm:$0xff] %vm2203, 0.0
      %2220 = vst.msk [vmem:[#allocation2 + $0x78] sm:$0x3] %vm2205, 0.0
      %2221 = vst.msk [vmem:[#allocation2 + $0x80] sm:$0xff] %vm2203, 0.0
      %2222 = vst.msk [vmem:[#allocation2 + $0x88] sm:$0x3] %vm2205, 0.0
      %2223 = vst.msk [vmem:[#allocation2 + $0x90] sm:$0xff] %vm2203, 0.0
      %2224 = vst.msk [vmem:[#allocation2 + $0x98] sm:$0x3] %vm2205, 0.0
      %s2225 = scalar_lea.vmem [#allocation2], 16
      %2226 = vst.msk [vmem:[%s2225 + $0x1] sm:$0xff] %vm2203, %v2195
      %2227 = vst.msk [vmem:[%s2225 + $0x11] sm:$0xff] %vm2203, %v2196
      %2228 = vst.msk [vmem:[%s2225 + $0x21] sm:$0xff] %vm2203, %v2197
      %2229 = vst.msk [vmem:[%s2225 + $0x31] sm:$0xff] %vm2203, %v2198
      %2230 = vst.msk [vmem:[%s2225 + $0x41] sm:$0xff] %vm2203, %v2199
      %2231 = vst.msk [vmem:[%s2225 + $0x51] sm:$0xff] %vm2203, %v2200
      %2232 = vst.msk [vmem:[%s2225 + $0x61] sm:$0xff] %vm2203, %v2201
      %2233 = vst.msk [vmem:[%s2225 + $0x71] sm:$0xff] %vm2203, %v2202
      %v2234 = vld [vmem:[#allocation2] sm:$0xff]
      %v2235 = vld [vmem:[#allocation2 + $0x8] sm:$0x3]
      %v2236 = vld [vmem:[#allocation2 + $0x10] sm:$0xff]
      %v2237 = vld [vmem:[#allocation2 + $0x18] sm:$0x3]
      %v2238 = vld [vmem:[#allocation2 + $0x20] sm:$0xff]
      %v2239 = vld [vmem:[#allocation2 + $0x28] sm:$0x3]
      %v2240 = vld [vmem:[#allocation2 + $0x30] sm:$0xff]
      %v2241 = vld [vmem:[#allocation2 + $0x38] sm:$0x3]
      %v2242 = vld [vmem:[#allocation2 + $0x40] sm:$0xff]
      %v2243 = vld [vmem:[#allocation2 + $0x48] sm:$0x3]
      %v2244 = vld [vmem:[#allocation2 + $0x50] sm:$0xff]
      %v2245 = vld [vmem:[#allocation2 + $0x58] sm:$0x3]
      %v2246 = vld [vmem:[#allocation2 + $0x60] sm:$0xff]
      %v2247 = vld [vmem:[#allocation2 + $0x68] sm:$0x3]
      %v2248 = vld [vmem:[#allocation2 + $0x70] sm:$0xff]
      %v2249 = vld [vmem:[#allocation2 + $0x78] sm:$0x3]
      %v2250 = vld [vmem:[#allocation2 + $0x80] sm:$0xff]
      %v2251 = vld [vmem:[#allocation2 + $0x88] sm:$0x3]
      %v2252 = vld [vmem:[#allocation2 + $0x90] sm:$0xff]
      %v2253 = vld [vmem:[#allocation2 + $0x98] sm:$0x3]
      %v2254 = vld [vmem:[%s7] sm:$0xff]
      %v2271 = vrot.slane %v2234, 1
      %v2272 = vrot.slane %v2235, 1
      %v2273 = vsel %vm929, %v2271, %v2272
      %v2274 = vrot.slane %v2236, 1
      %v2275 = vrot.slane %v2237, 1
      %v2276 = vsel %vm929, %v2274, %v2275
      %v2277 = vrot.slane %v2238, 1
      %v2278 = vrot.slane %v2239, 1
      %v2279 = vsel %vm929, %v2277, %v2278
      %v2280 = vrot.slane %v2240, 1
      %v2281 = vrot.slane %v2241, 1
      %v2282 = vsel %vm929, %v2280, %v2281
      %v2283 = vrot.slane %v2242, 1
      %v2284 = vrot.slane %v2243, 1
      %v2285 = vsel %vm929, %v2283, %v2284
      %v2286 = vrot.slane %v2244, 1
      %v2287 = vrot.slane %v2245, 1
      %v2288 = vsel %vm929, %v2286, %v2287
      %v2289 = vrot.slane %v2246, 1
      %v2290 = vrot.slane %v2247, 1
      %v2291 = vsel %vm929, %v2289, %v2290
      %v2292 = vrot.slane %v2248, 1
      %v2293 = vrot.slane %v2249, 1
      %v2294 = vsel %vm929, %v2292, %v2293
      %s2295 = scalar_lea.vmem %s7, 8
      %v2296 = vld [vmem:[%s2295] sm:$0xff]
      %v2297 = vsel %vm2203, %v2273, 0
      %v2299 = vsel %vm2203, %v2276, 0
      %v2301 = vsel %vm2203, %v2279, 0
      %v2303 = vsel %vm2203, %v2282, 0
      %v2305 = vsel %vm2203, %v2285, 0
      %v2307 = vsel %vm2203, %v2288, 0
      %v2309 = vsel %vm2203, %v2291, 0
      %v2311 = vsel %vm2203, %v2294, 0
      %2313 = vmatprep.subr.mxu0 0.0
      %2314 = vmatpush1.msra.mxu0 %v2296
      %2315 = vmatprep.subr.mxu0 0.0
      %2316 = vmatpush1.msra.mxu0 0.0
      %2317 = vmatprep.subr.mxu0 0.0
      %2318 = vmatpush1.msra.mxu0 0.0
      %2319 = vmatprep.subr.mxu0 0.0
      %2320 = vmatpush1.msra.mxu0 0.0
      %2321 = vmatprep.subr.mxu0 0.0
      %2322 = vmatpush1.msra.mxu0 0.0
      %2323 = vmatprep.subr.mxu0 0.0
      %2324 = vmatpush1.msra.mxu0 0.0
      %2325 = vmatprep.subr.mxu0 0.0
      %2326 = vmatpush1.msra.mxu0 0.0
      %2327 = vmatprep.subr.mxu0 0.0
      %2328 = vmatpush1.msra.mxu0 0.0
      %2329 = vmatprep.subr.mxu0 0.0
      %2330 = vmatpush1.msra.mxu0 0.0
      %2331 = vmatprep.subr.mxu0 0.0
      %2332 = vmatpush1.msra.mxu0 0.0
      %2333 = vmatprep.subr.mxu0 0.0
      %2334 = vmatpush1.msra.mxu0 0.0
      %2335 = vmatprep.subr.mxu0 0.0
      %2336 = vmatpush1.msra.mxu0 0.0
      %2337 = vmatprep.subr.mxu0 0.0
      %2338 = vmatpush1.msra.mxu0 0.0
      %2339 = vmatprep.subr.mxu0 0.0
      %2340 = vmatpush1.msra.mxu0 0.0
      %2341 = vmatprep.subr.mxu0 0.0
      %2342 = vmatpush1.msra.mxu0 0.0
      %2343 = vmatprep.subr.mxu0 0.0
      %2344 = vmatpush1.msra.mxu0 0.0
      %2345 = vmatprep.subr.mxu0 0.0
      %2346 = vmatpush1.msra.mxu0 0.0
      %2347 = vmatprep.subr.mxu0 0.0
      %2348 = vmatpush1.msra.mxu0 0.0
      %2349 = vmatprep.subr.mxu0 0.0
      %2350 = vmatpush1.msra.mxu0 0.0
      %2351 = vmatprep.subr.mxu0 0.0
      %2352 = vmatpush1.msra.mxu0 0.0
      %2353 = vmatprep.subr.mxu0 0.0
      %2354 = vmatpush1.msra.mxu0 0.0
      %2355 = vmatprep.subr.mxu0 0.0
      %2356 = vmatpush1.msra.mxu0 0.0
      %2357 = vmatprep.subr.mxu0 0.0
      %2358 = vmatpush1.msra.mxu0 0.0
      %2359 = vmatprep.subr.mxu0 0.0
      %2360 = vmatpush1.msra.mxu0 0.0
      %2361 = vmatprep.subr.mxu0 0.0
      %2362 = vmatpush1.msra.mxu0 0.0
      %2363 = vmatprep.subr.mxu0 0.0
      %2364 = vmatpush1.msra.mxu0 0.0
      %2365 = vmatprep.subr.mxu0 0.0
      %2366 = vmatpush1.msra.mxu0 0.0
      %2367 = vmatprep.subr.mxu0 0.0
      %2368 = vmatpush1.msra.mxu0 0.0
      %2369 = vmatprep.subr.mxu0 0.0
      %2370 = vmatpush1.msra.mxu0 0.0
      %2371 = vmatprep.subr.mxu0 0.0
      %2372 = vmatpush1.msra.mxu0 0.0
      %2373 = vmatprep.subr.mxu0 0.0
      %2374 = vmatpush1.msra.mxu0 0.0
      %2375 = vmatprep.subr.mxu0 0.0
      %2376 = vmatpush1.msra.mxu0 0.0
      %2377 = vmatprep.mubr.f32.mxu0 0.0
      %2378 = vmatmul.mubr.f32.gmra.mrb[0].mxu0 %v2297
      %v2379 = vpop.f32.mrb[0].mxu0
      %v2380 = vadd.f32 0.0, %v2379
      %v2381 = vpop.f32.mrb[0].mxu0
      %2382 = vmatprep.mubr.f32.mxu0 0.0
      %2383 = vmatmul.mubr.f32.gmra.mrb[0].mxu0 %v2299
      %v2384 = vpop.f32.mrb[0].mxu0
      %v2385 = vadd.f32 0.0, %v2384
      %v2386 = vpop.f32.mrb[0].mxu0
      %2387 = vmatprep.mubr.f32.mxu0 0.0
      %2388 = vmatmul.mubr.f32.gmra.mrb[0].mxu0 %v2301
      %v2389 = vpop.f32.mrb[0].mxu0
      %v2390 = vadd.f32 0.0, %v2389
      %v2391 = vpop.f32.mrb[0].mxu0
      %2392 = vmatprep.mubr.f32.mxu0 0.0
      %2393 = vmatmul.mubr.f32.gmra.mrb[0].mxu0 %v2303
      %v2394 = vpop.f32.mrb[0].mxu0
      %v2395 = vadd.f32 0.0, %v2394
      %v2396 = vpop.f32.mrb[0].mxu0
      %2397 = vmatprep.mubr.f32.mxu0 0.0
      %2398 = vmatmul.mubr.f32.gmra.mrb[0].mxu0 %v2305
      %v2399 = vpop.f32.mrb[0].mxu0
      %v2400 = vadd.f32 0.0, %v2399
      %v2401 = vpop.f32.mrb[0].mxu0
      %2402 = vmatprep.mubr.f32.mxu0 0.0
      %2403 = vmatmul.mubr.f32.gmra.mrb[0].mxu0 %v2307
      %v2404 = vpop.f32.mrb[0].mxu0
      %v2405 = vadd.f32 0.0, %v2404
      %v2406 = vpop.f32.mrb[0].mxu0
      %2407 = vmatprep.mubr.f32.mxu0 0.0
      %2408 = vmatmul.mubr.f32.gmra.mrb[0].mxu0 %v2309
      %v2409 = vpop.f32.mrb[0].mxu0
      %v2410 = vadd.f32 0.0, %v2409
      %v2411 = vpop.f32.mrb[0].mxu0
      %2412 = vmatprep.mubr.f32.mxu0 0.0
      %2413 = vmatmul.mubr.f32.gmra.mrb[0].mxu0 %v2311
      %v2414 = vpop.f32.mrb[0].mxu0
      %v2415 = vadd.f32 0.0, %v2414
      %v2416 = vpop.f32.mrb[0].mxu0
      %2417 = vdwg.mxu0
      %v2418 = vsel %vm2203, %v2234, 0
      %v2420 = vsel %vm2203, %v2236, 0
      %v2422 = vsel %vm2203, %v2238, 0
      %v2424 = vsel %vm2203, %v2240, 0
      %v2426 = vsel %vm2203, %v2242, 0
      %v2428 = vsel %vm2203, %v2244, 0
      %v2430 = vsel %vm2203, %v2246, 0
      %v2432 = vsel %vm2203, %v2248, 0
      %2434 = vmatprep.subr.mxu0 0.0
      %2435 = vmatpush1.msra.mxu0 %v2254
      %2436 = vmatprep.subr.mxu0 0.0
      %2437 = vmatpush1.msra.mxu0 0.0
      %2438 = vmatprep.subr.mxu0 0.0
      %2439 = vmatpush1.msra.mxu0 0.0
      %2440 = vmatprep.subr.mxu0 0.0
      %2441 = vmatpush1.msra.mxu0 0.0
      %2442 = vmatprep.subr.mxu0 0.0
      %2443 = vmatpush1.msra.mxu0 0.0
      %2444 = vmatprep.subr.mxu0 0.0
      %2445 = vmatpush1.msra.mxu0 0.0
      %2446 = vmatprep.subr.mxu0 0.0
      %2447 = vmatpush1.msra.mxu0 0.0
      %2448 = vmatprep.subr.mxu0 0.0
      %2449 = vmatpush1.msra.mxu0 0.0
      %2450 = vmatprep.subr.mxu0 0.0
      %2451 = vmatpush1.msra.mxu0 0.0
      %2452 = vmatprep.subr.mxu0 0.0
      %2453 = vmatpush1.msra.mxu0 0.0
      %2454 = vmatprep.subr.mxu0 0.0
      %2455 = vmatpush1.msra.mxu0 0.0
      %2456 = vmatprep.subr.mxu0 0.0
      %2457 = vmatpush1.msra.mxu0 0.0
      %2458 = vmatprep.subr.mxu0 0.0
      %2459 = vmatpush1.msra.mxu0 0.0
      %2460 = vmatprep.subr.mxu0 0.0
      %2461 = vmatpush1.msra.mxu0 0.0
      %2462 = vmatprep.subr.mxu0 0.0
      %2463 = vmatpush1.msra.mxu0 0.0
      %2464 = vmatprep.subr.mxu0 0.0
      %2465 = vmatpush1.msra.mxu0 0.0
      %2466 = vmatprep.subr.mxu0 0.0
      %2467 = vmatpush1.msra.mxu0 0.0
      %2468 = vmatprep.subr.mxu0 0.0
      %2469 = vmatpush1.msra.mxu0 0.0
      %2470 = vmatprep.subr.mxu0 0.0
      %2471 = vmatpush1.msra.mxu0 0.0
      %2472 = vmatprep.subr.mxu0 0.0
      %2473 = vmatpush1.msra.mxu0 0.0
      %2474 = vmatprep.subr.mxu0 0.0
      %2475 = vmatpush1.msra.mxu0 0.0
      %2476 = vmatprep.subr.mxu0 0.0
      %2477 = vmatpush1.msra.mxu0 0.0
      %2478 = vmatprep.subr.mxu0 0.0
      %2479 = vmatpush1.msra.mxu0 0.0
      %2480 = vmatprep.subr.mxu0 0.0
      %2481 = vmatpush1.msra.mxu0 0.0
      %2482 = vmatprep.subr.mxu0 0.0
      %2483 = vmatpush1.msra.mxu0 0.0
      %2484 = vmatprep.subr.mxu0 0.0
      %2485 = vmatpush1.msra.mxu0 0.0
      %2486 = vmatprep.subr.mxu0 0.0
      %2487 = vmatpush1.msra.mxu0 0.0
      %2488 = vmatprep.subr.mxu0 0.0
      %2489 = vmatpush1.msra.mxu0 0.0
      %2490 = vmatprep.subr.mxu0 0.0
      %2491 = vmatpush1.msra.mxu0 0.0
      %2492 = vmatprep.subr.mxu0 0.0
      %2493 = vmatpush1.msra.mxu0 0.0
      %2494 = vmatprep.subr.mxu0 0.0
      %2495 = vmatpush1.msra.mxu0 0.0
      %2496 = vmatprep.subr.mxu0 0.0
      %2497 = vmatpush1.msra.mxu0 0.0
      %2498 = vmatprep.mubr.f32.mxu0 0.0
      %2499 = vmatmul.mubr.f32.gmra.mrb[0].mxu0 %v2418
      %v2500 = vpop.f32.mrb[0].mxu0
      %v2501 = vadd.f32 %v2380, %v2500
      %v2502 = vpop.f32.mrb[0].mxu0
      %2503 = vmatprep.mubr.f32.mxu0 0.0
      %2504 = vmatmul.mubr.f32.gmra.mrb[0].mxu0 %v2420
      %v2505 = vpop.f32.mrb[0].mxu0
      %v2506 = vadd.f32 %v2385, %v2505
      %v2507 = vpop.f32.mrb[0].mxu0
      %2508 = vmatprep.mubr.f32.mxu0 0.0
      %2509 = vmatmul.mubr.f32.gmra.mrb[0].mxu0 %v2422
      %v2510 = vpop.f32.mrb[0].mxu0
      %v2511 = vadd.f32 %v2390, %v2510
      %v2512 = vpop.f32.mrb[0].mxu0
      %2513 = vmatprep.mubr.f32.mxu0 0.0
      %2514 = vmatmul.mubr.f32.gmra.mrb[0].mxu0 %v2424
      %v2515 = vpop.f32.mrb[0].mxu0
      %v2516 = vadd.f32 %v2395, %v2515
      %v2517 = vpop.f32.mrb[0].mxu0
      %2518 = vmatprep.mubr.f32.mxu0 0.0
      %2519 = vmatmul.mubr.f32.gmra.mrb[0].mxu0 %v2426
      %v2520 = vpop.f32.mrb[0].mxu0
      %v2521 = vadd.f32 %v2400, %v2520
      %v2522 = vpop.f32.mrb[0].mxu0
      %2523 = vmatprep.mubr.f32.mxu0 0.0
      %2524 = vmatmul.mubr.f32.gmra.mrb[0].mxu0 %v2428
      %v2525 = vpop.f32.mrb[0].mxu0
      %v2526 = vadd.f32 %v2405, %v2525
      %v2527 = vpop.f32.mrb[0].mxu0
      %2528 = vmatprep.mubr.f32.mxu0 0.0
      %2529 = vmatmul.mubr.f32.gmra.mrb[0].mxu0 %v2430
      %v2530 = vpop.f32.mrb[0].mxu0
      %v2531 = vadd.f32 %v2410, %v2530
      %v2532 = vpop.f32.mrb[0].mxu0
      %2533 = vmatprep.mubr.f32.mxu0 0.0
      %2534 = vmatmul.mubr.f32.gmra.mrb[0].mxu0 %v2432
      %v2535 = vpop.f32.mrb[0].mxu0
      %v2536 = vadd.f32 %v2415, %v2535
      %v2537 = vpop.f32.mrb[0].mxu0
      %2538 = vdwg.mxu0
      %vm2539 = vcmask 1045504
      %v2540 = vrot.slane %v2234, 2
      %v2541 = vrot.slane %v2235, 2
      %v2542 = vsel %vm2539, %v2540, %v2541
      %v2543 = vrot.slane %v2236, 2
      %v2544 = vrot.slane %v2237, 2
      %v2545 = vsel %vm2539, %v2543, %v2544
      %v2546 = vrot.slane %v2238, 2
      %v2547 = vrot.slane %v2239, 2
      %v2548 = vsel %vm2539, %v2546, %v2547
      %v2549 = vrot.slane %v2240, 2
      %v2550 = vrot.slane %v2241, 2
      %v2551 = vsel %vm2539, %v2549, %v2550
      %v2552 = vrot.slane %v2242, 2
      %v2553 = vrot.slane %v2243, 2
      %v2554 = vsel %vm2539, %v2552, %v2553
      %v2555 = vrot.slane %v2244, 2
      %v2556 = vrot.slane %v2245, 2
      %v2557 = vsel %vm2539, %v2555, %v2556
      %v2558 = vrot.slane %v2246, 2
      %v2559 = vrot.slane %v2247, 2
      %v2560 = vsel %vm2539, %v2558, %v2559
      %v2561 = vrot.slane %v2248, 2
      %v2562 = vrot.slane %v2249, 2
      %v2563 = vsel %vm2539, %v2561, %v2562
      %s2564 = scalar_lea.vmem %s7, 16
      %v2565 = vld [vmem:[%s2564] sm:$0xff]
      %v2566 = vsel %vm2203, %v2542, 0
      %v2568 = vsel %vm2203, %v2545, 0
      %v2570 = vsel %vm2203, %v2548, 0
      %v2572 = vsel %vm2203, %v2551, 0
      %v2574 = vsel %vm2203, %v2554, 0
      %v2576 = vsel %vm2203, %v2557, 0
      %v2578 = vsel %vm2203, %v2560, 0
      %v2580 = vsel %vm2203, %v2563, 0
      %2582 = vmatprep.subr.mxu0 0.0
      %2583 = vmatpush1.msra.mxu0 %v2565
      %2584 = vmatprep.subr.mxu0 0.0
      %2585 = vmatpush1.msra.mxu0 0.0
      %2586 = vmatprep.subr.mxu0 0.0
      %2587 = vmatpush1.msra.mxu0 0.0
      %2588 = vmatprep.subr.mxu0 0.0
      %2589 = vmatpush1.msra.mxu0 0.0
      %2590 = vmatprep.subr.mxu0 0.0
      %2591 = vmatpush1.msra.mxu0 0.0
      %2592 = vmatprep.subr.mxu0 0.0
      %2593 = vmatpush1.msra.mxu0 0.0
      %2594 = vmatprep.subr.mxu0 0.0
      %2595 = vmatpush1.msra.mxu0 0.0
      %2596 = vmatprep.subr.mxu0 0.0
      %2597 = vmatpush1.msra.mxu0 0.0
      %2598 = vmatprep.subr.mxu0 0.0
      %2599 = vmatpush1.msra.mxu0 0.0
      %2600 = vmatprep.subr.mxu0 0.0
      %2601 = vmatpush1.msra.mxu0 0.0
      %2602 = vmatprep.subr.mxu0 0.0
      %2603 = vmatpush1.msra.mxu0 0.0
      %2604 = vmatprep.subr.mxu0 0.0
      %2605 = vmatpush1.msra.mxu0 0.0
      %2606 = vmatprep.subr.mxu0 0.0
      %2607 = vmatpush1.msra.mxu0 0.0
      %2608 = vmatprep.subr.mxu0 0.0
      %2609 = vmatpush1.msra.mxu0 0.0
      %2610 = vmatprep.subr.mxu0 0.0
      %2611 = vmatpush1.msra.mxu0 0.0
      %2612 = vmatprep.subr.mxu0 0.0
      %2613 = vmatpush1.msra.mxu0 0.0
      %2614 = vmatprep.subr.mxu0 0.0
      %2615 = vmatpush1.msra.mxu0 0.0
      %2616 = vmatprep.subr.mxu0 0.0
      %2617 = vmatpush1.msra.mxu0 0.0
      %2618 = vmatprep.subr.mxu0 0.0
      %2619 = vmatpush1.msra.mxu0 0.0
      %2620 = vmatprep.subr.mxu0 0.0
      %2621 = vmatpush1.msra.mxu0 0.0
      %2622 = vmatprep.subr.mxu0 0.0
      %2623 = vmatpush1.msra.mxu0 0.0
      %2624 = vmatprep.subr.mxu0 0.0
      %2625 = vmatpush1.msra.mxu0 0.0
      %2626 = vmatprep.subr.mxu0 0.0
      %2627 = vmatpush1.msra.mxu0 0.0
      %2628 = vmatprep.subr.mxu0 0.0
      %2629 = vmatpush1.msra.mxu0 0.0
      %2630 = vmatprep.subr.mxu0 0.0
      %2631 = vmatpush1.msra.mxu0 0.0
      %2632 = vmatprep.subr.mxu0 0.0
      %2633 = vmatpush1.msra.mxu0 0.0
      %2634 = vmatprep.subr.mxu0 0.0
      %2635 = vmatpush1.msra.mxu0 0.0
      %2636 = vmatprep.subr.mxu0 0.0
      %2637 = vmatpush1.msra.mxu0 0.0
      %2638 = vmatprep.subr.mxu0 0.0
      %2639 = vmatpush1.msra.mxu0 0.0
      %2640 = vmatprep.subr.mxu0 0.0
      %2641 = vmatpush1.msra.mxu0 0.0
      %2642 = vmatprep.subr.mxu0 0.0
      %2643 = vmatpush1.msra.mxu0 0.0
      %2644 = vmatprep.subr.mxu0 0.0
      %2645 = vmatpush1.msra.mxu0 0.0
      %2646 = vmatprep.mubr.f32.mxu0 0.0
      %2647 = vmatmul.mubr.f32.gmra.mrb[0].mxu0 %v2566
      %v2648 = vpop.f32.mrb[0].mxu0
      %v2649 = vadd.f32 0.0, %v2648
      %v2650 = vpop.f32.mrb[0].mxu0
      %2651 = vmatprep.mubr.f32.mxu0 0.0
      %2652 = vmatmul.mubr.f32.gmra.mrb[0].mxu0 %v2568
      %v2653 = vpop.f32.mrb[0].mxu0
      %v2654 = vadd.f32 0.0, %v2653
      %v2655 = vpop.f32.mrb[0].mxu0
      %2656 = vmatprep.mubr.f32.mxu0 0.0
      %2657 = vmatmul.mubr.f32.gmra.mrb[0].mxu0 %v2570
      %v2658 = vpop.f32.mrb[0].mxu0
      %v2659 = vadd.f32 0.0, %v2658
      %v2660 = vpop.f32.mrb[0].mxu0
      %2661 = vmatprep.mubr.f32.mxu0 0.0
      %2662 = vmatmul.mubr.f32.gmra.mrb[0].mxu0 %v2572
      %v2663 = vpop.f32.mrb[0].mxu0
      %v2664 = vadd.f32 0.0, %v2663
      %v2665 = vpop.f32.mrb[0].mxu0
      %2666 = vmatprep.mubr.f32.mxu0 0.0
      %2667 = vmatmul.mubr.f32.gmra.mrb[0].mxu0 %v2574
      %v2668 = vpop.f32.mrb[0].mxu0
      %v2669 = vadd.f32 0.0, %v2668
      %v2670 = vpop.f32.mrb[0].mxu0
      %2671 = vmatprep.mubr.f32.mxu0 0.0
      %2672 = vmatmul.mubr.f32.gmra.mrb[0].mxu0 %v2576
      %v2673 = vpop.f32.mrb[0].mxu0
      %v2674 = vadd.f32 0.0, %v2673
      %v2675 = vpop.f32.mrb[0].mxu0
      %2676 = vmatprep.mubr.f32.mxu0 0.0
      %2677 = vmatmul.mubr.f32.gmra.mrb[0].mxu0 %v2578
      %v2678 = vpop.f32.mrb[0].mxu0
      %v2679 = vadd.f32 0.0, %v2678
      %v2680 = vpop.f32.mrb[0].mxu0
      %2681 = vmatprep.mubr.f32.mxu0 0.0
      %2682 = vmatmul.mubr.f32.gmra.mrb[0].mxu0 %v2580
      %v2683 = vpop.f32.mrb[0].mxu0
      %v2684 = vadd.f32 0.0, %v2683
      %v2685 = vpop.f32.mrb[0].mxu0
      %2686 = vdwg.mxu0
      %v2687 = vadd.f32 %v2501, %v2649
      %v2688 = vadd.f32 %v2506, %v2654
      %v2689 = vadd.f32 %v2511, %v2659
      %v2690 = vadd.f32 %v2516, %v2664
      %v2691 = vadd.f32 %v2521, %v2669
      %v2692 = vadd.f32 %v2526, %v2674
      %v2693 = vadd.f32 %v2531, %v2679
      %v2694 = vadd.f32 %v2536, %v2684
      %s2695 = scalar_lea.vmem %s7, 24
      %v2696 = vld [vmem:[%s2695] sm:$0xff]
      %v2698 = vsel %vm2203, %v2250, 0
      %2700 = vmatprep.subr.mxu0 0.0
      %2701 = vmatpush1.msra.mxu0 %v2696
      %2702 = vmatprep.subr.mxu0 0.0
      %2703 = vmatpush1.msra.mxu0 0.0
      %2704 = vmatprep.subr.mxu0 0.0
      %2705 = vmatpush1.msra.mxu0 0.0
      %2706 = vmatprep.subr.mxu0 0.0
      %2707 = vmatpush1.msra.mxu0 0.0
      %2708 = vmatprep.subr.mxu0 0.0
      %2709 = vmatpush1.msra.mxu0 0.0
      %2710 = vmatprep.subr.mxu0 0.0
      %2711 = vmatpush1.msra.mxu0 0.0
      %2712 = vmatprep.subr.mxu0 0.0
      %2713 = vmatpush1.msra.mxu0 0.0
      %2714 = vmatprep.subr.mxu0 0.0
      %2715 = vmatpush1.msra.mxu0 0.0
      %2716 = vmatprep.subr.mxu0 0.0
      %2717 = vmatpush1.msra.mxu0 0.0
      %2718 = vmatprep.subr.mxu0 0.0
      %2719 = vmatpush1.msra.mxu0 0.0
      %2720 = vmatprep.subr.mxu0 0.0
      %2721 = vmatpush1.msra.mxu0 0.0
      %2722 = vmatprep.subr.mxu0 0.0
      %2723 = vmatpush1.msra.mxu0 0.0
      %2724 = vmatprep.subr.mxu0 0.0
      %2725 = vmatpush1.msra.mxu0 0.0
      %2726 = vmatprep.subr.mxu0 0.0
      %2727 = vmatpush1.msra.mxu0 0.0
      %2728 = vmatprep.subr.mxu0 0.0
      %2729 = vmatpush1.msra.mxu0 0.0
      %2730 = vmatprep.subr.mxu0 0.0
      %2731 = vmatpush1.msra.mxu0 0.0
      %2732 = vmatprep.subr.mxu0 0.0
      %2733 = vmatpush1.msra.mxu0 0.0
      %2734 = vmatprep.subr.mxu0 0.0
      %2735 = vmatpush1.msra.mxu0 0.0
      %2736 = vmatprep.subr.mxu0 0.0
      %2737 = vmatpush1.msra.mxu0 0.0
      %2738 = vmatprep.subr.mxu0 0.0
      %2739 = vmatpush1.msra.mxu0 0.0
      %2740 = vmatprep.subr.mxu0 0.0
      %2741 = vmatpush1.msra.mxu0 0.0
      %2742 = vmatprep.subr.mxu0 0.0
      %2743 = vmatpush1.msra.mxu0 0.0
      %2744 = vmatprep.subr.mxu0 0.0
      %2745 = vmatpush1.msra.mxu0 0.0
      %2746 = vmatprep.subr.mxu0 0.0
      %2747 = vmatpush1.msra.mxu0 0.0
      %2748 = vmatprep.subr.mxu0 0.0
      %2749 = vmatpush1.msra.mxu0 0.0
      %2750 = vmatprep.subr.mxu0 0.0
      %2751 = vmatpush1.msra.mxu0 0.0
      %2752 = vmatprep.subr.mxu0 0.0
      %2753 = vmatpush1.msra.mxu0 0.0
      %2754 = vmatprep.subr.mxu0 0.0
      %2755 = vmatpush1.msra.mxu0 0.0
      %2756 = vmatprep.subr.mxu0 0.0
      %2757 = vmatpush1.msra.mxu0 0.0
      %2758 = vmatprep.subr.mxu0 0.0
      %2759 = vmatpush1.msra.mxu0 0.0
      %2760 = vmatprep.subr.mxu0 0.0
      %2761 = vmatpush1.msra.mxu0 0.0
      %2762 = vmatprep.subr.mxu0 0.0
      %2763 = vmatpush1.msra.mxu0 0.0
      %2764 = vmatprep.mubr.f32.mxu0 0.0
      %2765 = vmatmul.mubr.f32.gmra.mrb[0].mxu0 %v2420
      %v2766 = vpop.f32.mrb[0].mxu0
      %v2767 = vadd.f32 0.0, %v2766
      %v2768 = vpop.f32.mrb[0].mxu0
      %2769 = vmatprep.mubr.f32.mxu0 0.0
      %2770 = vmatmul.mubr.f32.gmra.mrb[0].mxu0 %v2422
      %v2771 = vpop.f32.mrb[0].mxu0
      %v2772 = vadd.f32 0.0, %v2771
      %v2773 = vpop.f32.mrb[0].mxu0
      %2774 = vmatprep.mubr.f32.mxu0 0.0
      %2775 = vmatmul.mubr.f32.gmra.mrb[0].mxu0 %v2424
      %v2776 = vpop.f32.mrb[0].mxu0
      %v2777 = vadd.f32 0.0, %v2776
      %v2778 = vpop.f32.mrb[0].mxu0
      %2779 = vmatprep.mubr.f32.mxu0 0.0
      %2780 = vmatmul.mubr.f32.gmra.mrb[0].mxu0 %v2426
      %v2781 = vpop.f32.mrb[0].mxu0
      %v2782 = vadd.f32 0.0, %v2781
      %v2783 = vpop.f32.mrb[0].mxu0
      %2784 = vmatprep.mubr.f32.mxu0 0.0
      %2785 = vmatmul.mubr.f32.gmra.mrb[0].mxu0 %v2428
      %v2786 = vpop.f32.mrb[0].mxu0
      %v2787 = vadd.f32 0.0, %v2786
      %v2788 = vpop.f32.mrb[0].mxu0
      %2789 = vmatprep.mubr.f32.mxu0 0.0
      %2790 = vmatmul.mubr.f32.gmra.mrb[0].mxu0 %v2430
      %v2791 = vpop.f32.mrb[0].mxu0
      %v2792 = vadd.f32 0.0, %v2791
      %v2793 = vpop.f32.mrb[0].mxu0
      %2794 = vmatprep.mubr.f32.mxu0 0.0
      %2795 = vmatmul.mubr.f32.gmra.mrb[0].mxu0 %v2432
      %v2796 = vpop.f32.mrb[0].mxu0
      %v2797 = vadd.f32 0.0, %v2796
      %v2798 = vpop.f32.mrb[0].mxu0
      %2799 = vmatprep.mubr.f32.mxu0 0.0
      %2800 = vmatmul.mubr.f32.gmra.mrb[0].mxu0 %v2698
      %v2801 = vpop.f32.mrb[0].mxu0
      %v2802 = vadd.f32 0.0, %v2801
      %v2803 = vpop.f32.mrb[0].mxu0
      %2804 = vdwg.mxu0
      %v2805 = vadd.f32 %v2687, %v2767
      %v2806 = vadd.f32 %v2688, %v2772
      %v2807 = vadd.f32 %v2689, %v2777
      %v2808 = vadd.f32 %v2690, %v2782
      %v2809 = vadd.f32 %v2691, %v2787
      %v2810 = vadd.f32 %v2692, %v2792
      %v2811 = vadd.f32 %v2693, %v2797
      %v2812 = vadd.f32 %v2694, %v2802
      %v2814 = vrot.slane %v2250, 1
      %v2815 = vrot.slane %v2251, 1
      %v2816 = vsel %vm929, %v2814, %v2815
      %s2817 = scalar_lea.vmem %s7, 32
      %v2818 = vld [vmem:[%s2817] sm:$0xff]
      %v2819 = vsel %vm2203, %v2816, 0
      %2821 = vmatprep.subr.mxu0 0.0
      %2822 = vmatpush1.msra.mxu0 %v2818
      %2823 = vmatprep.subr.mxu0 0.0
      %2824 = vmatpush1.msra.mxu0 0.0
      %2825 = vmatprep.subr.mxu0 0.0
      %2826 = vmatpush1.msra.mxu0 0.0
      %2827 = vmatprep.subr.mxu0 0.0
      %2828 = vmatpush1.msra.mxu0 0.0
      %2829 = vmatprep.subr.mxu0 0.0
      %2830 = vmatpush1.msra.mxu0 0.0
      %2831 = vmatprep.subr.mxu0 0.0
      %2832 = vmatpush1.msra.mxu0 0.0
      %2833 = vmatprep.subr.mxu0 0.0
      %2834 = vmatpush1.msra.mxu0 0.0
      %2835 = vmatprep.subr.mxu0 0.0
      %2836 = vmatpush1.msra.mxu0 0.0
      %2837 = vmatprep.subr.mxu0 0.0
      %2838 = vmatpush1.msra.mxu0 0.0
      %2839 = vmatprep.subr.mxu0 0.0
      %2840 = vmatpush1.msra.mxu0 0.0
      %2841 = vmatprep.subr.mxu0 0.0
      %2842 = vmatpush1.msra.mxu0 0.0
      %2843 = vmatprep.subr.mxu0 0.0
      %2844 = vmatpush1.msra.mxu0 0.0
      %2845 = vmatprep.subr.mxu0 0.0
      %2846 = vmatpush1.msra.mxu0 0.0
      %2847 = vmatprep.subr.mxu0 0.0
      %2848 = vmatpush1.msra.mxu0 0.0
      %2849 = vmatprep.subr.mxu0 0.0
      %2850 = vmatpush1.msra.mxu0 0.0
      %2851 = vmatprep.subr.mxu0 0.0
      %2852 = vmatpush1.msra.mxu0 0.0
      %2853 = vmatprep.subr.mxu0 0.0
      %2854 = vmatpush1.msra.mxu0 0.0
      %2855 = vmatprep.subr.mxu0 0.0
      %2856 = vmatpush1.msra.mxu0 0.0
      %2857 = vmatprep.subr.mxu0 0.0
      %2858 = vmatpush1.msra.mxu0 0.0
      %2859 = vmatprep.subr.mxu0 0.0
      %2860 = vmatpush1.msra.mxu0 0.0
      %2861 = vmatprep.subr.mxu0 0.0
      %2862 = vmatpush1.msra.mxu0 0.0
      %2863 = vmatprep.subr.mxu0 0.0
      %2864 = vmatpush1.msra.mxu0 0.0
      %2865 = vmatprep.subr.mxu0 0.0
      %2866 = vmatpush1.msra.mxu0 0.0
      %2867 = vmatprep.subr.mxu0 0.0
      %2868 = vmatpush1.msra.mxu0 0.0
      %2869 = vmatprep.subr.mxu0 0.0
      %2870 = vmatpush1.msra.mxu0 0.0
      %2871 = vmatprep.subr.mxu0 0.0
      %2872 = vmatpush1.msra.mxu0 0.0
      %2873 = vmatprep.subr.mxu0 0.0
      %2874 = vmatpush1.msra.mxu0 0.0
      %2875 = vmatprep.subr.mxu0 0.0
      %2876 = vmatpush1.msra.mxu0 0.0
      %2877 = vmatprep.subr.mxu0 0.0
      %2878 = vmatpush1.msra.mxu0 0.0
      %2879 = vmatprep.subr.mxu0 0.0
      %2880 = vmatpush1.msra.mxu0 0.0
      %2881 = vmatprep.subr.mxu0 0.0
      %2882 = vmatpush1.msra.mxu0 0.0
      %2883 = vmatprep.subr.mxu0 0.0
      %2884 = vmatpush1.msra.mxu0 0.0
      %2885 = vmatprep.mubr.f32.mxu0 0.0
      %2886 = vmatmul.mubr.f32.gmra.mrb[0].mxu0 %v2299
      %v2887 = vpop.f32.mrb[0].mxu0
      %v2888 = vadd.f32 0.0, %v2887
      %v2889 = vpop.f32.mrb[0].mxu0
      %2890 = vmatprep.mubr.f32.mxu0 0.0
      %2891 = vmatmul.mubr.f32.gmra.mrb[0].mxu0 %v2301
      %v2892 = vpop.f32.mrb[0].mxu0
      %v2893 = vadd.f32 0.0, %v2892
      %v2894 = vpop.f32.mrb[0].mxu0
      %2895 = vmatprep.mubr.f32.mxu0 0.0
      %2896 = vmatmul.mubr.f32.gmra.mrb[0].mxu0 %v2303
      %v2897 = vpop.f32.mrb[0].mxu0
      %v2898 = vadd.f32 0.0, %v2897
      %v2899 = vpop.f32.mrb[0].mxu0
      %2900 = vmatprep.mubr.f32.mxu0 0.0
      %2901 = vmatmul.mubr.f32.gmra.mrb[0].mxu0 %v2305
      %v2902 = vpop.f32.mrb[0].mxu0
      %v2903 = vadd.f32 0.0, %v2902
      %v2904 = vpop.f32.mrb[0].mxu0
      %2905 = vmatprep.mubr.f32.mxu0 0.0
      %2906 = vmatmul.mubr.f32.gmra.mrb[0].mxu0 %v2307
      %v2907 = vpop.f32.mrb[0].mxu0
      %v2908 = vadd.f32 0.0, %v2907
      %v2909 = vpop.f32.mrb[0].mxu0
      %2910 = vmatprep.mubr.f32.mxu0 0.0
      %2911 = vmatmul.mubr.f32.gmra.mrb[0].mxu0 %v2309
      %v2912 = vpop.f32.mrb[0].mxu0
      %v2913 = vadd.f32 0.0, %v2912
      %v2914 = vpop.f32.mrb[0].mxu0
      %2915 = vmatprep.mubr.f32.mxu0 0.0
      %2916 = vmatmul.mubr.f32.gmra.mrb[0].mxu0 %v2311
      %v2917 = vpop.f32.mrb[0].mxu0
      %v2918 = vadd.f32 0.0, %v2917
      %v2919 = vpop.f32.mrb[0].mxu0
      %2920 = vmatprep.mubr.f32.mxu0 0.0
      %2921 = vmatmul.mubr.f32.gmra.mrb[0].mxu0 %v2819
      %v2922 = vpop.f32.mrb[0].mxu0
      %v2923 = vadd.f32 0.0, %v2922
      %v2924 = vpop.f32.mrb[0].mxu0
      %2925 = vdwg.mxu0
      %v2926 = vadd.f32 %v2805, %v2888
      %v2927 = vadd.f32 %v2806, %v2893
      %v2928 = vadd.f32 %v2807, %v2898
      %v2929 = vadd.f32 %v2808, %v2903
      %v2930 = vadd.f32 %v2809, %v2908
      %v2931 = vadd.f32 %v2810, %v2913
      %v2932 = vadd.f32 %v2811, %v2918
      %v2933 = vadd.f32 %v2812, %v2923
      %v2934 = vrot.slane %v2250, 2
      %v2935 = vrot.slane %v2251, 2
      %v2936 = vsel %vm2539, %v2934, %v2935
      %s2937 = scalar_lea.vmem %s7, 40
      %v2938 = vld [vmem:[%s2937] sm:$0xff]
      %v2939 = vsel %vm2203, %v2936, 0
      %2941 = vmatprep.subr.mxu0 0.0
      %2942 = vmatpush1.msra.mxu0 %v2938
      %2943 = vmatprep.subr.mxu0 0.0
      %2944 = vmatpush1.msra.mxu0 0.0
      %2945 = vmatprep.subr.mxu0 0.0
      %2946 = vmatpush1.msra.mxu0 0.0
      %2947 = vmatprep.subr.mxu0 0.0
      %2948 = vmatpush1.msra.mxu0 0.0
      %2949 = vmatprep.subr.mxu0 0.0
      %2950 = vmatpush1.msra.mxu0 0.0
      %2951 = vmatprep.subr.mxu0 0.0
      %2952 = vmatpush1.msra.mxu0 0.0
      %2953 = vmatprep.subr.mxu0 0.0
      %2954 = vmatpush1.msra.mxu0 0.0
      %2955 = vmatprep.subr.mxu0 0.0
      %2956 = vmatpush1.msra.mxu0 0.0
      %2957 = vmatprep.subr.mxu0 0.0
      %2958 = vmatpush1.msra.mxu0 0.0
      %2959 = vmatprep.subr.mxu0 0.0
      %2960 = vmatpush1.msra.mxu0 0.0
      %2961 = vmatprep.subr.mxu0 0.0
      %2962 = vmatpush1.msra.mxu0 0.0
      %2963 = vmatprep.subr.mxu0 0.0
      %2964 = vmatpush1.msra.mxu0 0.0
      %2965 = vmatprep.subr.mxu0 0.0
      %2966 = vmatpush1.msra.mxu0 0.0
      %2967 = vmatprep.subr.mxu0 0.0
      %2968 = vmatpush1.msra.mxu0 0.0
      %2969 = vmatprep.subr.mxu0 0.0
      %2970 = vmatpush1.msra.mxu0 0.0
      %2971 = vmatprep.subr.mxu0 0.0
      %2972 = vmatpush1.msra.mxu0 0.0
      %2973 = vmatprep.subr.mxu0 0.0
      %2974 = vmatpush1.msra.mxu0 0.0
      %2975 = vmatprep.subr.mxu0 0.0
      %2976 = vmatpush1.msra.mxu0 0.0
      %2977 = vmatprep.subr.mxu0 0.0
      %2978 = vmatpush1.msra.mxu0 0.0
      %2979 = vmatprep.subr.mxu0 0.0
      %2980 = vmatpush1.msra.mxu0 0.0
      %2981 = vmatprep.subr.mxu0 0.0
      %2982 = vmatpush1.msra.mxu0 0.0
      %2983 = vmatprep.subr.mxu0 0.0
      %2984 = vmatpush1.msra.mxu0 0.0
      %2985 = vmatprep.subr.mxu0 0.0
      %2986 = vmatpush1.msra.mxu0 0.0
      %2987 = vmatprep.subr.mxu0 0.0
      %2988 = vmatpush1.msra.mxu0 0.0
      %2989 = vmatprep.subr.mxu0 0.0
      %2990 = vmatpush1.msra.mxu0 0.0
      %2991 = vmatprep.subr.mxu0 0.0
      %2992 = vmatpush1.msra.mxu0 0.0
      %2993 = vmatprep.subr.mxu0 0.0
      %2994 = vmatpush1.msra.mxu0 0.0
      %2995 = vmatprep.subr.mxu0 0.0
      %2996 = vmatpush1.msra.mxu0 0.0
      %2997 = vmatprep.subr.mxu0 0.0
      %2998 = vmatpush1.msra.mxu0 0.0
      %2999 = vmatprep.subr.mxu0 0.0
      %3000 = vmatpush1.msra.mxu0 0.0
      %3001 = vmatprep.subr.mxu0 0.0
      %3002 = vmatpush1.msra.mxu0 0.0
      %3003 = vmatprep.subr.mxu0 0.0
      %3004 = vmatpush1.msra.mxu0 0.0
      %3005 = vmatprep.mubr.f32.mxu0 0.0
      %3006 = vmatmul.mubr.f32.gmra.mrb[0].mxu0 %v2568
      %v3007 = vpop.f32.mrb[0].mxu0
      %v3008 = vadd.f32 0.0, %v3007
      %v3009 = vpop.f32.mrb[0].mxu0
      %3010 = vmatprep.mubr.f32.mxu0 0.0
      %3011 = vmatmul.mubr.f32.gmra.mrb[0].mxu0 %v2570
      %v3012 = vpop.f32.mrb[0].mxu0
      %v3013 = vadd.f32 0.0, %v3012
      %v3014 = vpop.f32.mrb[0].mxu0
      %3015 = vmatprep.mubr.f32.mxu0 0.0
      %3016 = vmatmul.mubr.f32.gmra.mrb[0].mxu0 %v2572
      %v3017 = vpop.f32.mrb[0].mxu0
      %v3018 = vadd.f32 0.0, %v3017
      %v3019 = vpop.f32.mrb[0].mxu0
      %3020 = vmatprep.mubr.f32.mxu0 0.0
      %3021 = vmatmul.mubr.f32.gmra.mrb[0].mxu0 %v2574
      %v3022 = vpop.f32.mrb[0].mxu0
      %v3023 = vadd.f32 0.0, %v3022
      %v3024 = vpop.f32.mrb[0].mxu0
      %3025 = vmatprep.mubr.f32.mxu0 0.0
      %3026 = vmatmul.mubr.f32.gmra.mrb[0].mxu0 %v2576
      %v3027 = vpop.f32.mrb[0].mxu0
      %v3028 = vadd.f32 0.0, %v3027
      %v3029 = vpop.f32.mrb[0].mxu0
      %3030 = vmatprep.mubr.f32.mxu0 0.0
      %3031 = vmatmul.mubr.f32.gmra.mrb[0].mxu0 %v2578
      %v3032 = vpop.f32.mrb[0].mxu0
      %v3033 = vadd.f32 0.0, %v3032
      %v3034 = vpop.f32.mrb[0].mxu0
      %3035 = vmatprep.mubr.f32.mxu0 0.0
      %3036 = vmatmul.mubr.f32.gmra.mrb[0].mxu0 %v2580
      %v3037 = vpop.f32.mrb[0].mxu0
      %v3038 = vadd.f32 0.0, %v3037
      %v3039 = vpop.f32.mrb[0].mxu0
      %3040 = vmatprep.mubr.f32.mxu0 0.0
      %3041 = vmatmul.mubr.f32.gmra.mrb[0].mxu0 %v2939
      %v3042 = vpop.f32.mrb[0].mxu0
      %v3043 = vadd.f32 0.0, %v3042
      %v3044 = vpop.f32.mrb[0].mxu0
      %3045 = vdwg.mxu0
      %v3046 = vadd.f32 %v2926, %v3008
      %v3047 = vadd.f32 %v2927, %v3013
      %v3048 = vadd.f32 %v2928, %v3018
      %v3049 = vadd.f32 %v2929, %v3023
      %v3050 = vadd.f32 %v2930, %v3028
      %v3051 = vadd.f32 %v2931, %v3033
      %v3052 = vadd.f32 %v2932, %v3038
      %v3053 = vadd.f32 %v2933, %v3043
      %s3054 = scalar_lea.vmem %s7, 48
      %v3055 = vld [vmem:[%s3054] sm:$0xff]
      %v3057 = vsel %vm2203, %v2252, 0
      %3059 = vmatprep.subr.mxu0 0.0
      %3060 = vmatpush1.msra.mxu0 %v3055
      %3061 = vmatprep.subr.mxu0 0.0
      %3062 = vmatpush1.msra.mxu0 0.0
      %3063 = vmatprep.subr.mxu0 0.0
      %3064 = vmatpush1.msra.mxu0 0.0
      %3065 = vmatprep.subr.mxu0 0.0
      %3066 = vmatpush1.msra.mxu0 0.0
      %3067 = vmatprep.subr.mxu0 0.0
      %3068 = vmatpush1.msra.mxu0 0.0
      %3069 = vmatprep.subr.mxu0 0.0
      %3070 = vmatpush1.msra.mxu0 0.0
      %3071 = vmatprep.subr.mxu0 0.0
      %3072 = vmatpush1.msra.mxu0 0.0
      %3073 = vmatprep.subr.mxu0 0.0
      %3074 = vmatpush1.msra.mxu0 0.0
      %3075 = vmatprep.subr.mxu0 0.0
      %3076 = vmatpush1.msra.mxu0 0.0
      %3077 = vmatprep.subr.mxu0 0.0
      %3078 = vmatpush1.msra.mxu0 0.0
      %3079 = vmatprep.subr.mxu0 0.0
      %3080 = vmatpush1.msra.mxu0 0.0
      %3081 = vmatprep.subr.mxu0 0.0
      %3082 = vmatpush1.msra.mxu0 0.0
      %3083 = vmatprep.subr.mxu0 0.0
      %3084 = vmatpush1.msra.mxu0 0.0
      %3085 = vmatprep.subr.mxu0 0.0
      %3086 = vmatpush1.msra.mxu0 0.0
      %3087 = vmatprep.subr.mxu0 0.0
      %3088 = vmatpush1.msra.mxu0 0.0
      %3089 = vmatprep.subr.mxu0 0.0
      %3090 = vmatpush1.msra.mxu0 0.0
      %3091 = vmatprep.subr.mxu0 0.0
      %3092 = vmatpush1.msra.mxu0 0.0
      %3093 = vmatprep.subr.mxu0 0.0
      %3094 = vmatpush1.msra.mxu0 0.0
      %3095 = vmatprep.subr.mxu0 0.0
      %3096 = vmatpush1.msra.mxu0 0.0
      %3097 = vmatprep.subr.mxu0 0.0
      %3098 = vmatpush1.msra.mxu0 0.0
      %3099 = vmatprep.subr.mxu0 0.0
      %3100 = vmatpush1.msra.mxu0 0.0
      %3101 = vmatprep.subr.mxu0 0.0
      %3102 = vmatpush1.msra.mxu0 0.0
      %3103 = vmatprep.subr.mxu0 0.0
      %3104 = vmatpush1.msra.mxu0 0.0
      %3105 = vmatprep.subr.mxu0 0.0
      %3106 = vmatpush1.msra.mxu0 0.0
      %3107 = vmatprep.subr.mxu0 0.0
      %3108 = vmatpush1.msra.mxu0 0.0
      %3109 = vmatprep.subr.mxu0 0.0
      %3110 = vmatpush1.msra.mxu0 0.0
      %3111 = vmatprep.subr.mxu0 0.0
      %3112 = vmatpush1.msra.mxu0 0.0
      %3113 = vmatprep.subr.mxu0 0.0
      %3114 = vmatpush1.msra.mxu0 0.0
      %3115 = vmatprep.subr.mxu0 0.0
      %3116 = vmatpush1.msra.mxu0 0.0
      %3117 = vmatprep.subr.mxu0 0.0
      %3118 = vmatpush1.msra.mxu0 0.0
      %3119 = vmatprep.subr.mxu0 0.0
      %3120 = vmatpush1.msra.mxu0 0.0
      %3121 = vmatprep.subr.mxu0 0.0
      %3122 = vmatpush1.msra.mxu0 0.0
      %3123 = vmatprep.mubr.f32.mxu0 0.0
      %3124 = vmatmul.mubr.f32.gmra.mrb[0].mxu0 %v2422
      %v3125 = vpop.f32.mrb[0].mxu0
      %v3126 = vadd.f32 0.0, %v3125
      %v3127 = vpop.f32.mrb[0].mxu0
      %3128 = vmatprep.mubr.f32.mxu0 0.0
      %3129 = vmatmul.mubr.f32.gmra.mrb[0].mxu0 %v2424
      %v3130 = vpop.f32.mrb[0].mxu0
      %v3131 = vadd.f32 0.0, %v3130
      %v3132 = vpop.f32.mrb[0].mxu0
      %3133 = vmatprep.mubr.f32.mxu0 0.0
      %3134 = vmatmul.mubr.f32.gmra.mrb[0].mxu0 %v2426
      %v3135 = vpop.f32.mrb[0].mxu0
      %v3136 = vadd.f32 0.0, %v3135
      %v3137 = vpop.f32.mrb[0].mxu0
      %3138 = vmatprep.mubr.f32.mxu0 0.0
      %3139 = vmatmul.mubr.f32.gmra.mrb[0].mxu0 %v2428
      %v3140 = vpop.f32.mrb[0].mxu0
      %v3141 = vadd.f32 0.0, %v3140
      %v3142 = vpop.f32.mrb[0].mxu0
      %3143 = vmatprep.mubr.f32.mxu0 0.0
      %3144 = vmatmul.mubr.f32.gmra.mrb[0].mxu0 %v2430
      %v3145 = vpop.f32.mrb[0].mxu0
      %v3146 = vadd.f32 0.0, %v3145
      %v3147 = vpop.f32.mrb[0].mxu0
      %3148 = vmatprep.mubr.f32.mxu0 0.0
      %3149 = vmatmul.mubr.f32.gmra.mrb[0].mxu0 %v2432
      %v3150 = vpop.f32.mrb[0].mxu0
      %v3151 = vadd.f32 0.0, %v3150
      %v3152 = vpop.f32.mrb[0].mxu0
      %3153 = vmatprep.mubr.f32.mxu0 0.0
      %3154 = vmatmul.mubr.f32.gmra.mrb[0].mxu0 %v2698
      %v3155 = vpop.f32.mrb[0].mxu0
      %v3156 = vadd.f32 0.0, %v3155
      %v3157 = vpop.f32.mrb[0].mxu0
      %3158 = vmatprep.mubr.f32.mxu0 0.0
      %3159 = vmatmul.mubr.f32.gmra.mrb[0].mxu0 %v3057
      %v3160 = vpop.f32.mrb[0].mxu0
      %v3161 = vadd.f32 0.0, %v3160
      %v3162 = vpop.f32.mrb[0].mxu0
      %3163 = vdwg.mxu0
      %v3164 = vadd.f32 %v3046, %v3126
      %v3165 = vadd.f32 %v3047, %v3131
      %v3166 = vadd.f32 %v3048, %v3136
      %v3167 = vadd.f32 %v3049, %v3141
      %v3168 = vadd.f32 %v3050, %v3146
      %v3169 = vadd.f32 %v3051, %v3151
      %v3170 = vadd.f32 %v3052, %v3156
      %v3171 = vadd.f32 %v3053, %v3161
      %v3173 = vrot.slane %v2252, 1
      %v3174 = vrot.slane %v2253, 1
      %v3175 = vsel %vm929, %v3173, %v3174
      %s3176 = scalar_lea.vmem %s7, 56
      %v3177 = vld [vmem:[%s3176] sm:$0xff]
      %v3178 = vsel %vm2203, %v3175, 0
      %3180 = vmatprep.subr.mxu0 0.0
      %3181 = vmatpush1.msra.mxu0 %v3177
      %3182 = vmatprep.subr.mxu0 0.0
      %3183 = vmatpush1.msra.mxu0 0.0
      %3184 = vmatprep.subr.mxu0 0.0
      %3185 = vmatpush1.msra.mxu0 0.0
      %3186 = vmatprep.subr.mxu0 0.0
      %3187 = vmatpush1.msra.mxu0 0.0
      %3188 = vmatprep.subr.mxu0 0.0
      %3189 = vmatpush1.msra.mxu0 0.0
      %3190 = vmatprep.subr.mxu0 0.0
      %3191 = vmatpush1.msra.mxu0 0.0
      %3192 = vmatprep.subr.mxu0 0.0
      %3193 = vmatpush1.msra.mxu0 0.0
      %3194 = vmatprep.subr.mxu0 0.0
      %3195 = vmatpush1.msra.mxu0 0.0
      %3196 = vmatprep.subr.mxu0 0.0
      %3197 = vmatpush1.msra.mxu0 0.0
      %3198 = vmatprep.subr.mxu0 0.0
      %3199 = vmatpush1.msra.mxu0 0.0
      %3200 = vmatprep.subr.mxu0 0.0
      %3201 = vmatpush1.msra.mxu0 0.0
      %3202 = vmatprep.subr.mxu0 0.0
      %3203 = vmatpush1.msra.mxu0 0.0
      %3204 = vmatprep.subr.mxu0 0.0
      %3205 = vmatpush1.msra.mxu0 0.0
      %3206 = vmatprep.subr.mxu0 0.0
      %3207 = vmatpush1.msra.mxu0 0.0
      %3208 = vmatprep.subr.mxu0 0.0
      %3209 = vmatpush1.msra.mxu0 0.0
      %3210 = vmatprep.subr.mxu0 0.0
      %3211 = vmatpush1.msra.mxu0 0.0
      %3212 = vmatprep.subr.mxu0 0.0
      %3213 = vmatpush1.msra.mxu0 0.0
      %3214 = vmatprep.subr.mxu0 0.0
      %3215 = vmatpush1.msra.mxu0 0.0
      %3216 = vmatprep.subr.mxu0 0.0
      %3217 = vmatpush1.msra.mxu0 0.0
      %3218 = vmatprep.subr.mxu0 0.0
      %3219 = vmatpush1.msra.mxu0 0.0
      %3220 = vmatprep.subr.mxu0 0.0
      %3221 = vmatpush1.msra.mxu0 0.0
      %3222 = vmatprep.subr.mxu0 0.0
      %3223 = vmatpush1.msra.mxu0 0.0
      %3224 = vmatprep.subr.mxu0 0.0
      %3225 = vmatpush1.msra.mxu0 0.0
      %3226 = vmatprep.subr.mxu0 0.0
      %3227 = vmatpush1.msra.mxu0 0.0
      %3228 = vmatprep.subr.mxu0 0.0
      %3229 = vmatpush1.msra.mxu0 0.0
      %3230 = vmatprep.subr.mxu0 0.0
      %3231 = vmatpush1.msra.mxu0 0.0
      %3232 = vmatprep.subr.mxu0 0.0
      %3233 = vmatpush1.msra.mxu0 0.0
      %3234 = vmatprep.subr.mxu0 0.0
      %3235 = vmatpush1.msra.mxu0 0.0
      %3236 = vmatprep.subr.mxu0 0.0
      %3237 = vmatpush1.msra.mxu0 0.0
      %3238 = vmatprep.subr.mxu0 0.0
      %3239 = vmatpush1.msra.mxu0 0.0
      %3240 = vmatprep.subr.mxu0 0.0
      %3241 = vmatpush1.msra.mxu0 0.0
      %3242 = vmatprep.subr.mxu0 0.0
      %3243 = vmatpush1.msra.mxu0 0.0
      %3244 = vmatprep.mubr.f32.mxu0 0.0
      %3245 = vmatmul.mubr.f32.gmra.mrb[0].mxu0 %v2301
      %v3246 = vpop.f32.mrb[0].mxu0
      %v3247 = vadd.f32 0.0, %v3246
      %v3248 = vpop.f32.mrb[0].mxu0
      %3249 = vmatprep.mubr.f32.mxu0 0.0
      %3250 = vmatmul.mubr.f32.gmra.mrb[0].mxu0 %v2303
      %v3251 = vpop.f32.mrb[0].mxu0
      %v3252 = vadd.f32 0.0, %v3251
      %v3253 = vpop.f32.mrb[0].mxu0
      %3254 = vmatprep.mubr.f32.mxu0 0.0
      %3255 = vmatmul.mubr.f32.gmra.mrb[0].mxu0 %v2305
      %v3256 = vpop.f32.mrb[0].mxu0
      %v3257 = vadd.f32 0.0, %v3256
      %v3258 = vpop.f32.mrb[0].mxu0
      %3259 = vmatprep.mubr.f32.mxu0 0.0
      %3260 = vmatmul.mubr.f32.gmra.mrb[0].mxu0 %v2307
      %v3261 = vpop.f32.mrb[0].mxu0
      %v3262 = vadd.f32 0.0, %v3261
      %v3263 = vpop.f32.mrb[0].mxu0
      %3264 = vmatprep.mubr.f32.mxu0 0.0
      %3265 = vmatmul.mubr.f32.gmra.mrb[0].mxu0 %v2309
      %v3266 = vpop.f32.mrb[0].mxu0
      %v3267 = vadd.f32 0.0, %v3266
      %v3268 = vpop.f32.mrb[0].mxu0
      %3269 = vmatprep.mubr.f32.mxu0 0.0
      %3270 = vmatmul.mubr.f32.gmra.mrb[0].mxu0 %v2311
      %v3271 = vpop.f32.mrb[0].mxu0
      %v3272 = vadd.f32 0.0, %v3271
      %v3273 = vpop.f32.mrb[0].mxu0
      %3274 = vmatprep.mubr.f32.mxu0 0.0
      %3275 = vmatmul.mubr.f32.gmra.mrb[0].mxu0 %v2819
      %v3276 = vpop.f32.mrb[0].mxu0
      %v3277 = vadd.f32 0.0, %v3276
      %v3278 = vpop.f32.mrb[0].mxu0
      %3279 = vmatprep.mubr.f32.mxu0 0.0
      %3280 = vmatmul.mubr.f32.gmra.mrb[0].mxu0 %v3178
      %v3281 = vpop.f32.mrb[0].mxu0
      %v3282 = vadd.f32 0.0, %v3281
      %v3283 = vpop.f32.mrb[0].mxu0
      %3284 = vdwg.mxu0
      %v3285 = vadd.f32 %v3164, %v3247
      %v3286 = vadd.f32 %v3165, %v3252
      %v3287 = vadd.f32 %v3166, %v3257
      %v3288 = vadd.f32 %v3167, %v3262
      %v3289 = vadd.f32 %v3168, %v3267
      %v3290 = vadd.f32 %v3169, %v3272
      %v3291 = vadd.f32 %v3170, %v3277
      %v3292 = vadd.f32 %v3171, %v3282
      %v3293 = vrot.slane %v2252, 2
      %v3294 = vrot.slane %v2253, 2
      %v3295 = vsel %vm2539, %v3293, %v3294
      %s3296 = scalar_lea.vmem %s7, 64
      %v3297 = vld [vmem:[%s3296] sm:$0xff]
      %v3298 = vsel %vm2203, %v3295, 0
      %3300 = vmatprep.subr.mxu0 0.0
      %3301 = vmatpush1.msra.mxu0 %v3297
      %3302 = vmatprep.subr.mxu0 0.0
      %3303 = vmatpush1.msra.mxu0 0.0
      %3304 = vmatprep.subr.mxu0 0.0
      %3305 = vmatpush1.msra.mxu0 0.0
      %3306 = vmatprep.subr.mxu0 0.0
      %3307 = vmatpush1.msra.mxu0 0.0
      %3308 = vmatprep.subr.mxu0 0.0
      %3309 = vmatpush1.msra.mxu0 0.0
      %3310 = vmatprep.subr.mxu0 0.0
      %3311 = vmatpush1.msra.mxu0 0.0
      %3312 = vmatprep.subr.mxu0 0.0
      %3313 = vmatpush1.msra.mxu0 0.0
      %3314 = vmatprep.subr.mxu0 0.0
      %3315 = vmatpush1.msra.mxu0 0.0
      %3316 = vmatprep.subr.mxu0 0.0
      %3317 = vmatpush1.msra.mxu0 0.0
      %3318 = vmatprep.subr.mxu0 0.0
      %3319 = vmatpush1.msra.mxu0 0.0
      %3320 = vmatprep.subr.mxu0 0.0
      %3321 = vmatpush1.msra.mxu0 0.0
      %3322 = vmatprep.subr.mxu0 0.0
      %3323 = vmatpush1.msra.mxu0 0.0
      %3324 = vmatprep.subr.mxu0 0.0
      %3325 = vmatpush1.msra.mxu0 0.0
      %3326 = vmatprep.subr.mxu0 0.0
      %3327 = vmatpush1.msra.mxu0 0.0
      %3328 = vmatprep.subr.mxu0 0.0
      %3329 = vmatpush1.msra.mxu0 0.0
      %3330 = vmatprep.subr.mxu0 0.0
      %3331 = vmatpush1.msra.mxu0 0.0
      %3332 = vmatprep.subr.mxu0 0.0
      %3333 = vmatpush1.msra.mxu0 0.0
      %3334 = vmatprep.subr.mxu0 0.0
      %3335 = vmatpush1.msra.mxu0 0.0
      %3336 = vmatprep.subr.mxu0 0.0
      %3337 = vmatpush1.msra.mxu0 0.0
      %3338 = vmatprep.subr.mxu0 0.0
      %3339 = vmatpush1.msra.mxu0 0.0
      %3340 = vmatprep.subr.mxu0 0.0
      %3341 = vmatpush1.msra.mxu0 0.0
      %3342 = vmatprep.subr.mxu0 0.0
      %3343 = vmatpush1.msra.mxu0 0.0
      %3344 = vmatprep.subr.mxu0 0.0
      %3345 = vmatpush1.msra.mxu0 0.0
      %3346 = vmatprep.subr.mxu0 0.0
      %3347 = vmatpush1.msra.mxu0 0.0
      %3348 = vmatprep.subr.mxu0 0.0
      %3349 = vmatpush1.msra.mxu0 0.0
      %3350 = vmatprep.subr.mxu0 0.0
      %3351 = vmatpush1.msra.mxu0 0.0
      %3352 = vmatprep.subr.mxu0 0.0
      %3353 = vmatpush1.msra.mxu0 0.0
      %3354 = vmatprep.subr.mxu0 0.0
      %3355 = vmatpush1.msra.mxu0 0.0
      %3356 = vmatprep.subr.mxu0 0.0
      %3357 = vmatpush1.msra.mxu0 0.0
      %3358 = vmatprep.subr.mxu0 0.0
      %3359 = vmatpush1.msra.mxu0 0.0
      %3360 = vmatprep.subr.mxu0 0.0
      %3361 = vmatpush1.msra.mxu0 0.0
      %3362 = vmatprep.subr.mxu0 0.0
      %3363 = vmatpush1.msra.mxu0 0.0
      %3364 = vmatprep.mubr.f32.mxu0 0.0
      %3365 = vmatmul.mubr.f32.gmra.mrb[0].mxu0 %v2570
      %v3366 = vpop.f32.mrb[0].mxu0
      %v3367 = vadd.f32 0.0, %v3366
      %v3368 = vpop.f32.mrb[0].mxu0
      %3369 = vmatprep.mubr.f32.mxu0 0.0
      %3370 = vmatmul.mubr.f32.gmra.mrb[0].mxu0 %v2572
      %v3371 = vpop.f32.mrb[0].mxu0
      %v3372 = vadd.f32 0.0, %v3371
      %v3373 = vpop.f32.mrb[0].mxu0
      %3374 = vmatprep.mubr.f32.mxu0 0.0
      %3375 = vmatmul.mubr.f32.gmra.mrb[0].mxu0 %v2574
      %v3376 = vpop.f32.mrb[0].mxu0
      %v3377 = vadd.f32 0.0, %v3376
      %v3378 = vpop.f32.mrb[0].mxu0
      %3379 = vmatprep.mubr.f32.mxu0 0.0
      %3380 = vmatmul.mubr.f32.gmra.mrb[0].mxu0 %v2576
      %v3381 = vpop.f32.mrb[0].mxu0
      %v3382 = vadd.f32 0.0, %v3381
      %v3383 = vpop.f32.mrb[0].mxu0
      %3384 = vmatprep.mubr.f32.mxu0 0.0
      %3385 = vmatmul.mubr.f32.gmra.mrb[0].mxu0 %v2578
      %v3386 = vpop.f32.mrb[0].mxu0
      %v3387 = vadd.f32 0.0, %v3386
      %v3388 = vpop.f32.mrb[0].mxu0
      %3389 = vmatprep.mubr.f32.mxu0 0.0
      %3390 = vmatmul.mubr.f32.gmra.mrb[0].mxu0 %v2580
      %v3391 = vpop.f32.mrb[0].mxu0
      %v3392 = vadd.f32 0.0, %v3391
      %v3393 = vpop.f32.mrb[0].mxu0
      %3394 = vmatprep.mubr.f32.mxu0 0.0
      %3395 = vmatmul.mubr.f32.gmra.mrb[0].mxu0 %v2939
      %v3396 = vpop.f32.mrb[0].mxu0
      %v3397 = vadd.f32 0.0, %v3396
      %v3398 = vpop.f32.mrb[0].mxu0
      %3399 = vmatprep.mubr.f32.mxu0 0.0
      %3400 = vmatmul.mubr.f32.gmra.mrb[0].mxu0 %v3298
      %v3401 = vpop.f32.mrb[0].mxu0
      %v3402 = vadd.f32 0.0, %v3401
      %v3403 = vpop.f32.mrb[0].mxu0
      %3404 = vdwg.mxu0
      %v3405 = vadd.f32 %v3285, %v3367
      %v3406 = vadd.f32 %v3286, %v3372
      %v3407 = vadd.f32 %v3287, %v3377
      %v3408 = vadd.f32 %v3288, %v3382
      %v3409 = vadd.f32 %v3289, %v3387
      %v3410 = vadd.f32 %v3290, %v3392
      %v3411 = vadd.f32 %v3291, %v3397
      %v3412 = vadd.f32 %v3292, %v3402
      %v3413 = vld [vmem:[%s8] sm:$0xf]
      %v3415 = vsel %vm1027, %v3413, 0
      %3417 = vmatprep.subr.mxu0 0.0
      %3418 = vmatpush1.msra.mxu0 %v3415
      %3419 = vmatprep.subr.mxu0 0.0
      %3420 = vmatpush1.msra.mxu0 0.0
      %3421 = vmatprep.subr.mxu0 0.0
      %3422 = vmatpush1.msra.mxu0 0.0
      %3423 = vmatprep.subr.mxu0 0.0
      %3424 = vmatpush1.msra.mxu0 0.0
      %3425 = vmatprep.subr.mxu0 0.0
      %3426 = vmatpush1.msra.mxu0 0.0
      %3427 = vmatprep.subr.mxu0 0.0
      %3428 = vmatpush1.msra.mxu0 0.0
      %3429 = vmatprep.subr.mxu0 0.0
      %3430 = vmatpush1.msra.mxu0 0.0
      %3431 = vmatprep.subr.mxu0 0.0
      %3432 = vmatpush1.msra.mxu0 0.0
      %3433 = vmatprep.subr.mxu0 0.0
      %3434 = vmatpush1.msra.mxu0 0.0
      %3435 = vmatprep.subr.mxu0 0.0
      %3436 = vmatpush1.msra.mxu0 0.0
      %3437 = vmatprep.subr.mxu0 0.0
      %3438 = vmatpush1.msra.mxu0 0.0
      %3439 = vmatprep.subr.mxu0 0.0
      %3440 = vmatpush1.msra.mxu0 0.0
      %3441 = vmatprep.subr.mxu0 0.0
      %3442 = vmatpush1.msra.mxu0 0.0
      %3443 = vmatprep.subr.mxu0 0.0
      %3444 = vmatpush1.msra.mxu0 0.0
      %3445 = vmatprep.subr.mxu0 0.0
      %3446 = vmatpush1.msra.mxu0 0.0
      %3447 = vmatprep.subr.mxu0 0.0
      %3448 = vmatpush1.msra.mxu0 0.0
      %3449 = vmatprep.subr.mxu0 0.0
      %3450 = vmatpush1.msra.mxu0 0.0
      %3451 = vmatprep.subr.mxu0 0.0
      %3452 = vmatpush1.msra.mxu0 0.0
      %3453 = vmatprep.subr.mxu0 0.0
      %3454 = vmatpush1.msra.mxu0 0.0
      %3455 = vmatprep.subr.mxu0 0.0
      %3456 = vmatpush1.msra.mxu0 0.0
      %3457 = vmatprep.subr.mxu0 0.0
      %3458 = vmatpush1.msra.mxu0 0.0
      %3459 = vmatprep.subr.mxu0 0.0
      %3460 = vmatpush1.msra.mxu0 0.0
      %3461 = vmatprep.subr.mxu0 0.0
      %3462 = vmatpush1.msra.mxu0 0.0
      %3463 = vmatprep.subr.mxu0 0.0
      %3464 = vmatpush1.msra.mxu0 0.0
      %3465 = vmatprep.subr.mxu0 0.0
      %3466 = vmatpush1.msra.mxu0 0.0
      %3467 = vmatprep.subr.mxu0 0.0
      %3468 = vmatpush1.msra.mxu0 0.0
      %3469 = vmatprep.subr.mxu0 0.0
      %3470 = vmatpush1.msra.mxu0 0.0
      %3471 = vmatprep.subr.mxu0 0.0
      %3472 = vmatpush1.msra.mxu0 0.0
      %3473 = vmatprep.subr.mxu0 0.0
      %3474 = vmatpush1.msra.mxu0 0.0
      %3475 = vmatprep.subr.mxu0 0.0
      %3476 = vmatpush1.msra.mxu0 0.0
      %3477 = vmatprep.subr.mxu0 0.0
      %3478 = vmatpush1.msra.mxu0 0.0
      %3479 = vmatprep.subr.mxu0 0.0
      %3480 = vmatpush1.msra.mxu0 0.0
      %3481 = vmatprep.mubr.f32.mxu0 0.0
      %3482 = vmatmul.mubr.f32.gmra.mrb[0].mxu0 %v1531
      %v3483 = vpop.f32.mrb[0].mxu0
      %v3484 = vadd.f32 0.0, %v3483
      %v3485 = vpop.f32.mrb[0].mxu0
      %3486 = vmatprep.mubr.f32.mxu0 0.0
      %3487 = vmatmul.mubr.f32.gmra.mrb[0].mxu0 %v1534
      %v3488 = vpop.f32.mrb[0].mxu0
      %v3489 = vadd.f32 0.0, %v3488
      %v3490 = vpop.f32.mrb[0].mxu0
      %3491 = vmatprep.mubr.f32.mxu0 0.0
      %3492 = vmatmul.mubr.f32.gmra.mrb[0].mxu0 %v1537
      %v3493 = vpop.f32.mrb[0].mxu0
      %v3494 = vadd.f32 0.0, %v3493
      %v3495 = vpop.f32.mrb[0].mxu0
      %3496 = vmatprep.mubr.f32.mxu0 0.0
      %3497 = vmatmul.mubr.f32.gmra.mrb[0].mxu0 %v1540
      %v3498 = vpop.f32.mrb[0].mxu0
      %v3499 = vadd.f32 0.0, %v3498
      %v3500 = vpop.f32.mrb[0].mxu0
      %3501 = vmatprep.mubr.f32.mxu0 0.0
      %3502 = vmatmul.mubr.f32.gmra.mrb[0].mxu0 %v1543
      %v3503 = vpop.f32.mrb[0].mxu0
      %v3504 = vadd.f32 0.0, %v3503
      %v3505 = vpop.f32.mrb[0].mxu0
      %3506 = vmatprep.mubr.f32.mxu0 0.0
      %3507 = vmatmul.mubr.f32.gmra.mrb[0].mxu0 %v1546
      %v3508 = vpop.f32.mrb[0].mxu0
      %v3509 = vadd.f32 0.0, %v3508
      %v3510 = vpop.f32.mrb[0].mxu0
      %3511 = vmatprep.mubr.f32.mxu0 0.0
      %3512 = vmatmul.mubr.f32.gmra.mrb[0].mxu0 %v1549
      %v3513 = vpop.f32.mrb[0].mxu0
      %v3514 = vadd.f32 0.0, %v3513
      %v3515 = vpop.f32.mrb[0].mxu0
      %3516 = vmatprep.mubr.f32.mxu0 0.0
      %3517 = vmatmul.mubr.f32.gmra.mrb[0].mxu0 %v1552
      %v3518 = vpop.f32.mrb[0].mxu0
      %v3519 = vadd.f32 0.0, %v3518
      %v3520 = vpop.f32.mrb[0].mxu0
      %3521 = vdwg.mxu0
      %v3522 = vadd.f32 %v3405, %v3484
      %v3523 = vadd.f32 %v3406, %v3489
      %v3524 = vadd.f32 %v3407, %v3494
      %v3525 = vadd.f32 %v3408, %v3499
      %v3526 = vadd.f32 %v3409, %v3504
      %v3527 = vadd.f32 %v3410, %v3509
      %v3528 = vadd.f32 %v3411, %v3514
      %v3529 = vadd.f32 %v3412, %v3519
      %3530 = vst.msk [vmem:[%s337] sm:$0xff] %vm2203, %v3522
      %3531 = vst.msk [vmem:[%s337 + $0x8] sm:$0xff] %vm2203, %v3523
      %3532 = vst.msk [vmem:[%s337 + $0x10] sm:$0xff] %vm2203, %v3524
      %3533 = vst.msk [vmem:[%s337 + $0x18] sm:$0xff] %vm2203, %v3525
      %3534 = vst.msk [vmem:[%s337 + $0x20] sm:$0xff] %vm2203, %v3526
      %3535 = vst.msk [vmem:[%s337 + $0x28] sm:$0xff] %vm2203, %v3527
      %3536 = vst.msk [vmem:[%s337 + $0x30] sm:$0xff] %vm2203, %v3528
      %3537 = vst.msk [vmem:[%s337 + $0x38] sm:$0xff] %vm2203, %v3529
      %p3538 = scmp.lt.s32.totalorder %s20, 1
      %s3539 = scalar_select %p3538, %s20, 1
      %s3540 = smul.addr %s3539, 8
      %s3541 = smul.addr %s3540, 8
      %s3542 = scalar_lea.vmem %s9, %s3541
      // Predicated region
      $region57: #{residual_block_forward.2} parent=55 // pred_check
        %p3543 = pneg %p232
      $region58: #{residual_block_forward.2} parent=55 // pred_check_branch
        %3545 = sbr.rel (%p3543) target = $region60
      $region59: #{residual_block_forward.2} parent=55 // pred_region
        _
      $region60: #{residual_block_forward.2} parent=55 // pred_fallthru
        _
    $region56: #{residual_block_forward.2} parent=5 // pred_fallthru
      _
    %p3546 = scmp.le.s32.totalorder 2, %s15
    // Predicated region
    $region61: #{residual_block_forward.2} parent=5 // pred_check
      %p3547 = pneg %p3546
    $region62: #{residual_block_forward.2} parent=5 // pred_check_branch
      %3549 = sbr.rel (%p3547) target = $region64
    $region63: #{residual_block_forward.2} parent=5 // pred_region
      %s3550 = ssub.s32 %s15, 2
      // Predicated region
      $region65: #{residual_block_forward.2} parent=63 // pred_check
        %p3551 = pneg %p238
      $region66: #{residual_block_forward.2} parent=63 // pred_check_branch
        %3553 = sbr.rel (%p3551) target = $region68
      $region67: #{residual_block_forward.2} parent=63 // pred_region
        %p3554 = scmp.lt.s32.totalorder %s21, 1
        %s3555 = scalar_select %p3554, %s21, 1
        %s3556 = smul.addr %s3555, 8
        %s3557 = smul.addr %s3556, 8
        %s3558 = scalar_lea.vmem %s9, %s3557
      $region68: #{residual_block_forward.2} parent=63 // pred_fallthru
        _
    $region64: #{residual_block_forward.2} parent=5 // pred_fallthru
      _
  $region6: #{residual_block_forward.2} parent=0 // loop_footer
    %s19 = sadd.s32 1, %s15
  $region7: #{residual_block_forward.2} parent=0 // loop_footer_branch
    %14 = sbr.rel target = $region3
  $region8: #{residual_block_forward.2} parent=0 // loop_exit
    _

</llo_original>
